<compile_context>
chip_gen: v7x
topology: tpu7x:2x2x1
jax: 0.10.0
libtpu: 0.0.40
codegen_flags: <defaults>
</compile_context>

<pallas_src>
import functools

import jax
import jax.numpy as jnp
from jax.experimental import pallas as pl
from jax.experimental.pallas import tpu as pltpu

BN_EPS = 1e-5
_VMEM_LIMIT = 32 * 1024 * 1024


def _round_up(x, m):
    return (x + m - 1) // m * m


# ----------------------------------------------------------------------------
# Fused matmul Pallas kernels
# ----------------------------------------------------------------------------
def _prologue(a_ref, scale_ref, shift_ref, in_act):
    """Optionally apply per-K-lane BN affine + activation to the A tile."""
    if in_act is None:
        return a_ref[...]
    a = a_ref[...].astype(jnp.float32) * scale_ref[...] + shift_ref[...]
    if in_act == "relu":
        a = jnp.maximum(a, 0.0)
    else:  # "leaky"
        a = jnp.where(a >= 0.0, a, 0.2 * a)
    return a.astype(jnp.bfloat16)


def _fused_mm_kernel(a_ref, b_ref, scale_ref, shift_ref, bias_ref,
                     o_ref, acc_ref, *, in_act, out_act):
    @pl.when(pl.program_id(2) == 0)
    def _():
        acc_ref[...] = jnp.zeros_like(acc_ref)

    a = _prologue(a_ref, scale_ref, shift_ref, in_act)
    acc_ref[...] += jnp.dot(a, b_ref[...], preferred_element_type=jnp.float32)

    @pl.when(pl.program_id(2) == pl.num_programs(2) - 1)
    def _():
        y = acc_ref[...] + bias_ref[...]
        if out_act == "relu":
            y = jnp.maximum(y, 0.0)
        elif out_act == "sigmoid":
            y = jax.nn.sigmoid(y)
        o_ref[...] = y


def _fused_mm_bins_kernel(a_ref, b_ref, scale_ref, shift_ref, bias_ref,
                          centers_ref, o_ref, e_ref, acc_ref, *, in_act,
                          num_bins):
    """Matmul + bias epilogue + per-phase softmax-over-bins expectation."""
    @pl.when(pl.program_id(2) == 0)
    def _():
        acc_ref[...] = jnp.zeros_like(acc_ref)

    a = _prologue(a_ref, scale_ref, shift_ref, in_act)
    acc_ref[...] += jnp.dot(a, b_ref[...], preferred_element_type=jnp.float32)

    @pl.when(pl.program_id(2) == pl.num_programs(2) - 1)
    def _():
        logits = acc_ref[...] + bias_ref[...]
        o_ref[...] = logits
        centers = centers_ref[...]
        cols = []
        for g in range(4):  # 4 sub-pixel phases, num_bins lanes each
            s = logits[:, g * num_bins:(g + 1) * num_bins]
            m = jnp.max(s, axis=-1, keepdims=True)
            e = jnp.exp(s - m)
            denom = jnp.sum(e, axis=-1, keepdims=True)
            p = e * pl.reciprocal(denom, approx=True)
            cols.append(jnp.sum(p * centers, axis=-1, keepdims=True))
        e_ref[...] = jnp.concatenate(cols, axis=-1)


def fused_matmul(a, b, scale_k, shift_k, bias_n, in_act, out_act,
                 centers=None, num_bins=None):
    """out = out_act(in_act(a*scale+shift) @ b + bias); optional bin expectation.

    a: (M, K) activations (cast to bf16), b: (K, N) weights, scale/shift: (K,),
    bias: (N,).  Returns (M, N) f32 [and (M, 4) expectation if centers given].
    """
    M, K = a.shape
    N = b.shape[1]
    bins = centers is not None

    if M <= 256:
        TM = _round_up(M, 8)
        Mp = TM
    else:
        TM = 256
        Mp = _round_up(M, 256)
    if K <= 1024:
        TK = K
        Kp = K
    else:
        TK = 512
        Kp = _round_up(K, 512)
    if bins or N <= 512:
        TN = N
        Np = N
    else:
        TN = 256
        Np = _round_up(N, 256)

    a_p = a.astype(jnp.bfloat16)
    if Mp != M or Kp != K:
        a_p = jnp.pad(a_p, ((0, Mp - M), (0, Kp - K)))
    b_p = b.astype(jnp.bfloat16)
    if Kp != K or Np != N:
        b_p = jnp.pad(b_p, ((0, Kp - K), (0, Np - N)))

    if scale_k is None:
        scale2 = jnp.zeros((1, Kp), jnp.float32)
        shift2 = jnp.zeros((1, Kp), jnp.float32)
    else:
        scale2 = jnp.pad(scale_k.astype(jnp.float32), (0, Kp - K)).reshape(1, Kp)
        shift2 = jnp.pad(shift_k.astype(jnp.float32), (0, Kp - K)).reshape(1, Kp)
    if bias_n is None:
        bias2 = jnp.zeros((1, Np), jnp.float32)
    else:
        bias2 = jnp.pad(bias_n.astype(jnp.float32), (0, Np - N)).reshape(1, Np)

    grid = (Mp // TM, Np // TN, Kp // TK)
    in_specs = [
        pl.BlockSpec((TM, TK), lambda m, n, k: (m, k)),
        pl.BlockSpec((TK, TN), lambda m, n, k: (k, n)),
        pl.BlockSpec((1, TK), lambda m, n, k: (0, k)),
        pl.BlockSpec((1, TK), lambda m, n, k: (0, k)),
        pl.BlockSpec((1, TN), lambda m, n, k: (0, n)),
    ]
    cparams = pltpu.CompilerParams(
        dimension_semantics=("parallel", "parallel", "arbitrary"),
        vmem_limit_bytes=_VMEM_LIMIT)
    scratch = [pltpu.VMEM((TM, TN), jnp.float32)]

    if not bins:
        out = pl.pallas_call(
            functools.partial(_fused_mm_kernel, in_act=in_act, out_act=out_act),
            out_shape=jax.ShapeDtypeStruct((Mp, Np), jnp.float32),
            grid=grid,
            in_specs=in_specs,
            out_specs=pl.BlockSpec((TM, TN), lambda m, n, k: (m, n)),
            scratch_shapes=scratch,
            compiler_params=cparams,
        )(a_p, b_p, scale2, shift2, bias2)
        return out[:M, :N]

    nb = num_bins
    assert N == 4 * nb and Np == N  # single lane tile for the bin heads
    centers2 = centers.astype(jnp.float32).reshape(1, nb)
    in_specs.append(pl.BlockSpec((1, nb), lambda m, n, k: (0, 0)))
    out, expec = pl.pallas_call(
        functools.partial(_fused_mm_bins_kernel, in_act=in_act, num_bins=nb),
        out_shape=(jax.ShapeDtypeStruct((Mp, Np), jnp.float32),
                   jax.ShapeDtypeStruct((Mp, 4), jnp.float32)),
        grid=grid,
        in_specs=in_specs,
        out_specs=(pl.BlockSpec((TM, TN), lambda m, n, k: (m, n)),
                   pl.BlockSpec((TM, 4), lambda m, n, k: (m, 0))),
        scratch_shapes=scratch,
        compiler_params=cparams,
    )(a_p, b_p, scale2, shift2, bias2, centers2)
    return out[:M, :N], expec[:M]


# ----------------------------------------------------------------------------
# Convolution wrappers (NHWC)
# ----------------------------------------------------------------------------
def _im2col_nhwc(x, k, stride, pad):
    """x: (N,H,W,C) -> patches (N*Ho*Wo, k*k*C), tap-major / channel-minor."""
    N, H, W, C = x.shape
    xp = jnp.pad(x, ((0, 0), (pad, pad), (pad, pad), (0, 0)))
    Ho = (H + 2 * pad - k) // stride + 1
    Wo = (W + 2 * pad - k) // stride + 1
    cols = []
    for di in range(k):
        for dj in range(k):
            cols.append(xp[:, di:di + stride * Ho:stride,
                           dj:dj + stride * Wo:stride, :])
    patches = jnp.concatenate(cols, axis=-1)
    return patches.reshape(N * Ho * Wo, k * k * C), Ho, Wo


def conv2d_fused(x, w_oihw, bias, stride, pad, in_act=None, in_affine=None,
                 out_act=None):
    """PyTorch-style Conv2d with everything fused into one Pallas matmul."""
    N, H, W, C = x.shape
    Cout, Cin, k, _ = w_oihw.shape
    patches, Ho, Wo = _im2col_nhwc(x.astype(jnp.bfloat16), k, stride, pad)
    w2 = w_oihw.transpose(2, 3, 1, 0).reshape(k * k * Cin, Cout)
    if in_affine is None:
        sk = hk = None
    else:
        sk = jnp.tile(in_affine[0], k * k)
        hk = jnp.tile(in_affine[1], k * k)
    y = fused_matmul(patches, w2, sk, hk, bias, in_act, out_act)
    return y.reshape(N, Ho, Wo, Cout)


# (output phase r/s, 3x3-tap offset di/dj) -> ConvTranspose kernel index
_TAP_TO_K = {(0, 0): 3, (0, 1): 1, (1, 1): 2, (1, 2): 0}


def _pack_convT_weights(ws):
    """Pack ConvTranspose2d(k=4,s=2,p=1) weights (Cin,Cout,4,4) of one or more
    heads sharing the same input into a (9*Cin, 4*sum(Cout)) matrix acting on a
    3x3/stride-1 im2col of the un-upsampled input; columns are
    (phase, head, cout) ordered (sub-pixel decomposition)."""
    Cin = ws[0].shape[0]
    Ctot = sum(int(w.shape[1]) for w in ws)
    W = jnp.zeros((3, 3, Cin, 4, Ctot), jnp.float32)
    for r in range(2):
        for s in range(2):
            ph = r * 2 + s
            off = 0
            for w in ws:
                co = int(w.shape[1])
                for (rr, di), kh in _TAP_TO_K.items():
                    if rr != r:
                        continue
                    for (ss, dj), kw in _TAP_TO_K.items():
                        if ss != s:
                            continue
                        W = W.at[di, dj, :, ph, off:off + co].set(w[:, :, kh, kw])
                off += co
    return W.reshape(9 * Cin, 4 * Ctot)


def _pixel_shuffle2(y2d, N, H, W, C):
    """(N*H*W, 4*C) phase-major -> (N, 2H, 2W, C)."""
    y = y2d.reshape(N, H, W, 2, 2, C)
    return y.transpose(0, 1, 3, 2, 4, 5).reshape(N, 2 * H, 2 * W, C)


def conv_transpose2d_fused(x, ws, in_affine, biases=None, out_act=None,
                           centers=None, num_bins=None):
    """Fused ConvTranspose2d(k=4,s=2,p=1) for one or several heads sharing x.
    Prologue applies ReLU(x * scale + shift) (the pending BN of the producer)."""
    N, H, W, C = x.shape
    Ctot = sum(int(w.shape[1]) for w in ws)
    patches, _, _ = _im2col_nhwc(x.astype(jnp.bfloat16), 3, 1, 1)
    w2 = _pack_convT_weights(ws)
    sk = jnp.tile(in_affine[0], 9)
    hk = jnp.tile(in_affine[1], 9)
    bias = None
    if biases is not None:
        bias = jnp.tile(jnp.concatenate(biases), 4)
    if centers is None:
        y = fused_matmul(patches, w2, sk, hk, bias, "relu", out_act)
        return _pixel_shuffle2(y, N, H, W, Ctot)
    y, e = fused_matmul(patches, w2, sk, hk, bias, "relu", None,
                        centers=centers, num_bins=num_bins)
    return _pixel_shuffle2(y, N, H, W, Ctot), _pixel_shuffle2(e, N, H, W, 1)


def _bn_affine(mean, var, gamma, beta):
    a = gamma / jnp.sqrt(var + BN_EPS)
    return a, beta - mean * a


# ----------------------------------------------------------------------------
# Parameters (deterministic synthetic init, PyTorch layouts)
# ----------------------------------------------------------------------------
def _decoder_channel_plan(num_downs, output_nc, ngf):
    plan = []
    for i in range(num_downs):
        inner_nc = ngf * min(2 ** (num_downs - i - 1), 8)
        outer_nc = (ngf * min(2 ** (num_downs - i - 2), 8)
                    if i < num_downs - 1 else output_nc)
        in_channels = inner_nc if i == 0 else inner_nc * 2
        plan.append((in_channels, outer_nc, i == num_downs - 1))
    return plan


def init_params(key, input_nc, output_nc, num_downs, ngf, num_bins):
    assert output_nc == num_bins
    keys = iter(jax.random.split(key, 256))

    def nrm(shape, scale=0.1):
        return scale * jax.random.normal(next(keys), shape, jnp.float32)

    params = {}
    enc = []
    in_c = input_nc
    for i in range(num_downs):
        out_c = ngf * min(2 ** i, 8)
        enc.append(dict(w=nrm((out_c, in_c, 4, 4)),
                        gamma=1.0 + nrm((out_c,), 0.05),
                        beta=nrm((out_c,), 0.05)))
        in_c = out_c
    params["encoder"] = enc

    def make_decoder(head_output_nc):
        blocks = []
        for in_ch, out_ch, outermost in _decoder_channel_plan(
                num_downs, head_output_nc, ngf):
            if outermost:
                blocks.append(dict(w=nrm((in_ch, out_ch, 4, 4)),
                                   b=nrm((out_ch,))))
            else:
                blocks.append(dict(w=nrm((in_ch, out_ch, 4, 4)),
                                   gamma=1.0 + nrm((out_ch,), 0.05),
                                   beta=nrm((out_ch,), 0.05)))
        return blocks

    params["x_head"] = make_decoder(output_nc)
    params["y_head"] = make_decoder(output_nc)
    params["z_head"] = make_decoder(output_nc)
    params["mask_head"] = make_decoder(1)

    params["rot"] = dict(
        w1=nrm((64, 3, 3, 3)), b1=nrm((64,)),
        w2=nrm((128, 64, 3, 3)), b2=nrm((128,)),
        w3=nrm((6, 128, 3, 3)), b3=nrm((6,)),
    )
    return params


# ----------------------------------------------------------------------------
# Forward pass
# ----------------------------------------------------------------------------
def rot6d_to_rotmat(x):
    x = x.reshape(-1, 3, 2)
    a1 = x[:, :, 0]
    a2 = x[:, :, 1]

    def normalize(v):
        n = jnp.linalg.norm(v, axis=1, keepdims=True)
        return v / jnp.maximum(n, 1e-12)

    b1 = normalize(a1)
    b2 = normalize(a2 - jnp.sum(b1 * a2, axis=1, keepdims=True) * b1)
    b3 = jnp.cross(b1, b2, axis=1)
    return jnp.stack([b1, b2, b3], axis=-1)


def unet_multihead_rot_forward(params, x_nchw):
    x = jnp.transpose(x_nchw, (0, 2, 3, 1))  # NHWC internally
    nd = len(params["encoder"])
    num_bins = int(params["x_head"][-1]["w"].shape[1])

    # --- shared encoder: store raw conv outputs + pending BN affine ---------
    enc_raw, enc_aff = [], []
    for i, p in enumerate(params["encoder"]):
        if i == 0:
            y = conv2d_fused(x, p["w"], None, 2, 1)
        else:  # previous layer's BN + LeakyReLU(0.2) applied in the prologue
            y = conv2d_fused(enc_raw[-1], p["w"], None, 2, 1,
                             in_act="leaky", in_affine=enc_aff[-1])
        mean = y.mean(axis=(0, 1, 2))
        var = y.var(axis=(0, 1, 2))
        enc_raw.append(y)
        enc_aff.append(_bn_affine(mean, var, p["gamma"], p["beta"]))
    enc_raw = enc_raw[::-1]
    enc_aff = enc_aff[::-1]

    heads = ("x_head", "y_head", "z_head", "mask_head")
    centers = jnp.linspace(-1.0, 1.0, num_bins).astype(jnp.float32)

    hid = {h: None for h in heads}
    hid_aff = {h: None for h in heads}
    logits, expec = {}, {}
    mask_estimated = None

    for lvl in range(nd):
        outermost = lvl == nd - 1
        first = lvl == 0
        skip_raw, skip_aff = enc_raw[lvl], enc_aff[lvl]

        if first and not outermost:
            # all four heads consume the same bottleneck -> one fused matmul
            blks = [params[h][0] for h in heads]
            y = conv_transpose2d_fused(skip_raw, [b["w"] for b in blks],
                                       skip_aff)
            mean = y.mean(axis=(0, 1, 2))
            var = y.var(axis=(0, 1, 2))
            off = 0
            for h, blk in zip(heads, blks):
                co = int(blk["w"].shape[1])
                hid[h] = y[..., off:off + co]
                hid_aff[h] = _bn_affine(mean[off:off + co], var[off:off + co],
                                        blk["gamma"], blk["beta"])
                off += co
            continue

        for h in heads:
            blk = params[h][lvl]
            if first:
                inp, aff = skip_raw, skip_aff
            else:
                inp = jnp.concatenate([hid[h], skip_raw], axis=-1)
                aff = (jnp.concatenate([hid_aff[h][0], skip_aff[0]]),
                       jnp.concatenate([hid_aff[h][1], skip_aff[1]]))
            if outermost:
                if h == "mask_head":
                    mask_estimated = conv_transpose2d_fused(
                        inp, [blk["w"]], aff, biases=[blk["b"]],
                        out_act="sigmoid")
                else:
                    logits[h], expec[h] = conv_transpose2d_fused(
                        inp, [blk["w"]], aff, biases=[blk["b"]],
                        centers=centers, num_bins=num_bins)
            else:
                y = conv_transpose2d_fused(inp, [blk["w"]], aff)
                mean = y.mean(axis=(0, 1, 2))
                var = y.var(axis=(0, 1, 2))
                hid[h] = y
                hid_aff[h] = _bn_affine(mean, var, blk["gamma"], blk["beta"])

    nocs = jnp.concatenate(
        [expec["x_head"], expec["y_head"], expec["z_head"]], axis=-1)  # NHWC

    # --- rotation head (bias + ReLU fused into the matmul epilogue) ---------
    r = params["rot"]
    h1 = conv2d_fused(nocs, r["w1"], r["b1"], 1, 1, out_act="relu")
    h2 = conv2d_fused(h1, r["w2"], r["b2"], 1, 1, out_act="relu")
    h3 = conv2d_fused(h2, r["w3"], r["b3"], 1, 1)
    rotation_6d = h3.mean(axis=(1, 2))  # AdaptiveAvgPool2d((1,1)) + Flatten
    rotation_matrix = rot6d_to_rotmat(rotation_6d)

    to_nchw = lambda t: jnp.transpose(t, (0, 3, 1, 2))
    return (to_nchw(logits["x_head"]), to_nchw(logits["y_head"]),
            to_nchw(logits["z_head"]), to_nchw(nocs),
            to_nchw(mask_estimated), rotation_matrix)


# ----------------------------------------------------------------------------
# Demo
# ----------------------------------------------------------------------------
if __name__ == "__main__":
    batch, input_nc, spatial = 2, 3, 16
    num_downs, ngf, num_bins = 3, 8, 8
    output_nc = num_bins  # required by the module (softmax over output_nc bins)

    key = jax.random.PRNGKey(0)
    k_param, k_x = jax.random.split(key)
    params = init_params(k_param, input_nc, output_nc, num_downs, ngf, num_bins)
    x = jax.random.normal(k_x, (batch, input_nc, spatial, spatial), jnp.float32)

    fwd = jax.jit(unet_multihead_rot_forward)
    outs = jax.block_until_ready(fwd(params, x))

    x_logits, y_logits, z_logits, nocs, mask, rotmat = outs
    assert x_logits.shape == (batch, num_bins, spatial, spatial)
    assert y_logits.shape == (batch, num_bins, spatial, spatial)
    assert z_logits.shape == (batch, num_bins, spatial, spatial)
    assert nocs.shape == (batch, 3, spatial, spatial)
    assert mask.shape == (batch, 1, spatial, spatial)
    assert rotmat.shape == (batch, 3, 3)
    assert all(bool(jnp.isfinite(o).all()) for o in outs)
    print("KERNEL_OK")
</pallas_src>

<mosaic_0001>
module attributes {stable_mosaic.version = 11 : i64} {
  func.func @_fused_mm_kernel(%arg0: i32, %arg1: i32, %arg2: i32, %arg3: memref<128x48xbf16, #tpu.memory_space<vmem>>, %arg4: memref<48x8xbf16, #tpu.memory_space<vmem>>, %arg5: memref<1x48xf32, #tpu.memory_space<vmem>>, %arg6: memref<1x48xf32, #tpu.memory_space<vmem>>, %arg7: memref<1x8xf32, #tpu.memory_space<vmem>>, %arg8: memref<128x8xf32, #tpu.memory_space<vmem>>, %arg9: memref<128x8xf32, #tpu.memory_space<vmem>>) attributes {dimension_semantics = [#tpu.dimension_semantics<parallel>, #tpu.dimension_semantics<parallel>, #tpu.dimension_semantics<arbitrary>], iteration_bounds = array<i64: 1, 1, 1>, scalar_prefetch = 0 : i64, scratch_operands = 1 : i64, tpu.core_type = #tpu.core_type<tc>, window_params = [{transform_indices = @transform_0, window_bounds = array<i64: 128, 48>}, {transform_indices = @transform_1, window_bounds = array<i64: 48, 8>}, {transform_indices = @transform_2, window_bounds = array<i64: 1, 48>}, {transform_indices = @transform_3, window_bounds = array<i64: 1, 48>}, {transform_indices = @transform_4, window_bounds = array<i64: 1, 8>}, {transform_indices = @transform_5, window_bounds = array<i64: 128, 8>}]} {
    %c0_i32 = arith.constant 0 : i32
    %0 = arith.cmpi eq, %arg2, %c0_i32 : i32
    %1 = arith.extui %0 : i1 to i32
    %c0_i32_0 = arith.constant 0 : i32
    %2 = arith.cmpi ne, %1, %c0_i32_0 : i32
    scf.if %2 {
      %cst_10 = arith.constant 0.000000e+00 : f32
      %12 = vector.broadcast %cst_10 : f32 to vector<128x8xf32>
      %c0_11 = arith.constant 0 : index
      %c0_12 = arith.constant 0 : index
      %13 = vector.load %arg9[%c0_11, %c0_12] : memref<128x8xf32, #tpu.memory_space<vmem>>, vector<128x8xf32>
      tpu.vector_store %arg9[%c0_11, %c0_12], %12 {strides = array<i32>} : memref<128x8xf32, #tpu.memory_space<vmem>>, vector<128x8xf32>,
    } else {
    }
    %c0 = arith.constant 0 : index
    %c0_1 = arith.constant 0 : index
    %3 = vector.load %arg3[%c0, %c0_1] : memref<128x48xbf16, #tpu.memory_space<vmem>>, vector<128x48xbf16>
    %c0_2 = arith.constant 0 : index
    %c0_3 = arith.constant 0 : index
    %4 = vector.load %arg9[%c0_2, %c0_3] : memref<128x8xf32, #tpu.memory_space<vmem>>, vector<128x8xf32>
    %c0_4 = arith.constant 0 : index
    %c0_5 = arith.constant 0 : index
    %5 = vector.load %arg4[%c0_4, %c0_5] : memref<48x8xbf16, #tpu.memory_space<vmem>>, vector<48x8xbf16>
    %cst = arith.constant dense<0.000000e+00> : vector<128x8xf32>
    %6 = tpu.matmul %3, %5, %cst {dimension_numbers = #tpu.dot_dimension_numbers<[1], [0], [0], [1], [0, 0, 1, 1], [], []>} : vector<128x48xbf16>, vector<48x8xbf16>, vector<128x8xf32> -> vector<128x8xf32>
    %7 = arith.addf %4, %6 : vector<128x8xf32>
    %c0_6 = arith.constant 0 : index
    %c0_7 = arith.constant 0 : index
    %8 = vector.load %arg9[%c0_6, %c0_7] : memref<128x8xf32, #tpu.memory_space<vmem>>, vector<128x8xf32>
    tpu.vector_store %arg9[%c0_6, %c0_7], %7 {strides = array<i32>} : memref<128x8xf32, #tpu.memory_space<vmem>>, vector<128x8xf32>,
    %c0_i32_8 = arith.constant 0 : i32
    %9 = arith.cmpi eq, %arg2, %c0_i32_8 : i32
    %10 = arith.extui %9 : i1 to i32
    %c0_i32_9 = arith.constant 0 : i32
    %11 = arith.cmpi ne, %10, %c0_i32_9 : i32
    scf.if %11 {
      %c0_10 = arith.constant 0 : index
      %c0_11 = arith.constant 0 : index
      %12 = vector.load %arg9[%c0_10, %c0_11] : memref<128x8xf32, #tpu.memory_space<vmem>>, vector<128x8xf32>
      %c0_12 = arith.constant 0 : index
      %c0_13 = arith.constant 0 : index
      %13 = vector.load %arg7[%c0_12, %c0_13] : memref<1x8xf32, #tpu.memory_space<vmem>>, vector<1x8xf32>
      %14 = vector.broadcast %13 : vector<1x8xf32> to vector<128x8xf32>
      %15 = arith.addf %12, %14 : vector<128x8xf32>
      %c0_14 = arith.constant 0 : index
      %c0_15 = arith.constant 0 : index
      %16 = vector.load %arg8[%c0_14, %c0_15] : memref<128x8xf32, #tpu.memory_space<vmem>>, vector<128x8xf32>
      tpu.vector_store %arg8[%c0_14, %c0_15], %15 {strides = array<i32>} : memref<128x8xf32, #tpu.memory_space<vmem>>, vector<128x8xf32>,
    } else {
    }
    return
  }
  func.func @transform_0(%arg0: i32, %arg1: i32, %arg2: i32) -> (i32, i32) {
    %c0_i32 = arith.constant 0 : i32
    return %arg0, %arg2 : i32, i32
  }
  func.func @transform_1(%arg0: i32, %arg1: i32, %arg2: i32) -> (i32, i32) {
    %c0_i32 = arith.constant 0 : i32
    return %arg2, %arg1 : i32, i32
  }
  func.func @transform_2(%arg0: i32, %arg1: i32, %arg2: i32) -> (i32, i32) {
    %c0_i32 = arith.constant 0 : i32
    %c0_i32_0 = arith.constant 0 : i32
    return %c0_i32, %arg2 : i32, i32
  }
  func.func @transform_3(%arg0: i32, %arg1: i32, %arg2: i32) -> (i32, i32) {
    %c0_i32 = arith.constant 0 : i32
    %c0_i32_0 = arith.constant 0 : i32
    return %c0_i32, %arg2 : i32, i32
  }
  func.func @transform_4(%arg0: i32, %arg1: i32, %arg2: i32) -> (i32, i32) {
    %c0_i32 = arith.constant 0 : i32
    %c0_i32_0 = arith.constant 0 : i32
    return %c0_i32, %arg1 : i32, i32
  }
  func.func @transform_5(%arg0: i32, %arg1: i32, %arg2: i32) -> (i32, i32) {
    %c0_i32 = arith.constant 0 : i32
    return %arg0, %arg1 : i32, i32
  }
}

module attributes {stable_mosaic.version = 11 : i64} {
  func.func @_fused_mm_kernel(%arg0: i32, %arg1: i32, %arg2: i32, %arg3: memref<32x128xbf16, #tpu.memory_space<vmem>>, %arg4: memref<128x16xbf16, #tpu.memory_space<vmem>>, %arg5: memref<1x128xf32, #tpu.memory_space<vmem>>, %arg6: memref<1x128xf32, #tpu.memory_space<vmem>>, %arg7: memref<1x16xf32, #tpu.memory_space<vmem>>, %arg8: memref<32x16xf32, #tpu.memory_space<vmem>>, %arg9: memref<32x16xf32, #tpu.memory_space<vmem>>) attributes {dimension_semantics = [#tpu.dimension_semantics<parallel>, #tpu.dimension_semantics<parallel>, #tpu.dimension_semantics<arbitrary>], iteration_bounds = array<i64: 1, 1, 1>, scalar_prefetch = 0 : i64, scratch_operands = 1 : i64, tpu.core_type = #tpu.core_type<tc>, window_params = [{transform_indices = @transform_0, window_bounds = array<i64: 32, 128>}, {transform_indices = @transform_1, window_bounds = array<i64: 128, 16>}, {transform_indices = @transform_2, window_bounds = array<i64: 1, 128>}, {transform_indices = @transform_3, window_bounds = array<i64: 1, 128>}, {transform_indices = @transform_4, window_bounds = array<i64: 1, 16>}, {transform_indices = @transform_5, window_bounds = array<i64: 32, 16>}]} {
    %c0_i32 = arith.constant 0 : i32
    %0 = arith.cmpi eq, %arg2, %c0_i32 : i32
    %1 = arith.extui %0 : i1 to i32
    %c0_i32_0 = arith.constant 0 : i32
    %2 = arith.cmpi ne, %1, %c0_i32_0 : i32
    scf.if %2 {
      %cst_16 = arith.constant 0.000000e+00 : f32
      %25 = vector.broadcast %cst_16 : f32 to vector<32x16xf32>
      %c0_17 = arith.constant 0 : index
      %c0_18 = arith.constant 0 : index
      %26 = vector.load %arg9[%c0_17, %c0_18] : memref<32x16xf32, #tpu.memory_space<vmem>>, vector<32x16xf32>
      tpu.vector_store %arg9[%c0_17, %c0_18], %25 {strides = array<i32>} : memref<32x16xf32, #tpu.memory_space<vmem>>, vector<32x16xf32>,
    } else {
    }
    %c0 = arith.constant 0 : index
    %c0_1 = arith.constant 0 : index
    %3 = vector.load %arg3[%c0, %c0_1] : memref<32x128xbf16, #tpu.memory_space<vmem>>, vector<32x128xbf16>
    %4 = arith.extf %3 : vector<32x128xbf16> to vector<32x128xf32>
    %c0_2 = arith.constant 0 : index
    %c0_3 = arith.constant 0 : index
    %5 = vector.load %arg5[%c0_2, %c0_3] : memref<1x128xf32, #tpu.memory_space<vmem>>, vector<1x128xf32>
    %6 = vector.broadcast %5 : vector<1x128xf32> to vector<32x128xf32>
    %7 = arith.mulf %4, %6 : vector<32x128xf32>
    %c0_4 = arith.constant 0 : index
    %c0_5 = arith.constant 0 : index
    %8 = vector.load %arg6[%c0_4, %c0_5] : memref<1x128xf32, #tpu.memory_space<vmem>>, vector<1x128xf32>
    %9 = vector.broadcast %8 : vector<1x128xf32> to vector<32x128xf32>
    %10 = arith.addf %7, %9 : vector<32x128xf32>
    %cst = arith.constant 0.000000e+00 : f32
    %11 = vector.broadcast %cst : f32 to vector<32x128xf32>
    %12 = arith.cmpf oge, %10, %11 : vector<32x128xf32>
    %cst_6 = arith.constant 2.000000e-01 : f32
    %13 = vector.broadcast %cst_6 : f32 to vector<32x128xf32>
    %14 = arith.mulf %13, %10 : vector<32x128xf32>
    %15 = arith.select %12, %10, %14 : vector<32x128xi1>, vector<32x128xf32>
    %16 = arith.truncf %15 : vector<32x128xf32> to vector<32x128xbf16>
    %c0_7 = arith.constant 0 : index
    %c0_8 = arith.constant 0 : index
    %17 = vector.load %arg9[%c0_7, %c0_8] : memref<32x16xf32, #tpu.memory_space<vmem>>, vector<32x16xf32>
    %c0_9 = arith.constant 0 : index
    %c0_10 = arith.constant 0 : index
    %18 = vector.load %arg4[%c0_9, %c0_10] : memref<128x16xbf16, #tpu.memory_space<vmem>>, vector<128x16xbf16>
    %cst_11 = arith.constant dense<0.000000e+00> : vector<32x16xf32>
    %19 = tpu.matmul %16, %18, %cst_11 {dimension_numbers = #tpu.dot_dimension_numbers<[1], [0], [0], [1], [0, 0, 1, 1], [], []>} : vector<32x128xbf16>, vector<128x16xbf16>, vector<32x16xf32> -> vector<32x16xf32>
    %20 = arith.addf %17, %19 : vector<32x16xf32>
    %c0_12 = arith.constant 0 : index
    %c0_13 = arith.constant 0 : index
    %21 = vector.load %arg9[%c0_12, %c0_13] : memref<32x16xf32, #tpu.memory_space<vmem>>, vector<32x16xf32>
    tpu.vector_store %arg9[%c0_12, %c0_13], %20 {strides = array<i32>} : memref<32x16xf32, #tpu.memory_space<vmem>>, vector<32x16xf32>,
    %c0_i32_14 = arith.constant 0 : i32
    %22 = arith.cmpi eq, %arg2, %c0_i32_14 : i32
    %23 = arith.extui %22 : i1 to i32
    %c0_i32_15 = arith.constant 0 : i32
    %24 = arith.cmpi ne, %23, %c0_i32_15 : i32
    scf.if %24 {
      %c0_16 = arith.constant 0 : index
      %c0_17 = arith.constant 0 : index
      %25 = vector.load %arg9[%c0_16, %c0_17] : memref<32x16xf32, #tpu.memory_space<vmem>>, vector<32x16xf32>
      %c0_18 = arith.constant 0 : index
      %c0_19 = arith.constant 0 : index
      %26 = vector.load %arg7[%c0_18, %c0_19] : memref<1x16xf32, #tpu.memory_space<vmem>>, vector<1x16xf32>
      %27 = vector.broadcast %26 : vector<1x16xf32> to vector<32x16xf32>
      %28 = arith.addf %25, %27 : vector<32x16xf32>
      %c0_20 = arith.constant 0 : index
      %c0_21 = arith.constant 0 : index
      %29 = vector.load %arg8[%c0_20, %c0_21] : memref<32x16xf32, #tpu.memory_space<vmem>>, vector<32x16xf32>
      tpu.vector_store %arg8[%c0_20, %c0_21], %28 {strides = array<i32>} : memref<32x16xf32, #tpu.memory_space<vmem>>, vector<32x16xf32>,
    } else {
    }
    return
  }
  func.func @transform_0(%arg0: i32, %arg1: i32, %arg2: i32) -> (i32, i32) {
    %c0_i32 = arith.constant 0 : i32
    return %arg0, %arg2 : i32, i32
  }
  func.func @transform_1(%arg0: i32, %arg1: i32, %arg2: i32) -> (i32, i32) {
    %c0_i32 = arith.constant 0 : i32
    return %arg2, %arg1 : i32, i32
  }
  func.func @transform_2(%arg0: i32, %arg1: i32, %arg2: i32) -> (i32, i32) {
    %c0_i32 = arith.constant 0 : i32
    %c0_i32_0 = arith.constant 0 : i32
    return %c0_i32, %arg2 : i32, i32
  }
  func.func @transform_3(%arg0: i32, %arg1: i32, %arg2: i32) -> (i32, i32) {
    %c0_i32 = arith.constant 0 : i32
    %c0_i32_0 = arith.constant 0 : i32
    return %c0_i32, %arg2 : i32, i32
  }
  func.func @transform_4(%arg0: i32, %arg1: i32, %arg2: i32) -> (i32, i32) {
    %c0_i32 = arith.constant 0 : i32
    %c0_i32_0 = arith.constant 0 : i32
    return %c0_i32, %arg1 : i32, i32
  }
  func.func @transform_5(%arg0: i32, %arg1: i32, %arg2: i32) -> (i32, i32) {
    %c0_i32 = arith.constant 0 : i32
    return %arg0, %arg1 : i32, i32
  }
}

module attributes {stable_mosaic.version = 11 : i64} {
  func.func @_fused_mm_kernel(%arg0: i32, %arg1: i32, %arg2: i32, %arg3: memref<8x256xbf16, #tpu.memory_space<vmem>>, %arg4: memref<256x32xbf16, #tpu.memory_space<vmem>>, %arg5: memref<1x256xf32, #tpu.memory_space<vmem>>, %arg6: memref<1x256xf32, #tpu.memory_space<vmem>>, %arg7: memref<1x32xf32, #tpu.memory_space<vmem>>, %arg8: memref<8x32xf32, #tpu.memory_space<vmem>>, %arg9: memref<8x32xf32, #tpu.memory_space<vmem>>) attributes {dimension_semantics = [#tpu.dimension_semantics<parallel>, #tpu.dimension_semantics<parallel>, #tpu.dimension_semantics<arbitrary>], iteration_bounds = array<i64: 1, 1, 1>, scalar_prefetch = 0 : i64, scratch_operands = 1 : i64, tpu.core_type = #tpu.core_type<tc>, window_params = [{transform_indices = @transform_0, window_bounds = array<i64: 8, 256>}, {transform_indices = @transform_1, window_bounds = array<i64: 256, 32>}, {transform_indices = @transform_2, window_bounds = array<i64: 1, 256>}, {transform_indices = @transform_3, window_bounds = array<i64: 1, 256>}, {transform_indices = @transform_4, window_bounds = array<i64: 1, 32>}, {transform_indices = @transform_5, window_bounds = array<i64: 8, 32>}]} {
    %c0_i32 = arith.constant 0 : i32
    %0 = arith.cmpi eq, %arg2, %c0_i32 : i32
    %1 = arith.extui %0 : i1 to i32
    %c0_i32_0 = arith.constant 0 : i32
    %2 = arith.cmpi ne, %1, %c0_i32_0 : i32
    scf.if %2 {
      %cst_16 = arith.constant 0.000000e+00 : f32
      %25 = vector.broadcast %cst_16 : f32 to vector<8x32xf32>
      %c0_17 = arith.constant 0 : index
      %c0_18 = arith.constant 0 : index
      %26 = vector.load %arg9[%c0_17, %c0_18] : memref<8x32xf32, #tpu.memory_space<vmem>>, vector<8x32xf32>
      tpu.vector_store %arg9[%c0_17, %c0_18], %25 {strides = array<i32>} : memref<8x32xf32, #tpu.memory_space<vmem>>, vector<8x32xf32>,
    } else {
    }
    %c0 = arith.constant 0 : index
    %c0_1 = arith.constant 0 : index
    %3 = vector.load %arg3[%c0, %c0_1] : memref<8x256xbf16, #tpu.memory_space<vmem>>, vector<8x256xbf16>
    %4 = arith.extf %3 : vector<8x256xbf16> to vector<8x256xf32>
    %c0_2 = arith.constant 0 : index
    %c0_3 = arith.constant 0 : index
    %5 = vector.load %arg5[%c0_2, %c0_3] : memref<1x256xf32, #tpu.memory_space<vmem>>, vector<1x256xf32>
    %6 = vector.broadcast %5 : vector<1x256xf32> to vector<8x256xf32>
    %7 = arith.mulf %4, %6 : vector<8x256xf32>
    %c0_4 = arith.constant 0 : index
    %c0_5 = arith.constant 0 : index
    %8 = vector.load %arg6[%c0_4, %c0_5] : memref<1x256xf32, #tpu.memory_space<vmem>>, vector<1x256xf32>
    %9 = vector.broadcast %8 : vector<1x256xf32> to vector<8x256xf32>
    %10 = arith.addf %7, %9 : vector<8x256xf32>
    %cst = arith.constant 0.000000e+00 : f32
    %11 = vector.broadcast %cst : f32 to vector<8x256xf32>
    %12 = arith.cmpf oge, %10, %11 : vector<8x256xf32>
    %cst_6 = arith.constant 2.000000e-01 : f32
    %13 = vector.broadcast %cst_6 : f32 to vector<8x256xf32>
    %14 = arith.mulf %13, %10 : vector<8x256xf32>
    %15 = arith.select %12, %10, %14 : vector<8x256xi1>, vector<8x256xf32>
    %16 = arith.truncf %15 : vector<8x256xf32> to vector<8x256xbf16>
    %c0_7 = arith.constant 0 : index
    %c0_8 = arith.constant 0 : index
    %17 = vector.load %arg9[%c0_7, %c0_8] : memref<8x32xf32, #tpu.memory_space<vmem>>, vector<8x32xf32>
    %c0_9 = arith.constant 0 : index
    %c0_10 = arith.constant 0 : index
    %18 = vector.load %arg4[%c0_9, %c0_10] : memref<256x32xbf16, #tpu.memory_space<vmem>>, vector<256x32xbf16>
    %cst_11 = arith.constant dense<0.000000e+00> : vector<8x32xf32>
    %19 = tpu.matmul %16, %18, %cst_11 {dimension_numbers = #tpu.dot_dimension_numbers<[1], [0], [0], [1], [0, 0, 1, 1], [], []>} : vector<8x256xbf16>, vector<256x32xbf16>, vector<8x32xf32> -> vector<8x32xf32>
    %20 = arith.addf %17, %19 : vector<8x32xf32>
    %c0_12 = arith.constant 0 : index
    %c0_13 = arith.constant 0 : index
    %21 = vector.load %arg9[%c0_12, %c0_13] : memref<8x32xf32, #tpu.memory_space<vmem>>, vector<8x32xf32>
    tpu.vector_store %arg9[%c0_12, %c0_13], %20 {strides = array<i32>} : memref<8x32xf32, #tpu.memory_space<vmem>>, vector<8x32xf32>,
    %c0_i32_14 = arith.constant 0 : i32
    %22 = arith.cmpi eq, %arg2, %c0_i32_14 : i32
    %23 = arith.extui %22 : i1 to i32
    %c0_i32_15 = arith.constant 0 : i32
    %24 = arith.cmpi ne, %23, %c0_i32_15 : i32
    scf.if %24 {
      %c0_16 = arith.constant 0 : index
      %c0_17 = arith.constant 0 : index
      %25 = vector.load %arg9[%c0_16, %c0_17] : memref<8x32xf32, #tpu.memory_space<vmem>>, vector<8x32xf32>
      %c0_18 = arith.constant 0 : index
      %c0_19 = arith.constant 0 : index
      %26 = vector.load %arg7[%c0_18, %c0_19] : memref<1x32xf32, #tpu.memory_space<vmem>>, vector<1x32xf32>
      %27 = vector.broadcast %26 : vector<1x32xf32> to vector<8x32xf32>
      %28 = arith.addf %25, %27 : vector<8x32xf32>
      %c0_20 = arith.constant 0 : index
      %c0_21 = arith.constant 0 : index
      %29 = vector.load %arg8[%c0_20, %c0_21] : memref<8x32xf32, #tpu.memory_space<vmem>>, vector<8x32xf32>
      tpu.vector_store %arg8[%c0_20, %c0_21], %28 {strides = array<i32>} : memref<8x32xf32, #tpu.memory_space<vmem>>, vector<8x32xf32>,
    } else {
    }
    return
  }
  func.func @transform_0(%arg0: i32, %arg1: i32, %arg2: i32) -> (i32, i32) {
    %c0_i32 = arith.constant 0 : i32
    return %arg0, %arg2 : i32, i32
  }
  func.func @transform_1(%arg0: i32, %arg1: i32, %arg2: i32) -> (i32, i32) {
    %c0_i32 = arith.constant 0 : i32
    return %arg2, %arg1 : i32, i32
  }
  func.func @transform_2(%arg0: i32, %arg1: i32, %arg2: i32) -> (i32, i32) {
    %c0_i32 = arith.constant 0 : i32
    %c0_i32_0 = arith.constant 0 : i32
    return %c0_i32, %arg2 : i32, i32
  }
  func.func @transform_3(%arg0: i32, %arg1: i32, %arg2: i32) -> (i32, i32) {
    %c0_i32 = arith.constant 0 : i32
    %c0_i32_0 = arith.constant 0 : i32
    return %c0_i32, %arg2 : i32, i32
  }
  func.func @transform_4(%arg0: i32, %arg1: i32, %arg2: i32) -> (i32, i32) {
    %c0_i32 = arith.constant 0 : i32
    %c0_i32_0 = arith.constant 0 : i32
    return %c0_i32, %arg1 : i32, i32
  }
  func.func @transform_5(%arg0: i32, %arg1: i32, %arg2: i32) -> (i32, i32) {
    %c0_i32 = arith.constant 0 : i32
    return %arg0, %arg1 : i32, i32
  }
}

module attributes {stable_mosaic.version = 11 : i64} {
  func.func @_fused_mm_kernel(%arg0: i32, %arg1: i32, %arg2: i32, %arg3: memref<8x288xbf16, #tpu.memory_space<vmem>>, %arg4: memref<288x256xbf16, #tpu.memory_space<vmem>>, %arg5: memref<1x288xf32, #tpu.memory_space<vmem>>, %arg6: memref<1x288xf32, #tpu.memory_space<vmem>>, %arg7: memref<1x256xf32, #tpu.memory_space<vmem>>, %arg8: memref<8x256xf32, #tpu.memory_space<vmem>>, %arg9: memref<8x256xf32, #tpu.memory_space<vmem>>) attributes {dimension_semantics = [#tpu.dimension_semantics<parallel>, #tpu.dimension_semantics<parallel>, #tpu.dimension_semantics<arbitrary>], iteration_bounds = array<i64: 1, 1, 1>, scalar_prefetch = 0 : i64, scratch_operands = 1 : i64, tpu.core_type = #tpu.core_type<tc>, window_params = [{transform_indices = @transform_0, window_bounds = array<i64: 8, 288>}, {transform_indices = @transform_1, window_bounds = array<i64: 288, 256>}, {transform_indices = @transform_2, window_bounds = array<i64: 1, 288>}, {transform_indices = @transform_3, window_bounds = array<i64: 1, 288>}, {transform_indices = @transform_4, window_bounds = array<i64: 1, 256>}, {transform_indices = @transform_5, window_bounds = array<i64: 8, 256>}]} {
    %c0_i32 = arith.constant 0 : i32
    %0 = arith.cmpi eq, %arg2, %c0_i32 : i32
    %1 = arith.extui %0 : i1 to i32
    %c0_i32_0 = arith.constant 0 : i32
    %2 = arith.cmpi ne, %1, %c0_i32_0 : i32
    scf.if %2 {
      %cst_15 = arith.constant 0.000000e+00 : f32
      %22 = vector.broadcast %cst_15 : f32 to vector<8x256xf32>
      %c0_16 = arith.constant 0 : index
      %c0_17 = arith.constant 0 : index
      %23 = vector.load %arg9[%c0_16, %c0_17] : memref<8x256xf32, #tpu.memory_space<vmem>>, vector<8x256xf32>
      tpu.vector_store %arg9[%c0_16, %c0_17], %22 {strides = array<i32>} : memref<8x256xf32, #tpu.memory_space<vmem>>, vector<8x256xf32>,
    } else {
    }
    %c0 = arith.constant 0 : index
    %c0_1 = arith.constant 0 : index
    %3 = vector.load %arg3[%c0, %c0_1] : memref<8x288xbf16, #tpu.memory_space<vmem>>, vector<8x288xbf16>
    %4 = arith.extf %3 : vector<8x288xbf16> to vector<8x288xf32>
    %c0_2 = arith.constant 0 : index
    %c0_3 = arith.constant 0 : index
    %5 = vector.load %arg5[%c0_2, %c0_3] : memref<1x288xf32, #tpu.memory_space<vmem>>, vector<1x288xf32>
    %6 = vector.broadcast %5 : vector<1x288xf32> to vector<8x288xf32>
    %7 = arith.mulf %4, %6 : vector<8x288xf32>
    %c0_4 = arith.constant 0 : index
    %c0_5 = arith.constant 0 : index
    %8 = vector.load %arg6[%c0_4, %c0_5] : memref<1x288xf32, #tpu.memory_space<vmem>>, vector<1x288xf32>
    %9 = vector.broadcast %8 : vector<1x288xf32> to vector<8x288xf32>
    %10 = arith.addf %7, %9 : vector<8x288xf32>
    %cst = arith.constant 0.000000e+00 : f32
    %11 = vector.broadcast %cst : f32 to vector<8x288xf32>
    %12 = arith.maximumf %10, %11 : vector<8x288xf32>
    %13 = arith.truncf %12 : vector<8x288xf32> to vector<8x288xbf16>
    %c0_6 = arith.constant 0 : index
    %c0_7 = arith.constant 0 : index
    %14 = vector.load %arg9[%c0_6, %c0_7] : memref<8x256xf32, #tpu.memory_space<vmem>>, vector<8x256xf32>
    %c0_8 = arith.constant 0 : index
    %c0_9 = arith.constant 0 : index
    %15 = vector.load %arg4[%c0_8, %c0_9] : memref<288x256xbf16, #tpu.memory_space<vmem>>, vector<288x256xbf16>
    %cst_10 = arith.constant dense<0.000000e+00> : vector<8x256xf32>
    %16 = tpu.matmul %13, %15, %cst_10 {dimension_numbers = #tpu.dot_dimension_numbers<[1], [0], [0], [1], [0, 0, 1, 1], [], []>} : vector<8x288xbf16>, vector<288x256xbf16>, vector<8x256xf32> -> vector<8x256xf32>
    %17 = arith.addf %14, %16 : vector<8x256xf32>
    %c0_11 = arith.constant 0 : index
    %c0_12 = arith.constant 0 : index
    %18 = vector.load %arg9[%c0_11, %c0_12] : memref<8x256xf32, #tpu.memory_space<vmem>>, vector<8x256xf32>
    tpu.vector_store %arg9[%c0_11, %c0_12], %17 {strides = array<i32>} : memref<8x256xf32, #tpu.memory_space<vmem>>, vector<8x256xf32>,
    %c0_i32_13 = arith.constant 0 : i32
    %19 = arith.cmpi eq, %arg2, %c0_i32_13 : i32
    %20 = arith.extui %19 : i1 to i32
    %c0_i32_14 = arith.constant 0 : i32
    %21 = arith.cmpi ne, %20, %c0_i32_14 : i32
    scf.if %21 {
      %c0_15 = arith.constant 0 : index
      %c0_16 = arith.constant 0 : index
      %22 = vector.load %arg9[%c0_15, %c0_16] : memref<8x256xf32, #tpu.memory_space<vmem>>, vector<8x256xf32>
      %c0_17 = arith.constant 0 : index
      %c0_18 = arith.constant 0 : index
      %23 = vector.load %arg7[%c0_17, %c0_18] : memref<1x256xf32, #tpu.memory_space<vmem>>, vector<1x256xf32>
      %24 = vector.broadcast %23 : vector<1x256xf32> to vector<8x256xf32>
      %25 = arith.addf %22, %24 : vector<8x256xf32>
      %c0_19 = arith.constant 0 : index
      %c0_20 = arith.constant 0 : index
      %26 = vector.load %arg8[%c0_19, %c0_20] : memref<8x256xf32, #tpu.memory_space<vmem>>, vector<8x256xf32>
      tpu.vector_store %arg8[%c0_19, %c0_20], %25 {strides = array<i32>} : memref<8x256xf32, #tpu.memory_space<vmem>>, vector<8x256xf32>,
    } else {
    }
    return
  }
  func.func @transform_0(%arg0: i32, %arg1: i32, %arg2: i32) -> (i32, i32) {
    %c0_i32 = arith.constant 0 : i32
    return %arg0, %arg2 : i32, i32
  }
  func.func @transform_1(%arg0: i32, %arg1: i32, %arg2: i32) -> (i32, i32) {
    %c0_i32 = arith.constant 0 : i32
    return %arg2, %arg1 : i32, i32
  }
  func.func @transform_2(%arg0: i32, %arg1: i32, %arg2: i32) -> (i32, i32) {
    %c0_i32 = arith.constant 0 : i32
    %c0_i32_0 = arith.constant 0 : i32
    return %c0_i32, %arg2 : i32, i32
  }
  func.func @transform_3(%arg0: i32, %arg1: i32, %arg2: i32) -> (i32, i32) {
    %c0_i32 = arith.constant 0 : i32
    %c0_i32_0 = arith.constant 0 : i32
    return %c0_i32, %arg2 : i32, i32
  }
  func.func @transform_4(%arg0: i32, %arg1: i32, %arg2: i32) -> (i32, i32) {
    %c0_i32 = arith.constant 0 : i32
    %c0_i32_0 = arith.constant 0 : i32
    return %c0_i32, %arg1 : i32, i32
  }
  func.func @transform_5(%arg0: i32, %arg1: i32, %arg2: i32) -> (i32, i32) {
    %c0_i32 = arith.constant 0 : i32
    return %arg0, %arg1 : i32, i32
  }
}

module attributes {stable_mosaic.version = 11 : i64} {
  func.func @_fused_mm_kernel(%arg0: i32, %arg1: i32, %arg2: i32, %arg3: memref<32x288xbf16, #tpu.memory_space<vmem>>, %arg4: memref<288x32xbf16, #tpu.memory_space<vmem>>, %arg5: memref<1x288xf32, #tpu.memory_space<vmem>>, %arg6: memref<1x288xf32, #tpu.memory_space<vmem>>, %arg7: memref<1x32xf32, #tpu.memory_space<vmem>>, %arg8: memref<32x32xf32, #tpu.memory_space<vmem>>, %arg9: memref<32x32xf32, #tpu.memory_space<vmem>>) attributes {dimension_semantics = [#tpu.dimension_semantics<parallel>, #tpu.dimension_semantics<parallel>, #tpu.dimension_semantics<arbitrary>], iteration_bounds = array<i64: 1, 1, 1>, scalar_prefetch = 0 : i64, scratch_operands = 1 : i64, tpu.core_type = #tpu.core_type<tc>, window_params = [{transform_indices = @transform_0, window_bounds = array<i64: 32, 288>}, {transform_indices = @transform_1, window_bounds = array<i64: 288, 32>}, {transform_indices = @transform_2, window_bounds = array<i64: 1, 288>}, {transform_indices = @transform_3, window_bounds = array<i64: 1, 288>}, {transform_indices = @transform_4, window_bounds = array<i64: 1, 32>}, {transform_indices = @transform_5, window_bounds = array<i64: 32, 32>}]} {
    %c0_i32 = arith.constant 0 : i32
    %0 = arith.cmpi eq, %arg2, %c0_i32 : i32
    %1 = arith.extui %0 : i1 to i32
    %c0_i32_0 = arith.constant 0 : i32
    %2 = arith.cmpi ne, %1, %c0_i32_0 : i32
    scf.if %2 {
      %cst_15 = arith.constant 0.000000e+00 : f32
      %22 = vector.broadcast %cst_15 : f32 to vector<32x32xf32>
      %c0_16 = arith.constant 0 : index
      %c0_17 = arith.constant 0 : index
      %23 = vector.load %arg9[%c0_16, %c0_17] : memref<32x32xf32, #tpu.memory_space<vmem>>, vector<32x32xf32>
      tpu.vector_store %arg9[%c0_16, %c0_17], %22 {strides = array<i32>} : memref<32x32xf32, #tpu.memory_space<vmem>>, vector<32x32xf32>,
    } else {
    }
    %c0 = arith.constant 0 : index
    %c0_1 = arith.constant 0 : index
    %3 = vector.load %arg3[%c0, %c0_1] : memref<32x288xbf16, #tpu.memory_space<vmem>>, vector<32x288xbf16>
    %4 = arith.extf %3 : vector<32x288xbf16> to vector<32x288xf32>
    %c0_2 = arith.constant 0 : index
    %c0_3 = arith.constant 0 : index
    %5 = vector.load %arg5[%c0_2, %c0_3] : memref<1x288xf32, #tpu.memory_space<vmem>>, vector<1x288xf32>
    %6 = vector.broadcast %5 : vector<1x288xf32> to vector<32x288xf32>
    %7 = arith.mulf %4, %6 : vector<32x288xf32>
    %c0_4 = arith.constant 0 : index
    %c0_5 = arith.constant 0 : index
    %8 = vector.load %arg6[%c0_4, %c0_5] : memref<1x288xf32, #tpu.memory_space<vmem>>, vector<1x288xf32>
    %9 = vector.broadcast %8 : vector<1x288xf32> to vector<32x288xf32>
    %10 = arith.addf %7, %9 : vector<32x288xf32>
    %cst = arith.constant 0.000000e+00 : f32
    %11 = vector.broadcast %cst : f32 to vector<32x288xf32>
    %12 = arith.maximumf %10, %11 : vector<32x288xf32>
    %13 = arith.truncf %12 : vector<32x288xf32> to vector<32x288xbf16>
    %c0_6 = arith.constant 0 : index
    %c0_7 = arith.constant 0 : index
    %14 = vector.load %arg9[%c0_6, %c0_7] : memref<32x32xf32, #tpu.memory_space<vmem>>, vector<32x32xf32>
    %c0_8 = arith.constant 0 : index
    %c0_9 = arith.constant 0 : index
    %15 = vector.load %arg4[%c0_8, %c0_9] : memref<288x32xbf16, #tpu.memory_space<vmem>>, vector<288x32xbf16>
    %cst_10 = arith.constant dense<0.000000e+00> : vector<32x32xf32>
    %16 = tpu.matmul %13, %15, %cst_10 {dimension_numbers = #tpu.dot_dimension_numbers<[1], [0], [0], [1], [0, 0, 1, 1], [], []>} : vector<32x288xbf16>, vector<288x32xbf16>, vector<32x32xf32> -> vector<32x32xf32>
    %17 = arith.addf %14, %16 : vector<32x32xf32>
    %c0_11 = arith.constant 0 : index
    %c0_12 = arith.constant 0 : index
    %18 = vector.load %arg9[%c0_11, %c0_12] : memref<32x32xf32, #tpu.memory_space<vmem>>, vector<32x32xf32>
    tpu.vector_store %arg9[%c0_11, %c0_12], %17 {strides = array<i32>} : memref<32x32xf32, #tpu.memory_space<vmem>>, vector<32x32xf32>,
    %c0_i32_13 = arith.constant 0 : i32
    %19 = arith.cmpi eq, %arg2, %c0_i32_13 : i32
    %20 = arith.extui %19 : i1 to i32
    %c0_i32_14 = arith.constant 0 : i32
    %21 = arith.cmpi ne, %20, %c0_i32_14 : i32
    scf.if %21 {
      %c0_15 = arith.constant 0 : index
      %c0_16 = arith.constant 0 : index
      %22 = vector.load %arg9[%c0_15, %c0_16] : memref<32x32xf32, #tpu.memory_space<vmem>>, vector<32x32xf32>
      %c0_17 = arith.constant 0 : index
      %c0_18 = arith.constant 0 : index
      %23 = vector.load %arg7[%c0_17, %c0_18] : memref<1x32xf32, #tpu.memory_space<vmem>>, vector<1x32xf32>
      %24 = vector.broadcast %23 : vector<1x32xf32> to vector<32x32xf32>
      %25 = arith.addf %22, %24 : vector<32x32xf32>
      %c0_19 = arith.constant 0 : index
      %c0_20 = arith.constant 0 : index
      %26 = vector.load %arg8[%c0_19, %c0_20] : memref<32x32xf32, #tpu.memory_space<vmem>>, vector<32x32xf32>
      tpu.vector_store %arg8[%c0_19, %c0_20], %25 {strides = array<i32>} : memref<32x32xf32, #tpu.memory_space<vmem>>, vector<32x32xf32>,
    } else {
    }
    return
  }
  func.func @transform_0(%arg0: i32, %arg1: i32, %arg2: i32) -> (i32, i32) {
    %c0_i32 = arith.constant 0 : i32
    return %arg0, %arg2 : i32, i32
  }
  func.func @transform_1(%arg0: i32, %arg1: i32, %arg2: i32) -> (i32, i32) {
    %c0_i32 = arith.constant 0 : i32
    return %arg2, %arg1 : i32, i32
  }
  func.func @transform_2(%arg0: i32, %arg1: i32, %arg2: i32) -> (i32, i32) {
    %c0_i32 = arith.constant 0 : i32
    %c0_i32_0 = arith.constant 0 : i32
    return %c0_i32, %arg2 : i32, i32
  }
  func.func @transform_3(%arg0: i32, %arg1: i32, %arg2: i32) -> (i32, i32) {
    %c0_i32 = arith.constant 0 : i32
    %c0_i32_0 = arith.constant 0 : i32
    return %c0_i32, %arg2 : i32, i32
  }
  func.func @transform_4(%arg0: i32, %arg1: i32, %arg2: i32) -> (i32, i32) {
    %c0_i32 = arith.constant 0 : i32
    %c0_i32_0 = arith.constant 0 : i32
    return %c0_i32, %arg1 : i32, i32
  }
  func.func @transform_5(%arg0: i32, %arg1: i32, %arg2: i32) -> (i32, i32) {
    %c0_i32 = arith.constant 0 : i32
    return %arg0, %arg1 : i32, i32
  }
}

module attributes {stable_mosaic.version = 11 : i64} {
  func.func @_fused_mm_bins_kernel(%arg0: i32, %arg1: i32, %arg2: i32, %arg3: memref<128x144xbf16, #tpu.memory_space<vmem>>, %arg4: memref<144x32xbf16, #tpu.memory_space<vmem>>, %arg5: memref<1x144xf32, #tpu.memory_space<vmem>>, %arg6: memref<1x144xf32, #tpu.memory_space<vmem>>, %arg7: memref<1x32xf32, #tpu.memory_space<vmem>>, %arg8: memref<1x8xf32, #tpu.memory_space<vmem>>, %arg9: memref<128x32xf32, #tpu.memory_space<vmem>>, %arg10: memref<128x4xf32, #tpu.memory_space<vmem>>, %arg11: memref<128x32xf32, #tpu.memory_space<vmem>>) attributes {dimension_semantics = [#tpu.dimension_semantics<parallel>, #tpu.dimension_semantics<parallel>, #tpu.dimension_semantics<arbitrary>], iteration_bounds = array<i64: 1, 1, 1>, scalar_prefetch = 0 : i64, scratch_operands = 1 : i64, tpu.core_type = #tpu.core_type<tc>, window_params = [{transform_indices = @transform_0, window_bounds = array<i64: 128, 144>}, {transform_indices = @transform_1, window_bounds = array<i64: 144, 32>}, {transform_indices = @transform_2, window_bounds = array<i64: 1, 144>}, {transform_indices = @transform_3, window_bounds = array<i64: 1, 144>}, {transform_indices = @transform_4, window_bounds = array<i64: 1, 32>}, {pipeline_mode = #tpu.pipeline_mode<synchronous>, transform_indices = @transform_5, window_bounds = array<i64: 1, 8>}, {transform_indices = @transform_6, window_bounds = array<i64: 128, 32>}, {transform_indices = @transform_7, window_bounds = array<i64: 128, 4>}]} {
    %c0_i32 = arith.constant 0 : i32
    %0 = arith.cmpi eq, %arg2, %c0_i32 : i32
    %1 = arith.extui %0 : i1 to i32
    %c0_i32_0 = arith.constant 0 : i32
    %2 = arith.cmpi ne, %1, %c0_i32_0 : i32
    scf.if %2 {
      %cst_15 = arith.constant 0.000000e+00 : f32
      %22 = vector.broadcast %cst_15 : f32 to vector<128x32xf32>
      %c0_16 = arith.constant 0 : index
      %c0_17 = arith.constant 0 : index
      %23 = vector.load %arg11[%c0_16, %c0_17] : memref<128x32xf32, #tpu.memory_space<vmem>>, vector<128x32xf32>
      tpu.vector_store %arg11[%c0_16, %c0_17], %22 {strides = array<i32>} : memref<128x32xf32, #tpu.memory_space<vmem>>, vector<128x32xf32>,
    } else {
    }
    %c0 = arith.constant 0 : index
    %c0_1 = arith.constant 0 : index
    %3 = vector.load %arg3[%c0, %c0_1] : memref<128x144xbf16, #tpu.memory_space<vmem>>, vector<128x144xbf16>
    %4 = arith.extf %3 : vector<128x144xbf16> to vector<128x144xf32>
    %c0_2 = arith.constant 0 : index
    %c0_3 = arith.constant 0 : index
    %5 = vector.load %arg5[%c0_2, %c0_3] : memref<1x144xf32, #tpu.memory_space<vmem>>, vector<1x144xf32>
    %6 = vector.broadcast %5 : vector<1x144xf32> to vector<128x144xf32>
    %7 = arith.mulf %4, %6 : vector<128x144xf32>
    %c0_4 = arith.constant 0 : index
    %c0_5 = arith.constant 0 : index
    %8 = vector.load %arg6[%c0_4, %c0_5] : memref<1x144xf32, #tpu.memory_space<vmem>>, vector<1x144xf32>
    %9 = vector.broadcast %8 : vector<1x144xf32> to vector<128x144xf32>
    %10 = arith.addf %7, %9 : vector<128x144xf32>
    %cst = arith.constant 0.000000e+00 : f32
    %11 = vector.broadcast %cst : f32 to vector<128x144xf32>
    %12 = arith.maximumf %10, %11 : vector<128x144xf32>
    %13 = arith.truncf %12 : vector<128x144xf32> to vector<128x144xbf16>
    %c0_6 = arith.constant 0 : index
    %c0_7 = arith.constant 0 : index
    %14 = vector.load %arg11[%c0_6, %c0_7] : memref<128x32xf32, #tpu.memory_space<vmem>>, vector<128x32xf32>
    %c0_8 = arith.constant 0 : index
    %c0_9 = arith.constant 0 : index
    %15 = vector.load %arg4[%c0_8, %c0_9] : memref<144x32xbf16, #tpu.memory_space<vmem>>, vector<144x32xbf16>
    %cst_10 = arith.constant dense<0.000000e+00> : vector<128x32xf32>
    %16 = tpu.matmul %13, %15, %cst_10 {dimension_numbers = #tpu.dot_dimension_numbers<[1], [0], [0], [1], [0, 0, 1, 1], [], []>} : vector<128x144xbf16>, vector<144x32xbf16>, vector<128x32xf32> -> vector<128x32xf32>
    %17 = arith.addf %14, %16 : vector<128x32xf32>
    %c0_11 = arith.constant 0 : index
    %c0_12 = arith.constant 0 : index
    %18 = vector.load %arg11[%c0_11, %c0_12] : memref<128x32xf32, #tpu.memory_space<vmem>>, vector<128x32xf32>
    tpu.vector_store %arg11[%c0_11, %c0_12], %17 {strides = array<i32>} : memref<128x32xf32, #tpu.memory_space<vmem>>, vector<128x32xf32>,
    %c0_i32_13 = arith.constant 0 : i32
    %19 = arith.cmpi eq, %arg2, %c0_i32_13 : i32
    %20 = arith.extui %19 : i1 to i32
    %c0_i32_14 = arith.constant 0 : i32
    %21 = arith.cmpi ne, %20, %c0_i32_14 : i32
    scf.if %21 {
      %c0_15 = arith.constant 0 : index
      %c0_16 = arith.constant 0 : index
      %22 = vector.load %arg11[%c0_15, %c0_16] : memref<128x32xf32, #tpu.memory_space<vmem>>, vector<128x32xf32>
      %c0_17 = arith.constant 0 : index
      %c0_18 = arith.constant 0 : index
      %23 = vector.load %arg7[%c0_17, %c0_18] : memref<1x32xf32, #tpu.memory_space<vmem>>, vector<1x32xf32>
      %24 = vector.broadcast %23 : vector<1x32xf32> to vector<128x32xf32>
      %25 = arith.addf %22, %24 : vector<128x32xf32>
      %c0_19 = arith.constant 0 : index
      %c0_20 = arith.constant 0 : index
      %26 = vector.load %arg9[%c0_19, %c0_20] : memref<128x32xf32, #tpu.memory_space<vmem>>, vector<128x32xf32>
      tpu.vector_store %arg9[%c0_19, %c0_20], %25 {strides = array<i32>} : memref<128x32xf32, #tpu.memory_space<vmem>>, vector<128x32xf32>,
      %c0_21 = arith.constant 0 : index
      %c0_22 = arith.constant 0 : index
      %27 = vector.load %arg8[%c0_21, %c0_22] : memref<1x8xf32, #tpu.memory_space<vmem>>, vector<1x8xf32>
      %28 = vector.extract_strided_slice %25 {offsets = [0, 0], sizes = [128, 8], strides = [1, 1]} : vector<128x32xf32> to vector<128x8xf32>
      %cst_23 = arith.constant dense<0xFF800000> : vector<128xf32>
      %29 = vector.multi_reduction <maximumf>, %28, %cst_23 [1] : vector<128x8xf32> to vector<128xf32>
      %30 = vector.shape_cast %29 : vector<128xf32> to vector<128x1xf32>
      %31 = vector.broadcast %30 : vector<128x1xf32> to vector<128x8xf32>
      %32 = arith.subf %28, %31 : vector<128x8xf32>
      %33 = math.exp %32 : vector<128x8xf32>
      %cst_24 = arith.constant dense<0.000000e+00> : vector<128xf32>
      %34 = vector.multi_reduction <add>, %33, %cst_24 [1] : vector<128x8xf32> to vector<128xf32>
      %35 = vector.shape_cast %34 : vector<128xf32> to vector<128x1xf32>
      %36 = tpu.reciprocal %35 {approx = true} : vector<128x1xf32> -> vector<128x1xf32>
      %37 = vector.broadcast %36 : vector<128x1xf32> to vector<128x8xf32>
      %38 = arith.mulf %33, %37 : vector<128x8xf32>
      %39 = vector.broadcast %27 : vector<1x8xf32> to vector<128x8xf32>
      %40 = arith.mulf %38, %39 : vector<128x8xf32>
      %cst_25 = arith.constant dense<0.000000e+00> : vector<128xf32>
      %41 = vector.multi_reduction <add>, %40, %cst_25 [1] : vector<128x8xf32> to vector<128xf32>
      %42 = vector.shape_cast %41 : vector<128xf32> to vector<128x1xf32>
      %43 = vector.extract_strided_slice %25 {offsets = [0, 8], sizes = [128, 8], strides = [1, 1]} : vector<128x32xf32> to vector<128x8xf32>
      %cst_26 = arith.constant dense<0xFF800000> : vector<128xf32>
      %44 = vector.multi_reduction <maximumf>, %43, %cst_26 [1] : vector<128x8xf32> to vector<128xf32>
      %45 = vector.shape_cast %44 : vector<128xf32> to vector<128x1xf32>
      %46 = vector.broadcast %45 : vector<128x1xf32> to vector<128x8xf32>
      %47 = arith.subf %43, %46 : vector<128x8xf32>
      %48 = math.exp %47 : vector<128x8xf32>
      %cst_27 = arith.constant dense<0.000000e+00> : vector<128xf32>
      %49 = vector.multi_reduction <add>, %48, %cst_27 [1] : vector<128x8xf32> to vector<128xf32>
      %50 = vector.shape_cast %49 : vector<128xf32> to vector<128x1xf32>
      %51 = tpu.reciprocal %50 {approx = true} : vector<128x1xf32> -> vector<128x1xf32>
      %52 = vector.broadcast %51 : vector<128x1xf32> to vector<128x8xf32>
      %53 = arith.mulf %48, %52 : vector<128x8xf32>
      %54 = vector.broadcast %27 : vector<1x8xf32> to vector<128x8xf32>
      %55 = arith.mulf %53, %54 : vector<128x8xf32>
      %cst_28 = arith.constant dense<0.000000e+00> : vector<128xf32>
      %56 = vector.multi_reduction <add>, %55, %cst_28 [1] : vector<128x8xf32> to vector<128xf32>
      %57 = vector.shape_cast %56 : vector<128xf32> to vector<128x1xf32>
      %58 = vector.extract_strided_slice %25 {offsets = [0, 16], sizes = [128, 8], strides = [1, 1]} : vector<128x32xf32> to vector<128x8xf32>
      %cst_29 = arith.constant dense<0xFF800000> : vector<128xf32>
      %59 = vector.multi_reduction <maximumf>, %58, %cst_29 [1] : vector<128x8xf32> to vector<128xf32>
      %60 = vector.shape_cast %59 : vector<128xf32> to vector<128x1xf32>
      %61 = vector.broadcast %60 : vector<128x1xf32> to vector<128x8xf32>
      %62 = arith.subf %58, %61 : vector<128x8xf32>
      %63 = math.exp %62 : vector<128x8xf32>
      %cst_30 = arith.constant dense<0.000000e+00> : vector<128xf32>
      %64 = vector.multi_reduction <add>, %63, %cst_30 [1] : vector<128x8xf32> to vector<128xf32>
      %65 = vector.shape_cast %64 : vector<128xf32> to vector<128x1xf32>
      %66 = tpu.reciprocal %65 {approx = true} : vector<128x1xf32> -> vector<128x1xf32>
      %67 = vector.broadcast %66 : vector<128x1xf32> to vector<128x8xf32>
      %68 = arith.mulf %63, %67 : vector<128x8xf32>
      %69 = vector.broadcast %27 : vector<1x8xf32> to vector<128x8xf32>
      %70 = arith.mulf %68, %69 : vector<128x8xf32>
      %cst_31 = arith.constant dense<0.000000e+00> : vector<128xf32>
      %71 = vector.multi_reduction <add>, %70, %cst_31 [1] : vector<128x8xf32> to vector<128xf32>
      %72 = vector.shape_cast %71 : vector<128xf32> to vector<128x1xf32>
      %73 = vector.extract_strided_slice %25 {offsets = [0, 24], sizes = [128, 8], strides = [1, 1]} : vector<128x32xf32> to vector<128x8xf32>
      %cst_32 = arith.constant dense<0xFF800000> : vector<128xf32>
      %74 = vector.multi_reduction <maximumf>, %73, %cst_32 [1] : vector<128x8xf32> to vector<128xf32>
      %75 = vector.shape_cast %74 : vector<128xf32> to vector<128x1xf32>
      %76 = vector.broadcast %75 : vector<128x1xf32> to vector<128x8xf32>
      %77 = arith.subf %73, %76 : vector<128x8xf32>
      %78 = math.exp %77 : vector<128x8xf32>
      %cst_33 = arith.constant dense<0.000000e+00> : vector<128xf32>
      %79 = vector.multi_reduction <add>, %78, %cst_33 [1] : vector<128x8xf32> to vector<128xf32>
      %80 = vector.shape_cast %79 : vector<128xf32> to vector<128x1xf32>
      %81 = tpu.reciprocal %80 {approx = true} : vector<128x1xf32> -> vector<128x1xf32>
      %82 = vector.broadcast %81 : vector<128x1xf32> to vector<128x8xf32>
      %83 = arith.mulf %78, %82 : vector<128x8xf32>
      %84 = vector.broadcast %27 : vector<1x8xf32> to vector<128x8xf32>
      %85 = arith.mulf %83, %84 : vector<128x8xf32>
      %cst_34 = arith.constant dense<0.000000e+00> : vector<128xf32>
      %86 = vector.multi_reduction <add>, %85, %cst_34 [1] : vector<128x8xf32> to vector<128xf32>
      %87 = vector.shape_cast %86 : vector<128xf32> to vector<128x1xf32>
      %88 = tpu.concatenate %42, %57, %72, %87 in 1 : vector<128x1xf32>, vector<128x1xf32>, vector<128x1xf32>, vector<128x1xf32> -> vector<128x4xf32>
      %c0_35 = arith.constant 0 : index
      %c0_36 = arith.constant 0 : index
      %89 = vector.load %arg10[%c0_35, %c0_36] : memref<128x4xf32, #tpu.memory_space<vmem>>, vector<128x4xf32>
      tpu.vector_store %arg10[%c0_35, %c0_36], %88 {strides = array<i32>} : memref<128x4xf32, #tpu.memory_space<vmem>>, vector<128x4xf32>,
    } else {
    }
    return
  }
  func.func @transform_0(%arg0: i32, %arg1: i32, %arg2: i32) -> (i32, i32) {
    %c0_i32 = arith.constant 0 : i32
    return %arg0, %arg2 : i32, i32
  }
  func.func @transform_1(%arg0: i32, %arg1: i32, %arg2: i32) -> (i32, i32) {
    %c0_i32 = arith.constant 0 : i32
    return %arg2, %arg1 : i32, i32
  }
  func.func @transform_2(%arg0: i32, %arg1: i32, %arg2: i32) -> (i32, i32) {
    %c0_i32 = arith.constant 0 : i32
    %c0_i32_0 = arith.constant 0 : i32
    return %c0_i32, %arg2 : i32, i32
  }
  func.func @transform_3(%arg0: i32, %arg1: i32, %arg2: i32) -> (i32, i32) {
    %c0_i32 = arith.constant 0 : i32
    %c0_i32_0 = arith.constant 0 : i32
    return %c0_i32, %arg2 : i32, i32
  }
  func.func @transform_4(%arg0: i32, %arg1: i32, %arg2: i32) -> (i32, i32) {
    %c0_i32 = arith.constant 0 : i32
    %c0_i32_0 = arith.constant 0 : i32
    return %c0_i32, %arg1 : i32, i32
  }
  func.func @transform_5(%arg0: i32, %arg1: i32, %arg2: i32) -> (i32, i32) {
    %c0_i32 = arith.constant 0 : i32
    %c0_i32_0 = arith.constant 0 : i32
    %c0_i32_1 = arith.constant 0 : i32
    return %c0_i32, %c0_i32_0 : i32, i32
  }
  func.func @transform_6(%arg0: i32, %arg1: i32, %arg2: i32) -> (i32, i32) {
    %c0_i32 = arith.constant 0 : i32
    return %arg0, %arg1 : i32, i32
  }
  func.func @transform_7(%arg0: i32, %arg1: i32, %arg2: i32) -> (i32, i32) {
    %c0_i32 = arith.constant 0 : i32
    %c0_i32_0 = arith.constant 0 : i32
    return %arg0, %c0_i32 : i32, i32
  }
}

module attributes {stable_mosaic.version = 11 : i64} {
  func.func @_fused_mm_kernel(%arg0: i32, %arg1: i32, %arg2: i32, %arg3: memref<256x27xbf16, #tpu.memory_space<vmem>>, %arg4: memref<27x64xbf16, #tpu.memory_space<vmem>>, %arg5: memref<1x27xf32, #tpu.memory_space<vmem>>, %arg6: memref<1x27xf32, #tpu.memory_space<vmem>>, %arg7: memref<1x64xf32, #tpu.memory_space<vmem>>, %arg8: memref<256x64xf32, #tpu.memory_space<vmem>>, %arg9: memref<256x64xf32, #tpu.memory_space<vmem>>) attributes {dimension_semantics = [#tpu.dimension_semantics<parallel>, #tpu.dimension_semantics<parallel>, #tpu.dimension_semantics<arbitrary>], iteration_bounds = array<i64: 2, 1, 1>, scalar_prefetch = 0 : i64, scratch_operands = 1 : i64, tpu.core_type = #tpu.core_type<tc>, window_params = [{transform_indices = @transform_0, window_bounds = array<i64: 256, 27>}, {transform_indices = @transform_1, window_bounds = array<i64: 27, 64>}, {transform_indices = @transform_2, window_bounds = array<i64: 1, 27>}, {transform_indices = @transform_3, window_bounds = array<i64: 1, 27>}, {transform_indices = @transform_4, window_bounds = array<i64: 1, 64>}, {transform_indices = @transform_5, window_bounds = array<i64: 256, 64>}]} {
    %c0_i32 = arith.constant 0 : i32
    %0 = arith.cmpi eq, %arg2, %c0_i32 : i32
    %1 = arith.extui %0 : i1 to i32
    %c0_i32_0 = arith.constant 0 : i32
    %2 = arith.cmpi ne, %1, %c0_i32_0 : i32
    scf.if %2 {
      %cst_10 = arith.constant 0.000000e+00 : f32
      %12 = vector.broadcast %cst_10 : f32 to vector<256x64xf32>
      %c0_11 = arith.constant 0 : index
      %c0_12 = arith.constant 0 : index
      %13 = vector.load %arg9[%c0_11, %c0_12] : memref<256x64xf32, #tpu.memory_space<vmem>>, vector<256x64xf32>
      tpu.vector_store %arg9[%c0_11, %c0_12], %12 {strides = array<i32>} : memref<256x64xf32, #tpu.memory_space<vmem>>, vector<256x64xf32>,
    } else {
    }
    %c0 = arith.constant 0 : index
    %c0_1 = arith.constant 0 : index
    %3 = vector.load %arg3[%c0, %c0_1] : memref<256x27xbf16, #tpu.memory_space<vmem>>, vector<256x27xbf16>
    %c0_2 = arith.constant 0 : index
    %c0_3 = arith.constant 0 : index
    %4 = vector.load %arg9[%c0_2, %c0_3] : memref<256x64xf32, #tpu.memory_space<vmem>>, vector<256x64xf32>
    %c0_4 = arith.constant 0 : index
    %c0_5 = arith.constant 0 : index
    %5 = vector.load %arg4[%c0_4, %c0_5] : memref<27x64xbf16, #tpu.memory_space<vmem>>, vector<27x64xbf16>
    %cst = arith.constant dense<0.000000e+00> : vector<256x64xf32>
    %6 = tpu.matmul %3, %5, %cst {dimension_numbers = #tpu.dot_dimension_numbers<[1], [0], [0], [1], [0, 0, 1, 1], [], []>} : vector<256x27xbf16>, vector<27x64xbf16>, vector<256x64xf32> -> vector<256x64xf32>
    %7 = arith.addf %4, %6 : vector<256x64xf32>
    %c0_6 = arith.constant 0 : index
    %c0_7 = arith.constant 0 : index
    %8 = vector.load %arg9[%c0_6, %c0_7] : memref<256x64xf32, #tpu.memory_space<vmem>>, vector<256x64xf32>
    tpu.vector_store %arg9[%c0_6, %c0_7], %7 {strides = array<i32>} : memref<256x64xf32, #tpu.memory_space<vmem>>, vector<256x64xf32>,
    %c0_i32_8 = arith.constant 0 : i32
    %9 = arith.cmpi eq, %arg2, %c0_i32_8 : i32
    %10 = arith.extui %9 : i1 to i32
    %c0_i32_9 = arith.constant 0 : i32
    %11 = arith.cmpi ne, %10, %c0_i32_9 : i32
    scf.if %11 {
      %c0_10 = arith.constant 0 : index
      %c0_11 = arith.constant 0 : index
      %12 = vector.load %arg9[%c0_10, %c0_11] : memref<256x64xf32, #tpu.memory_space<vmem>>, vector<256x64xf32>
      %c0_12 = arith.constant 0 : index
      %c0_13 = arith.constant 0 : index
      %13 = vector.load %arg7[%c0_12, %c0_13] : memref<1x64xf32, #tpu.memory_space<vmem>>, vector<1x64xf32>
      %14 = vector.broadcast %13 : vector<1x64xf32> to vector<256x64xf32>
      %15 = arith.addf %12, %14 : vector<256x64xf32>
      %cst_14 = arith.constant 0.000000e+00 : f32
      %16 = vector.broadcast %cst_14 : f32 to vector<256x64xf32>
      %17 = arith.maximumf %15, %16 : vector<256x64xf32>
      %c0_15 = arith.constant 0 : index
      %c0_16 = arith.constant 0 : index
      %18 = vector.load %arg8[%c0_15, %c0_16] : memref<256x64xf32, #tpu.memory_space<vmem>>, vector<256x64xf32>
      tpu.vector_store %arg8[%c0_15, %c0_16], %17 {strides = array<i32>} : memref<256x64xf32, #tpu.memory_space<vmem>>, vector<256x64xf32>,
    } else {
    }
    return
  }
  func.func @transform_0(%arg0: i32, %arg1: i32, %arg2: i32) -> (i32, i32) {
    %c0_i32 = arith.constant 0 : i32
    return %arg0, %arg2 : i32, i32
  }
  func.func @transform_1(%arg0: i32, %arg1: i32, %arg2: i32) -> (i32, i32) {
    %c0_i32 = arith.constant 0 : i32
    return %arg2, %arg1 : i32, i32
  }
  func.func @transform_2(%arg0: i32, %arg1: i32, %arg2: i32) -> (i32, i32) {
    %c0_i32 = arith.constant 0 : i32
    %c0_i32_0 = arith.constant 0 : i32
    return %c0_i32, %arg2 : i32, i32
  }
  func.func @transform_3(%arg0: i32, %arg1: i32, %arg2: i32) -> (i32, i32) {
    %c0_i32 = arith.constant 0 : i32
    %c0_i32_0 = arith.constant 0 : i32
    return %c0_i32, %arg2 : i32, i32
  }
  func.func @transform_4(%arg0: i32, %arg1: i32, %arg2: i32) -> (i32, i32) {
    %c0_i32 = arith.constant 0 : i32
    %c0_i32_0 = arith.constant 0 : i32
    return %c0_i32, %arg1 : i32, i32
  }
  func.func @transform_5(%arg0: i32, %arg1: i32, %arg2: i32) -> (i32, i32) {
    %c0_i32 = arith.constant 0 : i32
    return %arg0, %arg1 : i32, i32
  }
}

module attributes {stable_mosaic.version = 11 : i64} {
  func.func @_fused_mm_kernel(%arg0: i32, %arg1: i32, %arg2: i32, %arg3: memref<256x576xbf16, #tpu.memory_space<vmem>>, %arg4: memref<576x128xbf16, #tpu.memory_space<vmem>>, %arg5: memref<1x576xf32, #tpu.memory_space<vmem>>, %arg6: memref<1x576xf32, #tpu.memory_space<vmem>>, %arg7: memref<1x128xf32, #tpu.memory_space<vmem>>, %arg8: memref<256x128xf32, #tpu.memory_space<vmem>>, %arg9: memref<256x128xf32, #tpu.memory_space<vmem>>) attributes {dimension_semantics = [#tpu.dimension_semantics<parallel>, #tpu.dimension_semantics<parallel>, #tpu.dimension_semantics<arbitrary>], iteration_bounds = array<i64: 2, 1, 1>, scalar_prefetch = 0 : i64, scratch_operands = 1 : i64, tpu.core_type = #tpu.core_type<tc>, window_params = [{transform_indices = @transform_0, window_bounds = array<i64: 256, 576>}, {transform_indices = @transform_1, window_bounds = array<i64: 576, 128>}, {transform_indices = @transform_2, window_bounds = array<i64: 1, 576>}, {transform_indices = @transform_3, window_bounds = array<i64: 1, 576>}, {transform_indices = @transform_4, window_bounds = array<i64: 1, 128>}, {transform_indices = @transform_5, window_bounds = array<i64: 256, 128>}]} {
    %c0_i32 = arith.constant 0 : i32
    %0 = arith.cmpi eq, %arg2, %c0_i32 : i32
    %1 = arith.extui %0 : i1 to i32
    %c0_i32_0 = arith.constant 0 : i32
    %2 = arith.cmpi ne, %1, %c0_i32_0 : i32
    scf.if %2 {
      %cst_10 = arith.constant 0.000000e+00 : f32
      %12 = vector.broadcast %cst_10 : f32 to vector<256x128xf32>
      %c0_11 = arith.constant 0 : index
      %c0_12 = arith.constant 0 : index
      %13 = vector.load %arg9[%c0_11, %c0_12] : memref<256x128xf32, #tpu.memory_space<vmem>>, vector<256x128xf32>
      tpu.vector_store %arg9[%c0_11, %c0_12], %12 {strides = array<i32>} : memref<256x128xf32, #tpu.memory_space<vmem>>, vector<256x128xf32>,
    } else {
    }
    %c0 = arith.constant 0 : index
    %c0_1 = arith.constant 0 : index
    %3 = vector.load %arg3[%c0, %c0_1] : memref<256x576xbf16, #tpu.memory_space<vmem>>, vector<256x576xbf16>
    %c0_2 = arith.constant 0 : index
    %c0_3 = arith.constant 0 : index
    %4 = vector.load %arg9[%c0_2, %c0_3] : memref<256x128xf32, #tpu.memory_space<vmem>>, vector<256x128xf32>
    %c0_4 = arith.constant 0 : index
    %c0_5 = arith.constant 0 : index
    %5 = vector.load %arg4[%c0_4, %c0_5] : memref<576x128xbf16, #tpu.memory_space<vmem>>, vector<576x128xbf16>
    %cst = arith.constant dense<0.000000e+00> : vector<256x128xf32>
    %6 = tpu.matmul %3, %5, %cst {dimension_numbers = #tpu.dot_dimension_numbers<[1], [0], [0], [1], [0, 0, 1, 1], [], []>} : vector<256x576xbf16>, vector<576x128xbf16>, vector<256x128xf32> -> vector<256x128xf32>
    %7 = arith.addf %4, %6 : vector<256x128xf32>
    %c0_6 = arith.constant 0 : index
    %c0_7 = arith.constant 0 : index
    %8 = vector.load %arg9[%c0_6, %c0_7] : memref<256x128xf32, #tpu.memory_space<vmem>>, vector<256x128xf32>
    tpu.vector_store %arg9[%c0_6, %c0_7], %7 {strides = array<i32>} : memref<256x128xf32, #tpu.memory_space<vmem>>, vector<256x128xf32>,
    %c0_i32_8 = arith.constant 0 : i32
    %9 = arith.cmpi eq, %arg2, %c0_i32_8 : i32
    %10 = arith.extui %9 : i1 to i32
    %c0_i32_9 = arith.constant 0 : i32
    %11 = arith.cmpi ne, %10, %c0_i32_9 : i32
    scf.if %11 {
      %c0_10 = arith.constant 0 : index
      %c0_11 = arith.constant 0 : index
      %12 = vector.load %arg9[%c0_10, %c0_11] : memref<256x128xf32, #tpu.memory_space<vmem>>, vector<256x128xf32>
      %c0_12 = arith.constant 0 : index
      %c0_13 = arith.constant 0 : index
      %13 = vector.load %arg7[%c0_12, %c0_13] : memref<1x128xf32, #tpu.memory_space<vmem>>, vector<1x128xf32>
      %14 = vector.broadcast %13 : vector<1x128xf32> to vector<256x128xf32>
      %15 = arith.addf %12, %14 : vector<256x128xf32>
      %cst_14 = arith.constant 0.000000e+00 : f32
      %16 = vector.broadcast %cst_14 : f32 to vector<256x128xf32>
      %17 = arith.maximumf %15, %16 : vector<256x128xf32>
      %c0_15 = arith.constant 0 : index
      %c0_16 = arith.constant 0 : index
      %18 = vector.load %arg8[%c0_15, %c0_16] : memref<256x128xf32, #tpu.memory_space<vmem>>, vector<256x128xf32>
      tpu.vector_store %arg8[%c0_15, %c0_16], %17 {strides = array<i32>} : memref<256x128xf32, #tpu.memory_space<vmem>>, vector<256x128xf32>,
    } else {
    }
    return
  }
  func.func @transform_0(%arg0: i32, %arg1: i32, %arg2: i32) -> (i32, i32) {
    %c0_i32 = arith.constant 0 : i32
    return %arg0, %arg2 : i32, i32
  }
  func.func @transform_1(%arg0: i32, %arg1: i32, %arg2: i32) -> (i32, i32) {
    %c0_i32 = arith.constant 0 : i32
    return %arg2, %arg1 : i32, i32
  }
  func.func @transform_2(%arg0: i32, %arg1: i32, %arg2: i32) -> (i32, i32) {
    %c0_i32 = arith.constant 0 : i32
    %c0_i32_0 = arith.constant 0 : i32
    return %c0_i32, %arg2 : i32, i32
  }
  func.func @transform_3(%arg0: i32, %arg1: i32, %arg2: i32) -> (i32, i32) {
    %c0_i32 = arith.constant 0 : i32
    %c0_i32_0 = arith.constant 0 : i32
    return %c0_i32, %arg2 : i32, i32
  }
  func.func @transform_4(%arg0: i32, %arg1: i32, %arg2: i32) -> (i32, i32) {
    %c0_i32 = arith.constant 0 : i32
    %c0_i32_0 = arith.constant 0 : i32
    return %c0_i32, %arg1 : i32, i32
  }
  func.func @transform_5(%arg0: i32, %arg1: i32, %arg2: i32) -> (i32, i32) {
    %c0_i32 = arith.constant 0 : i32
    return %arg0, %arg1 : i32, i32
  }
}

module attributes {stable_mosaic.version = 11 : i64} {
  func.func @_fused_mm_kernel(%arg0: i32, %arg1: i32, %arg2: i32, %arg3: memref<256x512xbf16, #tpu.memory_space<vmem>>, %arg4: memref<512x6xbf16, #tpu.memory_space<vmem>>, %arg5: memref<1x512xf32, #tpu.memory_space<vmem>>, %arg6: memref<1x512xf32, #tpu.memory_space<vmem>>, %arg7: memref<1x6xf32, #tpu.memory_space<vmem>>, %arg8: memref<256x6xf32, #tpu.memory_space<vmem>>, %arg9: memref<256x6xf32, #tpu.memory_space<vmem>>) attributes {dimension_semantics = [#tpu.dimension_semantics<parallel>, #tpu.dimension_semantics<parallel>, #tpu.dimension_semantics<arbitrary>], iteration_bounds = array<i64: 2, 1, 3>, scalar_prefetch = 0 : i64, scratch_operands = 1 : i64, tpu.core_type = #tpu.core_type<tc>, window_params = [{transform_indices = @transform_0, window_bounds = array<i64: 256, 512>}, {transform_indices = @transform_1, window_bounds = array<i64: 512, 6>}, {transform_indices = @transform_2, window_bounds = array<i64: 1, 512>}, {transform_indices = @transform_3, window_bounds = array<i64: 1, 512>}, {transform_indices = @transform_4, window_bounds = array<i64: 1, 6>}, {transform_indices = @transform_5, window_bounds = array<i64: 256, 6>}]} {
    %c0_i32 = arith.constant 0 : i32
    %0 = arith.cmpi eq, %arg2, %c0_i32 : i32
    %1 = arith.extui %0 : i1 to i32
    %c0_i32_0 = arith.constant 0 : i32
    %2 = arith.cmpi ne, %1, %c0_i32_0 : i32
    scf.if %2 {
      %cst_9 = arith.constant 0.000000e+00 : f32
      %12 = vector.broadcast %cst_9 : f32 to vector<256x6xf32>
      %c0_10 = arith.constant 0 : index
      %c0_11 = arith.constant 0 : index
      %13 = vector.load %arg9[%c0_10, %c0_11] : memref<256x6xf32, #tpu.memory_space<vmem>>, vector<256x6xf32>
      tpu.vector_store %arg9[%c0_10, %c0_11], %12 {strides = array<i32>} : memref<256x6xf32, #tpu.memory_space<vmem>>, vector<256x6xf32>,
    } else {
    }
    %c0 = arith.constant 0 : index
    %c0_1 = arith.constant 0 : index
    %3 = vector.load %arg3[%c0, %c0_1] : memref<256x512xbf16, #tpu.memory_space<vmem>>, vector<256x512xbf16>
    %c0_2 = arith.constant 0 : index
    %c0_3 = arith.constant 0 : index
    %4 = vector.load %arg9[%c0_2, %c0_3] : memref<256x6xf32, #tpu.memory_space<vmem>>, vector<256x6xf32>
    %c0_4 = arith.constant 0 : index
    %c0_5 = arith.constant 0 : index
    %5 = vector.load %arg4[%c0_4, %c0_5] : memref<512x6xbf16, #tpu.memory_space<vmem>>, vector<512x6xbf16>
    %cst = arith.constant dense<0.000000e+00> : vector<256x6xf32>
    %6 = tpu.matmul %3, %5, %cst {dimension_numbers = #tpu.dot_dimension_numbers<[1], [0], [0], [1], [0, 0, 1, 1], [], []>} : vector<256x512xbf16>, vector<512x6xbf16>, vector<256x6xf32> -> vector<256x6xf32>
    %7 = arith.addf %4, %6 : vector<256x6xf32>
    %c0_6 = arith.constant 0 : index
    %c0_7 = arith.constant 0 : index
    %8 = vector.load %arg9[%c0_6, %c0_7] : memref<256x6xf32, #tpu.memory_space<vmem>>, vector<256x6xf32>
    tpu.vector_store %arg9[%c0_6, %c0_7], %7 {strides = array<i32>} : memref<256x6xf32, #tpu.memory_space<vmem>>, vector<256x6xf32>,
    %c2_i32 = arith.constant 2 : i32
    %9 = arith.cmpi eq, %arg2, %c2_i32 : i32
    %10 = arith.extui %9 : i1 to i32
    %c0_i32_8 = arith.constant 0 : i32
    %11 = arith.cmpi ne, %10, %c0_i32_8 : i32
    scf.if %11 {
      %c0_9 = arith.constant 0 : index
      %c0_10 = arith.constant 0 : index
      %12 = vector.load %arg9[%c0_9, %c0_10] : memref<256x6xf32, #tpu.memory_space<vmem>>, vector<256x6xf32>
      %c0_11 = arith.constant 0 : index
      %c0_12 = arith.constant 0 : index
      %13 = vector.load %arg7[%c0_11, %c0_12] : memref<1x6xf32, #tpu.memory_space<vmem>>, vector<1x6xf32>
      %14 = vector.broadcast %13 : vector<1x6xf32> to vector<256x6xf32>
      %15 = arith.addf %12, %14 : vector<256x6xf32>
      %c0_13 = arith.constant 0 : index
      %c0_14 = arith.constant 0 : index
      %16 = vector.load %arg8[%c0_13, %c0_14] : memref<256x6xf32, #tpu.memory_space<vmem>>, vector<256x6xf32>
      tpu.vector_store %arg8[%c0_13, %c0_14], %15 {strides = array<i32>} : memref<256x6xf32, #tpu.memory_space<vmem>>, vector<256x6xf32>,
    } else {
    }
    return
  }
  func.func @transform_0(%arg0: i32, %arg1: i32, %arg2: i32) -> (i32, i32) {
    %c0_i32 = arith.constant 0 : i32
    return %arg0, %arg2 : i32, i32
  }
  func.func @transform_1(%arg0: i32, %arg1: i32, %arg2: i32) -> (i32, i32) {
    %c0_i32 = arith.constant 0 : i32
    return %arg2, %arg1 : i32, i32
  }
  func.func @transform_2(%arg0: i32, %arg1: i32, %arg2: i32) -> (i32, i32) {
    %c0_i32 = arith.constant 0 : i32
    %c0_i32_0 = arith.constant 0 : i32
    return %c0_i32, %arg2 : i32, i32
  }
  func.func @transform_3(%arg0: i32, %arg1: i32, %arg2: i32) -> (i32, i32) {
    %c0_i32 = arith.constant 0 : i32
    %c0_i32_0 = arith.constant 0 : i32
    return %c0_i32, %arg2 : i32, i32
  }
  func.func @transform_4(%arg0: i32, %arg1: i32, %arg2: i32) -> (i32, i32) {
    %c0_i32 = arith.constant 0 : i32
    %c0_i32_0 = arith.constant 0 : i32
    return %c0_i32, %arg1 : i32, i32
  }
  func.func @transform_5(%arg0: i32, %arg1: i32, %arg2: i32) -> (i32, i32) {
    %c0_i32 = arith.constant 0 : i32
    return %arg0, %arg1 : i32, i32
  }
}

module attributes {stable_mosaic.version = 11 : i64} {
  func.func @_fused_mm_kernel(%arg0: i32, %arg1: i32, %arg2: i32, %arg3: memref<128x144xbf16, #tpu.memory_space<vmem>>, %arg4: memref<144x4xbf16, #tpu.memory_space<vmem>>, %arg5: memref<1x144xf32, #tpu.memory_space<vmem>>, %arg6: memref<1x144xf32, #tpu.memory_space<vmem>>, %arg7: memref<1x4xf32, #tpu.memory_space<vmem>>, %arg8: memref<128x4xf32, #tpu.memory_space<vmem>>, %arg9: memref<128x4xf32, #tpu.memory_space<vmem>>) attributes {dimension_semantics = [#tpu.dimension_semantics<parallel>, #tpu.dimension_semantics<parallel>, #tpu.dimension_semantics<arbitrary>], iteration_bounds = array<i64: 1, 1, 1>, scalar_prefetch = 0 : i64, scratch_operands = 1 : i64, tpu.core_type = #tpu.core_type<tc>, window_params = [{transform_indices = @transform_0, window_bounds = array<i64: 128, 144>}, {transform_indices = @transform_1, window_bounds = array<i64: 144, 4>}, {transform_indices = @transform_2, window_bounds = array<i64: 1, 144>}, {transform_indices = @transform_3, window_bounds = array<i64: 1, 144>}, {transform_indices = @transform_4, window_bounds = array<i64: 1, 4>}, {transform_indices = @transform_5, window_bounds = array<i64: 128, 4>}]} {
    %c0_i32 = arith.constant 0 : i32
    %0 = arith.cmpi eq, %arg2, %c0_i32 : i32
    %1 = arith.extui %0 : i1 to i32
    %c0_i32_0 = arith.constant 0 : i32
    %2 = arith.cmpi ne, %1, %c0_i32_0 : i32
    scf.if %2 {
      %cst_15 = arith.constant 0.000000e+00 : f32
      %22 = vector.broadcast %cst_15 : f32 to vector<128x4xf32>
      %c0_16 = arith.constant 0 : index
      %c0_17 = arith.constant 0 : index
      %23 = vector.load %arg9[%c0_16, %c0_17] : memref<128x4xf32, #tpu.memory_space<vmem>>, vector<128x4xf32>
      tpu.vector_store %arg9[%c0_16, %c0_17], %22 {strides = array<i32>} : memref<128x4xf32, #tpu.memory_space<vmem>>, vector<128x4xf32>,
    } else {
    }
    %c0 = arith.constant 0 : index
    %c0_1 = arith.constant 0 : index
    %3 = vector.load %arg3[%c0, %c0_1] : memref<128x144xbf16, #tpu.memory_space<vmem>>, vector<128x144xbf16>
    %4 = arith.extf %3 : vector<128x144xbf16> to vector<128x144xf32>
    %c0_2 = arith.constant 0 : index
    %c0_3 = arith.constant 0 : index
    %5 = vector.load %arg5[%c0_2, %c0_3] : memref<1x144xf32, #tpu.memory_space<vmem>>, vector<1x144xf32>
    %6 = vector.broadcast %5 : vector<1x144xf32> to vector<128x144xf32>
    %7 = arith.mulf %4, %6 : vector<128x144xf32>
    %c0_4 = arith.constant 0 : index
    %c0_5 = arith.constant 0 : index
    %8 = vector.load %arg6[%c0_4, %c0_5] : memref<1x144xf32, #tpu.memory_space<vmem>>, vector<1x144xf32>
    %9 = vector.broadcast %8 : vector<1x144xf32> to vector<128x144xf32>
    %10 = arith.addf %7, %9 : vector<128x144xf32>
    %cst = arith.constant 0.000000e+00 : f32
    %11 = vector.broadcast %cst : f32 to vector<128x144xf32>
    %12 = arith.maximumf %10, %11 : vector<128x144xf32>
    %13 = arith.truncf %12 : vector<128x144xf32> to vector<128x144xbf16>
    %c0_6 = arith.constant 0 : index
    %c0_7 = arith.constant 0 : index
    %14 = vector.load %arg9[%c0_6, %c0_7] : memref<128x4xf32, #tpu.memory_space<vmem>>, vector<128x4xf32>
    %c0_8 = arith.constant 0 : index
    %c0_9 = arith.constant 0 : index
    %15 = vector.load %arg4[%c0_8, %c0_9] : memref<144x4xbf16, #tpu.memory_space<vmem>>, vector<144x4xbf16>
    %cst_10 = arith.constant dense<0.000000e+00> : vector<128x4xf32>
    %16 = tpu.matmul %13, %15, %cst_10 {dimension_numbers = #tpu.dot_dimension_numbers<[1], [0], [0], [1], [0, 0, 1, 1], [], []>} : vector<128x144xbf16>, vector<144x4xbf16>, vector<128x4xf32> -> vector<128x4xf32>
    %17 = arith.addf %14, %16 : vector<128x4xf32>
    %c0_11 = arith.constant 0 : index
    %c0_12 = arith.constant 0 : index
    %18 = vector.load %arg9[%c0_11, %c0_12] : memref<128x4xf32, #tpu.memory_space<vmem>>, vector<128x4xf32>
    tpu.vector_store %arg9[%c0_11, %c0_12], %17 {strides = array<i32>} : memref<128x4xf32, #tpu.memory_space<vmem>>, vector<128x4xf32>,
    %c0_i32_13 = arith.constant 0 : i32
    %19 = arith.cmpi eq, %arg2, %c0_i32_13 : i32
    %20 = arith.extui %19 : i1 to i32
    %c0_i32_14 = arith.constant 0 : i32
    %21 = arith.cmpi ne, %20, %c0_i32_14 : i32
    scf.if %21 {
      %c0_15 = arith.constant 0 : index
      %c0_16 = arith.constant 0 : index
      %22 = vector.load %arg9[%c0_15, %c0_16] : memref<128x4xf32, #tpu.memory_space<vmem>>, vector<128x4xf32>
      %c0_17 = arith.constant 0 : index
      %c0_18 = arith.constant 0 : index
      %23 = vector.load %arg7[%c0_17, %c0_18] : memref<1x4xf32, #tpu.memory_space<vmem>>, vector<1x4xf32>
      %24 = vector.broadcast %23 : vector<1x4xf32> to vector<128x4xf32>
      %25 = arith.addf %22, %24 : vector<128x4xf32>
      %26 = arith.negf %25 : vector<128x4xf32>
      %27 = math.exp %26 : vector<128x4xf32>
      %cst_19 = arith.constant 1.000000e+00 : f32
      %28 = vector.broadcast %cst_19 : f32 to vector<128x4xf32>
      %29 = arith.addf %28, %27 : vector<128x4xf32>
      %30 = arith.divf %28, %29 : vector<128x4xf32>
      %c0_20 = arith.constant 0 : index
      %c0_21 = arith.constant 0 : index
      %31 = vector.load %arg8[%c0_20, %c0_21] : memref<128x4xf32, #tpu.memory_space<vmem>>, vector<128x4xf32>
      tpu.vector_store %arg8[%c0_20, %c0_21], %30 {strides = array<i32>} : memref<128x4xf32, #tpu.memory_space<vmem>>, vector<128x4xf32>,
    } else {
    }
    return
  }
  func.func @transform_0(%arg0: i32, %arg1: i32, %arg2: i32) -> (i32, i32) {
    %c0_i32 = arith.constant 0 : i32
    return %arg0, %arg2 : i32, i32
  }
  func.func @transform_1(%arg0: i32, %arg1: i32, %arg2: i32) -> (i32, i32) {
    %c0_i32 = arith.constant 0 : i32
    return %arg2, %arg1 : i32, i32
  }
  func.func @transform_2(%arg0: i32, %arg1: i32, %arg2: i32) -> (i32, i32) {
    %c0_i32 = arith.constant 0 : i32
    %c0_i32_0 = arith.constant 0 : i32
    return %c0_i32, %arg2 : i32, i32
  }
  func.func @transform_3(%arg0: i32, %arg1: i32, %arg2: i32) -> (i32, i32) {
    %c0_i32 = arith.constant 0 : i32
    %c0_i32_0 = arith.constant 0 : i32
    return %c0_i32, %arg2 : i32, i32
  }
  func.func @transform_4(%arg0: i32, %arg1: i32, %arg2: i32) -> (i32, i32) {
    %c0_i32 = arith.constant 0 : i32
    %c0_i32_0 = arith.constant 0 : i32
    return %c0_i32, %arg1 : i32, i32
  }
  func.func @transform_5(%arg0: i32, %arg1: i32, %arg2: i32) -> (i32, i32) {
    %c0_i32 = arith.constant 0 : i32
    return %arg0, %arg1 : i32, i32
  }
}

</mosaic_0001>

<llo_original>
// kernel: unet_multihead_rot_forward.15
$region0: #{unet_multihead_rot_forward.15}
  #allocation0 [shape = 'u32[]', space=smem, size = 0x4, offset = 0x4, fixed_abs, tag = 'smem constant byte address 0x4 - core index']
  #allocation1 [shape = 'u32[144,128]{1,0:T(1,128)}', space=vmem, size = 0x12000, scoped, tag = 'internal scratch']
  #allocation2 [shape = 'f32[128,8]{1,0:T(8,128)}', space=vmem, size = 0x10000, scoped, tag = 'scratch operand']
  %s0 = inlined_call_operand.vmem [shape: bf16[128,48], index: 0, kind: input, shape index: {}]
  %s1 = inlined_call_operand.vmem [shape: bf16[48,8], index: 1, kind: input, shape index: {}]
  %s2 = inlined_call_operand.vmem [shape: f32[1,48], index: 2, kind: input, shape index: {}, may-alias: {2,3}]
  %s3 = inlined_call_operand.vmem [shape: f32[1,48], index: 3, kind: input, shape index: {}, may-alias: {2,3}]
  %s4 = inlined_call_operand.vmem [shape: f32[1,8], index: 4, kind: input, shape index: {}]
  %s5 = inlined_call_operand.vmem [shape: f32[128,8], index: 5, kind: output, shape index: {}]
  %s6 = sld [smem:[#allocation0]]
  $region38: #{unet_multihead_rot_forward.15} parent=0
    _
  %s8 = ssub.s32 1, %s6
  %s9 = scalar_select 0, %s8, %s6
  // Predicated region
  $region2: #{unet_multihead_rot_forward.15} parent=0 // pred_check
    _
  $region3: #{unet_multihead_rot_forward.15} parent=0 // pred_check_branch
    %11 = sbr.rel (0) target = $region5
  $region4: #{unet_multihead_rot_forward.15} parent=0 // pred_region
    _
  $region5: #{unet_multihead_rot_forward.15} parent=0 // pred_fallthru
    _
  // Predicated region
  $region6: #{unet_multihead_rot_forward.15} parent=0 // pred_check
    _
  $region7: #{unet_multihead_rot_forward.15} parent=0 // pred_check_branch
    %13 = sbr.rel (0) target = $region9
  $region8: #{unet_multihead_rot_forward.15} parent=0 // pred_region
    _
  $region9: #{unet_multihead_rot_forward.15} parent=0 // pred_fallthru
    _
  // Predicated region
  $region10: #{unet_multihead_rot_forward.15} parent=0 // pred_check
    _
  $region11: #{unet_multihead_rot_forward.15} parent=0 // pred_check_branch
    %15 = sbr.rel (0) target = $region13
  $region12: #{unet_multihead_rot_forward.15} parent=0 // pred_region
    _
  $region13: #{unet_multihead_rot_forward.15} parent=0 // pred_fallthru
    _
  // Predicated region
  $region14: #{unet_multihead_rot_forward.15} parent=0 // pred_check
    _
  $region15: #{unet_multihead_rot_forward.15} parent=0 // pred_check_branch
    %17 = sbr.rel (0) target = $region17
  $region16: #{unet_multihead_rot_forward.15} parent=0 // pred_region
    _
  $region17: #{unet_multihead_rot_forward.15} parent=0 // pred_fallthru
    _
  // Predicated region
  $region18: #{unet_multihead_rot_forward.15} parent=0 // pred_check
    _
  $region19: #{unet_multihead_rot_forward.15} parent=0 // pred_check_branch
    %19 = sbr.rel (0) target = $region21
  $region20: #{unet_multihead_rot_forward.15} parent=0 // pred_region
    _
  $region21: #{unet_multihead_rot_forward.15} parent=0 // pred_fallthru
    _
  %p21 = scmp.eq.s32.totalorder 0, 0
  // Predicated region
  $region22: #{unet_multihead_rot_forward.15} parent=0 // pred_check
    %p22 = pneg %p21
  $region23: #{unet_multihead_rot_forward.15} parent=0 // pred_check_branch
    %24 = sbr.rel (%p22) target = $region25
  $region24: #{unet_multihead_rot_forward.15} parent=0 // pred_region
    %vm25 = vcmask 64512
    %26 = vst.msk [vmem:[#allocation2] sm:$0xff] %vm25, 0.0
    %27 = vst.msk [vmem:[#allocation2 + $0x8] sm:$0xff] %vm25, 0.0
    %28 = vst.msk [vmem:[#allocation2 + $0x10] sm:$0xff] %vm25, 0.0
    %29 = vst.msk [vmem:[#allocation2 + $0x18] sm:$0xff] %vm25, 0.0
    %30 = vst.msk [vmem:[#allocation2 + $0x20] sm:$0xff] %vm25, 0.0
    %31 = vst.msk [vmem:[#allocation2 + $0x28] sm:$0xff] %vm25, 0.0
    %32 = vst.msk [vmem:[#allocation2 + $0x30] sm:$0xff] %vm25, 0.0
    %33 = vst.msk [vmem:[#allocation2 + $0x38] sm:$0xff] %vm25, 0.0
    %34 = vst.msk [vmem:[#allocation2 + $0x40] sm:$0xff] %vm25, 0.0
    %35 = vst.msk [vmem:[#allocation2 + $0x48] sm:$0xff] %vm25, 0.0
    %36 = vst.msk [vmem:[#allocation2 + $0x50] sm:$0xff] %vm25, 0.0
    %37 = vst.msk [vmem:[#allocation2 + $0x58] sm:$0xff] %vm25, 0.0
    %38 = vst.msk [vmem:[#allocation2 + $0x60] sm:$0xff] %vm25, 0.0
    %39 = vst.msk [vmem:[#allocation2 + $0x68] sm:$0xff] %vm25, 0.0
    %40 = vst.msk [vmem:[#allocation2 + $0x70] sm:$0xff] %vm25, 0.0
    %41 = vst.msk [vmem:[#allocation2 + $0x78] sm:$0xff] %vm25, 0.0
  $region25: #{unet_multihead_rot_forward.15} parent=0 // pred_fallthru
    _
  %v42 = vld [vmem:[%s0] sm:$0xf]
  %v43 = vld [vmem:[%s0 + $0x4] sm:$0xf]
  %v44 = vld [vmem:[%s0 + $0x8] sm:$0xf]
  %v45 = vld [vmem:[%s0 + $0xc] sm:$0xf]
  %v46 = vld [vmem:[%s0 + $0x10] sm:$0xf]
  %v47 = vld [vmem:[%s0 + $0x14] sm:$0xf]
  %v48 = vld [vmem:[%s0 + $0x18] sm:$0xf]
  %v49 = vld [vmem:[%s0 + $0x1c] sm:$0xf]
  %v50 = vld [vmem:[%s0 + $0x20] sm:$0xf]
  %v51 = vld [vmem:[%s0 + $0x24] sm:$0xf]
  %v52 = vld [vmem:[%s0 + $0x28] sm:$0xf]
  %v53 = vld [vmem:[%s0 + $0x2c] sm:$0xf]
  %v54 = vld [vmem:[%s0 + $0x30] sm:$0xf]
  %v55 = vld [vmem:[%s0 + $0x34] sm:$0xf]
  %v56 = vld [vmem:[%s0 + $0x38] sm:$0xf]
  %v57 = vld [vmem:[%s0 + $0x3c] sm:$0xf]
  %v58 = vld [vmem:[#allocation2] sm:$0xff]
  %v59 = vld [vmem:[#allocation2 + $0x8] sm:$0xff]
  %v60 = vld [vmem:[#allocation2 + $0x10] sm:$0xff]
  %v61 = vld [vmem:[#allocation2 + $0x18] sm:$0xff]
  %v62 = vld [vmem:[#allocation2 + $0x20] sm:$0xff]
  %v63 = vld [vmem:[#allocation2 + $0x28] sm:$0xff]
  %v64 = vld [vmem:[#allocation2 + $0x30] sm:$0xff]
  %v65 = vld [vmem:[#allocation2 + $0x38] sm:$0xff]
  %v66 = vld [vmem:[#allocation2 + $0x40] sm:$0xff]
  %v67 = vld [vmem:[#allocation2 + $0x48] sm:$0xff]
  %v68 = vld [vmem:[#allocation2 + $0x50] sm:$0xff]
  %v69 = vld [vmem:[#allocation2 + $0x58] sm:$0xff]
  %v70 = vld [vmem:[#allocation2 + $0x60] sm:$0xff]
  %v71 = vld [vmem:[#allocation2 + $0x68] sm:$0xff]
  %v72 = vld [vmem:[#allocation2 + $0x70] sm:$0xff]
  %v73 = vld [vmem:[#allocation2 + $0x78] sm:$0xff]
  %v74 = vld [vmem:[%s1] sm:$0xf]
  %v75 = vld [vmem:[%s1 + $0x4] sm:$0xf]
  %v76 = vld [vmem:[%s1 + $0x8] sm:$0xf]
  %v77 = vld [vmem:[%s1 + $0xc] sm:$0xf]
  %v78 = vld [vmem:[%s1 + $0x10] sm:$0xf]
  %v79 = vld [vmem:[%s1 + $0x14] sm:$0xf]
  %v96 = vunpack.c.l.b16 %v42
  %v97 = vunpack.c.l.b16 %v43
  %v98 = vunpack.c.l.b16 %v44
  %v99 = vunpack.c.l.b16 %v45
  %v100 = vunpack.c.l.b16 %v46
  %v101 = vunpack.c.l.b16 %v47
  %v102 = vunpack.c.l.b16 %v48
  %v103 = vunpack.c.l.b16 %v49
  %v104 = vunpack.c.l.b16 %v50
  %v105 = vunpack.c.l.b16 %v51
  %v106 = vunpack.c.l.b16 %v52
  %v107 = vunpack.c.l.b16 %v53
  %v108 = vunpack.c.l.b16 %v54
  %v109 = vunpack.c.l.b16 %v55
  %v110 = vunpack.c.l.b16 %v56
  %v111 = vunpack.c.l.b16 %v57
  %v112 = vpack.c.b16 %v97, %v96
  %v113 = vpack.c.b16 %v99, %v98
  %v114 = vpack.c.b16 %v101, %v100
  %v115 = vpack.c.b16 %v103, %v102
  %v116 = vpack.c.b16 %v105, %v104
  %v117 = vpack.c.b16 %v107, %v106
  %v118 = vpack.c.b16 %v109, %v108
  %v119 = vpack.c.b16 %v111, %v110
  %v126 = vunpack.c.l.b16 %v74
  %v127 = vunpack.c.l.b16 %v75
  %v128 = vunpack.c.l.b16 %v76
  %v129 = vunpack.c.l.b16 %v77
  %v130 = vunpack.c.l.b16 %v78
  %v131 = vunpack.c.l.b16 %v79
  %v132 = vpack.c.b16 %v127, %v126
  %v133 = vpack.c.b16 %v129, %v128
  %v134 = vpack.c.b16 %v131, %v130
  %vm138 = vcmask 392192
  %v140 = vsel %vm138, %v112, 0
  %v143 = vsel %vm138, %v113, 0
  %v146 = vsel %vm138, %v114, 0
  %v149 = vsel %vm138, %v115, 0
  %v152 = vsel %vm138, %v116, 0
  %v155 = vsel %vm138, %v117, 0
  %v158 = vsel %vm138, %v118, 0
  %v161 = vsel %vm138, %v119, 0
  %163 = vmatprep.subr.bf16.mxu0 0
  %164 = vmatpush1.bf16.msra.mxu0 %v132
  %165 = vmatprep.subr.bf16.mxu0 0
  %166 = vmatpush1.bf16.msra.mxu0 %v133
  %167 = vmatprep.subr.bf16.mxu0 0
  %168 = vmatpush1.bf16.msra.mxu0 %v134
  %169 = vmatprep.subr.bf16.mxu0 0
  %170 = vmatpush1.bf16.msra.mxu0 0
  %171 = vmatprep.subr.bf16.mxu0 0
  %172 = vmatpush1.bf16.msra.mxu0 0
  %173 = vmatprep.subr.bf16.mxu0 0
  %174 = vmatpush1.bf16.msra.mxu0 0
  %175 = vmatprep.subr.bf16.mxu0 0
  %176 = vmatpush1.bf16.msra.mxu0 0
  %177 = vmatprep.subr.bf16.mxu0 0
  %178 = vmatpush1.bf16.msra.mxu0 0
  %179 = vmatprep.subr.bf16.mxu0 0
  %180 = vmatpush1.bf16.msra.mxu0 0
  %181 = vmatprep.subr.bf16.mxu0 0
  %182 = vmatpush1.bf16.msra.mxu0 0
  %183 = vmatprep.subr.bf16.mxu0 0
  %184 = vmatpush1.bf16.msra.mxu0 0
  %185 = vmatprep.subr.bf16.mxu0 0
  %186 = vmatpush1.bf16.msra.mxu0 0
  %187 = vmatprep.subr.bf16.mxu0 0
  %188 = vmatpush1.bf16.msra.mxu0 0
  %189 = vmatprep.subr.bf16.mxu0 0
  %190 = vmatpush1.bf16.msra.mxu0 0
  %191 = vmatprep.subr.bf16.mxu0 0
  %192 = vmatpush1.bf16.msra.mxu0 0
  %193 = vmatprep.subr.bf16.mxu0 0
  %194 = vmatpush1.bf16.msra.mxu0 0
  %195 = vmatprep.mubr.bf16.mxu0 0
  %196 = vmatmul.mubr.bf16.gmra.mrb[0].mxu0 %v140
  %v197 = vpop.f32.mrb[0].mxu0
  %v198 = vadd.f32 0.0, %v197
  %v199 = vpop.f32.mrb[0].mxu0
  %v200 = vpop.f32.mrb[0].mxu0
  %v201 = vadd.f32 0.0, %v200
  %v202 = vpop.f32.mrb[0].mxu0
  %203 = vmatprep.mubr.bf16.mxu0 0
  %204 = vmatmul.mubr.bf16.gmra.mrb[0].mxu0 %v143
  %v205 = vpop.f32.mrb[0].mxu0
  %v206 = vadd.f32 0.0, %v205
  %v207 = vpop.f32.mrb[0].mxu0
  %v208 = vpop.f32.mrb[0].mxu0
  %v209 = vadd.f32 0.0, %v208
  %v210 = vpop.f32.mrb[0].mxu0
  %211 = vmatprep.mubr.bf16.mxu0 0
  %212 = vmatmul.mubr.bf16.gmra.mrb[0].mxu0 %v146
  %v213 = vpop.f32.mrb[0].mxu0
  %v214 = vadd.f32 0.0, %v213
  %v215 = vpop.f32.mrb[0].mxu0
  %v216 = vpop.f32.mrb[0].mxu0
  %v217 = vadd.f32 0.0, %v216
  %v218 = vpop.f32.mrb[0].mxu0
  %219 = vmatprep.mubr.bf16.mxu0 0
  %220 = vmatmul.mubr.bf16.gmra.mrb[0].mxu0 %v149
  %v221 = vpop.f32.mrb[0].mxu0
  %v222 = vadd.f32 0.0, %v221
  %v223 = vpop.f32.mrb[0].mxu0
  %v224 = vpop.f32.mrb[0].mxu0
  %v225 = vadd.f32 0.0, %v224
  %v226 = vpop.f32.mrb[0].mxu0
  %227 = vmatprep.mubr.bf16.mxu0 0
  %228 = vmatmul.mubr.bf16.gmra.mrb[0].mxu0 %v152
  %v229 = vpop.f32.mrb[0].mxu0
  %v230 = vadd.f32 0.0, %v229
  %v231 = vpop.f32.mrb[0].mxu0
  %v232 = vpop.f32.mrb[0].mxu0
  %v233 = vadd.f32 0.0, %v232
  %v234 = vpop.f32.mrb[0].mxu0
  %235 = vmatprep.mubr.bf16.mxu0 0
  %236 = vmatmul.mubr.bf16.gmra.mrb[0].mxu0 %v155
  %v237 = vpop.f32.mrb[0].mxu0
  %v238 = vadd.f32 0.0, %v237
  %v239 = vpop.f32.mrb[0].mxu0
  %v240 = vpop.f32.mrb[0].mxu0
  %v241 = vadd.f32 0.0, %v240
  %v242 = vpop.f32.mrb[0].mxu0
  %243 = vmatprep.mubr.bf16.mxu0 0
  %244 = vmatmul.mubr.bf16.gmra.mrb[0].mxu0 %v158
  %v245 = vpop.f32.mrb[0].mxu0
  %v246 = vadd.f32 0.0, %v245
  %v247 = vpop.f32.mrb[0].mxu0
  %v248 = vpop.f32.mrb[0].mxu0
  %v249 = vadd.f32 0.0, %v248
  %v250 = vpop.f32.mrb[0].mxu0
  %251 = vmatprep.mubr.bf16.mxu0 0
  %252 = vmatmul.mubr.bf16.gmra.mrb[0].mxu0 %v161
  %v253 = vpop.f32.mrb[0].mxu0
  %v254 = vadd.f32 0.0, %v253
  %v255 = vpop.f32.mrb[0].mxu0
  %v256 = vpop.f32.mrb[0].mxu0
  %v257 = vadd.f32 0.0, %v256
  %v258 = vpop.f32.mrb[0].mxu0
  %259 = vdwg.mxu0
  %v260 = vadd.f32 %v58, %v198
  %v261 = vadd.f32 %v59, %v201
  %v262 = vadd.f32 %v60, %v206
  %v263 = vadd.f32 %v61, %v209
  %v264 = vadd.f32 %v62, %v214
  %v265 = vadd.f32 %v63, %v217
  %v266 = vadd.f32 %v64, %v222
  %v267 = vadd.f32 %v65, %v225
  %v268 = vadd.f32 %v66, %v230
  %v269 = vadd.f32 %v67, %v233
  %v270 = vadd.f32 %v68, %v238
  %v271 = vadd.f32 %v69, %v241
  %v272 = vadd.f32 %v70, %v246
  %v273 = vadd.f32 %v71, %v249
  %v274 = vadd.f32 %v72, %v254
  %v275 = vadd.f32 %v73, %v257
  %vm276 = vcmask 64512
  %277 = vst.msk [vmem:[#allocation2] sm:$0xff] %vm276, %v260
  %278 = vst.msk [vmem:[#allocation2 + $0x8] sm:$0xff] %vm276, %v261
  %279 = vst.msk [vmem:[#allocation2 + $0x10] sm:$0xff] %vm276, %v262
  %280 = vst.msk [vmem:[#allocation2 + $0x18] sm:$0xff] %vm276, %v263
  %281 = vst.msk [vmem:[#allocation2 + $0x20] sm:$0xff] %vm276, %v264
  %282 = vst.msk [vmem:[#allocation2 + $0x28] sm:$0xff] %vm276, %v265
  %283 = vst.msk [vmem:[#allocation2 + $0x30] sm:$0xff] %vm276, %v266
  %284 = vst.msk [vmem:[#allocation2 + $0x38] sm:$0xff] %vm276, %v267
  %285 = vst.msk [vmem:[#allocation2 + $0x40] sm:$0xff] %vm276, %v268
  %286 = vst.msk [vmem:[#allocation2 + $0x48] sm:$0xff] %vm276, %v269
  %287 = vst.msk [vmem:[#allocation2 + $0x50] sm:$0xff] %vm276, %v270
  %288 = vst.msk [vmem:[#allocation2 + $0x58] sm:$0xff] %vm276, %v271
  %289 = vst.msk [vmem:[#allocation2 + $0x60] sm:$0xff] %vm276, %v272
  %290 = vst.msk [vmem:[#allocation2 + $0x68] sm:$0xff] %vm276, %v273
  %291 = vst.msk [vmem:[#allocation2 + $0x70] sm:$0xff] %vm276, %v274
  %292 = vst.msk [vmem:[#allocation2 + $0x78] sm:$0xff] %vm276, %v275
  // Predicated region
  $region26: #{unet_multihead_rot_forward.15} parent=0 // pred_check
    %p293 = pneg %p21
  $region27: #{unet_multihead_rot_forward.15} parent=0 // pred_check_branch
    %295 = sbr.rel (%p293) target = $region29
  $region28: #{unet_multihead_rot_forward.15} parent=0 // pred_region
    %v296 = vld [vmem:[#allocation2] sm:$0xff]
    %v297 = vld [vmem:[#allocation2 + $0x8] sm:$0xff]
    %v298 = vld [vmem:[#allocation2 + $0x10] sm:$0xff]
    %v299 = vld [vmem:[#allocation2 + $0x18] sm:$0xff]
    %v300 = vld [vmem:[#allocation2 + $0x20] sm:$0xff]
    %v301 = vld [vmem:[#allocation2 + $0x28] sm:$0xff]
    %v302 = vld [vmem:[#allocation2 + $0x30] sm:$0xff]
    %v303 = vld [vmem:[#allocation2 + $0x38] sm:$0xff]
    %v304 = vld [vmem:[#allocation2 + $0x40] sm:$0xff]
    %v305 = vld [vmem:[#allocation2 + $0x48] sm:$0xff]
    %v306 = vld [vmem:[#allocation2 + $0x50] sm:$0xff]
    %v307 = vld [vmem:[#allocation2 + $0x58] sm:$0xff]
    %v308 = vld [vmem:[#allocation2 + $0x60] sm:$0xff]
    %v309 = vld [vmem:[#allocation2 + $0x68] sm:$0xff]
    %v310 = vld [vmem:[#allocation2 + $0x70] sm:$0xff]
    %v311 = vld [vmem:[#allocation2 + $0x78] sm:$0xff]
    %v312 = vld [vmem:[%s4] sm:$0x1]
    %v314 = vlaneseq
    %v315 = vshrl.u32 %v314, 7
    %v316 = vsub.s32 0, %v315
    %v317 = vrot.slane %v312, %v316
    %v319 = vadd.f32 %v296, %v317
    %v320 = vadd.f32 %v297, %v317
    %v321 = vadd.f32 %v298, %v317
    %v322 = vadd.f32 %v299, %v317
    %v323 = vadd.f32 %v300, %v317
    %v324 = vadd.f32 %v301, %v317
    %v325 = vadd.f32 %v302, %v317
    %v326 = vadd.f32 %v303, %v317
    %v327 = vadd.f32 %v304, %v317
    %v328 = vadd.f32 %v305, %v317
    %v329 = vadd.f32 %v306, %v317
    %v330 = vadd.f32 %v307, %v317
    %v331 = vadd.f32 %v308, %v317
    %v332 = vadd.f32 %v309, %v317
    %v333 = vadd.f32 %v310, %v317
    %v334 = vadd.f32 %v311, %v317
    %335 = vst.msk [vmem:[%s5] sm:$0xff] %vm276, %v319
    %336 = vst.msk [vmem:[%s5 + $0x8] sm:$0xff] %vm276, %v320
    %337 = vst.msk [vmem:[%s5 + $0x10] sm:$0xff] %vm276, %v321
    %338 = vst.msk [vmem:[%s5 + $0x18] sm:$0xff] %vm276, %v322
    %339 = vst.msk [vmem:[%s5 + $0x20] sm:$0xff] %vm276, %v323
    %340 = vst.msk [vmem:[%s5 + $0x28] sm:$0xff] %vm276, %v324
    %341 = vst.msk [vmem:[%s5 + $0x30] sm:$0xff] %vm276, %v325
    %342 = vst.msk [vmem:[%s5 + $0x38] sm:$0xff] %vm276, %v326
    %343 = vst.msk [vmem:[%s5 + $0x40] sm:$0xff] %vm276, %v327
    %344 = vst.msk [vmem:[%s5 + $0x48] sm:$0xff] %vm276, %v328
    %345 = vst.msk [vmem:[%s5 + $0x50] sm:$0xff] %vm276, %v329
    %346 = vst.msk [vmem:[%s5 + $0x58] sm:$0xff] %vm276, %v330
    %347 = vst.msk [vmem:[%s5 + $0x60] sm:$0xff] %vm276, %v331
    %348 = vst.msk [vmem:[%s5 + $0x68] sm:$0xff] %vm276, %v332
    %349 = vst.msk [vmem:[%s5 + $0x70] sm:$0xff] %vm276, %v333
    %350 = vst.msk [vmem:[%s5 + $0x78] sm:$0xff] %vm276, %v334
  $region29: #{unet_multihead_rot_forward.15} parent=0 // pred_fallthru
    _
  // Predicated region
  $region30: #{unet_multihead_rot_forward.15} parent=0 // pred_check
    _
  $region31: #{unet_multihead_rot_forward.15} parent=0 // pred_check_branch
    %352 = sbr.rel (0) target = $region33
  $region32: #{unet_multihead_rot_forward.15} parent=0 // pred_region
    _
  $region33: #{unet_multihead_rot_forward.15} parent=0 // pred_fallthru
    _
  // Predicated region
  $region34: #{unet_multihead_rot_forward.15} parent=0 // pred_check
    _
  $region35: #{unet_multihead_rot_forward.15} parent=0 // pred_check_branch
    %354 = sbr.rel (0) target = $region37
  $region36: #{unet_multihead_rot_forward.15} parent=0 // pred_region
    _
  $region37: #{unet_multihead_rot_forward.15} parent=0 // pred_fallthru
    _

// kernel: tile.133
$region0: #{tile.133}
  #allocation0 [shape = 's32[1]{0}', space=sflag, size = 0x4, scoped, tag = 'scoped memory for tile.133']
  %s0 = inlined_call_operand.vmem [shape: f32[8], index: 0, kind: input, shape index: {}]
  %s1 = inlined_call_operand.vmem [shape: f32[16,8], index: 1, kind: output, shape index: {}]
  // Predicated region
  $region2: #{tile.133} parent=0 // pred_check
    _
  $region3: #{tile.133} parent=0 // pred_check_branch
    %3 = sbr.rel (0) target = $region5
  $region4: #{tile.133} parent=0 // pred_region
    _
  $region5: #{tile.133} parent=0 // pred_fallthru
    _
  %v4 = vld [vmem:[%s0] ss:$0 sm:$0xff]
  %5 = vst [vmem:[%s1] sm:$0xff] %v4
  %s6 = scalar_lea.vmem %s1, 8
  %7 = vst [vmem:[%s6] sm:$0xff] %v4

// kernel: tile.143
$region0: #{tile.143}
  #allocation0 [shape = 's32[1]{0}', space=sflag, size = 0x4, scoped, tag = 'scoped memory for tile.143']
  %s0 = inlined_call_operand.vmem [shape: f32[16], index: 0, kind: input, shape index: {}]
  %s1 = inlined_call_operand.vmem [shape: f32[16,16], index: 1, kind: output, shape index: {}]
  // Predicated region
  $region2: #{tile.143} parent=0 // pred_check
    _
  $region3: #{tile.143} parent=0 // pred_check_branch
    %3 = sbr.rel (0) target = $region5
  $region4: #{tile.143} parent=0 // pred_region
    _
  $region5: #{tile.143} parent=0 // pred_fallthru
    _
  %v4 = vld [vmem:[%s0] ss:$0 sm:$0xff]
  %5 = vst [vmem:[%s1] sm:$0xff] %v4
  %s6 = scalar_lea.vmem %s1, 8
  %7 = vst [vmem:[%s6] sm:$0xff] %v4

// kernel: unet_multihead_rot_forward.16
$region0: #{unet_multihead_rot_forward.16}
  #allocation0 [shape = 'u32[]', space=smem, size = 0x4, offset = 0x4, fixed_abs, tag = 'smem constant byte address 0x4 - core index']
  #allocation1 [shape = 'u32[144,128]{1,0:T(1,128)}', space=vmem, size = 0x12000, scoped, tag = 'internal scratch']
  #allocation2 [shape = 'f32[32,16]{1,0:T(8,128)}', space=vmem, size = 0x4000, scoped, tag = 'scratch operand']
  %s0 = inlined_call_operand.vmem [shape: bf16[32,128], index: 0, kind: input, shape index: {}]
  %s1 = inlined_call_operand.vmem [shape: bf16[128,16], index: 1, kind: input, shape index: {}]
  %s2 = inlined_call_operand.vmem [shape: f32[1,128], index: 2, kind: input, shape index: {}]
  %s3 = inlined_call_operand.vmem [shape: f32[1,128], index: 3, kind: input, shape index: {}]
  %s4 = inlined_call_operand.vmem [shape: f32[1,16], index: 4, kind: input, shape index: {}]
  %s5 = inlined_call_operand.vmem [shape: f32[32,16], index: 5, kind: output, shape index: {}]
  %s6 = sld [smem:[#allocation0]]
  $region38: #{unet_multihead_rot_forward.16} parent=0
    _
  %s8 = ssub.s32 1, %s6
  %s9 = scalar_select 0, %s8, %s6
  // Predicated region
  $region2: #{unet_multihead_rot_forward.16} parent=0 // pred_check
    _
  $region3: #{unet_multihead_rot_forward.16} parent=0 // pred_check_branch
    %11 = sbr.rel (0) target = $region5
  $region4: #{unet_multihead_rot_forward.16} parent=0 // pred_region
    _
  $region5: #{unet_multihead_rot_forward.16} parent=0 // pred_fallthru
    _
  // Predicated region
  $region6: #{unet_multihead_rot_forward.16} parent=0 // pred_check
    _
  $region7: #{unet_multihead_rot_forward.16} parent=0 // pred_check_branch
    %13 = sbr.rel (0) target = $region9
  $region8: #{unet_multihead_rot_forward.16} parent=0 // pred_region
    _
  $region9: #{unet_multihead_rot_forward.16} parent=0 // pred_fallthru
    _
  // Predicated region
  $region10: #{unet_multihead_rot_forward.16} parent=0 // pred_check
    _
  $region11: #{unet_multihead_rot_forward.16} parent=0 // pred_check_branch
    %15 = sbr.rel (0) target = $region13
  $region12: #{unet_multihead_rot_forward.16} parent=0 // pred_region
    _
  $region13: #{unet_multihead_rot_forward.16} parent=0 // pred_fallthru
    _
  // Predicated region
  $region14: #{unet_multihead_rot_forward.16} parent=0 // pred_check
    _
  $region15: #{unet_multihead_rot_forward.16} parent=0 // pred_check_branch
    %17 = sbr.rel (0) target = $region17
  $region16: #{unet_multihead_rot_forward.16} parent=0 // pred_region
    _
  $region17: #{unet_multihead_rot_forward.16} parent=0 // pred_fallthru
    _
  // Predicated region
  $region18: #{unet_multihead_rot_forward.16} parent=0 // pred_check
    _
  $region19: #{unet_multihead_rot_forward.16} parent=0 // pred_check_branch
    %19 = sbr.rel (0) target = $region21
  $region20: #{unet_multihead_rot_forward.16} parent=0 // pred_region
    _
  $region21: #{unet_multihead_rot_forward.16} parent=0 // pred_fallthru
    _
  %p21 = scmp.eq.s32.totalorder 0, 0
  // Predicated region
  $region22: #{unet_multihead_rot_forward.16} parent=0 // pred_check
    %p22 = pneg %p21
  $region23: #{unet_multihead_rot_forward.16} parent=0 // pred_check_branch
    %24 = sbr.rel (%p22) target = $region25
  $region24: #{unet_multihead_rot_forward.16} parent=0 // pred_region
    %vm25 = vcmask 130048
    %26 = vst.msk [vmem:[#allocation2] sm:$0xff] %vm25, 0.0
    %27 = vst.msk [vmem:[#allocation2 + $0x8] sm:$0xff] %vm25, 0.0
    %28 = vst.msk [vmem:[#allocation2 + $0x10] sm:$0xff] %vm25, 0.0
    %29 = vst.msk [vmem:[#allocation2 + $0x18] sm:$0xff] %vm25, 0.0
  $region25: #{unet_multihead_rot_forward.16} parent=0 // pred_fallthru
    _
  %v30 = vld [vmem:[%s0] sm:$0xf]
  %v31 = vld [vmem:[%s0 + $0x4] sm:$0xf]
  %v32 = vld [vmem:[%s0 + $0x8] sm:$0xf]
  %v33 = vld [vmem:[%s0 + $0xc] sm:$0xf]
  %v34 = vunpack.c.l.bf16 %v30
  %v35 = vunpack.c.l.bf16 %v31
  %v36 = vunpack.c.l.bf16 %v32
  %v37 = vunpack.c.l.bf16 %v33
  %v38 = vld [vmem:[%s2] sm:$0x1]
  %v40 = vlaneseq
  %v41 = vshrl.u32 %v40, 7
  %v42 = vsub.s32 0, %v41
  %v43 = vrot.slane %v38, %v42
  %v45 = vmul.f32 %v34, %v43
  %v46 = vmul.f32 %v35, %v43
  %v47 = vmul.f32 %v36, %v43
  %v48 = vmul.f32 %v37, %v43
  %v49 = vld [vmem:[%s3] sm:$0x1]
  %v51 = vlaneseq
  %v52 = vshrl.u32 %v51, 7
  %v53 = vsub.s32 0, %v52
  %v54 = vrot.slane %v49, %v53
  %v56 = vadd.f32 %v45, %v54
  %v57 = vadd.f32 %v46, %v54
  %v58 = vadd.f32 %v47, %v54
  %v59 = vadd.f32 %v48, %v54
  %vm60 = vcmp.ge.f32.partialorder %v56, 0.0
  %vm61 = vcmp.ge.f32.partialorder %v57, 0.0
  %vm62 = vcmp.ge.f32.partialorder %v58, 0.0
  %vm63 = vcmp.ge.f32.partialorder %v59, 0.0
  %v64 = vmul.f32 %v56, 0.2
  %v65 = vmul.f32 %v57, 0.2
  %v66 = vmul.f32 %v58, 0.2
  %v67 = vmul.f32 %v59, 0.2
  %v68 = vsel %vm60, %v56, %v64
  %v69 = vsel %vm61, %v57, %v65
  %v70 = vsel %vm62, %v58, %v66
  %v71 = vsel %vm63, %v59, %v67
  %v72 = vpack.c.bf16 %v69, %v68
  %v73 = vpack.c.bf16 %v71, %v70
  %v74 = vld [vmem:[#allocation2] sm:$0xff]
  %v75 = vld [vmem:[#allocation2 + $0x8] sm:$0xff]
  %v76 = vld [vmem:[#allocation2 + $0x10] sm:$0xff]
  %v77 = vld [vmem:[#allocation2 + $0x18] sm:$0xff]
  %v78 = vld [vmem:[%s1] sm:$0xf]
  %v79 = vld [vmem:[%s1 + $0x4] sm:$0xf]
  %v80 = vld [vmem:[%s1 + $0x8] sm:$0xf]
  %v81 = vld [vmem:[%s1 + $0xc] sm:$0xf]
  %v82 = vld [vmem:[%s1 + $0x10] sm:$0xf]
  %v83 = vld [vmem:[%s1 + $0x14] sm:$0xf]
  %v84 = vld [vmem:[%s1 + $0x18] sm:$0xf]
  %v85 = vld [vmem:[%s1 + $0x1c] sm:$0xf]
  %v86 = vld [vmem:[%s1 + $0x20] sm:$0xf]
  %v87 = vld [vmem:[%s1 + $0x24] sm:$0xf]
  %v88 = vld [vmem:[%s1 + $0x28] sm:$0xf]
  %v89 = vld [vmem:[%s1 + $0x2c] sm:$0xf]
  %v90 = vld [vmem:[%s1 + $0x30] sm:$0xf]
  %v91 = vld [vmem:[%s1 + $0x34] sm:$0xf]
  %v92 = vld [vmem:[%s1 + $0x38] sm:$0xf]
  %v93 = vld [vmem:[%s1 + $0x3c] sm:$0xf]
  %v110 = vunpack.c.l.b16 %v78
  %v111 = vunpack.c.l.b16 %v79
  %v112 = vunpack.c.l.b16 %v80
  %v113 = vunpack.c.l.b16 %v81
  %v114 = vunpack.c.l.b16 %v82
  %v115 = vunpack.c.l.b16 %v83
  %v116 = vunpack.c.l.b16 %v84
  %v117 = vunpack.c.l.b16 %v85
  %v118 = vunpack.c.l.b16 %v86
  %v119 = vunpack.c.l.b16 %v87
  %v120 = vunpack.c.l.b16 %v88
  %v121 = vunpack.c.l.b16 %v89
  %v122 = vunpack.c.l.b16 %v90
  %v123 = vunpack.c.l.b16 %v91
  %v124 = vunpack.c.l.b16 %v92
  %v125 = vunpack.c.l.b16 %v93
  %v126 = vpack.c.b16 %v111, %v110
  %v127 = vpack.c.b16 %v113, %v112
  %v128 = vpack.c.b16 %v115, %v114
  %v129 = vpack.c.b16 %v117, %v116
  %v130 = vpack.c.b16 %v119, %v118
  %v131 = vpack.c.b16 %v121, %v120
  %v132 = vpack.c.b16 %v123, %v122
  %v133 = vpack.c.b16 %v125, %v124
  %142 = vmatprep.subr.bf16.mxu0 0
  %143 = vmatpush1.bf16.msra.mxu0 %v126
  %144 = vmatprep.subr.bf16.mxu0 0
  %145 = vmatpush1.bf16.msra.mxu0 %v127
  %146 = vmatprep.subr.bf16.mxu0 0
  %147 = vmatpush1.bf16.msra.mxu0 %v128
  %148 = vmatprep.subr.bf16.mxu0 0
  %149 = vmatpush1.bf16.msra.mxu0 %v129
  %150 = vmatprep.subr.bf16.mxu0 0
  %151 = vmatpush1.bf16.msra.mxu0 %v130
  %152 = vmatprep.subr.bf16.mxu0 0
  %153 = vmatpush1.bf16.msra.mxu0 %v131
  %154 = vmatprep.subr.bf16.mxu0 0
  %155 = vmatpush1.bf16.msra.mxu0 %v132
  %156 = vmatprep.subr.bf16.mxu0 0
  %157 = vmatpush1.bf16.msra.mxu0 %v133
  %158 = vmatprep.subr.bf16.mxu0 0
  %159 = vmatpush1.bf16.msra.mxu0 0
  %160 = vmatprep.subr.bf16.mxu0 0
  %161 = vmatpush1.bf16.msra.mxu0 0
  %162 = vmatprep.subr.bf16.mxu0 0
  %163 = vmatpush1.bf16.msra.mxu0 0
  %164 = vmatprep.subr.bf16.mxu0 0
  %165 = vmatpush1.bf16.msra.mxu0 0
  %166 = vmatprep.subr.bf16.mxu0 0
  %167 = vmatpush1.bf16.msra.mxu0 0
  %168 = vmatprep.subr.bf16.mxu0 0
  %169 = vmatpush1.bf16.msra.mxu0 0
  %170 = vmatprep.subr.bf16.mxu0 0
  %171 = vmatpush1.bf16.msra.mxu0 0
  %172 = vmatprep.subr.bf16.mxu0 0
  %173 = vmatpush1.bf16.msra.mxu0 0
  %174 = vmatprep.mubr.bf16.mxu0 0
  %175 = vmatmul.mubr.bf16.gmra.mrb[0].mxu0 %v72
  %v176 = vpop.f32.mrb[0].mxu0
  %v177 = vadd.f32 0.0, %v176
  %v178 = vpop.f32.mrb[0].mxu0
  %v179 = vpop.f32.mrb[0].mxu0
  %v180 = vadd.f32 0.0, %v179
  %v181 = vpop.f32.mrb[0].mxu0
  %182 = vmatprep.mubr.bf16.mxu0 0
  %183 = vmatmul.mubr.bf16.gmra.mrb[0].mxu0 %v73
  %v184 = vpop.f32.mrb[0].mxu0
  %v185 = vadd.f32 0.0, %v184
  %v186 = vpop.f32.mrb[0].mxu0
  %v187 = vpop.f32.mrb[0].mxu0
  %v188 = vadd.f32 0.0, %v187
  %v189 = vpop.f32.mrb[0].mxu0
  %190 = vdwg.mxu0
  %v191 = vadd.f32 %v74, %v177
  %v192 = vadd.f32 %v75, %v180
  %v193 = vadd.f32 %v76, %v185
  %v194 = vadd.f32 %v77, %v188
  %vm195 = vcmask 130048
  %196 = vst.msk [vmem:[#allocation2] sm:$0xff] %vm195, %v191
  %197 = vst.msk [vmem:[#allocation2 + $0x8] sm:$0xff] %vm195, %v192
  %198 = vst.msk [vmem:[#allocation2 + $0x10] sm:$0xff] %vm195, %v193
  %199 = vst.msk [vmem:[#allocation2 + $0x18] sm:$0xff] %vm195, %v194
  // Predicated region
  $region26: #{unet_multihead_rot_forward.16} parent=0 // pred_check
    %p200 = pneg %p21
  $region27: #{unet_multihead_rot_forward.16} parent=0 // pred_check_branch
    %202 = sbr.rel (%p200) target = $region29
  $region28: #{unet_multihead_rot_forward.16} parent=0 // pred_region
    %v203 = vld [vmem:[#allocation2] sm:$0xff]
    %v204 = vld [vmem:[#allocation2 + $0x8] sm:$0xff]
    %v205 = vld [vmem:[#allocation2 + $0x10] sm:$0xff]
    %v206 = vld [vmem:[#allocation2 + $0x18] sm:$0xff]
    %v207 = vld [vmem:[%s4] sm:$0x1]
    %v209 = vlaneseq
    %v210 = vshrl.u32 %v209, 7
    %v211 = vsub.s32 0, %v210
    %v212 = vrot.slane %v207, %v211
    %v214 = vadd.f32 %v203, %v212
    %v215 = vadd.f32 %v204, %v212
    %v216 = vadd.f32 %v205, %v212
    %v217 = vadd.f32 %v206, %v212
    %218 = vst.msk [vmem:[%s5] sm:$0xff] %vm195, %v214
    %219 = vst.msk [vmem:[%s5 + $0x8] sm:$0xff] %vm195, %v215
    %220 = vst.msk [vmem:[%s5 + $0x10] sm:$0xff] %vm195, %v216
    %221 = vst.msk [vmem:[%s5 + $0x18] sm:$0xff] %vm195, %v217
  $region29: #{unet_multihead_rot_forward.16} parent=0 // pred_fallthru
    _
  // Predicated region
  $region30: #{unet_multihead_rot_forward.16} parent=0 // pred_check
    _
  $region31: #{unet_multihead_rot_forward.16} parent=0 // pred_check_branch
    %223 = sbr.rel (0) target = $region33
  $region32: #{unet_multihead_rot_forward.16} parent=0 // pred_region
    _
  $region33: #{unet_multihead_rot_forward.16} parent=0 // pred_fallthru
    _
  // Predicated region
  $region34: #{unet_multihead_rot_forward.16} parent=0 // pred_check
    _
  $region35: #{unet_multihead_rot_forward.16} parent=0 // pred_check_branch
    %225 = sbr.rel (0) target = $region37
  $region36: #{unet_multihead_rot_forward.16} parent=0 // pred_region
    _
  $region37: #{unet_multihead_rot_forward.16} parent=0 // pred_fallthru
    _

// kernel: tile.153
$region0: #{tile.153}
  #allocation0 [shape = 's32[1]{0}', space=sflag, size = 0x4, scoped, tag = 'scoped memory for tile.153']
  %s0 = inlined_call_operand.vmem [shape: f32[32], index: 0, kind: input, shape index: {}]
  %s1 = inlined_call_operand.vmem [shape: f32[9,32], index: 1, kind: output, shape index: {}]
  // Predicated region
  $region2: #{tile.153} parent=0 // pred_check
    _
  $region3: #{tile.153} parent=0 // pred_check_branch
    %3 = sbr.rel (0) target = $region5
  $region4: #{tile.153} parent=0 // pred_region
    _
  $region5: #{tile.153} parent=0 // pred_fallthru
    _
  %v4 = vld [vmem:[%s0] ss:$0 sm:$0xff]
  %5 = vst [vmem:[%s1] sm:$0xff] %v4
  %s6 = scalar_lea.vmem %s1, 8
  %7 = vst [vmem:[%s6] sm:$0xff] %v4

// kernel: unet_multihead_rot_forward.17
$region0: #{unet_multihead_rot_forward.17}
  #allocation0 [shape = 'u32[]', space=smem, size = 0x4, offset = 0x4, fixed_abs, tag = 'smem constant byte address 0x4 - core index']
  #allocation1 [shape = 'u32[144,128]{1,0:T(1,128)}', space=vmem, size = 0x12000, scoped, tag = 'internal scratch']
  #allocation2 [shape = 'f32[8,32]{1,0:T(8,128)}', space=vmem, size = 0x1000, scoped, tag = 'scratch operand']
  %s0 = inlined_call_operand.vmem [shape: bf16[8,256], index: 0, kind: input, shape index: {}]
  %s1 = inlined_call_operand.vmem [shape: bf16[256,32], index: 1, kind: input, shape index: {}]
  %s2 = inlined_call_operand.vmem [shape: f32[1,256], index: 2, kind: input, shape index: {}]
  %s3 = inlined_call_operand.vmem [shape: f32[1,256], index: 3, kind: input, shape index: {}]
  %s4 = inlined_call_operand.vmem [shape: f32[1,32], index: 4, kind: input, shape index: {}]
  %s5 = inlined_call_operand.vmem [shape: f32[8,32], index: 5, kind: output, shape index: {}]
  %s6 = sld [smem:[#allocation0]]
  $region38: #{unet_multihead_rot_forward.17} parent=0
    _
  %s8 = ssub.s32 1, %s6
  %s9 = scalar_select 0, %s8, %s6
  // Predicated region
  $region2: #{unet_multihead_rot_forward.17} parent=0 // pred_check
    _
  $region3: #{unet_multihead_rot_forward.17} parent=0 // pred_check_branch
    %11 = sbr.rel (0) target = $region5
  $region4: #{unet_multihead_rot_forward.17} parent=0 // pred_region
    _
  $region5: #{unet_multihead_rot_forward.17} parent=0 // pred_fallthru
    _
  // Predicated region
  $region6: #{unet_multihead_rot_forward.17} parent=0 // pred_check
    _
  $region7: #{unet_multihead_rot_forward.17} parent=0 // pred_check_branch
    %13 = sbr.rel (0) target = $region9
  $region8: #{unet_multihead_rot_forward.17} parent=0 // pred_region
    _
  $region9: #{unet_multihead_rot_forward.17} parent=0 // pred_fallthru
    _
  // Predicated region
  $region10: #{unet_multihead_rot_forward.17} parent=0 // pred_check
    _
  $region11: #{unet_multihead_rot_forward.17} parent=0 // pred_check_branch
    %15 = sbr.rel (0) target = $region13
  $region12: #{unet_multihead_rot_forward.17} parent=0 // pred_region
    _
  $region13: #{unet_multihead_rot_forward.17} parent=0 // pred_fallthru
    _
  // Predicated region
  $region14: #{unet_multihead_rot_forward.17} parent=0 // pred_check
    _
  $region15: #{unet_multihead_rot_forward.17} parent=0 // pred_check_branch
    %17 = sbr.rel (0) target = $region17
  $region16: #{unet_multihead_rot_forward.17} parent=0 // pred_region
    _
  $region17: #{unet_multihead_rot_forward.17} parent=0 // pred_fallthru
    _
  // Predicated region
  $region18: #{unet_multihead_rot_forward.17} parent=0 // pred_check
    _
  $region19: #{unet_multihead_rot_forward.17} parent=0 // pred_check_branch
    %19 = sbr.rel (0) target = $region21
  $region20: #{unet_multihead_rot_forward.17} parent=0 // pred_region
    _
  $region21: #{unet_multihead_rot_forward.17} parent=0 // pred_fallthru
    _
  %p21 = scmp.eq.s32.totalorder 0, 0
  // Predicated region
  $region22: #{unet_multihead_rot_forward.17} parent=0 // pred_check
    %p22 = pneg %p21
  $region23: #{unet_multihead_rot_forward.17} parent=0 // pred_check_branch
    %24 = sbr.rel (%p22) target = $region25
  $region24: #{unet_multihead_rot_forward.17} parent=0 // pred_region
    %vm25 = vcmask 261120
    %26 = vst.msk [vmem:[#allocation2] sm:$0xff] %vm25, 0.0
  $region25: #{unet_multihead_rot_forward.17} parent=0 // pred_fallthru
    _
  %v27 = vld [vmem:[%s0] sm:$0xff]
  %v28 = vunpack.c.l.bf16 %v27
  %v29 = vunpack.c.h.bf16 %v27
  %v30 = vld [vmem:[%s2] sm:$0x3]
  %v32 = vlaneseq
  %v33 = vshrl.u32 %v32, 7
  %v34 = vsub.s32 0, %v33
  %v35 = vrot.slane %v30, %v34
  %v36 = vlaneseq
  %v37 = vshrl.u32 %v36, 7
  %v38 = vsub.s32 1, %v37
  %v39 = vrot.slane %v30, %v38
  %v42 = vmul.f32 %v28, %v35
  %v43 = vmul.f32 %v29, %v39
  %v44 = vld [vmem:[%s3] sm:$0x3]
  %v46 = vlaneseq
  %v47 = vshrl.u32 %v46, 7
  %v48 = vsub.s32 0, %v47
  %v49 = vrot.slane %v44, %v48
  %v50 = vlaneseq
  %v51 = vshrl.u32 %v50, 7
  %v52 = vsub.s32 1, %v51
  %v53 = vrot.slane %v44, %v52
  %v56 = vadd.f32 %v42, %v49
  %v57 = vadd.f32 %v43, %v53
  %vm58 = vcmp.ge.f32.partialorder %v56, 0.0
  %vm59 = vcmp.ge.f32.partialorder %v57, 0.0
  %v60 = vmul.f32 %v56, 0.2
  %v61 = vmul.f32 %v57, 0.2
  %v62 = vsel %vm58, %v56, %v60
  %v63 = vsel %vm59, %v57, %v61
  %v64 = vpack.c.bf16 %v62, %v62
  %v65 = vpack.c.bf16 %v63, %v63
  %v66 = vld [vmem:[#allocation2] sm:$0xff]
  %v67 = vld [vmem:[%s1] sm:$0xf]
  %v68 = vld [vmem:[%s1 + $0x4] sm:$0xf]
  %v69 = vld [vmem:[%s1 + $0x8] sm:$0xf]
  %v70 = vld [vmem:[%s1 + $0xc] sm:$0xf]
  %v71 = vld [vmem:[%s1 + $0x10] sm:$0xf]
  %v72 = vld [vmem:[%s1 + $0x14] sm:$0xf]
  %v73 = vld [vmem:[%s1 + $0x18] sm:$0xf]
  %v74 = vld [vmem:[%s1 + $0x1c] sm:$0xf]
  %v75 = vld [vmem:[%s1 + $0x20] sm:$0xf]
  %v76 = vld [vmem:[%s1 + $0x24] sm:$0xf]
  %v77 = vld [vmem:[%s1 + $0x28] sm:$0xf]
  %v78 = vld [vmem:[%s1 + $0x2c] sm:$0xf]
  %v79 = vld [vmem:[%s1 + $0x30] sm:$0xf]
  %v80 = vld [vmem:[%s1 + $0x34] sm:$0xf]
  %v81 = vld [vmem:[%s1 + $0x38] sm:$0xf]
  %v82 = vld [vmem:[%s1 + $0x3c] sm:$0xf]
  %v83 = vld [vmem:[%s1 + $0x40] sm:$0xf]
  %v84 = vld [vmem:[%s1 + $0x44] sm:$0xf]
  %v85 = vld [vmem:[%s1 + $0x48] sm:$0xf]
  %v86 = vld [vmem:[%s1 + $0x4c] sm:$0xf]
  %v87 = vld [vmem:[%s1 + $0x50] sm:$0xf]
  %v88 = vld [vmem:[%s1 + $0x54] sm:$0xf]
  %v89 = vld [vmem:[%s1 + $0x58] sm:$0xf]
  %v90 = vld [vmem:[%s1 + $0x5c] sm:$0xf]
  %v91 = vld [vmem:[%s1 + $0x60] sm:$0xf]
  %v92 = vld [vmem:[%s1 + $0x64] sm:$0xf]
  %v93 = vld [vmem:[%s1 + $0x68] sm:$0xf]
  %v94 = vld [vmem:[%s1 + $0x6c] sm:$0xf]
  %v95 = vld [vmem:[%s1 + $0x70] sm:$0xf]
  %v96 = vld [vmem:[%s1 + $0x74] sm:$0xf]
  %v97 = vld [vmem:[%s1 + $0x78] sm:$0xf]
  %v98 = vld [vmem:[%s1 + $0x7c] sm:$0xf]
  %v131 = vunpack.c.l.b16 %v67
  %v132 = vunpack.c.l.b16 %v68
  %v133 = vunpack.c.l.b16 %v69
  %v134 = vunpack.c.l.b16 %v70
  %v135 = vunpack.c.l.b16 %v71
  %v136 = vunpack.c.l.b16 %v72
  %v137 = vunpack.c.l.b16 %v73
  %v138 = vunpack.c.l.b16 %v74
  %v139 = vunpack.c.l.b16 %v75
  %v140 = vunpack.c.l.b16 %v76
  %v141 = vunpack.c.l.b16 %v77
  %v142 = vunpack.c.l.b16 %v78
  %v143 = vunpack.c.l.b16 %v79
  %v144 = vunpack.c.l.b16 %v80
  %v145 = vunpack.c.l.b16 %v81
  %v146 = vunpack.c.l.b16 %v82
  %v147 = vunpack.c.l.b16 %v83
  %v148 = vunpack.c.l.b16 %v84
  %v149 = vunpack.c.l.b16 %v85
  %v150 = vunpack.c.l.b16 %v86
  %v151 = vunpack.c.l.b16 %v87
  %v152 = vunpack.c.l.b16 %v88
  %v153 = vunpack.c.l.b16 %v89
  %v154 = vunpack.c.l.b16 %v90
  %v155 = vunpack.c.l.b16 %v91
  %v156 = vunpack.c.l.b16 %v92
  %v157 = vunpack.c.l.b16 %v93
  %v158 = vunpack.c.l.b16 %v94
  %v159 = vunpack.c.l.b16 %v95
  %v160 = vunpack.c.l.b16 %v96
  %v161 = vunpack.c.l.b16 %v97
  %v162 = vunpack.c.l.b16 %v98
  %v163 = vpack.c.b16 %v132, %v131
  %v164 = vpack.c.b16 %v134, %v133
  %v165 = vpack.c.b16 %v136, %v135
  %v166 = vpack.c.b16 %v138, %v137
  %v167 = vpack.c.b16 %v140, %v139
  %v168 = vpack.c.b16 %v142, %v141
  %v169 = vpack.c.b16 %v144, %v143
  %v170 = vpack.c.b16 %v146, %v145
  %v171 = vpack.c.b16 %v148, %v147
  %v172 = vpack.c.b16 %v150, %v149
  %v173 = vpack.c.b16 %v152, %v151
  %v174 = vpack.c.b16 %v154, %v153
  %v175 = vpack.c.b16 %v156, %v155
  %v176 = vpack.c.b16 %v158, %v157
  %v177 = vpack.c.b16 %v160, %v159
  %v178 = vpack.c.b16 %v162, %v161
  %195 = vmatprep.subr.bf16.mxu0 0
  %196 = vmatpush1.bf16.msra.mxu0 %v163
  %197 = vmatprep.subr.bf16.mxu0 0
  %198 = vmatpush1.bf16.msra.mxu0 %v164
  %199 = vmatprep.subr.bf16.mxu0 0
  %200 = vmatpush1.bf16.msra.mxu0 %v165
  %201 = vmatprep.subr.bf16.mxu0 0
  %202 = vmatpush1.bf16.msra.mxu0 %v166
  %203 = vmatprep.subr.bf16.mxu0 0
  %204 = vmatpush1.bf16.msra.mxu0 %v167
  %205 = vmatprep.subr.bf16.mxu0 0
  %206 = vmatpush1.bf16.msra.mxu0 %v168
  %207 = vmatprep.subr.bf16.mxu0 0
  %208 = vmatpush1.bf16.msra.mxu0 %v169
  %209 = vmatprep.subr.bf16.mxu0 0
  %210 = vmatpush1.bf16.msra.mxu0 %v170
  %211 = vmatprep.subr.bf16.mxu0 0
  %212 = vmatpush1.bf16.msra.mxu0 %v171
  %213 = vmatprep.subr.bf16.mxu0 0
  %214 = vmatpush1.bf16.msra.mxu0 %v172
  %215 = vmatprep.subr.bf16.mxu0 0
  %216 = vmatpush1.bf16.msra.mxu0 %v173
  %217 = vmatprep.subr.bf16.mxu0 0
  %218 = vmatpush1.bf16.msra.mxu0 %v174
  %219 = vmatprep.subr.bf16.mxu0 0
  %220 = vmatpush1.bf16.msra.mxu0 %v175
  %221 = vmatprep.subr.bf16.mxu0 0
  %222 = vmatpush1.bf16.msra.mxu0 %v176
  %223 = vmatprep.subr.bf16.mxu0 0
  %224 = vmatpush1.bf16.msra.mxu0 %v177
  %225 = vmatprep.subr.bf16.mxu0 0
  %226 = vmatpush1.bf16.msra.mxu0 %v178
  %227 = vmatprep.mubr.bf16.mxu0 %v65
  %228 = vmatmul.mubr.bf16.gmra.mrb[0].mxu0 %v64
  %v229 = vpop.f32.mrb[0].mxu0
  %v230 = vadd.f32 0.0, %v229
  %v231 = vpop.f32.mrb[0].mxu0
  %v232 = vpop.f32.mrb[0].mxu0
  %v233 = vpop.f32.mrb[0].mxu0
  %234 = vdwg.mxu0
  %v235 = vadd.f32 %v66, %v230
  %vm236 = vcmask 261120
  %237 = vst.msk [vmem:[#allocation2] sm:$0xff] %vm236, %v235
  // Predicated region
  $region26: #{unet_multihead_rot_forward.17} parent=0 // pred_check
    %p238 = pneg %p21
  $region27: #{unet_multihead_rot_forward.17} parent=0 // pred_check_branch
    %240 = sbr.rel (%p238) target = $region29
  $region28: #{unet_multihead_rot_forward.17} parent=0 // pred_region
    %v241 = vld [vmem:[#allocation2] sm:$0xff]
    %v242 = vld [vmem:[%s4] sm:$0x1]
    %v244 = vlaneseq
    %v245 = vshrl.u32 %v244, 7
    %v246 = vsub.s32 0, %v245
    %v247 = vrot.slane %v242, %v246
    %v249 = vadd.f32 %v241, %v247
    %250 = vst.msk [vmem:[%s5] sm:$0xff] %vm236, %v249
  $region29: #{unet_multihead_rot_forward.17} parent=0 // pred_fallthru
    _
  // Predicated region
  $region30: #{unet_multihead_rot_forward.17} parent=0 // pred_check
    _
  $region31: #{unet_multihead_rot_forward.17} parent=0 // pred_check_branch
    %252 = sbr.rel (0) target = $region33
  $region32: #{unet_multihead_rot_forward.17} parent=0 // pred_region
    _
  $region33: #{unet_multihead_rot_forward.17} parent=0 // pred_fallthru
    _
  // Predicated region
  $region34: #{unet_multihead_rot_forward.17} parent=0 // pred_check
    _
  $region35: #{unet_multihead_rot_forward.17} parent=0 // pred_check_branch
    %254 = sbr.rel (0) target = $region37
  $region36: #{unet_multihead_rot_forward.17} parent=0 // pred_region
    _
  $region37: #{unet_multihead_rot_forward.17} parent=0 // pred_fallthru
    _

// kernel: unet_multihead_rot_forward.18
$region0: #{unet_multihead_rot_forward.18}
  #allocation0 [shape = 'u32[]', space=smem, size = 0x4, offset = 0x4, fixed_abs, tag = 'smem constant byte address 0x4 - core index']
  #allocation1 [shape = 'u32[144,128]{1,0:T(1,128)}', space=vmem, size = 0x12000, scoped, tag = 'internal scratch']
  #allocation2 [shape = 'f32[8,256]{1,0:T(8,128)}', space=vmem, size = 0x2000, scoped, tag = 'scratch operand']
  %s0 = inlined_call_operand.vmem [shape: bf16[8,288], index: 0, kind: input, shape index: {}]
  %s1 = inlined_call_operand.vmem [shape: bf16[288,256], index: 1, kind: input, shape index: {}]
  %s2 = inlined_call_operand.vmem [shape: f32[1,288], index: 2, kind: input, shape index: {}]
  %s3 = inlined_call_operand.vmem [shape: f32[1,288], index: 3, kind: input, shape index: {}]
  %s4 = inlined_call_operand.vmem [shape: f32[1,256], index: 4, kind: input, shape index: {}]
  %s5 = inlined_call_operand.vmem [shape: f32[8,256], index: 5, kind: output, shape index: {}]
  %s6 = sld [smem:[#allocation0]]
  $region38: #{unet_multihead_rot_forward.18} parent=0
    _
  %s8 = ssub.s32 1, %s6
  %s9 = scalar_select 0, %s8, %s6
  // Predicated region
  $region2: #{unet_multihead_rot_forward.18} parent=0 // pred_check
    _
  $region3: #{unet_multihead_rot_forward.18} parent=0 // pred_check_branch
    %11 = sbr.rel (0) target = $region5
  $region4: #{unet_multihead_rot_forward.18} parent=0 // pred_region
    _
  $region5: #{unet_multihead_rot_forward.18} parent=0 // pred_fallthru
    _
  // Predicated region
  $region6: #{unet_multihead_rot_forward.18} parent=0 // pred_check
    _
  $region7: #{unet_multihead_rot_forward.18} parent=0 // pred_check_branch
    %13 = sbr.rel (0) target = $region9
  $region8: #{unet_multihead_rot_forward.18} parent=0 // pred_region
    _
  $region9: #{unet_multihead_rot_forward.18} parent=0 // pred_fallthru
    _
  // Predicated region
  $region10: #{unet_multihead_rot_forward.18} parent=0 // pred_check
    _
  $region11: #{unet_multihead_rot_forward.18} parent=0 // pred_check_branch
    %15 = sbr.rel (0) target = $region13
  $region12: #{unet_multihead_rot_forward.18} parent=0 // pred_region
    _
  $region13: #{unet_multihead_rot_forward.18} parent=0 // pred_fallthru
    _
  // Predicated region
  $region14: #{unet_multihead_rot_forward.18} parent=0 // pred_check
    _
  $region15: #{unet_multihead_rot_forward.18} parent=0 // pred_check_branch
    %17 = sbr.rel (0) target = $region17
  $region16: #{unet_multihead_rot_forward.18} parent=0 // pred_region
    _
  $region17: #{unet_multihead_rot_forward.18} parent=0 // pred_fallthru
    _
  // Predicated region
  $region18: #{unet_multihead_rot_forward.18} parent=0 // pred_check
    _
  $region19: #{unet_multihead_rot_forward.18} parent=0 // pred_check_branch
    %19 = sbr.rel (0) target = $region21
  $region20: #{unet_multihead_rot_forward.18} parent=0 // pred_region
    _
  $region21: #{unet_multihead_rot_forward.18} parent=0 // pred_fallthru
    _
  %p21 = scmp.eq.s32.totalorder 0, 0
  // Predicated region
  $region22: #{unet_multihead_rot_forward.18} parent=0 // pred_check
    %p22 = pneg %p21
  $region23: #{unet_multihead_rot_forward.18} parent=0 // pred_check_branch
    %24 = sbr.rel (%p22) target = $region25
  $region24: #{unet_multihead_rot_forward.18} parent=0 // pred_region
    %25 = vst [vmem:[#allocation2] sm:$0xff] 0.0
    %26 = vst [vmem:[#allocation2 + $0x8] sm:$0xff] 0.0
  $region25: #{unet_multihead_rot_forward.18} parent=0 // pred_fallthru
    _
  %v27 = vld [vmem:[%s0] sm:$0xff]
  %v28 = vld [vmem:[%s0 + $0x8] sm:$0xf]
  %v29 = vunpack.c.l.bf16 %v27
  %v30 = vunpack.c.h.bf16 %v27
  %v31 = vunpack.c.l.bf16 %v28
  %v32 = vld [vmem:[%s2] sm:$0x7]
  %v34 = vlaneseq
  %v35 = vshrl.u32 %v34, 7
  %v36 = vsub.s32 0, %v35
  %v37 = vrot.slane %v32, %v36
  %v38 = vlaneseq
  %v39 = vshrl.u32 %v38, 7
  %v40 = vsub.s32 1, %v39
  %v41 = vrot.slane %v32, %v40
  %v42 = vlaneseq
  %v43 = vshrl.u32 %v42, 7
  %v44 = vsub.s32 2, %v43
  %v45 = vrot.slane %v32, %v44
  %v49 = vmul.f32 %v29, %v37
  %v50 = vmul.f32 %v30, %v41
  %v51 = vmul.f32 %v31, %v45
  %v52 = vld [vmem:[%s3] sm:$0x7]
  %v54 = vlaneseq
  %v55 = vshrl.u32 %v54, 7
  %v56 = vsub.s32 0, %v55
  %v57 = vrot.slane %v52, %v56
  %v58 = vlaneseq
  %v59 = vshrl.u32 %v58, 7
  %v60 = vsub.s32 1, %v59
  %v61 = vrot.slane %v52, %v60
  %v62 = vlaneseq
  %v63 = vshrl.u32 %v62, 7
  %v64 = vsub.s32 2, %v63
  %v65 = vrot.slane %v52, %v64
  %v69 = vadd.f32 %v49, %v57
  %v70 = vadd.f32 %v50, %v61
  %v71 = vadd.f32 %v51, %v65
  %v72 = vmax.f32 %v69, 0.0
  %v73 = vmax.f32 %v70, 0.0
  %v74 = vmax.f32 %v71, 0.0
  %v75 = vpack.c.bf16 %v72, %v72
  %v76 = vpack.c.bf16 %v73, %v73
  %v77 = vpack.c.bf16 %v74, %v74
  %v78 = vld [vmem:[#allocation2] sm:$0xff]
  %v79 = vld [vmem:[#allocation2 + $0x8] sm:$0xff]
  %v80 = vld [vmem:[%s1] sm:$0xff]
  %v81 = vld [vmem:[%s1 + $0x8] sm:$0xff]
  %v82 = vld [vmem:[%s1 + $0x10] sm:$0xff]
  %v83 = vld [vmem:[%s1 + $0x18] sm:$0xff]
  %v84 = vld [vmem:[%s1 + $0x20] sm:$0xff]
  %v85 = vld [vmem:[%s1 + $0x28] sm:$0xff]
  %v86 = vld [vmem:[%s1 + $0x30] sm:$0xff]
  %v87 = vld [vmem:[%s1 + $0x38] sm:$0xff]
  %v88 = vld [vmem:[%s1 + $0x40] sm:$0xff]
  %v89 = vld [vmem:[%s1 + $0x48] sm:$0xff]
  %v90 = vld [vmem:[%s1 + $0x50] sm:$0xff]
  %v91 = vld [vmem:[%s1 + $0x58] sm:$0xff]
  %v92 = vld [vmem:[%s1 + $0x60] sm:$0xff]
  %v93 = vld [vmem:[%s1 + $0x68] sm:$0xff]
  %v94 = vld [vmem:[%s1 + $0x70] sm:$0xff]
  %v95 = vld [vmem:[%s1 + $0x78] sm:$0xff]
  %v96 = vld [vmem:[%s1 + $0x80] sm:$0xff]
  %v97 = vld [vmem:[%s1 + $0x88] sm:$0xff]
  %v98 = vld [vmem:[%s1 + $0x90] sm:$0xff]
  %v99 = vld [vmem:[%s1 + $0x98] sm:$0xff]
  %v100 = vld [vmem:[%s1 + $0xa0] sm:$0xff]
  %v101 = vld [vmem:[%s1 + $0xa8] sm:$0xff]
  %v102 = vld [vmem:[%s1 + $0xb0] sm:$0xff]
  %v103 = vld [vmem:[%s1 + $0xb8] sm:$0xff]
  %v104 = vld [vmem:[%s1 + $0xc0] sm:$0xff]
  %v105 = vld [vmem:[%s1 + $0xc8] sm:$0xff]
  %v106 = vld [vmem:[%s1 + $0xd0] sm:$0xff]
  %v107 = vld [vmem:[%s1 + $0xd8] sm:$0xff]
  %v108 = vld [vmem:[%s1 + $0xe0] sm:$0xff]
  %v109 = vld [vmem:[%s1 + $0xe8] sm:$0xff]
  %v110 = vld [vmem:[%s1 + $0xf0] sm:$0xff]
  %v111 = vld [vmem:[%s1 + $0xf8] sm:$0xff]
  %v112 = vld [vmem:[%s1 + $0x100] sm:$0xff]
  %v113 = vld [vmem:[%s1 + $0x108] sm:$0xff]
  %v114 = vld [vmem:[%s1 + $0x110] sm:$0xff]
  %v115 = vld [vmem:[%s1 + $0x118] sm:$0xff]
  %v152 = vunpack.c.l.b16 %v80
  %v153 = vunpack.c.h.b16 %v80
  %v154 = vunpack.c.l.b16 %v81
  %v155 = vunpack.c.h.b16 %v81
  %v156 = vunpack.c.l.b16 %v82
  %v157 = vunpack.c.h.b16 %v82
  %v158 = vunpack.c.l.b16 %v83
  %v159 = vunpack.c.h.b16 %v83
  %v160 = vunpack.c.l.b16 %v84
  %v161 = vunpack.c.h.b16 %v84
  %v162 = vunpack.c.l.b16 %v85
  %v163 = vunpack.c.h.b16 %v85
  %v164 = vunpack.c.l.b16 %v86
  %v165 = vunpack.c.h.b16 %v86
  %v166 = vunpack.c.l.b16 %v87
  %v167 = vunpack.c.h.b16 %v87
  %v168 = vunpack.c.l.b16 %v88
  %v169 = vunpack.c.h.b16 %v88
  %v170 = vunpack.c.l.b16 %v89
  %v171 = vunpack.c.h.b16 %v89
  %v172 = vunpack.c.l.b16 %v90
  %v173 = vunpack.c.h.b16 %v90
  %v174 = vunpack.c.l.b16 %v91
  %v175 = vunpack.c.h.b16 %v91
  %v176 = vunpack.c.l.b16 %v92
  %v177 = vunpack.c.h.b16 %v92
  %v178 = vunpack.c.l.b16 %v93
  %v179 = vunpack.c.h.b16 %v93
  %v180 = vunpack.c.l.b16 %v94
  %v181 = vunpack.c.h.b16 %v94
  %v182 = vunpack.c.l.b16 %v95
  %v183 = vunpack.c.h.b16 %v95
  %v184 = vunpack.c.l.b16 %v96
  %v185 = vunpack.c.h.b16 %v96
  %v186 = vunpack.c.l.b16 %v97
  %v187 = vunpack.c.h.b16 %v97
  %v188 = vunpack.c.l.b16 %v98
  %v189 = vunpack.c.h.b16 %v98
  %v190 = vunpack.c.l.b16 %v99
  %v191 = vunpack.c.h.b16 %v99
  %v192 = vunpack.c.l.b16 %v100
  %v193 = vunpack.c.h.b16 %v100
  %v194 = vunpack.c.l.b16 %v101
  %v195 = vunpack.c.h.b16 %v101
  %v196 = vunpack.c.l.b16 %v102
  %v197 = vunpack.c.h.b16 %v102
  %v198 = vunpack.c.l.b16 %v103
  %v199 = vunpack.c.h.b16 %v103
  %v200 = vunpack.c.l.b16 %v104
  %v201 = vunpack.c.h.b16 %v104
  %v202 = vunpack.c.l.b16 %v105
  %v203 = vunpack.c.h.b16 %v105
  %v204 = vunpack.c.l.b16 %v106
  %v205 = vunpack.c.h.b16 %v106
  %v206 = vunpack.c.l.b16 %v107
  %v207 = vunpack.c.h.b16 %v107
  %v208 = vunpack.c.l.b16 %v108
  %v209 = vunpack.c.h.b16 %v108
  %v210 = vunpack.c.l.b16 %v109
  %v211 = vunpack.c.h.b16 %v109
  %v212 = vunpack.c.l.b16 %v110
  %v213 = vunpack.c.h.b16 %v110
  %v214 = vunpack.c.l.b16 %v111
  %v215 = vunpack.c.h.b16 %v111
  %v216 = vunpack.c.l.b16 %v112
  %v217 = vunpack.c.h.b16 %v112
  %v218 = vunpack.c.l.b16 %v113
  %v219 = vunpack.c.h.b16 %v113
  %v220 = vunpack.c.l.b16 %v114
  %v221 = vunpack.c.h.b16 %v114
  %v222 = vunpack.c.l.b16 %v115
  %v223 = vunpack.c.h.b16 %v115
  %v224 = vpack.c.b16 %v154, %v152
  %v225 = vpack.c.b16 %v155, %v153
  %v226 = vpack.c.b16 %v158, %v156
  %v227 = vpack.c.b16 %v159, %v157
  %v228 = vpack.c.b16 %v162, %v160
  %v229 = vpack.c.b16 %v163, %v161
  %v230 = vpack.c.b16 %v166, %v164
  %v231 = vpack.c.b16 %v167, %v165
  %v232 = vpack.c.b16 %v170, %v168
  %v233 = vpack.c.b16 %v171, %v169
  %v234 = vpack.c.b16 %v174, %v172
  %v235 = vpack.c.b16 %v175, %v173
  %v236 = vpack.c.b16 %v178, %v176
  %v237 = vpack.c.b16 %v179, %v177
  %v238 = vpack.c.b16 %v182, %v180
  %v239 = vpack.c.b16 %v183, %v181
  %v240 = vpack.c.b16 %v186, %v184
  %v241 = vpack.c.b16 %v187, %v185
  %v242 = vpack.c.b16 %v190, %v188
  %v243 = vpack.c.b16 %v191, %v189
  %v244 = vpack.c.b16 %v194, %v192
  %v245 = vpack.c.b16 %v195, %v193
  %v246 = vpack.c.b16 %v198, %v196
  %v247 = vpack.c.b16 %v199, %v197
  %v248 = vpack.c.b16 %v202, %v200
  %v249 = vpack.c.b16 %v203, %v201
  %v250 = vpack.c.b16 %v206, %v204
  %v251 = vpack.c.b16 %v207, %v205
  %v252 = vpack.c.b16 %v210, %v208
  %v253 = vpack.c.b16 %v211, %v209
  %v254 = vpack.c.b16 %v214, %v212
  %v255 = vpack.c.b16 %v215, %v213
  %v256 = vpack.c.b16 %v218, %v216
  %v257 = vpack.c.b16 %v219, %v217
  %v258 = vpack.c.b16 %v222, %v220
  %v259 = vpack.c.b16 %v223, %v221
  %vm296 = vcmask 261120
  %v298 = vsel %vm296, %v77, 0
  %300 = vmatprep.subr.bf16.mxu0 %v225
  %301 = vmatpush1.bf16.msra.mxu0 %v224
  %302 = vmatprep.subr.bf16.mxu0 %v227
  %303 = vmatpush1.bf16.msra.mxu0 %v226
  %304 = vmatprep.subr.bf16.mxu0 %v229
  %305 = vmatpush1.bf16.msra.mxu0 %v228
  %306 = vmatprep.subr.bf16.mxu0 %v231
  %307 = vmatpush1.bf16.msra.mxu0 %v230
  %308 = vmatprep.subr.bf16.mxu0 %v233
  %309 = vmatpush1.bf16.msra.mxu0 %v232
  %310 = vmatprep.subr.bf16.mxu0 %v235
  %311 = vmatpush1.bf16.msra.mxu0 %v234
  %312 = vmatprep.subr.bf16.mxu0 %v237
  %313 = vmatpush1.bf16.msra.mxu0 %v236
  %314 = vmatprep.subr.bf16.mxu0 %v239
  %315 = vmatpush1.bf16.msra.mxu0 %v238
  %316 = vmatprep.subr.bf16.mxu0 %v241
  %317 = vmatpush1.bf16.msra.mxu0 %v240
  %318 = vmatprep.subr.bf16.mxu0 %v243
  %319 = vmatpush1.bf16.msra.mxu0 %v242
  %320 = vmatprep.subr.bf16.mxu0 %v245
  %321 = vmatpush1.bf16.msra.mxu0 %v244
  %322 = vmatprep.subr.bf16.mxu0 %v247
  %323 = vmatpush1.bf16.msra.mxu0 %v246
  %324 = vmatprep.subr.bf16.mxu0 %v249
  %325 = vmatpush1.bf16.msra.mxu0 %v248
  %326 = vmatprep.subr.bf16.mxu0 %v251
  %327 = vmatpush1.bf16.msra.mxu0 %v250
  %328 = vmatprep.subr.bf16.mxu0 %v253
  %329 = vmatpush1.bf16.msra.mxu0 %v252
  %330 = vmatprep.subr.bf16.mxu0 %v255
  %331 = vmatpush1.bf16.msra.mxu0 %v254
  %332 = vmatprep.mubr.bf16.mxu0 %v76
  %333 = vmatmul.mubr.bf16.gmra.mrb[0].mxu0 %v75
  %v334 = vpop.f32.mrb[0].mxu0
  %v335 = vadd.f32 0.0, %v334
  %v336 = vpop.f32.mrb[0].mxu0
  %v337 = vadd.f32 0.0, %v336
  %v338 = vpop.f32.mrb[0].mxu0
  %v339 = vpop.f32.mrb[0].mxu0
  %340 = vdwg.mxu0
  %341 = vmatprep.subr.bf16.mxu0 %v257
  %342 = vmatpush1.bf16.msra.mxu0 %v256
  %343 = vmatprep.subr.bf16.mxu0 %v259
  %344 = vmatpush1.bf16.msra.mxu0 %v258
  %345 = vmatprep.subr.bf16.mxu0 0
  %346 = vmatpush1.bf16.msra.mxu0 0
  %347 = vmatprep.subr.bf16.mxu0 0
  %348 = vmatpush1.bf16.msra.mxu0 0
  %349 = vmatprep.subr.bf16.mxu0 0
  %350 = vmatpush1.bf16.msra.mxu0 0
  %351 = vmatprep.subr.bf16.mxu0 0
  %352 = vmatpush1.bf16.msra.mxu0 0
  %353 = vmatprep.subr.bf16.mxu0 0
  %354 = vmatpush1.bf16.msra.mxu0 0
  %355 = vmatprep.subr.bf16.mxu0 0
  %356 = vmatpush1.bf16.msra.mxu0 0
  %357 = vmatprep.subr.bf16.mxu0 0
  %358 = vmatpush1.bf16.msra.mxu0 0
  %359 = vmatprep.subr.bf16.mxu0 0
  %360 = vmatpush1.bf16.msra.mxu0 0
  %361 = vmatprep.subr.bf16.mxu0 0
  %362 = vmatpush1.bf16.msra.mxu0 0
  %363 = vmatprep.subr.bf16.mxu0 0
  %364 = vmatpush1.bf16.msra.mxu0 0
  %365 = vmatprep.subr.bf16.mxu0 0
  %366 = vmatpush1.bf16.msra.mxu0 0
  %367 = vmatprep.subr.bf16.mxu0 0
  %368 = vmatpush1.bf16.msra.mxu0 0
  %369 = vmatprep.subr.bf16.mxu0 0
  %370 = vmatpush1.bf16.msra.mxu0 0
  %371 = vmatprep.subr.bf16.mxu0 0
  %372 = vmatpush1.bf16.msra.mxu0 0
  %373 = vmatprep.mubr.bf16.mxu0 0
  %374 = vmatmul.mubr.bf16.gmra.mrb[0].mxu0 %v298
  %v375 = vpop.f32.mrb[0].mxu0
  %v376 = vadd.f32 %v335, %v375
  %v377 = vpop.f32.mrb[0].mxu0
  %v378 = vadd.f32 %v337, %v377
  %v379 = vpop.f32.mrb[0].mxu0
  %v380 = vpop.f32.mrb[0].mxu0
  %381 = vdwg.mxu0
  %v382 = vadd.f32 %v78, %v376
  %v383 = vadd.f32 %v79, %v378
  %384 = vst [vmem:[#allocation2] sm:$0xff] %v382
  %385 = vst [vmem:[#allocation2 + $0x8] sm:$0xff] %v383
  // Predicated region
  $region26: #{unet_multihead_rot_forward.18} parent=0 // pred_check
    %p386 = pneg %p21
  $region27: #{unet_multihead_rot_forward.18} parent=0 // pred_check_branch
    %388 = sbr.rel (%p386) target = $region29
  $region28: #{unet_multihead_rot_forward.18} parent=0 // pred_region
    %v389 = vld [vmem:[#allocation2] sm:$0xff]
    %v390 = vld [vmem:[#allocation2 + $0x8] sm:$0xff]
    %v391 = vld [vmem:[%s4] sm:$0x3]
    %v393 = vlaneseq
    %v394 = vshrl.u32 %v393, 7
    %v395 = vsub.s32 0, %v394
    %v396 = vrot.slane %v391, %v395
    %v397 = vlaneseq
    %v398 = vshrl.u32 %v397, 7
    %v399 = vsub.s32 1, %v398
    %v400 = vrot.slane %v391, %v399
    %v403 = vadd.f32 %v389, %v396
    %v404 = vadd.f32 %v390, %v400
    %405 = vst [vmem:[%s5] sm:$0xff] %v403
    %406 = vst [vmem:[%s5 + $0x8] sm:$0xff] %v404
  $region29: #{unet_multihead_rot_forward.18} parent=0 // pred_fallthru
    _
  // Predicated region
  $region30: #{unet_multihead_rot_forward.18} parent=0 // pred_check
    _
  $region31: #{unet_multihead_rot_forward.18} parent=0 // pred_check_branch
    %408 = sbr.rel (0) target = $region33
  $region32: #{unet_multihead_rot_forward.18} parent=0 // pred_region
    _
  $region33: #{unet_multihead_rot_forward.18} parent=0 // pred_fallthru
    _
  // Predicated region
  $region34: #{unet_multihead_rot_forward.18} parent=0 // pred_check
    _
  $region35: #{unet_multihead_rot_forward.18} parent=0 // pred_check_branch
    %410 = sbr.rel (0) target = $region37
  $region36: #{unet_multihead_rot_forward.18} parent=0 // pred_region
    _
  $region37: #{unet_multihead_rot_forward.18} parent=0 // pred_fallthru
    _

// kernel: unet_multihead_rot_forward.19
$region0: #{unet_multihead_rot_forward.19}
  #allocation0 [shape = 'u32[]', space=smem, size = 0x4, offset = 0x4, fixed_abs, tag = 'smem constant byte address 0x4 - core index']
  #allocation1 [shape = 'u32[144,128]{1,0:T(1,128)}', space=vmem, size = 0x12000, scoped, tag = 'internal scratch']
  #allocation2 [shape = 'f32[32,32]{1,0:T(8,128)}', space=vmem, size = 0x4000, scoped, tag = 'scratch operand']
  %s0 = inlined_call_operand.vmem [shape: bf16[32,288], index: 0, kind: input, shape index: {}]
  %s1 = inlined_call_operand.vmem [shape: bf16[288,32], index: 1, kind: input, shape index: {}]
  %s2 = inlined_call_operand.vmem [shape: f32[1,288], index: 2, kind: input, shape index: {}]
  %s3 = inlined_call_operand.vmem [shape: f32[1,288], index: 3, kind: input, shape index: {}]
  %s4 = inlined_call_operand.vmem [shape: f32[1,32], index: 4, kind: input, shape index: {}]
  %s5 = inlined_call_operand.vmem [shape: f32[32,32], index: 5, kind: output, shape index: {}]
  %s6 = sld [smem:[#allocation0]]
  $region38: #{unet_multihead_rot_forward.19} parent=0
    _
  %s8 = ssub.s32 1, %s6
  %s9 = scalar_select 0, %s8, %s6
  // Predicated region
  $region2: #{unet_multihead_rot_forward.19} parent=0 // pred_check
    _
  $region3: #{unet_multihead_rot_forward.19} parent=0 // pred_check_branch
    %11 = sbr.rel (0) target = $region5
  $region4: #{unet_multihead_rot_forward.19} parent=0 // pred_region
    _
  $region5: #{unet_multihead_rot_forward.19} parent=0 // pred_fallthru
    _
  // Predicated region
  $region6: #{unet_multihead_rot_forward.19} parent=0 // pred_check
    _
  $region7: #{unet_multihead_rot_forward.19} parent=0 // pred_check_branch
    %13 = sbr.rel (0) target = $region9
  $region8: #{unet_multihead_rot_forward.19} parent=0 // pred_region
    _
  $region9: #{unet_multihead_rot_forward.19} parent=0 // pred_fallthru
    _
  // Predicated region
  $region10: #{unet_multihead_rot_forward.19} parent=0 // pred_check
    _
  $region11: #{unet_multihead_rot_forward.19} parent=0 // pred_check_branch
    %15 = sbr.rel (0) target = $region13
  $region12: #{unet_multihead_rot_forward.19} parent=0 // pred_region
    _
  $region13: #{unet_multihead_rot_forward.19} parent=0 // pred_fallthru
    _
  // Predicated region
  $region14: #{unet_multihead_rot_forward.19} parent=0 // pred_check
    _
  $region15: #{unet_multihead_rot_forward.19} parent=0 // pred_check_branch
    %17 = sbr.rel (0) target = $region17
  $region16: #{unet_multihead_rot_forward.19} parent=0 // pred_region
    _
  $region17: #{unet_multihead_rot_forward.19} parent=0 // pred_fallthru
    _
  // Predicated region
  $region18: #{unet_multihead_rot_forward.19} parent=0 // pred_check
    _
  $region19: #{unet_multihead_rot_forward.19} parent=0 // pred_check_branch
    %19 = sbr.rel (0) target = $region21
  $region20: #{unet_multihead_rot_forward.19} parent=0 // pred_region
    _
  $region21: #{unet_multihead_rot_forward.19} parent=0 // pred_fallthru
    _
  %p21 = scmp.eq.s32.totalorder 0, 0
  // Predicated region
  $region22: #{unet_multihead_rot_forward.19} parent=0 // pred_check
    %p22 = pneg %p21
  $region23: #{unet_multihead_rot_forward.19} parent=0 // pred_check_branch
    %24 = sbr.rel (%p22) target = $region25
  $region24: #{unet_multihead_rot_forward.19} parent=0 // pred_region
    %vm25 = vcmask 261120
    %26 = vst.msk [vmem:[#allocation2] sm:$0xff] %vm25, 0.0
    %27 = vst.msk [vmem:[#allocation2 + $0x8] sm:$0xff] %vm25, 0.0
    %28 = vst.msk [vmem:[#allocation2 + $0x10] sm:$0xff] %vm25, 0.0
    %29 = vst.msk [vmem:[#allocation2 + $0x18] sm:$0xff] %vm25, 0.0
  $region25: #{unet_multihead_rot_forward.19} parent=0 // pred_fallthru
    _
  %v30 = vld [vmem:[%s0] sm:$0xff]
  %v31 = vld [vmem:[%s0 + $0x8] sm:$0xf]
  %v32 = vld [vmem:[%s0 + $0xc] sm:$0xff]
  %v33 = vld [vmem:[%s0 + $0x14] sm:$0xf]
  %v34 = vld [vmem:[%s0 + $0x18] sm:$0xff]
  %v35 = vld [vmem:[%s0 + $0x20] sm:$0xf]
  %v36 = vld [vmem:[%s0 + $0x24] sm:$0xff]
  %v37 = vld [vmem:[%s0 + $0x2c] sm:$0xf]
  %v38 = vunpack.c.l.bf16 %v30
  %v39 = vunpack.c.h.bf16 %v30
  %v40 = vunpack.c.l.bf16 %v31
  %v41 = vunpack.c.l.bf16 %v32
  %v42 = vunpack.c.h.bf16 %v32
  %v43 = vunpack.c.l.bf16 %v33
  %v44 = vunpack.c.l.bf16 %v34
  %v45 = vunpack.c.h.bf16 %v34
  %v46 = vunpack.c.l.bf16 %v35
  %v47 = vunpack.c.l.bf16 %v36
  %v48 = vunpack.c.h.bf16 %v36
  %v49 = vunpack.c.l.bf16 %v37
  %v50 = vld [vmem:[%s2] sm:$0x7]
  %v52 = vlaneseq
  %v53 = vshrl.u32 %v52, 7
  %v54 = vsub.s32 0, %v53
  %v55 = vrot.slane %v50, %v54
  %v56 = vlaneseq
  %v57 = vshrl.u32 %v56, 7
  %v58 = vsub.s32 1, %v57
  %v59 = vrot.slane %v50, %v58
  %v60 = vlaneseq
  %v61 = vshrl.u32 %v60, 7
  %v62 = vsub.s32 2, %v61
  %v63 = vrot.slane %v50, %v62
  %v67 = vmul.f32 %v38, %v55
  %v68 = vmul.f32 %v39, %v59
  %v69 = vmul.f32 %v40, %v63
  %v70 = vmul.f32 %v41, %v55
  %v71 = vmul.f32 %v42, %v59
  %v72 = vmul.f32 %v43, %v63
  %v73 = vmul.f32 %v44, %v55
  %v74 = vmul.f32 %v45, %v59
  %v75 = vmul.f32 %v46, %v63
  %v76 = vmul.f32 %v47, %v55
  %v77 = vmul.f32 %v48, %v59
  %v78 = vmul.f32 %v49, %v63
  %v79 = vld [vmem:[%s3] sm:$0x7]
  %v81 = vlaneseq
  %v82 = vshrl.u32 %v81, 7
  %v83 = vsub.s32 0, %v82
  %v84 = vrot.slane %v79, %v83
  %v85 = vlaneseq
  %v86 = vshrl.u32 %v85, 7
  %v87 = vsub.s32 1, %v86
  %v88 = vrot.slane %v79, %v87
  %v89 = vlaneseq
  %v90 = vshrl.u32 %v89, 7
  %v91 = vsub.s32 2, %v90
  %v92 = vrot.slane %v79, %v91
  %v96 = vadd.f32 %v67, %v84
  %v97 = vadd.f32 %v68, %v88
  %v98 = vadd.f32 %v69, %v92
  %v99 = vadd.f32 %v70, %v84
  %v100 = vadd.f32 %v71, %v88
  %v101 = vadd.f32 %v72, %v92
  %v102 = vadd.f32 %v73, %v84
  %v103 = vadd.f32 %v74, %v88
  %v104 = vadd.f32 %v75, %v92
  %v105 = vadd.f32 %v76, %v84
  %v106 = vadd.f32 %v77, %v88
  %v107 = vadd.f32 %v78, %v92
  %v108 = vmax.f32 %v96, 0.0
  %v109 = vmax.f32 %v97, 0.0
  %v110 = vmax.f32 %v98, 0.0
  %v111 = vmax.f32 %v99, 0.0
  %v112 = vmax.f32 %v100, 0.0
  %v113 = vmax.f32 %v101, 0.0
  %v114 = vmax.f32 %v102, 0.0
  %v115 = vmax.f32 %v103, 0.0
  %v116 = vmax.f32 %v104, 0.0
  %v117 = vmax.f32 %v105, 0.0
  %v118 = vmax.f32 %v106, 0.0
  %v119 = vmax.f32 %v107, 0.0
  %v120 = vpack.c.bf16 %v111, %v108
  %v121 = vpack.c.bf16 %v112, %v109
  %v122 = vpack.c.bf16 %v113, %v110
  %v123 = vpack.c.bf16 %v117, %v114
  %v124 = vpack.c.bf16 %v118, %v115
  %v125 = vpack.c.bf16 %v119, %v116
  %v126 = vld [vmem:[#allocation2] sm:$0xff]
  %v127 = vld [vmem:[#allocation2 + $0x8] sm:$0xff]
  %v128 = vld [vmem:[#allocation2 + $0x10] sm:$0xff]
  %v129 = vld [vmem:[#allocation2 + $0x18] sm:$0xff]
  %v130 = vld [vmem:[%s1] sm:$0xf]
  %v131 = vld [vmem:[%s1 + $0x4] sm:$0xf]
  %v132 = vld [vmem:[%s1 + $0x8] sm:$0xf]
  %v133 = vld [vmem:[%s1 + $0xc] sm:$0xf]
  %v134 = vld [vmem:[%s1 + $0x10] sm:$0xf]
  %v135 = vld [vmem:[%s1 + $0x14] sm:$0xf]
  %v136 = vld [vmem:[%s1 + $0x18] sm:$0xf]
  %v137 = vld [vmem:[%s1 + $0x1c] sm:$0xf]
  %v138 = vld [vmem:[%s1 + $0x20] sm:$0xf]
  %v139 = vld [vmem:[%s1 + $0x24] sm:$0xf]
  %v140 = vld [vmem:[%s1 + $0x28] sm:$0xf]
  %v141 = vld [vmem:[%s1 + $0x2c] sm:$0xf]
  %v142 = vld [vmem:[%s1 + $0x30] sm:$0xf]
  %v143 = vld [vmem:[%s1 + $0x34] sm:$0xf]
  %v144 = vld [vmem:[%s1 + $0x38] sm:$0xf]
  %v145 = vld [vmem:[%s1 + $0x3c] sm:$0xf]
  %v146 = vld [vmem:[%s1 + $0x40] sm:$0xf]
  %v147 = vld [vmem:[%s1 + $0x44] sm:$0xf]
  %v148 = vld [vmem:[%s1 + $0x48] sm:$0xf]
  %v149 = vld [vmem:[%s1 + $0x4c] sm:$0xf]
  %v150 = vld [vmem:[%s1 + $0x50] sm:$0xf]
  %v151 = vld [vmem:[%s1 + $0x54] sm:$0xf]
  %v152 = vld [vmem:[%s1 + $0x58] sm:$0xf]
  %v153 = vld [vmem:[%s1 + $0x5c] sm:$0xf]
  %v154 = vld [vmem:[%s1 + $0x60] sm:$0xf]
  %v155 = vld [vmem:[%s1 + $0x64] sm:$0xf]
  %v156 = vld [vmem:[%s1 + $0x68] sm:$0xf]
  %v157 = vld [vmem:[%s1 + $0x6c] sm:$0xf]
  %v158 = vld [vmem:[%s1 + $0x70] sm:$0xf]
  %v159 = vld [vmem:[%s1 + $0x74] sm:$0xf]
  %v160 = vld [vmem:[%s1 + $0x78] sm:$0xf]
  %v161 = vld [vmem:[%s1 + $0x7c] sm:$0xf]
  %v162 = vld [vmem:[%s1 + $0x80] sm:$0xf]
  %v163 = vld [vmem:[%s1 + $0x84] sm:$0xf]
  %v164 = vld [vmem:[%s1 + $0x88] sm:$0xf]
  %v165 = vld [vmem:[%s1 + $0x8c] sm:$0xf]
  %v202 = vunpack.c.l.b16 %v130
  %v203 = vunpack.c.l.b16 %v131
  %v204 = vunpack.c.l.b16 %v132
  %v205 = vunpack.c.l.b16 %v133
  %v206 = vunpack.c.l.b16 %v134
  %v207 = vunpack.c.l.b16 %v135
  %v208 = vunpack.c.l.b16 %v136
  %v209 = vunpack.c.l.b16 %v137
  %v210 = vunpack.c.l.b16 %v138
  %v211 = vunpack.c.l.b16 %v139
  %v212 = vunpack.c.l.b16 %v140
  %v213 = vunpack.c.l.b16 %v141
  %v214 = vunpack.c.l.b16 %v142
  %v215 = vunpack.c.l.b16 %v143
  %v216 = vunpack.c.l.b16 %v144
  %v217 = vunpack.c.l.b16 %v145
  %v218 = vunpack.c.l.b16 %v146
  %v219 = vunpack.c.l.b16 %v147
  %v220 = vunpack.c.l.b16 %v148
  %v221 = vunpack.c.l.b16 %v149
  %v222 = vunpack.c.l.b16 %v150
  %v223 = vunpack.c.l.b16 %v151
  %v224 = vunpack.c.l.b16 %v152
  %v225 = vunpack.c.l.b16 %v153
  %v226 = vunpack.c.l.b16 %v154
  %v227 = vunpack.c.l.b16 %v155
  %v228 = vunpack.c.l.b16 %v156
  %v229 = vunpack.c.l.b16 %v157
  %v230 = vunpack.c.l.b16 %v158
  %v231 = vunpack.c.l.b16 %v159
  %v232 = vunpack.c.l.b16 %v160
  %v233 = vunpack.c.l.b16 %v161
  %v234 = vunpack.c.l.b16 %v162
  %v235 = vunpack.c.l.b16 %v163
  %v236 = vunpack.c.l.b16 %v164
  %v237 = vunpack.c.l.b16 %v165
  %v238 = vpack.c.b16 %v203, %v202
  %v239 = vpack.c.b16 %v205, %v204
  %v240 = vpack.c.b16 %v207, %v206
  %v241 = vpack.c.b16 %v209, %v208
  %v242 = vpack.c.b16 %v211, %v210
  %v243 = vpack.c.b16 %v213, %v212
  %v244 = vpack.c.b16 %v215, %v214
  %v245 = vpack.c.b16 %v217, %v216
  %v246 = vpack.c.b16 %v219, %v218
  %v247 = vpack.c.b16 %v221, %v220
  %v248 = vpack.c.b16 %v223, %v222
  %v249 = vpack.c.b16 %v225, %v224
  %v250 = vpack.c.b16 %v227, %v226
  %v251 = vpack.c.b16 %v229, %v228
  %v252 = vpack.c.b16 %v231, %v230
  %v253 = vpack.c.b16 %v233, %v232
  %v254 = vpack.c.b16 %v235, %v234
  %v255 = vpack.c.b16 %v237, %v236
  %vm274 = vcmask 261120
  %v276 = vsel %vm274, %v122, 0
  %v279 = vsel %vm274, %v125, 0
  %281 = vmatprep.subr.bf16.mxu0 0
  %282 = vmatpush1.bf16.msra.mxu0 %v238
  %283 = vmatprep.subr.bf16.mxu0 0
  %284 = vmatpush1.bf16.msra.mxu0 %v239
  %285 = vmatprep.subr.bf16.mxu0 0
  %286 = vmatpush1.bf16.msra.mxu0 %v240
  %287 = vmatprep.subr.bf16.mxu0 0
  %288 = vmatpush1.bf16.msra.mxu0 %v241
  %289 = vmatprep.subr.bf16.mxu0 0
  %290 = vmatpush1.bf16.msra.mxu0 %v242
  %291 = vmatprep.subr.bf16.mxu0 0
  %292 = vmatpush1.bf16.msra.mxu0 %v243
  %293 = vmatprep.subr.bf16.mxu0 0
  %294 = vmatpush1.bf16.msra.mxu0 %v244
  %295 = vmatprep.subr.bf16.mxu0 0
  %296 = vmatpush1.bf16.msra.mxu0 %v245
  %297 = vmatprep.subr.bf16.mxu0 0
  %298 = vmatpush1.bf16.msra.mxu0 %v246
  %299 = vmatprep.subr.bf16.mxu0 0
  %300 = vmatpush1.bf16.msra.mxu0 %v247
  %301 = vmatprep.subr.bf16.mxu0 0
  %302 = vmatpush1.bf16.msra.mxu0 %v248
  %303 = vmatprep.subr.bf16.mxu0 0
  %304 = vmatpush1.bf16.msra.mxu0 %v249
  %305 = vmatprep.subr.bf16.mxu0 0
  %306 = vmatpush1.bf16.msra.mxu0 %v250
  %307 = vmatprep.subr.bf16.mxu0 0
  %308 = vmatpush1.bf16.msra.mxu0 %v251
  %309 = vmatprep.subr.bf16.mxu0 0
  %310 = vmatpush1.bf16.msra.mxu0 %v252
  %311 = vmatprep.subr.bf16.mxu0 0
  %312 = vmatpush1.bf16.msra.mxu0 %v253
  %313 = vmatprep.mubr.bf16.mxu0 %v121
  %314 = vmatmul.mubr.bf16.gmra.mrb[0].mxu0 %v120
  %v315 = vpop.f32.mrb[0].mxu0
  %v316 = vadd.f32 0.0, %v315
  %v317 = vpop.f32.mrb[0].mxu0
  %v318 = vpop.f32.mrb[0].mxu0
  %v319 = vadd.f32 0.0, %v318
  %v320 = vpop.f32.mrb[0].mxu0
  %321 = vmatprep.mubr.bf16.mxu0 %v124
  %322 = vmatmul.mubr.bf16.gmra.mrb[0].mxu0 %v123
  %v323 = vpop.f32.mrb[0].mxu0
  %v324 = vadd.f32 0.0, %v323
  %v325 = vpop.f32.mrb[0].mxu0
  %v326 = vpop.f32.mrb[0].mxu0
  %v327 = vadd.f32 0.0, %v326
  %v328 = vpop.f32.mrb[0].mxu0
  %329 = vdwg.mxu0
  %330 = vmatprep.subr.bf16.mxu0 0
  %331 = vmatpush1.bf16.msra.mxu0 %v254
  %332 = vmatprep.subr.bf16.mxu0 0
  %333 = vmatpush1.bf16.msra.mxu0 %v255
  %334 = vmatprep.subr.bf16.mxu0 0
  %335 = vmatpush1.bf16.msra.mxu0 0
  %336 = vmatprep.subr.bf16.mxu0 0
  %337 = vmatpush1.bf16.msra.mxu0 0
  %338 = vmatprep.subr.bf16.mxu0 0
  %339 = vmatpush1.bf16.msra.mxu0 0
  %340 = vmatprep.subr.bf16.mxu0 0
  %341 = vmatpush1.bf16.msra.mxu0 0
  %342 = vmatprep.subr.bf16.mxu0 0
  %343 = vmatpush1.bf16.msra.mxu0 0
  %344 = vmatprep.subr.bf16.mxu0 0
  %345 = vmatpush1.bf16.msra.mxu0 0
  %346 = vmatprep.subr.bf16.mxu0 0
  %347 = vmatpush1.bf16.msra.mxu0 0
  %348 = vmatprep.subr.bf16.mxu0 0
  %349 = vmatpush1.bf16.msra.mxu0 0
  %350 = vmatprep.subr.bf16.mxu0 0
  %351 = vmatpush1.bf16.msra.mxu0 0
  %352 = vmatprep.subr.bf16.mxu0 0
  %353 = vmatpush1.bf16.msra.mxu0 0
  %354 = vmatprep.subr.bf16.mxu0 0
  %355 = vmatpush1.bf16.msra.mxu0 0
  %356 = vmatprep.subr.bf16.mxu0 0
  %357 = vmatpush1.bf16.msra.mxu0 0
  %358 = vmatprep.subr.bf16.mxu0 0
  %359 = vmatpush1.bf16.msra.mxu0 0
  %360 = vmatprep.subr.bf16.mxu0 0
  %361 = vmatpush1.bf16.msra.mxu0 0
  %362 = vmatprep.mubr.bf16.mxu0 0
  %363 = vmatmul.mubr.bf16.gmra.mrb[0].mxu0 %v276
  %v364 = vpop.f32.mrb[0].mxu0
  %v365 = vadd.f32 %v316, %v364
  %v366 = vpop.f32.mrb[0].mxu0
  %v367 = vpop.f32.mrb[0].mxu0
  %v368 = vadd.f32 %v319, %v367
  %v369 = vpop.f32.mrb[0].mxu0
  %370 = vmatprep.mubr.bf16.mxu0 0
  %371 = vmatmul.mubr.bf16.gmra.mrb[0].mxu0 %v279
  %v372 = vpop.f32.mrb[0].mxu0
  %v373 = vadd.f32 %v324, %v372
  %v374 = vpop.f32.mrb[0].mxu0
  %v375 = vpop.f32.mrb[0].mxu0
  %v376 = vadd.f32 %v327, %v375
  %v377 = vpop.f32.mrb[0].mxu0
  %378 = vdwg.mxu0
  %v379 = vadd.f32 %v126, %v365
  %v380 = vadd.f32 %v127, %v368
  %v381 = vadd.f32 %v128, %v373
  %v382 = vadd.f32 %v129, %v376
  %383 = vst.msk [vmem:[#allocation2] sm:$0xff] %vm274, %v379
  %384 = vst.msk [vmem:[#allocation2 + $0x8] sm:$0xff] %vm274, %v380
  %385 = vst.msk [vmem:[#allocation2 + $0x10] sm:$0xff] %vm274, %v381
  %386 = vst.msk [vmem:[#allocation2 + $0x18] sm:$0xff] %vm274, %v382
  // Predicated region
  $region26: #{unet_multihead_rot_forward.19} parent=0 // pred_check
    %p387 = pneg %p21
  $region27: #{unet_multihead_rot_forward.19} parent=0 // pred_check_branch
    %389 = sbr.rel (%p387) target = $region29
  $region28: #{unet_multihead_rot_forward.19} parent=0 // pred_region
    %v390 = vld [vmem:[#allocation2] sm:$0xff]
    %v391 = vld [vmem:[#allocation2 + $0x8] sm:$0xff]
    %v392 = vld [vmem:[#allocation2 + $0x10] sm:$0xff]
    %v393 = vld [vmem:[#allocation2 + $0x18] sm:$0xff]
    %v394 = vld [vmem:[%s4] sm:$0x1]
    %v396 = vlaneseq
    %v397 = vshrl.u32 %v396, 7
    %v398 = vsub.s32 0, %v397
    %v399 = vrot.slane %v394, %v398
    %v401 = vadd.f32 %v390, %v399
    %v402 = vadd.f32 %v391, %v399
    %v403 = vadd.f32 %v392, %v399
    %v404 = vadd.f32 %v393, %v399
    %405 = vst.msk [vmem:[%s5] sm:$0xff] %vm274, %v401
    %406 = vst.msk [vmem:[%s5 + $0x8] sm:$0xff] %vm274, %v402
    %407 = vst.msk [vmem:[%s5 + $0x10] sm:$0xff] %vm274, %v403
    %408 = vst.msk [vmem:[%s5 + $0x18] sm:$0xff] %vm274, %v404
  $region29: #{unet_multihead_rot_forward.19} parent=0 // pred_fallthru
    _
  // Predicated region
  $region30: #{unet_multihead_rot_forward.19} parent=0 // pred_check
    _
  $region31: #{unet_multihead_rot_forward.19} parent=0 // pred_check_branch
    %410 = sbr.rel (0) target = $region33
  $region32: #{unet_multihead_rot_forward.19} parent=0 // pred_region
    _
  $region33: #{unet_multihead_rot_forward.19} parent=0 // pred_fallthru
    _
  // Predicated region
  $region34: #{unet_multihead_rot_forward.19} parent=0 // pred_check
    _
  $region35: #{unet_multihead_rot_forward.19} parent=0 // pred_check_branch
    %412 = sbr.rel (0) target = $region37
  $region36: #{unet_multihead_rot_forward.19} parent=0 // pred_region
    _
  $region37: #{unet_multihead_rot_forward.19} parent=0 // pred_fallthru
    _

// kernel: tile.223
$region0: #{tile.223}
  #allocation0 [shape = 's32[1]{0}', space=sflag, size = 0x4, scoped, tag = 'scoped memory for tile.223']
  %s0 = inlined_call_operand.vmem [shape: f32[16], index: 0, kind: input, shape index: {}]
  %s1 = inlined_call_operand.vmem [shape: f32[9,16], index: 1, kind: output, shape index: {}]
  // Predicated region
  $region2: #{tile.223} parent=0 // pred_check
    _
  $region3: #{tile.223} parent=0 // pred_check_branch
    %3 = sbr.rel (0) target = $region5
  $region4: #{tile.223} parent=0 // pred_region
    _
  $region5: #{tile.223} parent=0 // pred_fallthru
    _
  %v4 = vld [vmem:[%s0] ss:$0 sm:$0xff]
  %5 = vst [vmem:[%s1] sm:$0xff] %v4
  %s6 = scalar_lea.vmem %s1, 8
  %7 = vst [vmem:[%s6] sm:$0xff] %v4

// kernel: tile.228
$region0: #{tile.228}
  #allocation0 [shape = 's32[1]{0}', space=sflag, size = 0x4, scoped, tag = 'scoped memory for tile.228']
  %s0 = inlined_call_operand.vmem [shape: f32[8], index: 0, kind: input, shape index: {}]
  %s1 = inlined_call_operand.vmem [shape: f32[4,8], index: 1, kind: output, shape index: {}]
  // Predicated region
  $region2: #{tile.228} parent=0 // pred_check
    _
  $region3: #{tile.228} parent=0 // pred_check_branch
    %3 = sbr.rel (0) target = $region5
  $region4: #{tile.228} parent=0 // pred_region
    _
  $region5: #{tile.228} parent=0 // pred_fallthru
    _
  %v4 = vld [vmem:[%s0] ss:$0 sm:$0xff]
  %5 = vst [vmem:[%s1] sm:$0xf] %v4

// kernel: unet_multihead_rot_forward.24
$region0: #{unet_multihead_rot_forward.24}
  #allocation0 [shape = 'u32[]', space=smem, size = 0x4, offset = 0x4, fixed_abs, tag = 'smem constant byte address 0x4 - core index']
  #allocation1 [shape = 'u32[144,128]{1,0:T(1,128)}', space=vmem, size = 0x12000, scoped, tag = 'internal scratch']
  #allocation2 [shape = 'f32[128,32]{1,0:T(8,128)}', space=vmem, size = 0x10000, scoped, tag = 'scratch operand']
  %s0 = inlined_call_operand.vmem [shape: bf16[128,144], index: 0, kind: input, shape index: {}]
  %s1 = inlined_call_operand.vmem [shape: bf16[144,32], index: 1, kind: input, shape index: {}]
  %s2 = inlined_call_operand.vmem [shape: f32[1,144], index: 2, kind: input, shape index: {}]
  %s3 = inlined_call_operand.vmem [shape: f32[1,144], index: 3, kind: input, shape index: {}]
  %s4 = inlined_call_operand.vmem [shape: f32[1,32], index: 4, kind: input, shape index: {}]
  %s5 = inlined_call_operand.vmem [shape: f32[1,8], index: 5, kind: input, shape index: {}]
  %s6 = inlined_call_operand.vmem [shape: f32[128,32], index: 6, kind: output, shape index: {0}]
  %s7 = inlined_call_operand.vmem [shape: f32[128,4], index: 7, kind: output, shape index: {1}]
  %8 = xla_tuple %s6, %s7
  %s9 = sld [smem:[#allocation0]]
  $region50: #{unet_multihead_rot_forward.24} parent=0
    _
  %s11 = ssub.s32 1, %s9
  %s12 = scalar_select 0, %s11, %s9
  // Predicated region
  $region2: #{unet_multihead_rot_forward.24} parent=0 // pred_check
    _
  $region3: #{unet_multihead_rot_forward.24} parent=0 // pred_check_branch
    %14 = sbr.rel (0) target = $region5
  $region4: #{unet_multihead_rot_forward.24} parent=0 // pred_region
    _
  $region5: #{unet_multihead_rot_forward.24} parent=0 // pred_fallthru
    _
  // Predicated region
  $region6: #{unet_multihead_rot_forward.24} parent=0 // pred_check
    _
  $region7: #{unet_multihead_rot_forward.24} parent=0 // pred_check_branch
    %16 = sbr.rel (0) target = $region9
  $region8: #{unet_multihead_rot_forward.24} parent=0 // pred_region
    _
  $region9: #{unet_multihead_rot_forward.24} parent=0 // pred_fallthru
    _
  // Predicated region
  $region10: #{unet_multihead_rot_forward.24} parent=0 // pred_check
    _
  $region11: #{unet_multihead_rot_forward.24} parent=0 // pred_check_branch
    %18 = sbr.rel (0) target = $region13
  $region12: #{unet_multihead_rot_forward.24} parent=0 // pred_region
    _
  $region13: #{unet_multihead_rot_forward.24} parent=0 // pred_fallthru
    _
  // Predicated region
  $region14: #{unet_multihead_rot_forward.24} parent=0 // pred_check
    _
  $region15: #{unet_multihead_rot_forward.24} parent=0 // pred_check_branch
    %20 = sbr.rel (0) target = $region17
  $region16: #{unet_multihead_rot_forward.24} parent=0 // pred_region
    _
  $region17: #{unet_multihead_rot_forward.24} parent=0 // pred_fallthru
    _
  // Predicated region
  $region18: #{unet_multihead_rot_forward.24} parent=0 // pred_check
    _
  $region19: #{unet_multihead_rot_forward.24} parent=0 // pred_check_branch
    %22 = sbr.rel (0) target = $region21
  $region20: #{unet_multihead_rot_forward.24} parent=0 // pred_region
    _
  $region21: #{unet_multihead_rot_forward.24} parent=0 // pred_fallthru
    _
  // Predicated region
  $region22: #{unet_multihead_rot_forward.24} parent=0 // pred_check
    _
  $region23: #{unet_multihead_rot_forward.24} parent=0 // pred_check_branch
    %24 = sbr.rel (0) target = $region25
  $region24: #{unet_multihead_rot_forward.24} parent=0 // pred_region
    _
  $region25: #{unet_multihead_rot_forward.24} parent=0 // pred_fallthru
    _
  %p26 = scmp.eq.s32.totalorder 0, 0
  // Predicated region
  $region26: #{unet_multihead_rot_forward.24} parent=0 // pred_check
    %p27 = pneg %p26
  $region27: #{unet_multihead_rot_forward.24} parent=0 // pred_check_branch
    %29 = sbr.rel (%p27) target = $region29
  $region28: #{unet_multihead_rot_forward.24} parent=0 // pred_region
    %vm30 = vcmask 261120
    %31 = vst.msk [vmem:[#allocation2] sm:$0xff] %vm30, 0.0
    %32 = vst.msk [vmem:[#allocation2 + $0x8] sm:$0xff] %vm30, 0.0
    %33 = vst.msk [vmem:[#allocation2 + $0x10] sm:$0xff] %vm30, 0.0
    %34 = vst.msk [vmem:[#allocation2 + $0x18] sm:$0xff] %vm30, 0.0
    %35 = vst.msk [vmem:[#allocation2 + $0x20] sm:$0xff] %vm30, 0.0
    %36 = vst.msk [vmem:[#allocation2 + $0x28] sm:$0xff] %vm30, 0.0
    %37 = vst.msk [vmem:[#allocation2 + $0x30] sm:$0xff] %vm30, 0.0
    %38 = vst.msk [vmem:[#allocation2 + $0x38] sm:$0xff] %vm30, 0.0
    %39 = vst.msk [vmem:[#allocation2 + $0x40] sm:$0xff] %vm30, 0.0
    %40 = vst.msk [vmem:[#allocation2 + $0x48] sm:$0xff] %vm30, 0.0
    %41 = vst.msk [vmem:[#allocation2 + $0x50] sm:$0xff] %vm30, 0.0
    %42 = vst.msk [vmem:[#allocation2 + $0x58] sm:$0xff] %vm30, 0.0
    %43 = vst.msk [vmem:[#allocation2 + $0x60] sm:$0xff] %vm30, 0.0
    %44 = vst.msk [vmem:[#allocation2 + $0x68] sm:$0xff] %vm30, 0.0
    %45 = vst.msk [vmem:[#allocation2 + $0x70] sm:$0xff] %vm30, 0.0
    %46 = vst.msk [vmem:[#allocation2 + $0x78] sm:$0xff] %vm30, 0.0
  $region29: #{unet_multihead_rot_forward.24} parent=0 // pred_fallthru
    _
  %v47 = vld [vmem:[%s0] sm:$0xff]
  %v48 = vld [vmem:[%s0 + $0x8] sm:$0xff]
  %v49 = vld [vmem:[%s0 + $0x10] sm:$0xff]
  %v50 = vld [vmem:[%s0 + $0x18] sm:$0xff]
  %v51 = vld [vmem:[%s0 + $0x20] sm:$0xff]
  %v52 = vld [vmem:[%s0 + $0x28] sm:$0xff]
  %v53 = vld [vmem:[%s0 + $0x30] sm:$0xff]
  %v54 = vld [vmem:[%s0 + $0x38] sm:$0xff]
  %v55 = vld [vmem:[%s0 + $0x40] sm:$0xff]
  %v56 = vld [vmem:[%s0 + $0x48] sm:$0xff]
  %v57 = vld [vmem:[%s0 + $0x50] sm:$0xff]
  %v58 = vld [vmem:[%s0 + $0x58] sm:$0xff]
  %v59 = vld [vmem:[%s0 + $0x60] sm:$0xff]
  %v60 = vld [vmem:[%s0 + $0x68] sm:$0xff]
  %v61 = vld [vmem:[%s0 + $0x70] sm:$0xff]
  %v62 = vld [vmem:[%s0 + $0x78] sm:$0xff]
  %v63 = vunpack.c.l.bf16 %v47
  %v64 = vunpack.c.h.bf16 %v47
  %v65 = vunpack.c.l.bf16 %v48
  %v66 = vunpack.c.h.bf16 %v48
  %v67 = vunpack.c.l.bf16 %v49
  %v68 = vunpack.c.h.bf16 %v49
  %v69 = vunpack.c.l.bf16 %v50
  %v70 = vunpack.c.h.bf16 %v50
  %v71 = vunpack.c.l.bf16 %v51
  %v72 = vunpack.c.h.bf16 %v51
  %v73 = vunpack.c.l.bf16 %v52
  %v74 = vunpack.c.h.bf16 %v52
  %v75 = vunpack.c.l.bf16 %v53
  %v76 = vunpack.c.h.bf16 %v53
  %v77 = vunpack.c.l.bf16 %v54
  %v78 = vunpack.c.h.bf16 %v54
  %v79 = vunpack.c.l.bf16 %v55
  %v80 = vunpack.c.h.bf16 %v55
  %v81 = vunpack.c.l.bf16 %v56
  %v82 = vunpack.c.h.bf16 %v56
  %v83 = vunpack.c.l.bf16 %v57
  %v84 = vunpack.c.h.bf16 %v57
  %v85 = vunpack.c.l.bf16 %v58
  %v86 = vunpack.c.h.bf16 %v58
  %v87 = vunpack.c.l.bf16 %v59
  %v88 = vunpack.c.h.bf16 %v59
  %v89 = vunpack.c.l.bf16 %v60
  %v90 = vunpack.c.h.bf16 %v60
  %v91 = vunpack.c.l.bf16 %v61
  %v92 = vunpack.c.h.bf16 %v61
  %v93 = vunpack.c.l.bf16 %v62
  %v94 = vunpack.c.h.bf16 %v62
  %v95 = vld [vmem:[%s2] sm:$0x3]
  %v97 = vlaneseq
  %v98 = vshrl.u32 %v97, 7
  %v99 = vsub.s32 0, %v98
  %v100 = vrot.slane %v95, %v99
  %v101 = vlaneseq
  %v102 = vshrl.u32 %v101, 7
  %v103 = vsub.s32 1, %v102
  %v104 = vrot.slane %v95, %v103
  %v107 = vmul.f32 %v63, %v100
  %v108 = vmul.f32 %v64, %v104
  %v109 = vmul.f32 %v65, %v100
  %v110 = vmul.f32 %v66, %v104
  %v111 = vmul.f32 %v67, %v100
  %v112 = vmul.f32 %v68, %v104
  %v113 = vmul.f32 %v69, %v100
  %v114 = vmul.f32 %v70, %v104
  %v115 = vmul.f32 %v71, %v100
  %v116 = vmul.f32 %v72, %v104
  %v117 = vmul.f32 %v73, %v100
  %v118 = vmul.f32 %v74, %v104
  %v119 = vmul.f32 %v75, %v100
  %v120 = vmul.f32 %v76, %v104
  %v121 = vmul.f32 %v77, %v100
  %v122 = vmul.f32 %v78, %v104
  %v123 = vmul.f32 %v79, %v100
  %v124 = vmul.f32 %v80, %v104
  %v125 = vmul.f32 %v81, %v100
  %v126 = vmul.f32 %v82, %v104
  %v127 = vmul.f32 %v83, %v100
  %v128 = vmul.f32 %v84, %v104
  %v129 = vmul.f32 %v85, %v100
  %v130 = vmul.f32 %v86, %v104
  %v131 = vmul.f32 %v87, %v100
  %v132 = vmul.f32 %v88, %v104
  %v133 = vmul.f32 %v89, %v100
  %v134 = vmul.f32 %v90, %v104
  %v135 = vmul.f32 %v91, %v100
  %v136 = vmul.f32 %v92, %v104
  %v137 = vmul.f32 %v93, %v100
  %v138 = vmul.f32 %v94, %v104
  %v139 = vld [vmem:[%s3] sm:$0x3]
  %v141 = vlaneseq
  %v142 = vshrl.u32 %v141, 7
  %v143 = vsub.s32 0, %v142
  %v144 = vrot.slane %v139, %v143
  %v145 = vlaneseq
  %v146 = vshrl.u32 %v145, 7
  %v147 = vsub.s32 1, %v146
  %v148 = vrot.slane %v139, %v147
  %v151 = vadd.f32 %v107, %v144
  %v152 = vadd.f32 %v108, %v148
  %v153 = vadd.f32 %v109, %v144
  %v154 = vadd.f32 %v110, %v148
  %v155 = vadd.f32 %v111, %v144
  %v156 = vadd.f32 %v112, %v148
  %v157 = vadd.f32 %v113, %v144
  %v158 = vadd.f32 %v114, %v148
  %v159 = vadd.f32 %v115, %v144
  %v160 = vadd.f32 %v116, %v148
  %v161 = vadd.f32 %v117, %v144
  %v162 = vadd.f32 %v118, %v148
  %v163 = vadd.f32 %v119, %v144
  %v164 = vadd.f32 %v120, %v148
  %v165 = vadd.f32 %v121, %v144
  %v166 = vadd.f32 %v122, %v148
  %v167 = vadd.f32 %v123, %v144
  %v168 = vadd.f32 %v124, %v148
  %v169 = vadd.f32 %v125, %v144
  %v170 = vadd.f32 %v126, %v148
  %v171 = vadd.f32 %v127, %v144
  %v172 = vadd.f32 %v128, %v148
  %v173 = vadd.f32 %v129, %v144
  %v174 = vadd.f32 %v130, %v148
  %v175 = vadd.f32 %v131, %v144
  %v176 = vadd.f32 %v132, %v148
  %v177 = vadd.f32 %v133, %v144
  %v178 = vadd.f32 %v134, %v148
  %v179 = vadd.f32 %v135, %v144
  %v180 = vadd.f32 %v136, %v148
  %v181 = vadd.f32 %v137, %v144
  %v182 = vadd.f32 %v138, %v148
  %v183 = vmax.f32 %v151, 0.0
  %v184 = vmax.f32 %v152, 0.0
  %v185 = vmax.f32 %v153, 0.0
  %v186 = vmax.f32 %v154, 0.0
  %v187 = vmax.f32 %v155, 0.0
  %v188 = vmax.f32 %v156, 0.0
  %v189 = vmax.f32 %v157, 0.0
  %v190 = vmax.f32 %v158, 0.0
  %v191 = vmax.f32 %v159, 0.0
  %v192 = vmax.f32 %v160, 0.0
  %v193 = vmax.f32 %v161, 0.0
  %v194 = vmax.f32 %v162, 0.0
  %v195 = vmax.f32 %v163, 0.0
  %v196 = vmax.f32 %v164, 0.0
  %v197 = vmax.f32 %v165, 0.0
  %v198 = vmax.f32 %v166, 0.0
  %v199 = vmax.f32 %v167, 0.0
  %v200 = vmax.f32 %v168, 0.0
  %v201 = vmax.f32 %v169, 0.0
  %v202 = vmax.f32 %v170, 0.0
  %v203 = vmax.f32 %v171, 0.0
  %v204 = vmax.f32 %v172, 0.0
  %v205 = vmax.f32 %v173, 0.0
  %v206 = vmax.f32 %v174, 0.0
  %v207 = vmax.f32 %v175, 0.0
  %v208 = vmax.f32 %v176, 0.0
  %v209 = vmax.f32 %v177, 0.0
  %v210 = vmax.f32 %v178, 0.0
  %v211 = vmax.f32 %v179, 0.0
  %v212 = vmax.f32 %v180, 0.0
  %v213 = vmax.f32 %v181, 0.0
  %v214 = vmax.f32 %v182, 0.0
  %v215 = vpack.c.bf16 %v185, %v183
  %v216 = vpack.c.bf16 %v186, %v184
  %v217 = vpack.c.bf16 %v189, %v187
  %v218 = vpack.c.bf16 %v190, %v188
  %v219 = vpack.c.bf16 %v193, %v191
  %v220 = vpack.c.bf16 %v194, %v192
  %v221 = vpack.c.bf16 %v197, %v195
  %v222 = vpack.c.bf16 %v198, %v196
  %v223 = vpack.c.bf16 %v201, %v199
  %v224 = vpack.c.bf16 %v202, %v200
  %v225 = vpack.c.bf16 %v205, %v203
  %v226 = vpack.c.bf16 %v206, %v204
  %v227 = vpack.c.bf16 %v209, %v207
  %v228 = vpack.c.bf16 %v210, %v208
  %v229 = vpack.c.bf16 %v213, %v211
  %v230 = vpack.c.bf16 %v214, %v212
  %v231 = vld [vmem:[#allocation2] sm:$0xff]
  %v232 = vld [vmem:[#allocation2 + $0x8] sm:$0xff]
  %v233 = vld [vmem:[#allocation2 + $0x10] sm:$0xff]
  %v234 = vld [vmem:[#allocation2 + $0x18] sm:$0xff]
  %v235 = vld [vmem:[#allocation2 + $0x20] sm:$0xff]
  %v236 = vld [vmem:[#allocation2 + $0x28] sm:$0xff]
  %v237 = vld [vmem:[#allocation2 + $0x30] sm:$0xff]
  %v238 = vld [vmem:[#allocation2 + $0x38] sm:$0xff]
  %v239 = vld [vmem:[#allocation2 + $0x40] sm:$0xff]
  %v240 = vld [vmem:[#allocation2 + $0x48] sm:$0xff]
  %v241 = vld [vmem:[#allocation2 + $0x50] sm:$0xff]
  %v242 = vld [vmem:[#allocation2 + $0x58] sm:$0xff]
  %v243 = vld [vmem:[#allocation2 + $0x60] sm:$0xff]
  %v244 = vld [vmem:[#allocation2 + $0x68] sm:$0xff]
  %v245 = vld [vmem:[#allocation2 + $0x70] sm:$0xff]
  %v246 = vld [vmem:[#allocation2 + $0x78] sm:$0xff]
  %v247 = vld [vmem:[%s1] sm:$0xf]
  %v248 = vld [vmem:[%s1 + $0x4] sm:$0xf]
  %v249 = vld [vmem:[%s1 + $0x8] sm:$0xf]
  %v250 = vld [vmem:[%s1 + $0xc] sm:$0xf]
  %v251 = vld [vmem:[%s1 + $0x10] sm:$0xf]
  %v252 = vld [vmem:[%s1 + $0x14] sm:$0xf]
  %v253 = vld [vmem:[%s1 + $0x18] sm:$0xf]
  %v254 = vld [vmem:[%s1 + $0x1c] sm:$0xf]
  %v255 = vld [vmem:[%s1 + $0x20] sm:$0xf]
  %v256 = vld [vmem:[%s1 + $0x24] sm:$0xf]
  %v257 = vld [vmem:[%s1 + $0x28] sm:$0xf]
  %v258 = vld [vmem:[%s1 + $0x2c] sm:$0xf]
  %v259 = vld [vmem:[%s1 + $0x30] sm:$0xf]
  %v260 = vld [vmem:[%s1 + $0x34] sm:$0xf]
  %v261 = vld [vmem:[%s1 + $0x38] sm:$0xf]
  %v262 = vld [vmem:[%s1 + $0x3c] sm:$0xf]
  %v263 = vld [vmem:[%s1 + $0x40] sm:$0xf]
  %v264 = vld [vmem:[%s1 + $0x44] sm:$0xf]
  %v283 = vunpack.c.l.b16 %v247
  %v284 = vunpack.c.l.b16 %v248
  %v285 = vunpack.c.l.b16 %v249
  %v286 = vunpack.c.l.b16 %v250
  %v287 = vunpack.c.l.b16 %v251
  %v288 = vunpack.c.l.b16 %v252
  %v289 = vunpack.c.l.b16 %v253
  %v290 = vunpack.c.l.b16 %v254
  %v291 = vunpack.c.l.b16 %v255
  %v292 = vunpack.c.l.b16 %v256
  %v293 = vunpack.c.l.b16 %v257
  %v294 = vunpack.c.l.b16 %v258
  %v295 = vunpack.c.l.b16 %v259
  %v296 = vunpack.c.l.b16 %v260
  %v297 = vunpack.c.l.b16 %v261
  %v298 = vunpack.c.l.b16 %v262
  %v299 = vunpack.c.l.b16 %v263
  %v300 = vunpack.c.l.b16 %v264
  %v301 = vpack.c.b16 %v284, %v283
  %v302 = vpack.c.b16 %v286, %v285
  %v303 = vpack.c.b16 %v288, %v287
  %v304 = vpack.c.b16 %v290, %v289
  %v305 = vpack.c.b16 %v292, %v291
  %v306 = vpack.c.b16 %v294, %v293
  %v307 = vpack.c.b16 %v296, %v295
  %v308 = vpack.c.b16 %v298, %v297
  %v309 = vpack.c.b16 %v300, %v299
  %vm319 = vcmask 130048
  %v321 = vsel %vm319, %v216, 0
  %v324 = vsel %vm319, %v218, 0
  %v327 = vsel %vm319, %v220, 0
  %v330 = vsel %vm319, %v222, 0
  %v333 = vsel %vm319, %v224, 0
  %v336 = vsel %vm319, %v226, 0
  %v339 = vsel %vm319, %v228, 0
  %v342 = vsel %vm319, %v230, 0
  %344 = vmatprep.subr.bf16.mxu0 0
  %345 = vmatpush1.bf16.msra.mxu0 %v301
  %346 = vmatprep.subr.bf16.mxu0 0
  %347 = vmatpush1.bf16.msra.mxu0 %v302
  %348 = vmatprep.subr.bf16.mxu0 0
  %349 = vmatpush1.bf16.msra.mxu0 %v303
  %350 = vmatprep.subr.bf16.mxu0 0
  %351 = vmatpush1.bf16.msra.mxu0 %v304
  %352 = vmatprep.subr.bf16.mxu0 0
  %353 = vmatpush1.bf16.msra.mxu0 %v305
  %354 = vmatprep.subr.bf16.mxu0 0
  %355 = vmatpush1.bf16.msra.mxu0 %v306
  %356 = vmatprep.subr.bf16.mxu0 0
  %357 = vmatpush1.bf16.msra.mxu0 %v307
  %358 = vmatprep.subr.bf16.mxu0 0
  %359 = vmatpush1.bf16.msra.mxu0 %v308
  %360 = vmatprep.subr.bf16.mxu0 0
  %361 = vmatpush1.bf16.msra.mxu0 %v309
  %362 = vmatprep.subr.bf16.mxu0 0
  %363 = vmatpush1.bf16.msra.mxu0 0
  %364 = vmatprep.subr.bf16.mxu0 0
  %365 = vmatpush1.bf16.msra.mxu0 0
  %366 = vmatprep.subr.bf16.mxu0 0
  %367 = vmatpush1.bf16.msra.mxu0 0
  %368 = vmatprep.subr.bf16.mxu0 0
  %369 = vmatpush1.bf16.msra.mxu0 0
  %370 = vmatprep.subr.bf16.mxu0 0
  %371 = vmatpush1.bf16.msra.mxu0 0
  %372 = vmatprep.subr.bf16.mxu0 0
  %373 = vmatpush1.bf16.msra.mxu0 0
  %374 = vmatprep.subr.bf16.mxu0 0
  %375 = vmatpush1.bf16.msra.mxu0 0
  %376 = vmatprep.mubr.bf16.mxu0 %v321
  %377 = vmatmul.mubr.bf16.gmra.mrb[0].mxu0 %v215
  %v378 = vpop.f32.mrb[0].mxu0
  %v379 = vadd.f32 0.0, %v378
  %v380 = vpop.f32.mrb[0].mxu0
  %v381 = vpop.f32.mrb[0].mxu0
  %v382 = vadd.f32 0.0, %v381
  %v383 = vpop.f32.mrb[0].mxu0
  %384 = vmatprep.mubr.bf16.mxu0 %v324
  %385 = vmatmul.mubr.bf16.gmra.mrb[0].mxu0 %v217
  %v386 = vpop.f32.mrb[0].mxu0
  %v387 = vadd.f32 0.0, %v386
  %v388 = vpop.f32.mrb[0].mxu0
  %v389 = vpop.f32.mrb[0].mxu0
  %v390 = vadd.f32 0.0, %v389
  %v391 = vpop.f32.mrb[0].mxu0
  %392 = vmatprep.mubr.bf16.mxu0 %v327
  %393 = vmatmul.mubr.bf16.gmra.mrb[0].mxu0 %v219
  %v394 = vpop.f32.mrb[0].mxu0
  %v395 = vadd.f32 0.0, %v394
  %v396 = vpop.f32.mrb[0].mxu0
  %v397 = vpop.f32.mrb[0].mxu0
  %v398 = vadd.f32 0.0, %v397
  %v399 = vpop.f32.mrb[0].mxu0
  %400 = vmatprep.mubr.bf16.mxu0 %v330
  %401 = vmatmul.mubr.bf16.gmra.mrb[0].mxu0 %v221
  %v402 = vpop.f32.mrb[0].mxu0
  %v403 = vadd.f32 0.0, %v402
  %v404 = vpop.f32.mrb[0].mxu0
  %v405 = vpop.f32.mrb[0].mxu0
  %v406 = vadd.f32 0.0, %v405
  %v407 = vpop.f32.mrb[0].mxu0
  %408 = vmatprep.mubr.bf16.mxu0 %v333
  %409 = vmatmul.mubr.bf16.gmra.mrb[0].mxu0 %v223
  %v410 = vpop.f32.mrb[0].mxu0
  %v411 = vadd.f32 0.0, %v410
  %v412 = vpop.f32.mrb[0].mxu0
  %v413 = vpop.f32.mrb[0].mxu0
  %v414 = vadd.f32 0.0, %v413
  %v415 = vpop.f32.mrb[0].mxu0
  %416 = vmatprep.mubr.bf16.mxu0 %v336
  %417 = vmatmul.mubr.bf16.gmra.mrb[0].mxu0 %v225
  %v418 = vpop.f32.mrb[0].mxu0
  %v419 = vadd.f32 0.0, %v418
  %v420 = vpop.f32.mrb[0].mxu0
  %v421 = vpop.f32.mrb[0].mxu0
  %v422 = vadd.f32 0.0, %v421
  %v423 = vpop.f32.mrb[0].mxu0
  %424 = vmatprep.mubr.bf16.mxu0 %v339
  %425 = vmatmul.mubr.bf16.gmra.mrb[0].mxu0 %v227
  %v426 = vpop.f32.mrb[0].mxu0
  %v427 = vadd.f32 0.0, %v426
  %v428 = vpop.f32.mrb[0].mxu0
  %v429 = vpop.f32.mrb[0].mxu0
  %v430 = vadd.f32 0.0, %v429
  %v431 = vpop.f32.mrb[0].mxu0
  %432 = vmatprep.mubr.bf16.mxu0 %v342
  %433 = vmatmul.mubr.bf16.gmra.mrb[0].mxu0 %v229
  %v434 = vpop.f32.mrb[0].mxu0
  %v435 = vadd.f32 0.0, %v434
  %v436 = vpop.f32.mrb[0].mxu0
  %v437 = vpop.f32.mrb[0].mxu0
  %v438 = vadd.f32 0.0, %v437
  %v439 = vpop.f32.mrb[0].mxu0
  %440 = vdwg.mxu0
  %v441 = vadd.f32 %v231, %v379
  %v442 = vadd.f32 %v232, %v382
  %v443 = vadd.f32 %v233, %v387
  %v444 = vadd.f32 %v234, %v390
  %v445 = vadd.f32 %v235, %v395
  %v446 = vadd.f32 %v236, %v398
  %v447 = vadd.f32 %v237, %v403
  %v448 = vadd.f32 %v238, %v406
  %v449 = vadd.f32 %v239, %v411
  %v450 = vadd.f32 %v240, %v414
  %v451 = vadd.f32 %v241, %v419
  %v452 = vadd.f32 %v242, %v422
  %v453 = vadd.f32 %v243, %v427
  %v454 = vadd.f32 %v244, %v430
  %v455 = vadd.f32 %v245, %v435
  %v456 = vadd.f32 %v246, %v438
  %vm457 = vcmask 261120
  %458 = vst.msk [vmem:[#allocation2] sm:$0xff] %vm457, %v441
  %459 = vst.msk [vmem:[#allocation2 + $0x8] sm:$0xff] %vm457, %v442
  %460 = vst.msk [vmem:[#allocation2 + $0x10] sm:$0xff] %vm457, %v443
  %461 = vst.msk [vmem:[#allocation2 + $0x18] sm:$0xff] %vm457, %v444
  %462 = vst.msk [vmem:[#allocation2 + $0x20] sm:$0xff] %vm457, %v445
  %463 = vst.msk [vmem:[#allocation2 + $0x28] sm:$0xff] %vm457, %v446
  %464 = vst.msk [vmem:[#allocation2 + $0x30] sm:$0xff] %vm457, %v447
  %465 = vst.msk [vmem:[#allocation2 + $0x38] sm:$0xff] %vm457, %v448
  %466 = vst.msk [vmem:[#allocation2 + $0x40] sm:$0xff] %vm457, %v449
  %467 = vst.msk [vmem:[#allocation2 + $0x48] sm:$0xff] %vm457, %v450
  %468 = vst.msk [vmem:[#allocation2 + $0x50] sm:$0xff] %vm457, %v451
  %469 = vst.msk [vmem:[#allocation2 + $0x58] sm:$0xff] %vm457, %v452
  %470 = vst.msk [vmem:[#allocation2 + $0x60] sm:$0xff] %vm457, %v453
  %471 = vst.msk [vmem:[#allocation2 + $0x68] sm:$0xff] %vm457, %v454
  %472 = vst.msk [vmem:[#allocation2 + $0x70] sm:$0xff] %vm457, %v455
  %473 = vst.msk [vmem:[#allocation2 + $0x78] sm:$0xff] %vm457, %v456
  // Predicated region
  $region30: #{unet_multihead_rot_forward.24} parent=0 // pred_check
    %p474 = pneg %p26
  $region31: #{unet_multihead_rot_forward.24} parent=0 // pred_check_branch
    %476 = sbr.rel (%p474) target = $region33
  $region32: #{unet_multihead_rot_forward.24} parent=0 // pred_region
    %v477 = vld [vmem:[#allocation2] sm:$0xff]
    %v478 = vld [vmem:[#allocation2 + $0x8] sm:$0xff]
    %v479 = vld [vmem:[#allocation2 + $0x10] sm:$0xff]
    %v480 = vld [vmem:[#allocation2 + $0x18] sm:$0xff]
    %v481 = vld [vmem:[#allocation2 + $0x20] sm:$0xff]
    %v482 = vld [vmem:[#allocation2 + $0x28] sm:$0xff]
    %v483 = vld [vmem:[#allocation2 + $0x30] sm:$0xff]
    %v484 = vld [vmem:[#allocation2 + $0x38] sm:$0xff]
    %v485 = vld [vmem:[#allocation2 + $0x40] sm:$0xff]
    %v486 = vld [vmem:[#allocation2 + $0x48] sm:$0xff]
    %v487 = vld [vmem:[#allocation2 + $0x50] sm:$0xff]
    %v488 = vld [vmem:[#allocation2 + $0x58] sm:$0xff]
    %v489 = vld [vmem:[#allocation2 + $0x60] sm:$0xff]
    %v490 = vld [vmem:[#allocation2 + $0x68] sm:$0xff]
    %v491 = vld [vmem:[#allocation2 + $0x70] sm:$0xff]
    %v492 = vld [vmem:[#allocation2 + $0x78] sm:$0xff]
    %v493 = vld [vmem:[%s4] sm:$0x1]
    %v495 = vlaneseq
    %v496 = vshrl.u32 %v495, 7
    %v497 = vsub.s32 0, %v496
    %v498 = vrot.slane %v493, %v497
    %v500 = vadd.f32 %v477, %v498
    %v501 = vadd.f32 %v478, %v498
    %v502 = vadd.f32 %v479, %v498
    %v503 = vadd.f32 %v480, %v498
    %v504 = vadd.f32 %v481, %v498
    %v505 = vadd.f32 %v482, %v498
    %v506 = vadd.f32 %v483, %v498
    %v507 = vadd.f32 %v484, %v498
    %v508 = vadd.f32 %v485, %v498
    %v509 = vadd.f32 %v486, %v498
    %v510 = vadd.f32 %v487, %v498
    %v511 = vadd.f32 %v488, %v498
    %v512 = vadd.f32 %v489, %v498
    %v513 = vadd.f32 %v490, %v498
    %v514 = vadd.f32 %v491, %v498
    %v515 = vadd.f32 %v492, %v498
    %516 = vst.msk [vmem:[%s6] sm:$0xff] %vm457, %v500
    %517 = vst.msk [vmem:[%s6 + $0x8] sm:$0xff] %vm457, %v501
    %518 = vst.msk [vmem:[%s6 + $0x10] sm:$0xff] %vm457, %v502
    %519 = vst.msk [vmem:[%s6 + $0x18] sm:$0xff] %vm457, %v503
    %520 = vst.msk [vmem:[%s6 + $0x20] sm:$0xff] %vm457, %v504
    %521 = vst.msk [vmem:[%s6 + $0x28] sm:$0xff] %vm457, %v505
    %522 = vst.msk [vmem:[%s6 + $0x30] sm:$0xff] %vm457, %v506
    %523 = vst.msk [vmem:[%s6 + $0x38] sm:$0xff] %vm457, %v507
    %524 = vst.msk [vmem:[%s6 + $0x40] sm:$0xff] %vm457, %v508
    %525 = vst.msk [vmem:[%s6 + $0x48] sm:$0xff] %vm457, %v509
    %526 = vst.msk [vmem:[%s6 + $0x50] sm:$0xff] %vm457, %v510
    %527 = vst.msk [vmem:[%s6 + $0x58] sm:$0xff] %vm457, %v511
    %528 = vst.msk [vmem:[%s6 + $0x60] sm:$0xff] %vm457, %v512
    %529 = vst.msk [vmem:[%s6 + $0x68] sm:$0xff] %vm457, %v513
    %530 = vst.msk [vmem:[%s6 + $0x70] sm:$0xff] %vm457, %v514
    %531 = vst.msk [vmem:[%s6 + $0x78] sm:$0xff] %vm457, %v515
    %v532 = vld [vmem:[%s5] sm:$0x1]
    %vm533 = vcmask 64512
    %v534 = vsel %vm533, %v500, -inf
    %535 = vmax.xlane.f32.xlu0 %v534
    %v536 = vpop.xlane.xlu0 %535
    %v537 = vsel %vm533, %v501, -inf
    %538 = vmax.xlane.f32.xlu0 %v537
    %v539 = vpop.xlane.xlu0 %538
    %v540 = vsel %vm533, %v502, -inf
    %541 = vmax.xlane.f32.xlu0 %v540
    %v542 = vpop.xlane.xlu0 %541
    %v543 = vsel %vm533, %v503, -inf
    %544 = vmax.xlane.f32.xlu0 %v543
    %v545 = vpop.xlane.xlu0 %544
    %v546 = vsel %vm533, %v504, -inf
    %547 = vmax.xlane.f32.xlu0 %v546
    %v548 = vpop.xlane.xlu0 %547
    %v549 = vsel %vm533, %v505, -inf
    %550 = vmax.xlane.f32.xlu0 %v549
    %v551 = vpop.xlane.xlu0 %550
    %v552 = vsel %vm533, %v506, -inf
    %553 = vmax.xlane.f32.xlu0 %v552
    %v554 = vpop.xlane.xlu0 %553
    %v555 = vsel %vm533, %v507, -inf
    %556 = vmax.xlane.f32.xlu0 %v555
    %v557 = vpop.xlane.xlu0 %556
    %v558 = vsel %vm533, %v508, -inf
    %559 = vmax.xlane.f32.xlu0 %v558
    %v560 = vpop.xlane.xlu0 %559
    %v561 = vsel %vm533, %v509, -inf
    %562 = vmax.xlane.f32.xlu0 %v561
    %v563 = vpop.xlane.xlu0 %562
    %v564 = vsel %vm533, %v510, -inf
    %565 = vmax.xlane.f32.xlu0 %v564
    %v566 = vpop.xlane.xlu0 %565
    %v567 = vsel %vm533, %v511, -inf
    %568 = vmax.xlane.f32.xlu0 %v567
    %v569 = vpop.xlane.xlu0 %568
    %v570 = vsel %vm533, %v512, -inf
    %571 = vmax.xlane.f32.xlu0 %v570
    %v572 = vpop.xlane.xlu0 %571
    %v573 = vsel %vm533, %v513, -inf
    %574 = vmax.xlane.f32.xlu0 %v573
    %v575 = vpop.xlane.xlu0 %574
    %v576 = vsel %vm533, %v514, -inf
    %577 = vmax.xlane.f32.xlu0 %v576
    %v578 = vpop.xlane.xlu0 %577
    %v579 = vsel %vm533, %v515, -inf
    %580 = vmax.xlane.f32.xlu0 %v579
    %v581 = vpop.xlane.xlu0 %580
    %v582 = vsub.f32 %v500, %v536
    %v583 = vsub.f32 %v501, %v539
    %v584 = vsub.f32 %v502, %v542
    %v585 = vsub.f32 %v503, %v545
    %v586 = vsub.f32 %v504, %v548
    %v587 = vsub.f32 %v505, %v551
    %v588 = vsub.f32 %v506, %v554
    %v589 = vsub.f32 %v507, %v557
    %v590 = vsub.f32 %v508, %v560
    %v591 = vsub.f32 %v509, %v563
    %v592 = vsub.f32 %v510, %v566
    %v593 = vsub.f32 %v511, %v569
    %v594 = vsub.f32 %v512, %v572
    %v595 = vsub.f32 %v513, %v575
    %v596 = vsub.f32 %v514, %v578
    %v597 = vsub.f32 %v515, %v581
    %v598 = vmul.f32 %v582, 1.442695
    %v599 = vpow.pop %v598
    %v600 = vmul.f32 %v583, 1.442695
    %v601 = vpow.pop %v600
    %v602 = vmul.f32 %v584, 1.442695
    %v603 = vpow.pop %v602
    %v604 = vmul.f32 %v585, 1.442695
    %v605 = vpow.pop %v604
    %v606 = vmul.f32 %v586, 1.442695
    %v607 = vpow.pop %v606
    %v608 = vmul.f32 %v587, 1.442695
    %v609 = vpow.pop %v608
    %v610 = vmul.f32 %v588, 1.442695
    %v611 = vpow.pop %v610
    %v612 = vmul.f32 %v589, 1.442695
    %v613 = vpow.pop %v612
    %v614 = vmul.f32 %v590, 1.442695
    %v615 = vpow.pop %v614
    %v616 = vmul.f32 %v591, 1.442695
    %v617 = vpow.pop %v616
    %v618 = vmul.f32 %v592, 1.442695
    %v619 = vpow.pop %v618
    %v620 = vmul.f32 %v593, 1.442695
    %v621 = vpow.pop %v620
    %v622 = vmul.f32 %v594, 1.442695
    %v623 = vpow.pop %v622
    %v624 = vmul.f32 %v595, 1.442695
    %v625 = vpow.pop %v624
    %v626 = vmul.f32 %v596, 1.442695
    %v627 = vpow.pop %v626
    %v628 = vmul.f32 %v597, 1.442695
    %v629 = vpow.pop %v628
    %v630 = vsel %vm533, %v599, 0.0
    %631 = vadd.xlane.f32.xlu0 %v630
    %v632 = vpop.xlane.xlu0 %631
    %v633 = vsel %vm533, %v601, 0.0
    %634 = vadd.xlane.f32.xlu0 %v633
    %v635 = vpop.xlane.xlu0 %634
    %v636 = vsel %vm533, %v603, 0.0
    %637 = vadd.xlane.f32.xlu0 %v636
    %v638 = vpop.xlane.xlu0 %637
    %v639 = vsel %vm533, %v605, 0.0
    %640 = vadd.xlane.f32.xlu0 %v639
    %v641 = vpop.xlane.xlu0 %640
    %v642 = vsel %vm533, %v607, 0.0
    %643 = vadd.xlane.f32.xlu0 %v642
    %v644 = vpop.xlane.xlu0 %643
    %v645 = vsel %vm533, %v609, 0.0
    %646 = vadd.xlane.f32.xlu0 %v645
    %v647 = vpop.xlane.xlu0 %646
    %v648 = vsel %vm533, %v611, 0.0
    %649 = vadd.xlane.f32.xlu0 %v648
    %v650 = vpop.xlane.xlu0 %649
    %v651 = vsel %vm533, %v613, 0.0
    %652 = vadd.xlane.f32.xlu0 %v651
    %v653 = vpop.xlane.xlu0 %652
    %v654 = vsel %vm533, %v615, 0.0
    %655 = vadd.xlane.f32.xlu0 %v654
    %v656 = vpop.xlane.xlu0 %655
    %v657 = vsel %vm533, %v617, 0.0
    %658 = vadd.xlane.f32.xlu0 %v657
    %v659 = vpop.xlane.xlu0 %658
    %v660 = vsel %vm533, %v619, 0.0
    %661 = vadd.xlane.f32.xlu0 %v660
    %v662 = vpop.xlane.xlu0 %661
    %v663 = vsel %vm533, %v621, 0.0
    %664 = vadd.xlane.f32.xlu0 %v663
    %v665 = vpop.xlane.xlu0 %664
    %v666 = vsel %vm533, %v623, 0.0
    %667 = vadd.xlane.f32.xlu0 %v666
    %v668 = vpop.xlane.xlu0 %667
    %v669 = vsel %vm533, %v625, 0.0
    %670 = vadd.xlane.f32.xlu0 %v669
    %v671 = vpop.xlane.xlu0 %670
    %v672 = vsel %vm533, %v627, 0.0
    %673 = vadd.xlane.f32.xlu0 %v672
    %v674 = vpop.xlane.xlu0 %673
    %v675 = vsel %vm533, %v629, 0.0
    %676 = vadd.xlane.f32.xlu0 %v675
    %v677 = vpop.xlane.xlu0 %676
    %v678 = vrcp.pop %v632
    %v679 = vrcp.pop %v635
    %v680 = vrcp.pop %v638
    %v681 = vrcp.pop %v641
    %v682 = vrcp.pop %v644
    %v683 = vrcp.pop %v647
    %v684 = vrcp.pop %v650
    %v685 = vrcp.pop %v653
    %v686 = vrcp.pop %v656
    %v687 = vrcp.pop %v659
    %v688 = vrcp.pop %v662
    %v689 = vrcp.pop %v665
    %v690 = vrcp.pop %v668
    %v691 = vrcp.pop %v671
    %v692 = vrcp.pop %v674
    %v693 = vrcp.pop %v677
    %v694 = vmul.f32 %v599, %v678
    %v695 = vmul.f32 %v601, %v679
    %v696 = vmul.f32 %v603, %v680
    %v697 = vmul.f32 %v605, %v681
    %v698 = vmul.f32 %v607, %v682
    %v699 = vmul.f32 %v609, %v683
    %v700 = vmul.f32 %v611, %v684
    %v701 = vmul.f32 %v613, %v685
    %v702 = vmul.f32 %v615, %v686
    %v703 = vmul.f32 %v617, %v687
    %v704 = vmul.f32 %v619, %v688
    %v705 = vmul.f32 %v621, %v689
    %v706 = vmul.f32 %v623, %v690
    %v707 = vmul.f32 %v625, %v691
    %v708 = vmul.f32 %v627, %v692
    %v709 = vmul.f32 %v629, %v693
    %v711 = vlaneseq
    %v712 = vshrl.u32 %v711, 7
    %v713 = vsub.s32 0, %v712
    %v714 = vrot.slane %v532, %v713
    %v716 = vmul.f32 %v694, %v714
    %v717 = vmul.f32 %v695, %v714
    %v718 = vmul.f32 %v696, %v714
    %v719 = vmul.f32 %v697, %v714
    %v720 = vmul.f32 %v698, %v714
    %v721 = vmul.f32 %v699, %v714
    %v722 = vmul.f32 %v700, %v714
    %v723 = vmul.f32 %v701, %v714
    %v724 = vmul.f32 %v702, %v714
    %v725 = vmul.f32 %v703, %v714
    %v726 = vmul.f32 %v704, %v714
    %v727 = vmul.f32 %v705, %v714
    %v728 = vmul.f32 %v706, %v714
    %v729 = vmul.f32 %v707, %v714
    %v730 = vmul.f32 %v708, %v714
    %v731 = vmul.f32 %v709, %v714
    %v732 = vsel %vm533, %v716, 0.0
    %733 = vadd.xlane.f32.xlu0 %v732
    %v734 = vpop.xlane.xlu0 %733
    %v735 = vsel %vm533, %v717, 0.0
    %736 = vadd.xlane.f32.xlu0 %v735
    %v737 = vpop.xlane.xlu0 %736
    %v738 = vsel %vm533, %v718, 0.0
    %739 = vadd.xlane.f32.xlu0 %v738
    %v740 = vpop.xlane.xlu0 %739
    %v741 = vsel %vm533, %v719, 0.0
    %742 = vadd.xlane.f32.xlu0 %v741
    %v743 = vpop.xlane.xlu0 %742
    %v744 = vsel %vm533, %v720, 0.0
    %745 = vadd.xlane.f32.xlu0 %v744
    %v746 = vpop.xlane.xlu0 %745
    %v747 = vsel %vm533, %v721, 0.0
    %748 = vadd.xlane.f32.xlu0 %v747
    %v749 = vpop.xlane.xlu0 %748
    %v750 = vsel %vm533, %v722, 0.0
    %751 = vadd.xlane.f32.xlu0 %v750
    %v752 = vpop.xlane.xlu0 %751
    %v753 = vsel %vm533, %v723, 0.0
    %754 = vadd.xlane.f32.xlu0 %v753
    %v755 = vpop.xlane.xlu0 %754
    %v756 = vsel %vm533, %v724, 0.0
    %757 = vadd.xlane.f32.xlu0 %v756
    %v758 = vpop.xlane.xlu0 %757
    %v759 = vsel %vm533, %v725, 0.0
    %760 = vadd.xlane.f32.xlu0 %v759
    %v761 = vpop.xlane.xlu0 %760
    %v762 = vsel %vm533, %v726, 0.0
    %763 = vadd.xlane.f32.xlu0 %v762
    %v764 = vpop.xlane.xlu0 %763
    %v765 = vsel %vm533, %v727, 0.0
    %766 = vadd.xlane.f32.xlu0 %v765
    %v767 = vpop.xlane.xlu0 %766
    %v768 = vsel %vm533, %v728, 0.0
    %769 = vadd.xlane.f32.xlu0 %v768
    %v770 = vpop.xlane.xlu0 %769
    %v771 = vsel %vm533, %v729, 0.0
    %772 = vadd.xlane.f32.xlu0 %v771
    %v773 = vpop.xlane.xlu0 %772
    %v774 = vsel %vm533, %v730, 0.0
    %775 = vadd.xlane.f32.xlu0 %v774
    %v776 = vpop.xlane.xlu0 %775
    %v777 = vsel %vm533, %v731, 0.0
    %778 = vadd.xlane.f32.xlu0 %v777
    %v779 = vpop.xlane.xlu0 %778
    %vm780 = vcmask 130112
    %v781 = vsel %vm780, %v500, -inf
    %782 = vmax.xlane.f32.xlu0 %v781
    %v783 = vpop.xlane.xlu0 %782
    %v784 = vsel %vm780, %v501, -inf
    %785 = vmax.xlane.f32.xlu0 %v784
    %v786 = vpop.xlane.xlu0 %785
    %v787 = vsel %vm780, %v502, -inf
    %788 = vmax.xlane.f32.xlu0 %v787
    %v789 = vpop.xlane.xlu0 %788
    %v790 = vsel %vm780, %v503, -inf
    %791 = vmax.xlane.f32.xlu0 %v790
    %v792 = vpop.xlane.xlu0 %791
    %v793 = vsel %vm780, %v504, -inf
    %794 = vmax.xlane.f32.xlu0 %v793
    %v795 = vpop.xlane.xlu0 %794
    %v796 = vsel %vm780, %v505, -inf
    %797 = vmax.xlane.f32.xlu0 %v796
    %v798 = vpop.xlane.xlu0 %797
    %v799 = vsel %vm780, %v506, -inf
    %800 = vmax.xlane.f32.xlu0 %v799
    %v801 = vpop.xlane.xlu0 %800
    %v802 = vsel %vm780, %v507, -inf
    %803 = vmax.xlane.f32.xlu0 %v802
    %v804 = vpop.xlane.xlu0 %803
    %v805 = vsel %vm780, %v508, -inf
    %806 = vmax.xlane.f32.xlu0 %v805
    %v807 = vpop.xlane.xlu0 %806
    %v808 = vsel %vm780, %v509, -inf
    %809 = vmax.xlane.f32.xlu0 %v808
    %v810 = vpop.xlane.xlu0 %809
    %v811 = vsel %vm780, %v510, -inf
    %812 = vmax.xlane.f32.xlu0 %v811
    %v813 = vpop.xlane.xlu0 %812
    %v814 = vsel %vm780, %v511, -inf
    %815 = vmax.xlane.f32.xlu0 %v814
    %v816 = vpop.xlane.xlu0 %815
    %v817 = vsel %vm780, %v512, -inf
    %818 = vmax.xlane.f32.xlu0 %v817
    %v819 = vpop.xlane.xlu0 %818
    %v820 = vsel %vm780, %v513, -inf
    %821 = vmax.xlane.f32.xlu0 %v820
    %v822 = vpop.xlane.xlu0 %821
    %v823 = vsel %vm780, %v514, -inf
    %824 = vmax.xlane.f32.xlu0 %v823
    %v825 = vpop.xlane.xlu0 %824
    %v826 = vsel %vm780, %v515, -inf
    %827 = vmax.xlane.f32.xlu0 %v826
    %v828 = vpop.xlane.xlu0 %827
    %v829 = vsub.f32 %v500, %v783
    %v830 = vsub.f32 %v501, %v786
    %v831 = vsub.f32 %v502, %v789
    %v832 = vsub.f32 %v503, %v792
    %v833 = vsub.f32 %v504, %v795
    %v834 = vsub.f32 %v505, %v798
    %v835 = vsub.f32 %v506, %v801
    %v836 = vsub.f32 %v507, %v804
    %v837 = vsub.f32 %v508, %v807
    %v838 = vsub.f32 %v509, %v810
    %v839 = vsub.f32 %v510, %v813
    %v840 = vsub.f32 %v511, %v816
    %v841 = vsub.f32 %v512, %v819
    %v842 = vsub.f32 %v513, %v822
    %v843 = vsub.f32 %v514, %v825
    %v844 = vsub.f32 %v515, %v828
    %v845 = vmul.f32 %v829, 1.442695
    %v846 = vpow.pop %v845
    %v847 = vmul.f32 %v830, 1.442695
    %v848 = vpow.pop %v847
    %v849 = vmul.f32 %v831, 1.442695
    %v850 = vpow.pop %v849
    %v851 = vmul.f32 %v832, 1.442695
    %v852 = vpow.pop %v851
    %v853 = vmul.f32 %v833, 1.442695
    %v854 = vpow.pop %v853
    %v855 = vmul.f32 %v834, 1.442695
    %v856 = vpow.pop %v855
    %v857 = vmul.f32 %v835, 1.442695
    %v858 = vpow.pop %v857
    %v859 = vmul.f32 %v836, 1.442695
    %v860 = vpow.pop %v859
    %v861 = vmul.f32 %v837, 1.442695
    %v862 = vpow.pop %v861
    %v863 = vmul.f32 %v838, 1.442695
    %v864 = vpow.pop %v863
    %v865 = vmul.f32 %v839, 1.442695
    %v866 = vpow.pop %v865
    %v867 = vmul.f32 %v840, 1.442695
    %v868 = vpow.pop %v867
    %v869 = vmul.f32 %v841, 1.442695
    %v870 = vpow.pop %v869
    %v871 = vmul.f32 %v842, 1.442695
    %v872 = vpow.pop %v871
    %v873 = vmul.f32 %v843, 1.442695
    %v874 = vpow.pop %v873
    %v875 = vmul.f32 %v844, 1.442695
    %v876 = vpow.pop %v875
    %893 = vrot.lane.b32.xlu0 %v846, 120
    %v894 = vpop.permute.xlu0 %893
    %895 = vrot.lane.b32.xlu0 %v848, 120
    %v896 = vpop.permute.xlu0 %895
    %897 = vrot.lane.b32.xlu0 %v850, 120
    %v898 = vpop.permute.xlu0 %897
    %899 = vrot.lane.b32.xlu0 %v852, 120
    %v900 = vpop.permute.xlu0 %899
    %901 = vrot.lane.b32.xlu0 %v854, 120
    %v902 = vpop.permute.xlu0 %901
    %903 = vrot.lane.b32.xlu0 %v856, 120
    %v904 = vpop.permute.xlu0 %903
    %905 = vrot.lane.b32.xlu0 %v858, 120
    %v906 = vpop.permute.xlu0 %905
    %907 = vrot.lane.b32.xlu0 %v860, 120
    %v908 = vpop.permute.xlu0 %907
    %909 = vrot.lane.b32.xlu0 %v862, 120
    %v910 = vpop.permute.xlu0 %909
    %911 = vrot.lane.b32.xlu0 %v864, 120
    %v912 = vpop.permute.xlu0 %911
    %913 = vrot.lane.b32.xlu0 %v866, 120
    %v914 = vpop.permute.xlu0 %913
    %915 = vrot.lane.b32.xlu0 %v868, 120
    %v916 = vpop.permute.xlu0 %915
    %917 = vrot.lane.b32.xlu0 %v870, 120
    %v918 = vpop.permute.xlu0 %917
    %919 = vrot.lane.b32.xlu0 %v872, 120
    %v920 = vpop.permute.xlu0 %919
    %921 = vrot.lane.b32.xlu0 %v874, 120
    %v922 = vpop.permute.xlu0 %921
    %923 = vrot.lane.b32.xlu0 %v876, 120
    %v924 = vpop.permute.xlu0 %923
    %v941 = vsel %vm533, %v894, 0.0
    %942 = vadd.xlane.f32.xlu0 %v941
    %v943 = vpop.xlane.xlu0 %942
    %v944 = vsel %vm533, %v896, 0.0
    %945 = vadd.xlane.f32.xlu0 %v944
    %v946 = vpop.xlane.xlu0 %945
    %v947 = vsel %vm533, %v898, 0.0
    %948 = vadd.xlane.f32.xlu0 %v947
    %v949 = vpop.xlane.xlu0 %948
    %v950 = vsel %vm533, %v900, 0.0
    %951 = vadd.xlane.f32.xlu0 %v950
    %v952 = vpop.xlane.xlu0 %951
    %v953 = vsel %vm533, %v902, 0.0
    %954 = vadd.xlane.f32.xlu0 %v953
    %v955 = vpop.xlane.xlu0 %954
    %v956 = vsel %vm533, %v904, 0.0
    %957 = vadd.xlane.f32.xlu0 %v956
    %v958 = vpop.xlane.xlu0 %957
    %v959 = vsel %vm533, %v906, 0.0
    %960 = vadd.xlane.f32.xlu0 %v959
    %v961 = vpop.xlane.xlu0 %960
    %v962 = vsel %vm533, %v908, 0.0
    %963 = vadd.xlane.f32.xlu0 %v962
    %v964 = vpop.xlane.xlu0 %963
    %v965 = vsel %vm533, %v910, 0.0
    %966 = vadd.xlane.f32.xlu0 %v965
    %v967 = vpop.xlane.xlu0 %966
    %v968 = vsel %vm533, %v912, 0.0
    %969 = vadd.xlane.f32.xlu0 %v968
    %v970 = vpop.xlane.xlu0 %969
    %v971 = vsel %vm533, %v914, 0.0
    %972 = vadd.xlane.f32.xlu0 %v971
    %v973 = vpop.xlane.xlu0 %972
    %v974 = vsel %vm533, %v916, 0.0
    %975 = vadd.xlane.f32.xlu0 %v974
    %v976 = vpop.xlane.xlu0 %975
    %v977 = vsel %vm533, %v918, 0.0
    %978 = vadd.xlane.f32.xlu0 %v977
    %v979 = vpop.xlane.xlu0 %978
    %v980 = vsel %vm533, %v920, 0.0
    %981 = vadd.xlane.f32.xlu0 %v980
    %v982 = vpop.xlane.xlu0 %981
    %v983 = vsel %vm533, %v922, 0.0
    %984 = vadd.xlane.f32.xlu0 %v983
    %v985 = vpop.xlane.xlu0 %984
    %v986 = vsel %vm533, %v924, 0.0
    %987 = vadd.xlane.f32.xlu0 %v986
    %v988 = vpop.xlane.xlu0 %987
    %v989 = vrcp.pop %v943
    %v990 = vrcp.pop %v946
    %v991 = vrcp.pop %v949
    %v992 = vrcp.pop %v952
    %v993 = vrcp.pop %v955
    %v994 = vrcp.pop %v958
    %v995 = vrcp.pop %v961
    %v996 = vrcp.pop %v964
    %v997 = vrcp.pop %v967
    %v998 = vrcp.pop %v970
    %v999 = vrcp.pop %v973
    %v1000 = vrcp.pop %v976
    %v1001 = vrcp.pop %v979
    %v1002 = vrcp.pop %v982
    %v1003 = vrcp.pop %v985
    %v1004 = vrcp.pop %v988
    %v1005 = vmul.f32 %v846, %v989
    %v1006 = vmul.f32 %v848, %v990
    %v1007 = vmul.f32 %v850, %v991
    %v1008 = vmul.f32 %v852, %v992
    %v1009 = vmul.f32 %v854, %v993
    %v1010 = vmul.f32 %v856, %v994
    %v1011 = vmul.f32 %v858, %v995
    %v1012 = vmul.f32 %v860, %v996
    %v1013 = vmul.f32 %v862, %v997
    %v1014 = vmul.f32 %v864, %v998
    %v1015 = vmul.f32 %v866, %v999
    %v1016 = vmul.f32 %v868, %v1000
    %v1017 = vmul.f32 %v870, %v1001
    %v1018 = vmul.f32 %v872, %v1002
    %v1019 = vmul.f32 %v874, %v1003
    %v1020 = vmul.f32 %v876, %v1004
    %1021 = vrot.lane.b32.xlu0 %v714, 8
    %v1022 = vpop.permute.xlu0 %1021
    %v1024 = vmul.f32 %v1005, %v1022
    %v1025 = vmul.f32 %v1006, %v1022
    %v1026 = vmul.f32 %v1007, %v1022
    %v1027 = vmul.f32 %v1008, %v1022
    %v1028 = vmul.f32 %v1009, %v1022
    %v1029 = vmul.f32 %v1010, %v1022
    %v1030 = vmul.f32 %v1011, %v1022
    %v1031 = vmul.f32 %v1012, %v1022
    %v1032 = vmul.f32 %v1013, %v1022
    %v1033 = vmul.f32 %v1014, %v1022
    %v1034 = vmul.f32 %v1015, %v1022
    %v1035 = vmul.f32 %v1016, %v1022
    %v1036 = vmul.f32 %v1017, %v1022
    %v1037 = vmul.f32 %v1018, %v1022
    %v1038 = vmul.f32 %v1019, %v1022
    %v1039 = vmul.f32 %v1020, %v1022
    %1056 = vrot.lane.b32.xlu0 %v1024, 120
    %v1057 = vpop.permute.xlu0 %1056
    %1058 = vrot.lane.b32.xlu0 %v1025, 120
    %v1059 = vpop.permute.xlu0 %1058
    %1060 = vrot.lane.b32.xlu0 %v1026, 120
    %v1061 = vpop.permute.xlu0 %1060
    %1062 = vrot.lane.b32.xlu0 %v1027, 120
    %v1063 = vpop.permute.xlu0 %1062
    %1064 = vrot.lane.b32.xlu0 %v1028, 120
    %v1065 = vpop.permute.xlu0 %1064
    %1066 = vrot.lane.b32.xlu0 %v1029, 120
    %v1067 = vpop.permute.xlu0 %1066
    %1068 = vrot.lane.b32.xlu0 %v1030, 120
    %v1069 = vpop.permute.xlu0 %1068
    %1070 = vrot.lane.b32.xlu0 %v1031, 120
    %v1071 = vpop.permute.xlu0 %1070
    %1072 = vrot.lane.b32.xlu0 %v1032, 120
    %v1073 = vpop.permute.xlu0 %1072
    %1074 = vrot.lane.b32.xlu0 %v1033, 120
    %v1075 = vpop.permute.xlu0 %1074
    %1076 = vrot.lane.b32.xlu0 %v1034, 120
    %v1077 = vpop.permute.xlu0 %1076
    %1078 = vrot.lane.b32.xlu0 %v1035, 120
    %v1079 = vpop.permute.xlu0 %1078
    %1080 = vrot.lane.b32.xlu0 %v1036, 120
    %v1081 = vpop.permute.xlu0 %1080
    %1082 = vrot.lane.b32.xlu0 %v1037, 120
    %v1083 = vpop.permute.xlu0 %1082
    %1084 = vrot.lane.b32.xlu0 %v1038, 120
    %v1085 = vpop.permute.xlu0 %1084
    %1086 = vrot.lane.b32.xlu0 %v1039, 120
    %v1087 = vpop.permute.xlu0 %1086
    %v1104 = vsel %vm533, %v1057, 0.0
    %1105 = vadd.xlane.f32.xlu0 %v1104
    %v1106 = vpop.xlane.xlu0 %1105
    %v1107 = vsel %vm533, %v1059, 0.0
    %1108 = vadd.xlane.f32.xlu0 %v1107
    %v1109 = vpop.xlane.xlu0 %1108
    %v1110 = vsel %vm533, %v1061, 0.0
    %1111 = vadd.xlane.f32.xlu0 %v1110
    %v1112 = vpop.xlane.xlu0 %1111
    %v1113 = vsel %vm533, %v1063, 0.0
    %1114 = vadd.xlane.f32.xlu0 %v1113
    %v1115 = vpop.xlane.xlu0 %1114
    %v1116 = vsel %vm533, %v1065, 0.0
    %1117 = vadd.xlane.f32.xlu0 %v1116
    %v1118 = vpop.xlane.xlu0 %1117
    %v1119 = vsel %vm533, %v1067, 0.0
    %1120 = vadd.xlane.f32.xlu0 %v1119
    %v1121 = vpop.xlane.xlu0 %1120
    %v1122 = vsel %vm533, %v1069, 0.0
    %1123 = vadd.xlane.f32.xlu0 %v1122
    %v1124 = vpop.xlane.xlu0 %1123
    %v1125 = vsel %vm533, %v1071, 0.0
    %1126 = vadd.xlane.f32.xlu0 %v1125
    %v1127 = vpop.xlane.xlu0 %1126
    %v1128 = vsel %vm533, %v1073, 0.0
    %1129 = vadd.xlane.f32.xlu0 %v1128
    %v1130 = vpop.xlane.xlu0 %1129
    %v1131 = vsel %vm533, %v1075, 0.0
    %1132 = vadd.xlane.f32.xlu0 %v1131
    %v1133 = vpop.xlane.xlu0 %1132
    %v1134 = vsel %vm533, %v1077, 0.0
    %1135 = vadd.xlane.f32.xlu0 %v1134
    %v1136 = vpop.xlane.xlu0 %1135
    %v1137 = vsel %vm533, %v1079, 0.0
    %1138 = vadd.xlane.f32.xlu0 %v1137
    %v1139 = vpop.xlane.xlu0 %1138
    %v1140 = vsel %vm533, %v1081, 0.0
    %1141 = vadd.xlane.f32.xlu0 %v1140
    %v1142 = vpop.xlane.xlu0 %1141
    %v1143 = vsel %vm533, %v1083, 0.0
    %1144 = vadd.xlane.f32.xlu0 %v1143
    %v1145 = vpop.xlane.xlu0 %1144
    %v1146 = vsel %vm533, %v1085, 0.0
    %1147 = vadd.xlane.f32.xlu0 %v1146
    %v1148 = vpop.xlane.xlu0 %1147
    %v1149 = vsel %vm533, %v1087, 0.0
    %1150 = vadd.xlane.f32.xlu0 %v1149
    %v1151 = vpop.xlane.xlu0 %1150
    %vm1152 = vcmask 195712
    %v1153 = vsel %vm1152, %v500, -inf
    %1154 = vmax.xlane.f32.xlu0 %v1153
    %v1155 = vpop.xlane.xlu0 %1154
    %v1156 = vsel %vm1152, %v501, -inf
    %1157 = vmax.xlane.f32.xlu0 %v1156
    %v1158 = vpop.xlane.xlu0 %1157
    %v1159 = vsel %vm1152, %v502, -inf
    %1160 = vmax.xlane.f32.xlu0 %v1159
    %v1161 = vpop.xlane.xlu0 %1160
    %v1162 = vsel %vm1152, %v503, -inf
    %1163 = vmax.xlane.f32.xlu0 %v1162
    %v1164 = vpop.xlane.xlu0 %1163
    %v1165 = vsel %vm1152, %v504, -inf
    %1166 = vmax.xlane.f32.xlu0 %v1165
    %v1167 = vpop.xlane.xlu0 %1166
    %v1168 = vsel %vm1152, %v505, -inf
    %1169 = vmax.xlane.f32.xlu0 %v1168
    %v1170 = vpop.xlane.xlu0 %1169
    %v1171 = vsel %vm1152, %v506, -inf
    %1172 = vmax.xlane.f32.xlu0 %v1171
    %v1173 = vpop.xlane.xlu0 %1172
    %v1174 = vsel %vm1152, %v507, -inf
    %1175 = vmax.xlane.f32.xlu0 %v1174
    %v1176 = vpop.xlane.xlu0 %1175
    %v1177 = vsel %vm1152, %v508, -inf
    %1178 = vmax.xlane.f32.xlu0 %v1177
    %v1179 = vpop.xlane.xlu0 %1178
    %v1180 = vsel %vm1152, %v509, -inf
    %1181 = vmax.xlane.f32.xlu0 %v1180
    %v1182 = vpop.xlane.xlu0 %1181
    %v1183 = vsel %vm1152, %v510, -inf
    %1184 = vmax.xlane.f32.xlu0 %v1183
    %v1185 = vpop.xlane.xlu0 %1184
    %v1186 = vsel %vm1152, %v511, -inf
    %1187 = vmax.xlane.f32.xlu0 %v1186
    %v1188 = vpop.xlane.xlu0 %1187
    %v1189 = vsel %vm1152, %v512, -inf
    %1190 = vmax.xlane.f32.xlu0 %v1189
    %v1191 = vpop.xlane.xlu0 %1190
    %v1192 = vsel %vm1152, %v513, -inf
    %1193 = vmax.xlane.f32.xlu0 %v1192
    %v1194 = vpop.xlane.xlu0 %1193
    %v1195 = vsel %vm1152, %v514, -inf
    %1196 = vmax.xlane.f32.xlu0 %v1195
    %v1197 = vpop.xlane.xlu0 %1196
    %v1198 = vsel %vm1152, %v515, -inf
    %1199 = vmax.xlane.f32.xlu0 %v1198
    %v1200 = vpop.xlane.xlu0 %1199
    %v1201 = vsub.f32 %v500, %v1155
    %v1202 = vsub.f32 %v501, %v1158
    %v1203 = vsub.f32 %v502, %v1161
    %v1204 = vsub.f32 %v503, %v1164
    %v1205 = vsub.f32 %v504, %v1167
    %v1206 = vsub.f32 %v505, %v1170
    %v1207 = vsub.f32 %v506, %v1173
    %v1208 = vsub.f32 %v507, %v1176
    %v1209 = vsub.f32 %v508, %v1179
    %v1210 = vsub.f32 %v509, %v1182
    %v1211 = vsub.f32 %v510, %v1185
    %v1212 = vsub.f32 %v511, %v1188
    %v1213 = vsub.f32 %v512, %v1191
    %v1214 = vsub.f32 %v513, %v1194
    %v1215 = vsub.f32 %v514, %v1197
    %v1216 = vsub.f32 %v515, %v1200
    %v1217 = vmul.f32 %v1201, 1.442695
    %v1218 = vpow.pop %v1217
    %v1219 = vmul.f32 %v1202, 1.442695
    %v1220 = vpow.pop %v1219
    %v1221 = vmul.f32 %v1203, 1.442695
    %v1222 = vpow.pop %v1221
    %v1223 = vmul.f32 %v1204, 1.442695
    %v1224 = vpow.pop %v1223
    %v1225 = vmul.f32 %v1205, 1.442695
    %v1226 = vpow.pop %v1225
    %v1227 = vmul.f32 %v1206, 1.442695
    %v1228 = vpow.pop %v1227
    %v1229 = vmul.f32 %v1207, 1.442695
    %v1230 = vpow.pop %v1229
    %v1231 = vmul.f32 %v1208, 1.442695
    %v1232 = vpow.pop %v1231
    %v1233 = vmul.f32 %v1209, 1.442695
    %v1234 = vpow.pop %v1233
    %v1235 = vmul.f32 %v1210, 1.442695
    %v1236 = vpow.pop %v1235
    %v1237 = vmul.f32 %v1211, 1.442695
    %v1238 = vpow.pop %v1237
    %v1239 = vmul.f32 %v1212, 1.442695
    %v1240 = vpow.pop %v1239
    %v1241 = vmul.f32 %v1213, 1.442695
    %v1242 = vpow.pop %v1241
    %v1243 = vmul.f32 %v1214, 1.442695
    %v1244 = vpow.pop %v1243
    %v1245 = vmul.f32 %v1215, 1.442695
    %v1246 = vpow.pop %v1245
    %v1247 = vmul.f32 %v1216, 1.442695
    %v1248 = vpow.pop %v1247
    %1265 = vrot.lane.b32.xlu0 %v1218, 112
    %v1266 = vpop.permute.xlu0 %1265
    %1267 = vrot.lane.b32.xlu0 %v1220, 112
    %v1268 = vpop.permute.xlu0 %1267
    %1269 = vrot.lane.b32.xlu0 %v1222, 112
    %v1270 = vpop.permute.xlu0 %1269
    %1271 = vrot.lane.b32.xlu0 %v1224, 112
    %v1272 = vpop.permute.xlu0 %1271
    %1273 = vrot.lane.b32.xlu0 %v1226, 112
    %v1274 = vpop.permute.xlu0 %1273
    %1275 = vrot.lane.b32.xlu0 %v1228, 112
    %v1276 = vpop.permute.xlu0 %1275
    %1277 = vrot.lane.b32.xlu0 %v1230, 112
    %v1278 = vpop.permute.xlu0 %1277
    %1279 = vrot.lane.b32.xlu0 %v1232, 112
    %v1280 = vpop.permute.xlu0 %1279
    %1281 = vrot.lane.b32.xlu0 %v1234, 112
    %v1282 = vpop.permute.xlu0 %1281
    %1283 = vrot.lane.b32.xlu0 %v1236, 112
    %v1284 = vpop.permute.xlu0 %1283
    %1285 = vrot.lane.b32.xlu0 %v1238, 112
    %v1286 = vpop.permute.xlu0 %1285
    %1287 = vrot.lane.b32.xlu0 %v1240, 112
    %v1288 = vpop.permute.xlu0 %1287
    %1289 = vrot.lane.b32.xlu0 %v1242, 112
    %v1290 = vpop.permute.xlu0 %1289
    %1291 = vrot.lane.b32.xlu0 %v1244, 112
    %v1292 = vpop.permute.xlu0 %1291
    %1293 = vrot.lane.b32.xlu0 %v1246, 112
    %v1294 = vpop.permute.xlu0 %1293
    %1295 = vrot.lane.b32.xlu0 %v1248, 112
    %v1296 = vpop.permute.xlu0 %1295
    %v1313 = vsel %vm533, %v1266, 0.0
    %1314 = vadd.xlane.f32.xlu0 %v1313
    %v1315 = vpop.xlane.xlu0 %1314
    %v1316 = vsel %vm533, %v1268, 0.0
    %1317 = vadd.xlane.f32.xlu0 %v1316
    %v1318 = vpop.xlane.xlu0 %1317
    %v1319 = vsel %vm533, %v1270, 0.0
    %1320 = vadd.xlane.f32.xlu0 %v1319
    %v1321 = vpop.xlane.xlu0 %1320
    %v1322 = vsel %vm533, %v1272, 0.0
    %1323 = vadd.xlane.f32.xlu0 %v1322
    %v1324 = vpop.xlane.xlu0 %1323
    %v1325 = vsel %vm533, %v1274, 0.0
    %1326 = vadd.xlane.f32.xlu0 %v1325
    %v1327 = vpop.xlane.xlu0 %1326
    %v1328 = vsel %vm533, %v1276, 0.0
    %1329 = vadd.xlane.f32.xlu0 %v1328
    %v1330 = vpop.xlane.xlu0 %1329
    %v1331 = vsel %vm533, %v1278, 0.0
    %1332 = vadd.xlane.f32.xlu0 %v1331
    %v1333 = vpop.xlane.xlu0 %1332
    %v1334 = vsel %vm533, %v1280, 0.0
    %1335 = vadd.xlane.f32.xlu0 %v1334
    %v1336 = vpop.xlane.xlu0 %1335
    %v1337 = vsel %vm533, %v1282, 0.0
    %1338 = vadd.xlane.f32.xlu0 %v1337
    %v1339 = vpop.xlane.xlu0 %1338
    %v1340 = vsel %vm533, %v1284, 0.0
    %1341 = vadd.xlane.f32.xlu0 %v1340
    %v1342 = vpop.xlane.xlu0 %1341
    %v1343 = vsel %vm533, %v1286, 0.0
    %1344 = vadd.xlane.f32.xlu0 %v1343
    %v1345 = vpop.xlane.xlu0 %1344
    %v1346 = vsel %vm533, %v1288, 0.0
    %1347 = vadd.xlane.f32.xlu0 %v1346
    %v1348 = vpop.xlane.xlu0 %1347
    %v1349 = vsel %vm533, %v1290, 0.0
    %1350 = vadd.xlane.f32.xlu0 %v1349
    %v1351 = vpop.xlane.xlu0 %1350
    %v1352 = vsel %vm533, %v1292, 0.0
    %1353 = vadd.xlane.f32.xlu0 %v1352
    %v1354 = vpop.xlane.xlu0 %1353
    %v1355 = vsel %vm533, %v1294, 0.0
    %1356 = vadd.xlane.f32.xlu0 %v1355
    %v1357 = vpop.xlane.xlu0 %1356
    %v1358 = vsel %vm533, %v1296, 0.0
    %1359 = vadd.xlane.f32.xlu0 %v1358
    %v1360 = vpop.xlane.xlu0 %1359
    %v1361 = vrcp.pop %v1315
    %v1362 = vrcp.pop %v1318
    %v1363 = vrcp.pop %v1321
    %v1364 = vrcp.pop %v1324
    %v1365 = vrcp.pop %v1327
    %v1366 = vrcp.pop %v1330
    %v1367 = vrcp.pop %v1333
    %v1368 = vrcp.pop %v1336
    %v1369 = vrcp.pop %v1339
    %v1370 = vrcp.pop %v1342
    %v1371 = vrcp.pop %v1345
    %v1372 = vrcp.pop %v1348
    %v1373 = vrcp.pop %v1351
    %v1374 = vrcp.pop %v1354
    %v1375 = vrcp.pop %v1357
    %v1376 = vrcp.pop %v1360
    %v1377 = vmul.f32 %v1218, %v1361
    %v1378 = vmul.f32 %v1220, %v1362
    %v1379 = vmul.f32 %v1222, %v1363
    %v1380 = vmul.f32 %v1224, %v1364
    %v1381 = vmul.f32 %v1226, %v1365
    %v1382 = vmul.f32 %v1228, %v1366
    %v1383 = vmul.f32 %v1230, %v1367
    %v1384 = vmul.f32 %v1232, %v1368
    %v1385 = vmul.f32 %v1234, %v1369
    %v1386 = vmul.f32 %v1236, %v1370
    %v1387 = vmul.f32 %v1238, %v1371
    %v1388 = vmul.f32 %v1240, %v1372
    %v1389 = vmul.f32 %v1242, %v1373
    %v1390 = vmul.f32 %v1244, %v1374
    %v1391 = vmul.f32 %v1246, %v1375
    %v1392 = vmul.f32 %v1248, %v1376
    %1393 = vrot.lane.b32.xlu0 %v714, 16
    %v1394 = vpop.permute.xlu0 %1393
    %v1396 = vmul.f32 %v1377, %v1394
    %v1397 = vmul.f32 %v1378, %v1394
    %v1398 = vmul.f32 %v1379, %v1394
    %v1399 = vmul.f32 %v1380, %v1394
    %v1400 = vmul.f32 %v1381, %v1394
    %v1401 = vmul.f32 %v1382, %v1394
    %v1402 = vmul.f32 %v1383, %v1394
    %v1403 = vmul.f32 %v1384, %v1394
    %v1404 = vmul.f32 %v1385, %v1394
    %v1405 = vmul.f32 %v1386, %v1394
    %v1406 = vmul.f32 %v1387, %v1394
    %v1407 = vmul.f32 %v1388, %v1394
    %v1408 = vmul.f32 %v1389, %v1394
    %v1409 = vmul.f32 %v1390, %v1394
    %v1410 = vmul.f32 %v1391, %v1394
    %v1411 = vmul.f32 %v1392, %v1394
    %1428 = vrot.lane.b32.xlu0 %v1396, 112
    %v1429 = vpop.permute.xlu0 %1428
    %1430 = vrot.lane.b32.xlu0 %v1397, 112
    %v1431 = vpop.permute.xlu0 %1430
    %1432 = vrot.lane.b32.xlu0 %v1398, 112
    %v1433 = vpop.permute.xlu0 %1432
    %1434 = vrot.lane.b32.xlu0 %v1399, 112
    %v1435 = vpop.permute.xlu0 %1434
    %1436 = vrot.lane.b32.xlu0 %v1400, 112
    %v1437 = vpop.permute.xlu0 %1436
    %1438 = vrot.lane.b32.xlu0 %v1401, 112
    %v1439 = vpop.permute.xlu0 %1438
    %1440 = vrot.lane.b32.xlu0 %v1402, 112
    %v1441 = vpop.permute.xlu0 %1440
    %1442 = vrot.lane.b32.xlu0 %v1403, 112
    %v1443 = vpop.permute.xlu0 %1442
    %1444 = vrot.lane.b32.xlu0 %v1404, 112
    %v1445 = vpop.permute.xlu0 %1444
    %1446 = vrot.lane.b32.xlu0 %v1405, 112
    %v1447 = vpop.permute.xlu0 %1446
    %1448 = vrot.lane.b32.xlu0 %v1406, 112
    %v1449 = vpop.permute.xlu0 %1448
    %1450 = vrot.lane.b32.xlu0 %v1407, 112
    %v1451 = vpop.permute.xlu0 %1450
    %1452 = vrot.lane.b32.xlu0 %v1408, 112
    %v1453 = vpop.permute.xlu0 %1452
    %1454 = vrot.lane.b32.xlu0 %v1409, 112
    %v1455 = vpop.permute.xlu0 %1454
    %1456 = vrot.lane.b32.xlu0 %v1410, 112
    %v1457 = vpop.permute.xlu0 %1456
    %1458 = vrot.lane.b32.xlu0 %v1411, 112
    %v1459 = vpop.permute.xlu0 %1458
    %v1476 = vsel %vm533, %v1429, 0.0
    %1477 = vadd.xlane.f32.xlu0 %v1476
    %v1478 = vpop.xlane.xlu0 %1477
    %v1479 = vsel %vm533, %v1431, 0.0
    %1480 = vadd.xlane.f32.xlu0 %v1479
    %v1481 = vpop.xlane.xlu0 %1480
    %v1482 = vsel %vm533, %v1433, 0.0
    %1483 = vadd.xlane.f32.xlu0 %v1482
    %v1484 = vpop.xlane.xlu0 %1483
    %v1485 = vsel %vm533, %v1435, 0.0
    %1486 = vadd.xlane.f32.xlu0 %v1485
    %v1487 = vpop.xlane.xlu0 %1486
    %v1488 = vsel %vm533, %v1437, 0.0
    %1489 = vadd.xlane.f32.xlu0 %v1488
    %v1490 = vpop.xlane.xlu0 %1489
    %v1491 = vsel %vm533, %v1439, 0.0
    %1492 = vadd.xlane.f32.xlu0 %v1491
    %v1493 = vpop.xlane.xlu0 %1492
    %v1494 = vsel %vm533, %v1441, 0.0
    %1495 = vadd.xlane.f32.xlu0 %v1494
    %v1496 = vpop.xlane.xlu0 %1495
    %v1497 = vsel %vm533, %v1443, 0.0
    %1498 = vadd.xlane.f32.xlu0 %v1497
    %v1499 = vpop.xlane.xlu0 %1498
    %v1500 = vsel %vm533, %v1445, 0.0
    %1501 = vadd.xlane.f32.xlu0 %v1500
    %v1502 = vpop.xlane.xlu0 %1501
    %v1503 = vsel %vm533, %v1447, 0.0
    %1504 = vadd.xlane.f32.xlu0 %v1503
    %v1505 = vpop.xlane.xlu0 %1504
    %v1506 = vsel %vm533, %v1449, 0.0
    %1507 = vadd.xlane.f32.xlu0 %v1506
    %v1508 = vpop.xlane.xlu0 %1507
    %v1509 = vsel %vm533, %v1451, 0.0
    %1510 = vadd.xlane.f32.xlu0 %v1509
    %v1511 = vpop.xlane.xlu0 %1510
    %v1512 = vsel %vm533, %v1453, 0.0
    %1513 = vadd.xlane.f32.xlu0 %v1512
    %v1514 = vpop.xlane.xlu0 %1513
    %v1515 = vsel %vm533, %v1455, 0.0
    %1516 = vadd.xlane.f32.xlu0 %v1515
    %v1517 = vpop.xlane.xlu0 %1516
    %v1518 = vsel %vm533, %v1457, 0.0
    %1519 = vadd.xlane.f32.xlu0 %v1518
    %v1520 = vpop.xlane.xlu0 %1519
    %v1521 = vsel %vm533, %v1459, 0.0
    %1522 = vadd.xlane.f32.xlu0 %v1521
    %v1523 = vpop.xlane.xlu0 %1522
    %vm1524 = vcmask 261312
    %v1525 = vsel %vm1524, %v500, -inf
    %1526 = vmax.xlane.f32.xlu0 %v1525
    %v1527 = vpop.xlane.xlu0 %1526
    %v1528 = vsel %vm1524, %v501, -inf
    %1529 = vmax.xlane.f32.xlu0 %v1528
    %v1530 = vpop.xlane.xlu0 %1529
    %v1531 = vsel %vm1524, %v502, -inf
    %1532 = vmax.xlane.f32.xlu0 %v1531
    %v1533 = vpop.xlane.xlu0 %1532
    %v1534 = vsel %vm1524, %v503, -inf
    %1535 = vmax.xlane.f32.xlu0 %v1534
    %v1536 = vpop.xlane.xlu0 %1535
    %v1537 = vsel %vm1524, %v504, -inf
    %1538 = vmax.xlane.f32.xlu0 %v1537
    %v1539 = vpop.xlane.xlu0 %1538
    %v1540 = vsel %vm1524, %v505, -inf
    %1541 = vmax.xlane.f32.xlu0 %v1540
    %v1542 = vpop.xlane.xlu0 %1541
    %v1543 = vsel %vm1524, %v506, -inf
    %1544 = vmax.xlane.f32.xlu0 %v1543
    %v1545 = vpop.xlane.xlu0 %1544
    %v1546 = vsel %vm1524, %v507, -inf
    %1547 = vmax.xlane.f32.xlu0 %v1546
    %v1548 = vpop.xlane.xlu0 %1547
    %v1549 = vsel %vm1524, %v508, -inf
    %1550 = vmax.xlane.f32.xlu0 %v1549
    %v1551 = vpop.xlane.xlu0 %1550
    %v1552 = vsel %vm1524, %v509, -inf
    %1553 = vmax.xlane.f32.xlu0 %v1552
    %v1554 = vpop.xlane.xlu0 %1553
    %v1555 = vsel %vm1524, %v510, -inf
    %1556 = vmax.xlane.f32.xlu0 %v1555
    %v1557 = vpop.xlane.xlu0 %1556
    %v1558 = vsel %vm1524, %v511, -inf
    %1559 = vmax.xlane.f32.xlu0 %v1558
    %v1560 = vpop.xlane.xlu0 %1559
    %v1561 = vsel %vm1524, %v512, -inf
    %1562 = vmax.xlane.f32.xlu0 %v1561
    %v1563 = vpop.xlane.xlu0 %1562
    %v1564 = vsel %vm1524, %v513, -inf
    %1565 = vmax.xlane.f32.xlu0 %v1564
    %v1566 = vpop.xlane.xlu0 %1565
    %v1567 = vsel %vm1524, %v514, -inf
    %1568 = vmax.xlane.f32.xlu0 %v1567
    %v1569 = vpop.xlane.xlu0 %1568
    %v1570 = vsel %vm1524, %v515, -inf
    %1571 = vmax.xlane.f32.xlu0 %v1570
    %v1572 = vpop.xlane.xlu0 %1571
    %v1573 = vsub.f32 %v500, %v1527
    %v1574 = vsub.f32 %v501, %v1530
    %v1575 = vsub.f32 %v502, %v1533
    %v1576 = vsub.f32 %v503, %v1536
    %v1577 = vsub.f32 %v504, %v1539
    %v1578 = vsub.f32 %v505, %v1542
    %v1579 = vsub.f32 %v506, %v1545
    %v1580 = vsub.f32 %v507, %v1548
    %v1581 = vsub.f32 %v508, %v1551
    %v1582 = vsub.f32 %v509, %v1554
    %v1583 = vsub.f32 %v510, %v1557
    %v1584 = vsub.f32 %v511, %v1560
    %v1585 = vsub.f32 %v512, %v1563
    %v1586 = vsub.f32 %v513, %v1566
    %v1587 = vsub.f32 %v514, %v1569
    %v1588 = vsub.f32 %v515, %v1572
    %v1589 = vmul.f32 %v1573, 1.442695
    %v1590 = vpow.pop %v1589
    %v1591 = vmul.f32 %v1574, 1.442695
    %v1592 = vpow.pop %v1591
    %v1593 = vmul.f32 %v1575, 1.442695
    %v1594 = vpow.pop %v1593
    %v1595 = vmul.f32 %v1576, 1.442695
    %v1596 = vpow.pop %v1595
    %v1597 = vmul.f32 %v1577, 1.442695
    %v1598 = vpow.pop %v1597
    %v1599 = vmul.f32 %v1578, 1.442695
    %v1600 = vpow.pop %v1599
    %v1601 = vmul.f32 %v1579, 1.442695
    %v1602 = vpow.pop %v1601
    %v1603 = vmul.f32 %v1580, 1.442695
    %v1604 = vpow.pop %v1603
    %v1605 = vmul.f32 %v1581, 1.442695
    %v1606 = vpow.pop %v1605
    %v1607 = vmul.f32 %v1582, 1.442695
    %v1608 = vpow.pop %v1607
    %v1609 = vmul.f32 %v1583, 1.442695
    %v1610 = vpow.pop %v1609
    %v1611 = vmul.f32 %v1584, 1.442695
    %v1612 = vpow.pop %v1611
    %v1613 = vmul.f32 %v1585, 1.442695
    %v1614 = vpow.pop %v1613
    %v1615 = vmul.f32 %v1586, 1.442695
    %v1616 = vpow.pop %v1615
    %v1617 = vmul.f32 %v1587, 1.442695
    %v1618 = vpow.pop %v1617
    %v1619 = vmul.f32 %v1588, 1.442695
    %v1620 = vpow.pop %v1619
    %1637 = vrot.lane.b32.xlu0 %v1590, 104
    %v1638 = vpop.permute.xlu0 %1637
    %1639 = vrot.lane.b32.xlu0 %v1592, 104
    %v1640 = vpop.permute.xlu0 %1639
    %1641 = vrot.lane.b32.xlu0 %v1594, 104
    %v1642 = vpop.permute.xlu0 %1641
    %1643 = vrot.lane.b32.xlu0 %v1596, 104
    %v1644 = vpop.permute.xlu0 %1643
    %1645 = vrot.lane.b32.xlu0 %v1598, 104
    %v1646 = vpop.permute.xlu0 %1645
    %1647 = vrot.lane.b32.xlu0 %v1600, 104
    %v1648 = vpop.permute.xlu0 %1647
    %1649 = vrot.lane.b32.xlu0 %v1602, 104
    %v1650 = vpop.permute.xlu0 %1649
    %1651 = vrot.lane.b32.xlu0 %v1604, 104
    %v1652 = vpop.permute.xlu0 %1651
    %1653 = vrot.lane.b32.xlu0 %v1606, 104
    %v1654 = vpop.permute.xlu0 %1653
    %1655 = vrot.lane.b32.xlu0 %v1608, 104
    %v1656 = vpop.permute.xlu0 %1655
    %1657 = vrot.lane.b32.xlu0 %v1610, 104
    %v1658 = vpop.permute.xlu0 %1657
    %1659 = vrot.lane.b32.xlu0 %v1612, 104
    %v1660 = vpop.permute.xlu0 %1659
    %1661 = vrot.lane.b32.xlu0 %v1614, 104
    %v1662 = vpop.permute.xlu0 %1661
    %1663 = vrot.lane.b32.xlu0 %v1616, 104
    %v1664 = vpop.permute.xlu0 %1663
    %1665 = vrot.lane.b32.xlu0 %v1618, 104
    %v1666 = vpop.permute.xlu0 %1665
    %1667 = vrot.lane.b32.xlu0 %v1620, 104
    %v1668 = vpop.permute.xlu0 %1667
    %v1685 = vsel %vm533, %v1638, 0.0
    %1686 = vadd.xlane.f32.xlu0 %v1685
    %v1687 = vpop.xlane.xlu0 %1686
    %v1688 = vsel %vm533, %v1640, 0.0
    %1689 = vadd.xlane.f32.xlu0 %v1688
    %v1690 = vpop.xlane.xlu0 %1689
    %v1691 = vsel %vm533, %v1642, 0.0
    %1692 = vadd.xlane.f32.xlu0 %v1691
    %v1693 = vpop.xlane.xlu0 %1692
    %v1694 = vsel %vm533, %v1644, 0.0
    %1695 = vadd.xlane.f32.xlu0 %v1694
    %v1696 = vpop.xlane.xlu0 %1695
    %v1697 = vsel %vm533, %v1646, 0.0
    %1698 = vadd.xlane.f32.xlu0 %v1697
    %v1699 = vpop.xlane.xlu0 %1698
    %v1700 = vsel %vm533, %v1648, 0.0
    %1701 = vadd.xlane.f32.xlu0 %v1700
    %v1702 = vpop.xlane.xlu0 %1701
    %v1703 = vsel %vm533, %v1650, 0.0
    %1704 = vadd.xlane.f32.xlu0 %v1703
    %v1705 = vpop.xlane.xlu0 %1704
    %v1706 = vsel %vm533, %v1652, 0.0
    %1707 = vadd.xlane.f32.xlu0 %v1706
    %v1708 = vpop.xlane.xlu0 %1707
    %v1709 = vsel %vm533, %v1654, 0.0
    %1710 = vadd.xlane.f32.xlu0 %v1709
    %v1711 = vpop.xlane.xlu0 %1710
    %v1712 = vsel %vm533, %v1656, 0.0
    %1713 = vadd.xlane.f32.xlu0 %v1712
    %v1714 = vpop.xlane.xlu0 %1713
    %v1715 = vsel %vm533, %v1658, 0.0
    %1716 = vadd.xlane.f32.xlu0 %v1715
    %v1717 = vpop.xlane.xlu0 %1716
    %v1718 = vsel %vm533, %v1660, 0.0
    %1719 = vadd.xlane.f32.xlu0 %v1718
    %v1720 = vpop.xlane.xlu0 %1719
    %v1721 = vsel %vm533, %v1662, 0.0
    %1722 = vadd.xlane.f32.xlu0 %v1721
    %v1723 = vpop.xlane.xlu0 %1722
    %v1724 = vsel %vm533, %v1664, 0.0
    %1725 = vadd.xlane.f32.xlu0 %v1724
    %v1726 = vpop.xlane.xlu0 %1725
    %v1727 = vsel %vm533, %v1666, 0.0
    %1728 = vadd.xlane.f32.xlu0 %v1727
    %v1729 = vpop.xlane.xlu0 %1728
    %v1730 = vsel %vm533, %v1668, 0.0
    %1731 = vadd.xlane.f32.xlu0 %v1730
    %v1732 = vpop.xlane.xlu0 %1731
    %v1733 = vrcp.pop %v1687
    %v1734 = vrcp.pop %v1690
    %v1735 = vrcp.pop %v1693
    %v1736 = vrcp.pop %v1696
    %v1737 = vrcp.pop %v1699
    %v1738 = vrcp.pop %v1702
    %v1739 = vrcp.pop %v1705
    %v1740 = vrcp.pop %v1708
    %v1741 = vrcp.pop %v1711
    %v1742 = vrcp.pop %v1714
    %v1743 = vrcp.pop %v1717
    %v1744 = vrcp.pop %v1720
    %v1745 = vrcp.pop %v1723
    %v1746 = vrcp.pop %v1726
    %v1747 = vrcp.pop %v1729
    %v1748 = vrcp.pop %v1732
    %v1749 = vmul.f32 %v1590, %v1733
    %v1750 = vmul.f32 %v1592, %v1734
    %v1751 = vmul.f32 %v1594, %v1735
    %v1752 = vmul.f32 %v1596, %v1736
    %v1753 = vmul.f32 %v1598, %v1737
    %v1754 = vmul.f32 %v1600, %v1738
    %v1755 = vmul.f32 %v1602, %v1739
    %v1756 = vmul.f32 %v1604, %v1740
    %v1757 = vmul.f32 %v1606, %v1741
    %v1758 = vmul.f32 %v1608, %v1742
    %v1759 = vmul.f32 %v1610, %v1743
    %v1760 = vmul.f32 %v1612, %v1744
    %v1761 = vmul.f32 %v1614, %v1745
    %v1762 = vmul.f32 %v1616, %v1746
    %v1763 = vmul.f32 %v1618, %v1747
    %v1764 = vmul.f32 %v1620, %v1748
    %1765 = vrot.lane.b32.xlu0 %v714, 24
    %v1766 = vpop.permute.xlu0 %1765
    %v1768 = vmul.f32 %v1749, %v1766
    %v1769 = vmul.f32 %v1750, %v1766
    %v1770 = vmul.f32 %v1751, %v1766
    %v1771 = vmul.f32 %v1752, %v1766
    %v1772 = vmul.f32 %v1753, %v1766
    %v1773 = vmul.f32 %v1754, %v1766
    %v1774 = vmul.f32 %v1755, %v1766
    %v1775 = vmul.f32 %v1756, %v1766
    %v1776 = vmul.f32 %v1757, %v1766
    %v1777 = vmul.f32 %v1758, %v1766
    %v1778 = vmul.f32 %v1759, %v1766
    %v1779 = vmul.f32 %v1760, %v1766
    %v1780 = vmul.f32 %v1761, %v1766
    %v1781 = vmul.f32 %v1762, %v1766
    %v1782 = vmul.f32 %v1763, %v1766
    %v1783 = vmul.f32 %v1764, %v1766
    %1800 = vrot.lane.b32.xlu0 %v1768, 104
    %v1801 = vpop.permute.xlu0 %1800
    %1802 = vrot.lane.b32.xlu0 %v1769, 104
    %v1803 = vpop.permute.xlu0 %1802
    %1804 = vrot.lane.b32.xlu0 %v1770, 104
    %v1805 = vpop.permute.xlu0 %1804
    %1806 = vrot.lane.b32.xlu0 %v1771, 104
    %v1807 = vpop.permute.xlu0 %1806
    %1808 = vrot.lane.b32.xlu0 %v1772, 104
    %v1809 = vpop.permute.xlu0 %1808
    %1810 = vrot.lane.b32.xlu0 %v1773, 104
    %v1811 = vpop.permute.xlu0 %1810
    %1812 = vrot.lane.b32.xlu0 %v1774, 104
    %v1813 = vpop.permute.xlu0 %1812
    %1814 = vrot.lane.b32.xlu0 %v1775, 104
    %v1815 = vpop.permute.xlu0 %1814
    %1816 = vrot.lane.b32.xlu0 %v1776, 104
    %v1817 = vpop.permute.xlu0 %1816
    %1818 = vrot.lane.b32.xlu0 %v1777, 104
    %v1819 = vpop.permute.xlu0 %1818
    %1820 = vrot.lane.b32.xlu0 %v1778, 104
    %v1821 = vpop.permute.xlu0 %1820
    %1822 = vrot.lane.b32.xlu0 %v1779, 104
    %v1823 = vpop.permute.xlu0 %1822
    %1824 = vrot.lane.b32.xlu0 %v1780, 104
    %v1825 = vpop.permute.xlu0 %1824
    %1826 = vrot.lane.b32.xlu0 %v1781, 104
    %v1827 = vpop.permute.xlu0 %1826
    %1828 = vrot.lane.b32.xlu0 %v1782, 104
    %v1829 = vpop.permute.xlu0 %1828
    %1830 = vrot.lane.b32.xlu0 %v1783, 104
    %v1831 = vpop.permute.xlu0 %1830
    %v1848 = vsel %vm533, %v1801, 0.0
    %1849 = vadd.xlane.f32.xlu0 %v1848
    %v1850 = vpop.xlane.xlu0 %1849
    %v1851 = vsel %vm533, %v1803, 0.0
    %1852 = vadd.xlane.f32.xlu0 %v1851
    %v1853 = vpop.xlane.xlu0 %1852
    %v1854 = vsel %vm533, %v1805, 0.0
    %1855 = vadd.xlane.f32.xlu0 %v1854
    %v1856 = vpop.xlane.xlu0 %1855
    %v1857 = vsel %vm533, %v1807, 0.0
    %1858 = vadd.xlane.f32.xlu0 %v1857
    %v1859 = vpop.xlane.xlu0 %1858
    %v1860 = vsel %vm533, %v1809, 0.0
    %1861 = vadd.xlane.f32.xlu0 %v1860
    %v1862 = vpop.xlane.xlu0 %1861
    %v1863 = vsel %vm533, %v1811, 0.0
    %1864 = vadd.xlane.f32.xlu0 %v1863
    %v1865 = vpop.xlane.xlu0 %1864
    %v1866 = vsel %vm533, %v1813, 0.0
    %1867 = vadd.xlane.f32.xlu0 %v1866
    %v1868 = vpop.xlane.xlu0 %1867
    %v1869 = vsel %vm533, %v1815, 0.0
    %1870 = vadd.xlane.f32.xlu0 %v1869
    %v1871 = vpop.xlane.xlu0 %1870
    %v1872 = vsel %vm533, %v1817, 0.0
    %1873 = vadd.xlane.f32.xlu0 %v1872
    %v1874 = vpop.xlane.xlu0 %1873
    %v1875 = vsel %vm533, %v1819, 0.0
    %1876 = vadd.xlane.f32.xlu0 %v1875
    %v1877 = vpop.xlane.xlu0 %1876
    %v1878 = vsel %vm533, %v1821, 0.0
    %1879 = vadd.xlane.f32.xlu0 %v1878
    %v1880 = vpop.xlane.xlu0 %1879
    %v1881 = vsel %vm533, %v1823, 0.0
    %1882 = vadd.xlane.f32.xlu0 %v1881
    %v1883 = vpop.xlane.xlu0 %1882
    %v1884 = vsel %vm533, %v1825, 0.0
    %1885 = vadd.xlane.f32.xlu0 %v1884
    %v1886 = vpop.xlane.xlu0 %1885
    %v1887 = vsel %vm533, %v1827, 0.0
    %1888 = vadd.xlane.f32.xlu0 %v1887
    %v1889 = vpop.xlane.xlu0 %1888
    %v1890 = vsel %vm533, %v1829, 0.0
    %1891 = vadd.xlane.f32.xlu0 %v1890
    %v1892 = vpop.xlane.xlu0 %1891
    %v1893 = vsel %vm533, %v1831, 0.0
    %1894 = vadd.xlane.f32.xlu0 %v1893
    %v1895 = vpop.xlane.xlu0 %1894
    %vm1896 = vcmask 7168
    %v1897 = vsel %vm1896, %v734, %v1106
    %v1898 = vsel %vm1896, %v737, %v1109
    %v1899 = vsel %vm1896, %v740, %v1112
    %v1900 = vsel %vm1896, %v743, %v1115
    %v1901 = vsel %vm1896, %v746, %v1118
    %v1902 = vsel %vm1896, %v749, %v1121
    %v1903 = vsel %vm1896, %v752, %v1124
    %v1904 = vsel %vm1896, %v755, %v1127
    %v1905 = vsel %vm1896, %v758, %v1130
    %v1906 = vsel %vm1896, %v761, %v1133
    %v1907 = vsel %vm1896, %v764, %v1136
    %v1908 = vsel %vm1896, %v767, %v1139
    %v1909 = vsel %vm1896, %v770, %v1142
    %v1910 = vsel %vm1896, %v773, %v1145
    %v1911 = vsel %vm1896, %v776, %v1148
    %v1912 = vsel %vm1896, %v779, %v1151
    %vm1913 = vcmask 15360
    %v1914 = vsel %vm1913, %v1897, %v1478
    %v1915 = vsel %vm1913, %v1898, %v1481
    %v1916 = vsel %vm1913, %v1899, %v1484
    %v1917 = vsel %vm1913, %v1900, %v1487
    %v1918 = vsel %vm1913, %v1901, %v1490
    %v1919 = vsel %vm1913, %v1902, %v1493
    %v1920 = vsel %vm1913, %v1903, %v1496
    %v1921 = vsel %vm1913, %v1904, %v1499
    %v1922 = vsel %vm1913, %v1905, %v1502
    %v1923 = vsel %vm1913, %v1906, %v1505
    %v1924 = vsel %vm1913, %v1907, %v1508
    %v1925 = vsel %vm1913, %v1908, %v1511
    %v1926 = vsel %vm1913, %v1909, %v1514
    %v1927 = vsel %vm1913, %v1910, %v1517
    %v1928 = vsel %vm1913, %v1911, %v1520
    %v1929 = vsel %vm1913, %v1912, %v1523
    %vm1930 = vcmask 23552
    %v1931 = vsel %vm1930, %v1914, %v1850
    %v1932 = vsel %vm1930, %v1915, %v1853
    %v1933 = vsel %vm1930, %v1916, %v1856
    %v1934 = vsel %vm1930, %v1917, %v1859
    %v1935 = vsel %vm1930, %v1918, %v1862
    %v1936 = vsel %vm1930, %v1919, %v1865
    %v1937 = vsel %vm1930, %v1920, %v1868
    %v1938 = vsel %vm1930, %v1921, %v1871
    %v1939 = vsel %vm1930, %v1922, %v1874
    %v1940 = vsel %vm1930, %v1923, %v1877
    %v1941 = vsel %vm1930, %v1924, %v1880
    %v1942 = vsel %vm1930, %v1925, %v1883
    %v1943 = vsel %vm1930, %v1926, %v1886
    %v1944 = vsel %vm1930, %v1927, %v1889
    %v1945 = vsel %vm1930, %v1928, %v1892
    %v1946 = vsel %vm1930, %v1929, %v1895
    %vm1947 = vcmask 31744
    %1948 = vst.msk [vmem:[%s7] sm:$0xff] %vm1947, %v1931
    %1949 = vst.msk [vmem:[%s7 + $0x8] sm:$0xff] %vm1947, %v1932
    %1950 = vst.msk [vmem:[%s7 + $0x10] sm:$0xff] %vm1947, %v1933
    %1951 = vst.msk [vmem:[%s7 + $0x18] sm:$0xff] %vm1947, %v1934
    %1952 = vst.msk [vmem:[%s7 + $0x20] sm:$0xff] %vm1947, %v1935
    %1953 = vst.msk [vmem:[%s7 + $0x28] sm:$0xff] %vm1947, %v1936
    %1954 = vst.msk [vmem:[%s7 + $0x30] sm:$0xff] %vm1947, %v1937
    %1955 = vst.msk [vmem:[%s7 + $0x38] sm:$0xff] %vm1947, %v1938
    %1956 = vst.msk [vmem:[%s7 + $0x40] sm:$0xff] %vm1947, %v1939
    %1957 = vst.msk [vmem:[%s7 + $0x48] sm:$0xff] %vm1947, %v1940
    %1958 = vst.msk [vmem:[%s7 + $0x50] sm:$0xff] %vm1947, %v1941
    %1959 = vst.msk [vmem:[%s7 + $0x58] sm:$0xff] %vm1947, %v1942
    %1960 = vst.msk [vmem:[%s7 + $0x60] sm:$0xff] %vm1947, %v1943
    %1961 = vst.msk [vmem:[%s7 + $0x68] sm:$0xff] %vm1947, %v1944
    %1962 = vst.msk [vmem:[%s7 + $0x70] sm:$0xff] %vm1947, %v1945
    %1963 = vst.msk [vmem:[%s7 + $0x78] sm:$0xff] %vm1947, %v1946
  $region33: #{unet_multihead_rot_forward.24} parent=0 // pred_fallthru
    _
  // Predicated region
  $region34: #{unet_multihead_rot_forward.24} parent=0 // pred_check
    _
  $region35: #{unet_multihead_rot_forward.24} parent=0 // pred_check_branch
    %1965 = sbr.rel (0) target = $region37
  $region36: #{unet_multihead_rot_forward.24} parent=0 // pred_region
    _
  $region37: #{unet_multihead_rot_forward.24} parent=0 // pred_fallthru
    _
  // Predicated region
  $region38: #{unet_multihead_rot_forward.24} parent=0 // pred_check
    _
  $region39: #{unet_multihead_rot_forward.24} parent=0 // pred_check_branch
    %1967 = sbr.rel (0) target = $region41
  $region40: #{unet_multihead_rot_forward.24} parent=0 // pred_region
    _
  $region41: #{unet_multihead_rot_forward.24} parent=0 // pred_fallthru
    _
  // Predicated region
  $region42: #{unet_multihead_rot_forward.24} parent=0 // pred_check
    _
  $region43: #{unet_multihead_rot_forward.24} parent=0 // pred_check_branch
    %1969 = sbr.rel (0) target = $region45
  $region44: #{unet_multihead_rot_forward.24} parent=0 // pred_region
    _
  $region45: #{unet_multihead_rot_forward.24} parent=0 // pred_fallthru
    _
  // Predicated region
  $region46: #{unet_multihead_rot_forward.24} parent=0 // pred_check
    _
  $region47: #{unet_multihead_rot_forward.24} parent=0 // pred_check_branch
    %1971 = sbr.rel (0) target = $region49
  $region48: #{unet_multihead_rot_forward.24} parent=0 // pred_region
    _
  $region49: #{unet_multihead_rot_forward.24} parent=0 // pred_fallthru
    _

// kernel: unet_multihead_rot_forward.27
$region0: #{unet_multihead_rot_forward.27}
  #allocation0 [shape = 'u32[]', space=smem, size = 0x4, offset = 0x4, fixed_abs, tag = 'smem constant byte address 0x4 - core index']
  #allocation1 [shape = 'u32[144,128]{1,0:T(1,128)}', space=vmem, size = 0x12000, scoped, tag = 'internal scratch']
  #allocation2 [shape = 'f32[256,64]{1,0:T(8,128)}', space=vmem, size = 0x20000, scoped, tag = 'scratch operand']
  %s0 = inlined_call_operand.vmem [shape: bf16[512,27], index: 0, kind: input, shape index: {}]
  %s1 = inlined_call_operand.vmem [shape: bf16[27,64], index: 1, kind: input, shape index: {}]
  %s2 = inlined_call_operand.vmem [shape: f32[1,27], index: 2, kind: input, shape index: {}, may-alias: {2,3}]
  %s3 = inlined_call_operand.vmem [shape: f32[1,27], index: 3, kind: input, shape index: {}, may-alias: {2,3}]
  %s4 = inlined_call_operand.vmem [shape: f32[1,64], index: 4, kind: input, shape index: {}]
  %s5 = inlined_call_operand.vmem [shape: f32[512,64], index: 5, kind: output, shape index: {}]
  %s6 = sld [smem:[#allocation0]]
  $region61: #{unet_multihead_rot_forward.27} parent=0
    _
  %s8 = ssub.s32 1, %s6
  %s9 = scalar_select 0, %s8, %s6
  loop: start=0, step=1, limit=4
  $region2: #{unet_multihead_rot_forward.27} parent=0 // loop_pre_header
    _
  $region3: #{unet_multihead_rot_forward.27} parent=0 // loop_header
    %s11 = sphi 0, %s15
    %p12 = scmp.ge.s32.totalorder %s11, 4
    %s18 = sphi 0, %s37
    %s19 = sphi 0, %s33
    %s20 = sphi 0, %s29
    %s21 = sphi 0, %s18
    %s22 = sphi 0, %s19
    %s23 = sphi 0, %s20
    %s24 = sphi 0, %s21
    %s25 = sphi 0, %s22
    %s26 = sphi 0, %s23
    %s42 = sphi 0, %s44
    %s45 = sphi 0, %s42
    %s46 = sphi 0, %s45
    %s62 = sphi 0, %s46
    %s70 = sphi 0, %s72
    %s73 = sphi 0, %s70
    %s74 = sphi 0, %s73
    %s90 = sphi 0, %s74
    %s96 = sphi 0, %s98
    %s99 = sphi 0, %s96
    %s100 = sphi 0, %s99
    %s116 = sphi 0, %s100
    %s122 = sphi 0, %s124
    %s125 = sphi 0, %s122
    %s126 = sphi 0, %s125
    %s142 = sphi 0, %s126
    %s148 = sphi 0, %s150
    %s151 = sphi 0, %s148
    %s152 = sphi 0, %s151
    %s168 = sphi 0, %s152
    %s176 = sphi 0, %s178
    %s179 = sphi 0, %s176
    %s180 = sphi 0, %s179
    %s196 = sphi 0, %s180
  $region4: #{unet_multihead_rot_forward.27} parent=0 // loop_header_branch
    %14 = sbr.rel (%p12) target = $region8
  $region5: #{unet_multihead_rot_forward.27} parent=0 // loop_body
    %s16 = ssub.s32 %s11, 1
    %s17 = ssub.s32 %s11, 2
    %s27 = sadd.s32 1, %s20
    %p28 = scmp.ge.s32.totalorder %s27, 1
    %s29 = scalar_select %p28, 0, %s27
    %s30 = sadd.s32 1, %s19
    %s31 = scalar_select %p28, %s30, %s19
    %p32 = scmp.ge.s32.totalorder %s31, 1
    %s33 = scalar_select %p32, 0, %s31
    %s34 = sadd.s32 1, %s18
    %s35 = scalar_select %p32, %s34, %s18
    %p36 = scmp.ge.s32.totalorder %s35, 2
    %s37 = scalar_select %p36, 0, %s35
    %s38 = ssub.s32 %s18, %s37
    %s39 = ssub.s32 %s20, %s29
    %s40 = sor.u32 %s38, %s39
    %p41 = scmp.eq.s32.totalorder %s40, 0
    %s43 = sadd.s32 %s42, 1
    %s44 = scalar_select %p41, %s42, %s43
    %p47 = pneg %p41
    %p48 = scmp.eq.s32.totalorder %s11, 1
    %p49 = por %p47, %p48
    %p50 = scmp.ne.s32.totalorder %s42, %s45
    %p51 = scmp.eq.s32.totalorder %s11, 0
    %p52 = por %p50, %p51
    %p53 = scmp.ne.s32.totalorder %s42, %s45
    %p54 = scmp.eq.s32.totalorder %s16, 1
    %p55 = por %p53, %p54
    %p56 = scmp.ne.s32.totalorder %s45, %s46
    %p57 = scmp.eq.s32.totalorder %s16, 0
    %p58 = por %p56, %p57
    %p59 = scmp.ne.s32.totalorder %s45, %s46
    %p60 = scmp.eq.s32.totalorder %s17, 1
    %p61 = por %p59, %p60
    %p63 = scmp.ne.s32.totalorder %s46, %s62
    %p64 = scmp.eq.s32.totalorder %s17, 0
    %p65 = por %p63, %p64
    %s66 = ssub.s32 %s20, %s29
    %s67 = ssub.s32 %s19, %s33
    %s68 = sor.u32 %s66, %s67
    %p69 = scmp.eq.s32.totalorder %s68, 0
    %s71 = sadd.s32 %s70, 1
    %s72 = scalar_select %p69, %s70, %s71
    %p75 = pneg %p69
    %p76 = scmp.eq.s32.totalorder %s11, 1
    %p77 = por %p75, %p76
    %p78 = scmp.ne.s32.totalorder %s70, %s73
    %p79 = scmp.eq.s32.totalorder %s11, 0
    %p80 = por %p78, %p79
    %p81 = scmp.ne.s32.totalorder %s70, %s73
    %p82 = scmp.eq.s32.totalorder %s16, 1
    %p83 = por %p81, %p82
    %p84 = scmp.ne.s32.totalorder %s73, %s74
    %p85 = scmp.eq.s32.totalorder %s16, 0
    %p86 = por %p84, %p85
    %p87 = scmp.ne.s32.totalorder %s73, %s74
    %p88 = scmp.eq.s32.totalorder %s17, 1
    %p89 = por %p87, %p88
    %p91 = scmp.ne.s32.totalorder %s74, %s90
    %p92 = scmp.eq.s32.totalorder %s17, 0
    %p93 = por %p91, %p92
    %s94 = ssub.s32 %s20, %s29
    %p95 = scmp.eq.s32.totalorder %s94, 0
    %s97 = sadd.s32 %s96, 1
    %s98 = scalar_select %p95, %s96, %s97
    %p101 = pneg %p95
    %p102 = scmp.eq.s32.totalorder %s11, 1
    %p103 = por %p101, %p102
    %p104 = scmp.ne.s32.totalorder %s96, %s99
    %p105 = scmp.eq.s32.totalorder %s11, 0
    %p106 = por %p104, %p105
    %p107 = scmp.ne.s32.totalorder %s96, %s99
    %p108 = scmp.eq.s32.totalorder %s16, 1
    %p109 = por %p107, %p108
    %p110 = scmp.ne.s32.totalorder %s99, %s100
    %p111 = scmp.eq.s32.totalorder %s16, 0
    %p112 = por %p110, %p111
    %p113 = scmp.ne.s32.totalorder %s99, %s100
    %p114 = scmp.eq.s32.totalorder %s17, 1
    %p115 = por %p113, %p114
    %p117 = scmp.ne.s32.totalorder %s100, %s116
    %p118 = scmp.eq.s32.totalorder %s17, 0
    %p119 = por %p117, %p118
    %s120 = ssub.s32 %s20, %s29
    %p121 = scmp.eq.s32.totalorder %s120, 0
    %s123 = sadd.s32 %s122, 1
    %s124 = scalar_select %p121, %s122, %s123
    %p127 = pneg %p121
    %p128 = scmp.eq.s32.totalorder %s11, 1
    %p129 = por %p127, %p128
    %p130 = scmp.ne.s32.totalorder %s122, %s125
    %p131 = scmp.eq.s32.totalorder %s11, 0
    %p132 = por %p130, %p131
    %p133 = scmp.ne.s32.totalorder %s122, %s125
    %p134 = scmp.eq.s32.totalorder %s16, 1
    %p135 = por %p133, %p134
    %p136 = scmp.ne.s32.totalorder %s125, %s126
    %p137 = scmp.eq.s32.totalorder %s16, 0
    %p138 = por %p136, %p137
    %p139 = scmp.ne.s32.totalorder %s125, %s126
    %p140 = scmp.eq.s32.totalorder %s17, 1
    %p141 = por %p139, %p140
    %p143 = scmp.ne.s32.totalorder %s126, %s142
    %p144 = scmp.eq.s32.totalorder %s17, 0
    %p145 = por %p143, %p144
    %s146 = ssub.s32 %s19, %s33
    %p147 = scmp.eq.s32.totalorder %s146, 0
    %s149 = sadd.s32 %s148, 1
    %s150 = scalar_select %p147, %s148, %s149
    %p153 = pneg %p147
    %p154 = scmp.eq.s32.totalorder %s11, 1
    %p155 = por %p153, %p154
    %p156 = scmp.ne.s32.totalorder %s148, %s151
    %p157 = scmp.eq.s32.totalorder %s11, 0
    %p158 = por %p156, %p157
    %p159 = scmp.ne.s32.totalorder %s148, %s151
    %p160 = scmp.eq.s32.totalorder %s16, 1
    %p161 = por %p159, %p160
    %p162 = scmp.ne.s32.totalorder %s151, %s152
    %p163 = scmp.eq.s32.totalorder %s16, 0
    %p164 = por %p162, %p163
    %p165 = scmp.ne.s32.totalorder %s151, %s152
    %p166 = scmp.eq.s32.totalorder %s17, 1
    %p167 = por %p165, %p166
    %p169 = scmp.ne.s32.totalorder %s152, %s168
    %p170 = scmp.eq.s32.totalorder %s17, 0
    %p171 = por %p169, %p170
    %s172 = ssub.s32 %s18, %s37
    %s173 = ssub.s32 %s19, %s33
    %s174 = sor.u32 %s172, %s173
    %p175 = scmp.eq.s32.totalorder %s174, 0
    %s177 = sadd.s32 %s176, 1
    %s178 = scalar_select %p175, %s176, %s177
    %p181 = pneg %p175
    %p182 = scmp.eq.s32.totalorder %s11, 1
    %p183 = por %p181, %p182
    %p184 = scmp.ne.s32.totalorder %s176, %s179
    %p185 = scmp.eq.s32.totalorder %s11, 0
    %p186 = por %p184, %p185
    %p187 = scmp.ne.s32.totalorder %s176, %s179
    %p188 = scmp.eq.s32.totalorder %s16, 1
    %p189 = por %p187, %p188
    %p190 = scmp.ne.s32.totalorder %s179, %s180
    %p191 = scmp.eq.s32.totalorder %s16, 0
    %p192 = por %p190, %p191
    %p193 = scmp.ne.s32.totalorder %s179, %s180
    %p194 = scmp.eq.s32.totalorder %s17, 1
    %p195 = por %p193, %p194
    %p197 = scmp.ne.s32.totalorder %s180, %s196
    %p198 = scmp.eq.s32.totalorder %s17, 0
    %p199 = por %p197, %p198
    %p200 = scmp.le.s32.totalorder 1, %s11
    %p201 = scmp.lt.s32.totalorder %s11, 3
    %p202 = pnand %p200, %p201
    %p203 = pneg %p202
    // Predicated region
    $region9: #{unet_multihead_rot_forward.27} parent=5 // pred_check
      _
    $region10: #{unet_multihead_rot_forward.27} parent=5 // pred_check_branch
      %205 = sbr.rel (%p202) target = $region12
    $region11: #{unet_multihead_rot_forward.27} parent=5 // pred_region
      %s206 = ssub.s32 %s11, 1
      // Predicated region
      $region13: #{unet_multihead_rot_forward.27} parent=11 // pred_check
        %p207 = pneg %p86
      $region14: #{unet_multihead_rot_forward.27} parent=11 // pred_check_branch
        %209 = sbr.rel (%p207) target = $region16
      $region15: #{unet_multihead_rot_forward.27} parent=11 // pred_region
        %s210 = smul.u32 4, %s23
        %p211 = scmp.lt.s32.totalorder %s210, 3
        %s212 = scalar_select %p211, %s210, 3
        %p213 = scmp.lt.s32.totalorder %s22, 0
        %s214 = scalar_select %p213, %s22, 0
        %s215 = sadd.s32 %s214, %s212
        %s216 = smul.addr %s215, 4
        %s217 = scalar_lea.vmem %s1, %s216
        %s218 = smul.u32 4, %s23
      $region16: #{unet_multihead_rot_forward.27} parent=11 // pred_fallthru
        _
      // Predicated region
      $region17: #{unet_multihead_rot_forward.27} parent=11 // pred_check
        %p219 = pneg %p112
      $region18: #{unet_multihead_rot_forward.27} parent=11 // pred_check_branch
        %221 = sbr.rel (%p219) target = $region20
      $region19: #{unet_multihead_rot_forward.27} parent=11 // pred_region
        %p222 = scmp.lt.s32.totalorder %s23, 0
        %s223 = scalar_select %p222, %s23, 0
        %s224 = scalar_lea.vmem %s2, %s223
      $region20: #{unet_multihead_rot_forward.27} parent=11 // pred_fallthru
        _
      // Predicated region
      $region21: #{unet_multihead_rot_forward.27} parent=11 // pred_check
        %p225 = pneg %p138
      $region22: #{unet_multihead_rot_forward.27} parent=11 // pred_check_branch
        %227 = sbr.rel (%p225) target = $region24
      $region23: #{unet_multihead_rot_forward.27} parent=11 // pred_region
        %p228 = scmp.lt.s32.totalorder %s23, 0
        %s229 = scalar_select %p228, %s23, 0
        %s230 = scalar_lea.vmem %s3, %s229
      $region24: #{unet_multihead_rot_forward.27} parent=11 // pred_fallthru
        _
      // Predicated region
      $region25: #{unet_multihead_rot_forward.27} parent=11 // pred_check
        %p231 = pneg %p164
      $region26: #{unet_multihead_rot_forward.27} parent=11 // pred_check_branch
        %233 = sbr.rel (%p231) target = $region28
      $region27: #{unet_multihead_rot_forward.27} parent=11 // pred_region
        %p234 = scmp.lt.s32.totalorder %s22, 0
        %s235 = scalar_select %p234, %s22, 0
        %s236 = scalar_lea.vmem %s4, %s235
      $region28: #{unet_multihead_rot_forward.27} parent=11 // pred_fallthru
        _
    $region12: #{unet_multihead_rot_forward.27} parent=5 // pred_fallthru
      _
    %p237 = scmp.lt.s32.totalorder %s11, 2
    // Predicated region
    $region29: #{unet_multihead_rot_forward.27} parent=5 // pred_check
      %p238 = pneg %p237
    $region30: #{unet_multihead_rot_forward.27} parent=5 // pred_check_branch
      %240 = sbr.rel (%p238) target = $region32
    $region31: #{unet_multihead_rot_forward.27} parent=5 // pred_region
      // Predicated region
      $region33: #{unet_multihead_rot_forward.27} parent=31 // pred_check
        %p241 = pneg %p52
      $region34: #{unet_multihead_rot_forward.27} parent=31 // pred_check_branch
        %243 = sbr.rel (%p241) target = $region36
      $region35: #{unet_multihead_rot_forward.27} parent=31 // pred_region
        %s244 = smul.u32 32, %s18
        %p245 = scmp.lt.s32.totalorder %s244, 63
        %s246 = scalar_select %p245, %s244, 63
        %p247 = scmp.lt.s32.totalorder %s20, 0
        %s248 = scalar_select %p247, %s20, 0
        %s249 = sadd.s32 %s248, %s246
        %s250 = smul.addr %s249, 4
        %s251 = scalar_lea.vmem %s0, %s250
        %s252 = smul.u32 32, %s18
      $region36: #{unet_multihead_rot_forward.27} parent=31 // pred_fallthru
        _
    $region32: #{unet_multihead_rot_forward.27} parent=5 // pred_fallthru
      _
    %p253 = scmp.le.s32.totalorder 1, %s11
    %p254 = scmp.lt.s32.totalorder %s11, 3
    %p255 = pnand %p253, %p254
    %p256 = pneg %p255
    // Predicated region
    $region37: #{unet_multihead_rot_forward.27} parent=5 // pred_check
      _
    $region38: #{unet_multihead_rot_forward.27} parent=5 // pred_check_branch
      %258 = sbr.rel (%p255) target = $region40
    $region39: #{unet_multihead_rot_forward.27} parent=5 // pred_region
      %s259 = ssub.s32 %s11, 1
      %s260 = smul.u32 32, %s21
      %p261 = scmp.lt.s32.totalorder %s260, 63
      %s262 = scalar_select %p261, %s260, 63
      %p263 = scmp.lt.s32.totalorder %s23, 0
      %s264 = scalar_select %p263, %s23, 0
      %s265 = sadd.s32 %s264, %s262
      %s266 = smul.addr %s265, 4
      %s267 = scalar_lea.vmem %s0, %s266
      %p268 = pneg %p58
      %p269 = pneg %p55
      %s270 = smul.u32 4, %s23
      %p271 = scmp.lt.s32.totalorder %s270, 3
      %s272 = scalar_select %p271, %s270, 3
      %p273 = scmp.lt.s32.totalorder %s22, 0
      %s274 = scalar_select %p273, %s22, 0
      %s275 = sadd.s32 %s274, %s272
      %s276 = smul.addr %s275, 4
      %s277 = scalar_lea.vmem %s1, %s276
      %p278 = pneg %p86
      %p279 = pneg %p83
      %p280 = scmp.lt.s32.totalorder %s23, 0
      %s281 = scalar_select %p280, %s23, 0
      %s282 = scalar_lea.vmem %s2, %s281
      %p283 = pneg %p112
      %p284 = pneg %p109
      %p285 = scmp.lt.s32.totalorder %s23, 0
      %s286 = scalar_select %p285, %s23, 0
      %s287 = scalar_lea.vmem %s3, %s286
      %p288 = pneg %p138
      %p289 = pneg %p135
      %p290 = scmp.lt.s32.totalorder %s22, 0
      %s291 = scalar_select %p290, %s22, 0
      %s292 = scalar_lea.vmem %s4, %s291
      %p293 = pneg %p164
      %p294 = pneg %p161
      %p295 = pneg %p192
      %p296 = pneg %p189
      %s297 = smul.u32 32, %s21
      %p298 = scmp.lt.s32.totalorder %s297, 63
      %s299 = scalar_select %p298, %s297, 63
      %p300 = scmp.lt.s32.totalorder %s22, 0
      %s301 = scalar_select %p300, %s22, 0
      %s302 = sadd.s32 %s301, %s299
      %s303 = smul.addr %s302, 8
      %s304 = scalar_lea.vmem %s5, %s303
      %s305 = smul.u32 32, %s21
      %p306 = scmp.lt.s32.totalorder %s305, 63
      %s307 = scalar_select %p306, %s305, 63
      %p308 = scmp.lt.s32.totalorder %s23, 0
      %s309 = scalar_select %p308, %s23, 0
      %s310 = sadd.s32 %s309, %s307
      %s311 = smul.addr %s310, 4
      %s312 = scalar_lea.vmem %s0, %s311
      %s313 = smul.u32 32, %s21
      %s314 = smul.u32 4, %s23
      %p315 = scmp.lt.s32.totalorder %s314, 3
      %s316 = scalar_select %p315, %s314, 3
      %p317 = scmp.lt.s32.totalorder %s22, 0
      %s318 = scalar_select %p317, %s22, 0
      %s319 = sadd.s32 %s318, %s316
      %s320 = smul.addr %s319, 4
      %s321 = scalar_lea.vmem %s1, %s320
      %s322 = smul.u32 4, %s23
      %p323 = scmp.lt.s32.totalorder %s23, 0
      %s324 = scalar_select %p323, %s23, 0
      %s325 = scalar_lea.vmem %s2, %s324
      %p326 = scmp.lt.s32.totalorder %s23, 0
      %s327 = scalar_select %p326, %s23, 0
      %s328 = scalar_lea.vmem %s3, %s327
      %p329 = scmp.lt.s32.totalorder %s22, 0
      %s330 = scalar_select %p329, %s22, 0
      %s331 = scalar_lea.vmem %s4, %s330
      %s332 = smul.u32 32, %s21
      %p333 = scmp.lt.s32.totalorder %s332, 63
      %s334 = scalar_select %p333, %s332, 63
      %p335 = scmp.lt.s32.totalorder %s22, 0
      %s336 = scalar_select %p335, %s22, 0
      %s337 = sadd.s32 %s336, %s334
      %s338 = smul.addr %s337, 8
      %s339 = scalar_lea.vmem %s5, %s338
      %s340 = smul.u32 32, %s21
      %p342 = scmp.eq.s32.totalorder %s23, 0
      // Predicated region
      $region41: #{unet_multihead_rot_forward.27} parent=39 // pred_check
        %p343 = pneg %p342
      $region42: #{unet_multihead_rot_forward.27} parent=39 // pred_check_branch
        %345 = sbr.rel (%p343) target = $region44
      $region43: #{unet_multihead_rot_forward.27} parent=39 // pred_region
        %vm346 = vcmask 523264
        %347 = vst.msk [vmem:[#allocation2] sm:$0xff] %vm346, 0.0
        %348 = vst.msk [vmem:[#allocation2 + $0x8] sm:$0xff] %vm346, 0.0
        %349 = vst.msk [vmem:[#allocation2 + $0x10] sm:$0xff] %vm346, 0.0
        %350 = vst.msk [vmem:[#allocation2 + $0x18] sm:$0xff] %vm346, 0.0
        %351 = vst.msk [vmem:[#allocation2 + $0x20] sm:$0xff] %vm346, 0.0
        %352 = vst.msk [vmem:[#allocation2 + $0x28] sm:$0xff] %vm346, 0.0
        %353 = vst.msk [vmem:[#allocation2 + $0x30] sm:$0xff] %vm346, 0.0
        %354 = vst.msk [vmem:[#allocation2 + $0x38] sm:$0xff] %vm346, 0.0
        %355 = vst.msk [vmem:[#allocation2 + $0x40] sm:$0xff] %vm346, 0.0
        %356 = vst.msk [vmem:[#allocation2 + $0x48] sm:$0xff] %vm346, 0.0
        %357 = vst.msk [vmem:[#allocation2 + $0x50] sm:$0xff] %vm346, 0.0
        %358 = vst.msk [vmem:[#allocation2 + $0x58] sm:$0xff] %vm346, 0.0
        %359 = vst.msk [vmem:[#allocation2 + $0x60] sm:$0xff] %vm346, 0.0
        %360 = vst.msk [vmem:[#allocation2 + $0x68] sm:$0xff] %vm346, 0.0
        %361 = vst.msk [vmem:[#allocation2 + $0x70] sm:$0xff] %vm346, 0.0
        %362 = vst.msk [vmem:[#allocation2 + $0x78] sm:$0xff] %vm346, 0.0
        %363 = vst.msk [vmem:[#allocation2 + $0x80] sm:$0xff] %vm346, 0.0
        %364 = vst.msk [vmem:[#allocation2 + $0x88] sm:$0xff] %vm346, 0.0
        %365 = vst.msk [vmem:[#allocation2 + $0x90] sm:$0xff] %vm346, 0.0
        %366 = vst.msk [vmem:[#allocation2 + $0x98] sm:$0xff] %vm346, 0.0
        %367 = vst.msk [vmem:[#allocation2 + $0xa0] sm:$0xff] %vm346, 0.0
        %368 = vst.msk [vmem:[#allocation2 + $0xa8] sm:$0xff] %vm346, 0.0
        %369 = vst.msk [vmem:[#allocation2 + $0xb0] sm:$0xff] %vm346, 0.0
        %370 = vst.msk [vmem:[#allocation2 + $0xb8] sm:$0xff] %vm346, 0.0
        %371 = vst.msk [vmem:[#allocation2 + $0xc0] sm:$0xff] %vm346, 0.0
        %372 = vst.msk [vmem:[#allocation2 + $0xc8] sm:$0xff] %vm346, 0.0
        %373 = vst.msk [vmem:[#allocation2 + $0xd0] sm:$0xff] %vm346, 0.0
        %374 = vst.msk [vmem:[#allocation2 + $0xd8] sm:$0xff] %vm346, 0.0
        %375 = vst.msk [vmem:[#allocation2 + $0xe0] sm:$0xff] %vm346, 0.0
        %376 = vst.msk [vmem:[#allocation2 + $0xe8] sm:$0xff] %vm346, 0.0
        %377 = vst.msk [vmem:[#allocation2 + $0xf0] sm:$0xff] %vm346, 0.0
        %378 = vst.msk [vmem:[#allocation2 + $0xf8] sm:$0xff] %vm346, 0.0
      $region44: #{unet_multihead_rot_forward.27} parent=39 // pred_fallthru
        _
      %v379 = vld [vmem:[%s312] sm:$0xf]
      %v380 = vld [vmem:[%s312 + $0x4] sm:$0xf]
      %v381 = vld [vmem:[%s312 + $0x8] sm:$0xf]
      %v382 = vld [vmem:[%s312 + $0xc] sm:$0xf]
      %v383 = vld [vmem:[%s312 + $0x10] sm:$0xf]
      %v384 = vld [vmem:[%s312 + $0x14] sm:$0xf]
      %v385 = vld [vmem:[%s312 + $0x18] sm:$0xf]
      %v386 = vld [vmem:[%s312 + $0x1c] sm:$0xf]
      %v387 = vld [vmem:[%s312 + $0x20] sm:$0xf]
      %v388 = vld [vmem:[%s312 + $0x24] sm:$0xf]
      %v389 = vld [vmem:[%s312 + $0x28] sm:$0xf]
      %v390 = vld [vmem:[%s312 + $0x2c] sm:$0xf]
      %v391 = vld [vmem:[%s312 + $0x30] sm:$0xf]
      %v392 = vld [vmem:[%s312 + $0x34] sm:$0xf]
      %v393 = vld [vmem:[%s312 + $0x38] sm:$0xf]
      %v394 = vld [vmem:[%s312 + $0x3c] sm:$0xf]
      %v395 = vld [vmem:[%s312 + $0x40] sm:$0xf]
      %v396 = vld [vmem:[%s312 + $0x44] sm:$0xf]
      %v397 = vld [vmem:[%s312 + $0x48] sm:$0xf]
      %v398 = vld [vmem:[%s312 + $0x4c] sm:$0xf]
      %v399 = vld [vmem:[%s312 + $0x50] sm:$0xf]
      %v400 = vld [vmem:[%s312 + $0x54] sm:$0xf]
      %v401 = vld [vmem:[%s312 + $0x58] sm:$0xf]
      %v402 = vld [vmem:[%s312 + $0x5c] sm:$0xf]
      %v403 = vld [vmem:[%s312 + $0x60] sm:$0xf]
      %v404 = vld [vmem:[%s312 + $0x64] sm:$0xf]
      %v405 = vld [vmem:[%s312 + $0x68] sm:$0xf]
      %v406 = vld [vmem:[%s312 + $0x6c] sm:$0xf]
      %v407 = vld [vmem:[%s312 + $0x70] sm:$0xf]
      %v408 = vld [vmem:[%s312 + $0x74] sm:$0xf]
      %v409 = vld [vmem:[%s312 + $0x78] sm:$0xf]
      %v410 = vld [vmem:[%s312 + $0x7c] sm:$0xf]
      %v411 = vld [vmem:[#allocation2] sm:$0xff]
      %v412 = vld [vmem:[#allocation2 + $0x8] sm:$0xff]
      %v413 = vld [vmem:[#allocation2 + $0x10] sm:$0xff]
      %v414 = vld [vmem:[#allocation2 + $0x18] sm:$0xff]
      %v415 = vld [vmem:[#allocation2 + $0x20] sm:$0xff]
      %v416 = vld [vmem:[#allocation2 + $0x28] sm:$0xff]
      %v417 = vld [vmem:[#allocation2 + $0x30] sm:$0xff]
      %v418 = vld [vmem:[#allocation2 + $0x38] sm:$0xff]
      %v419 = vld [vmem:[#allocation2 + $0x40] sm:$0xff]
      %v420 = vld [vmem:[#allocation2 + $0x48] sm:$0xff]
      %v421 = vld [vmem:[#allocation2 + $0x50] sm:$0xff]
      %v422 = vld [vmem:[#allocation2 + $0x58] sm:$0xff]
      %v423 = vld [vmem:[#allocation2 + $0x60] sm:$0xff]
      %v424 = vld [vmem:[#allocation2 + $0x68] sm:$0xff]
      %v425 = vld [vmem:[#allocation2 + $0x70] sm:$0xff]
      %v426 = vld [vmem:[#allocation2 + $0x78] sm:$0xff]
      %v427 = vld [vmem:[#allocation2 + $0x80] sm:$0xff]
      %v428 = vld [vmem:[#allocation2 + $0x88] sm:$0xff]
      %v429 = vld [vmem:[#allocation2 + $0x90] sm:$0xff]
      %v430 = vld [vmem:[#allocation2 + $0x98] sm:$0xff]
      %v431 = vld [vmem:[#allocation2 + $0xa0] sm:$0xff]
      %v432 = vld [vmem:[#allocation2 + $0xa8] sm:$0xff]
      %v433 = vld [vmem:[#allocation2 + $0xb0] sm:$0xff]
      %v434 = vld [vmem:[#allocation2 + $0xb8] sm:$0xff]
      %v435 = vld [vmem:[#allocation2 + $0xc0] sm:$0xff]
      %v436 = vld [vmem:[#allocation2 + $0xc8] sm:$0xff]
      %v437 = vld [vmem:[#allocation2 + $0xd0] sm:$0xff]
      %v438 = vld [vmem:[#allocation2 + $0xd8] sm:$0xff]
      %v439 = vld [vmem:[#allocation2 + $0xe0] sm:$0xff]
      %v440 = vld [vmem:[#allocation2 + $0xe8] sm:$0xff]
      %v441 = vld [vmem:[#allocation2 + $0xf0] sm:$0xff]
      %v442 = vld [vmem:[#allocation2 + $0xf8] sm:$0xff]
      %v443 = vld [vmem:[%s321] sm:$0xf]
      %v444 = vld [vmem:[%s321 + $0x4] sm:$0xf]
      %v445 = vld [vmem:[%s321 + $0x8] sm:$0xf]
      %v446 = vld [vmem:[%s321 + $0xc] sm:$0x3]
      %v479 = vunpack.c.l.b16 %v379
      %v480 = vunpack.c.l.b16 %v380
      %v481 = vunpack.c.l.b16 %v381
      %v482 = vunpack.c.l.b16 %v382
      %v483 = vunpack.c.l.b16 %v383
      %v484 = vunpack.c.l.b16 %v384
      %v485 = vunpack.c.l.b16 %v385
      %v486 = vunpack.c.l.b16 %v386
      %v487 = vunpack.c.l.b16 %v387
      %v488 = vunpack.c.l.b16 %v388
      %v489 = vunpack.c.l.b16 %v389
      %v490 = vunpack.c.l.b16 %v390
      %v491 = vunpack.c.l.b16 %v391
      %v492 = vunpack.c.l.b16 %v392
      %v493 = vunpack.c.l.b16 %v393
      %v494 = vunpack.c.l.b16 %v394
      %v495 = vunpack.c.l.b16 %v395
      %v496 = vunpack.c.l.b16 %v396
      %v497 = vunpack.c.l.b16 %v397
      %v498 = vunpack.c.l.b16 %v398
      %v499 = vunpack.c.l.b16 %v399
      %v500 = vunpack.c.l.b16 %v400
      %v501 = vunpack.c.l.b16 %v401
      %v502 = vunpack.c.l.b16 %v402
      %v503 = vunpack.c.l.b16 %v403
      %v504 = vunpack.c.l.b16 %v404
      %v505 = vunpack.c.l.b16 %v405
      %v506 = vunpack.c.l.b16 %v406
      %v507 = vunpack.c.l.b16 %v407
      %v508 = vunpack.c.l.b16 %v408
      %v509 = vunpack.c.l.b16 %v409
      %v510 = vunpack.c.l.b16 %v410
      %v511 = vpack.c.b16 %v480, %v479
      %v512 = vpack.c.b16 %v482, %v481
      %v513 = vpack.c.b16 %v484, %v483
      %v514 = vpack.c.b16 %v486, %v485
      %v515 = vpack.c.b16 %v488, %v487
      %v516 = vpack.c.b16 %v490, %v489
      %v517 = vpack.c.b16 %v492, %v491
      %v518 = vpack.c.b16 %v494, %v493
      %v519 = vpack.c.b16 %v496, %v495
      %v520 = vpack.c.b16 %v498, %v497
      %v521 = vpack.c.b16 %v500, %v499
      %v522 = vpack.c.b16 %v502, %v501
      %v523 = vpack.c.b16 %v504, %v503
      %v524 = vpack.c.b16 %v506, %v505
      %v525 = vpack.c.b16 %v508, %v507
      %v526 = vpack.c.b16 %v510, %v509
      %v531 = vunpack.c.l.b16 %v443
      %v532 = vunpack.c.l.b16 %v444
      %v533 = vunpack.c.l.b16 %v445
      %v534 = vunpack.c.l.b16 %v446
      %v535 = vpack.c.b16 %v532, %v531
      %v536 = vpack.c.b16 %v534, %v533
      %vm538 = vcmask 220160
      %v540 = vsel %vm538, %v511, 0
      %v543 = vsel %vm538, %v512, 0
      %v546 = vsel %vm538, %v513, 0
      %v549 = vsel %vm538, %v514, 0
      %v552 = vsel %vm538, %v515, 0
      %v555 = vsel %vm538, %v516, 0
      %v558 = vsel %vm538, %v517, 0
      %v561 = vsel %vm538, %v518, 0
      %v564 = vsel %vm538, %v519, 0
      %v567 = vsel %vm538, %v520, 0
      %v570 = vsel %vm538, %v521, 0
      %v573 = vsel %vm538, %v522, 0
      %v576 = vsel %vm538, %v523, 0
      %v579 = vsel %vm538, %v524, 0
      %v582 = vsel %vm538, %v525, 0
      %v585 = vsel %vm538, %v526, 0
      %vm587 = vcmask 1044480
      %vm588 = vcmask 1045504
      %v589 = vsel %vm587, 4294967295, 65535
      %v590 = vsel %vm588, %v589, 0
      %v592 = vand.u32 %v536, %v590
      %594 = vmatprep.subr.bf16.mxu0 0
      %595 = vmatpush1.bf16.msra.mxu0 %v535
      %596 = vmatprep.subr.bf16.mxu0 0
      %597 = vmatpush1.bf16.msra.mxu0 %v592
      %598 = vmatprep.subr.bf16.mxu0 0
      %599 = vmatpush1.bf16.msra.mxu0 0
      %600 = vmatprep.subr.bf16.mxu0 0
      %601 = vmatpush1.bf16.msra.mxu0 0
      %602 = vmatprep.subr.bf16.mxu0 0
      %603 = vmatpush1.bf16.msra.mxu0 0
      %604 = vmatprep.subr.bf16.mxu0 0
      %605 = vmatpush1.bf16.msra.mxu0 0
      %606 = vmatprep.subr.bf16.mxu0 0
      %607 = vmatpush1.bf16.msra.mxu0 0
      %608 = vmatprep.subr.bf16.mxu0 0
      %609 = vmatpush1.bf16.msra.mxu0 0
      %610 = vmatprep.subr.bf16.mxu0 0
      %611 = vmatpush1.bf16.msra.mxu0 0
      %612 = vmatprep.subr.bf16.mxu0 0
      %613 = vmatpush1.bf16.msra.mxu0 0
      %614 = vmatprep.subr.bf16.mxu0 0
      %615 = vmatpush1.bf16.msra.mxu0 0
      %616 = vmatprep.subr.bf16.mxu0 0
      %617 = vmatpush1.bf16.msra.mxu0 0
      %618 = vmatprep.subr.bf16.mxu0 0
      %619 = vmatpush1.bf16.msra.mxu0 0
      %620 = vmatprep.subr.bf16.mxu0 0
      %621 = vmatpush1.bf16.msra.mxu0 0
      %622 = vmatprep.subr.bf16.mxu0 0
      %623 = vmatpush1.bf16.msra.mxu0 0
      %624 = vmatprep.subr.bf16.mxu0 0
      %625 = vmatpush1.bf16.msra.mxu0 0
      %626 = vmatprep.mubr.bf16.mxu0 0
      %627 = vmatmul.mubr.bf16.gmra.mrb[0].mxu0 %v540
      %v628 = vpop.f32.mrb[0].mxu0
      %v629 = vadd.f32 0.0, %v628
      %v630 = vpop.f32.mrb[0].mxu0
      %v631 = vpop.f32.mrb[0].mxu0
      %v632 = vadd.f32 0.0, %v631
      %v633 = vpop.f32.mrb[0].mxu0
      %634 = vmatprep.mubr.bf16.mxu0 0
      %635 = vmatmul.mubr.bf16.gmra.mrb[0].mxu0 %v543
      %v636 = vpop.f32.mrb[0].mxu0
      %v637 = vadd.f32 0.0, %v636
      %v638 = vpop.f32.mrb[0].mxu0
      %v639 = vpop.f32.mrb[0].mxu0
      %v640 = vadd.f32 0.0, %v639
      %v641 = vpop.f32.mrb[0].mxu0
      %642 = vmatprep.mubr.bf16.mxu0 0
      %643 = vmatmul.mubr.bf16.gmra.mrb[0].mxu0 %v546
      %v644 = vpop.f32.mrb[0].mxu0
      %v645 = vadd.f32 0.0, %v644
      %v646 = vpop.f32.mrb[0].mxu0
      %v647 = vpop.f32.mrb[0].mxu0
      %v648 = vadd.f32 0.0, %v647
      %v649 = vpop.f32.mrb[0].mxu0
      %650 = vmatprep.mubr.bf16.mxu0 0
      %651 = vmatmul.mubr.bf16.gmra.mrb[0].mxu0 %v549
      %v652 = vpop.f32.mrb[0].mxu0
      %v653 = vadd.f32 0.0, %v652
      %v654 = vpop.f32.mrb[0].mxu0
      %v655 = vpop.f32.mrb[0].mxu0
      %v656 = vadd.f32 0.0, %v655
      %v657 = vpop.f32.mrb[0].mxu0
      %658 = vmatprep.mubr.bf16.mxu0 0
      %659 = vmatmul.mubr.bf16.gmra.mrb[0].mxu0 %v552
      %v660 = vpop.f32.mrb[0].mxu0
      %v661 = vadd.f32 0.0, %v660
      %v662 = vpop.f32.mrb[0].mxu0
      %v663 = vpop.f32.mrb[0].mxu0
      %v664 = vadd.f32 0.0, %v663
      %v665 = vpop.f32.mrb[0].mxu0
      %666 = vmatprep.mubr.bf16.mxu0 0
      %667 = vmatmul.mubr.bf16.gmra.mrb[0].mxu0 %v555
      %v668 = vpop.f32.mrb[0].mxu0
      %v669 = vadd.f32 0.0, %v668
      %v670 = vpop.f32.mrb[0].mxu0
      %v671 = vpop.f32.mrb[0].mxu0
      %v672 = vadd.f32 0.0, %v671
      %v673 = vpop.f32.mrb[0].mxu0
      %674 = vmatprep.mubr.bf16.mxu0 0
      %675 = vmatmul.mubr.bf16.gmra.mrb[0].mxu0 %v558
      %v676 = vpop.f32.mrb[0].mxu0
      %v677 = vadd.f32 0.0, %v676
      %v678 = vpop.f32.mrb[0].mxu0
      %v679 = vpop.f32.mrb[0].mxu0
      %v680 = vadd.f32 0.0, %v679
      %v681 = vpop.f32.mrb[0].mxu0
      %682 = vmatprep.mubr.bf16.mxu0 0
      %683 = vmatmul.mubr.bf16.gmra.mrb[0].mxu0 %v561
      %v684 = vpop.f32.mrb[0].mxu0
      %v685 = vadd.f32 0.0, %v684
      %v686 = vpop.f32.mrb[0].mxu0
      %v687 = vpop.f32.mrb[0].mxu0
      %v688 = vadd.f32 0.0, %v687
      %v689 = vpop.f32.mrb[0].mxu0
      %690 = vmatprep.mubr.bf16.mxu0 0
      %691 = vmatmul.mubr.bf16.gmra.mrb[0].mxu0 %v564
      %v692 = vpop.f32.mrb[0].mxu0
      %v693 = vadd.f32 0.0, %v692
      %v694 = vpop.f32.mrb[0].mxu0
      %v695 = vpop.f32.mrb[0].mxu0
      %v696 = vadd.f32 0.0, %v695
      %v697 = vpop.f32.mrb[0].mxu0
      %698 = vmatprep.mubr.bf16.mxu0 0
      %699 = vmatmul.mubr.bf16.gmra.mrb[0].mxu0 %v567
      %v700 = vpop.f32.mrb[0].mxu0
      %v701 = vadd.f32 0.0, %v700
      %v702 = vpop.f32.mrb[0].mxu0
      %v703 = vpop.f32.mrb[0].mxu0
      %v704 = vadd.f32 0.0, %v703
      %v705 = vpop.f32.mrb[0].mxu0
      %706 = vmatprep.mubr.bf16.mxu0 0
      %707 = vmatmul.mubr.bf16.gmra.mrb[0].mxu0 %v570
      %v708 = vpop.f32.mrb[0].mxu0
      %v709 = vadd.f32 0.0, %v708
      %v710 = vpop.f32.mrb[0].mxu0
      %v711 = vpop.f32.mrb[0].mxu0
      %v712 = vadd.f32 0.0, %v711
      %v713 = vpop.f32.mrb[0].mxu0
      %714 = vmatprep.mubr.bf16.mxu0 0
      %715 = vmatmul.mubr.bf16.gmra.mrb[0].mxu0 %v573
      %v716 = vpop.f32.mrb[0].mxu0
      %v717 = vadd.f32 0.0, %v716
      %v718 = vpop.f32.mrb[0].mxu0
      %v719 = vpop.f32.mrb[0].mxu0
      %v720 = vadd.f32 0.0, %v719
      %v721 = vpop.f32.mrb[0].mxu0
      %722 = vmatprep.mubr.bf16.mxu0 0
      %723 = vmatmul.mubr.bf16.gmra.mrb[0].mxu0 %v576
      %v724 = vpop.f32.mrb[0].mxu0
      %v725 = vadd.f32 0.0, %v724
      %v726 = vpop.f32.mrb[0].mxu0
      %v727 = vpop.f32.mrb[0].mxu0
      %v728 = vadd.f32 0.0, %v727
      %v729 = vpop.f32.mrb[0].mxu0
      %730 = vmatprep.mubr.bf16.mxu0 0
      %731 = vmatmul.mubr.bf16.gmra.mrb[0].mxu0 %v579
      %v732 = vpop.f32.mrb[0].mxu0
      %v733 = vadd.f32 0.0, %v732
      %v734 = vpop.f32.mrb[0].mxu0
      %v735 = vpop.f32.mrb[0].mxu0
      %v736 = vadd.f32 0.0, %v735
      %v737 = vpop.f32.mrb[0].mxu0
      %738 = vmatprep.mubr.bf16.mxu0 0
      %739 = vmatmul.mubr.bf16.gmra.mrb[0].mxu0 %v582
      %v740 = vpop.f32.mrb[0].mxu0
      %v741 = vadd.f32 0.0, %v740
      %v742 = vpop.f32.mrb[0].mxu0
      %v743 = vpop.f32.mrb[0].mxu0
      %v744 = vadd.f32 0.0, %v743
      %v745 = vpop.f32.mrb[0].mxu0
      %746 = vmatprep.mubr.bf16.mxu0 0
      %747 = vmatmul.mubr.bf16.gmra.mrb[0].mxu0 %v585
      %v748 = vpop.f32.mrb[0].mxu0
      %v749 = vadd.f32 0.0, %v748
      %v750 = vpop.f32.mrb[0].mxu0
      %v751 = vpop.f32.mrb[0].mxu0
      %v752 = vadd.f32 0.0, %v751
      %v753 = vpop.f32.mrb[0].mxu0
      %754 = vdwg.mxu0
      %v755 = vadd.f32 %v411, %v629
      %v756 = vadd.f32 %v412, %v632
      %v757 = vadd.f32 %v413, %v637
      %v758 = vadd.f32 %v414, %v640
      %v759 = vadd.f32 %v415, %v645
      %v760 = vadd.f32 %v416, %v648
      %v761 = vadd.f32 %v417, %v653
      %v762 = vadd.f32 %v418, %v656
      %v763 = vadd.f32 %v419, %v661
      %v764 = vadd.f32 %v420, %v664
      %v765 = vadd.f32 %v421, %v669
      %v766 = vadd.f32 %v422, %v672
      %v767 = vadd.f32 %v423, %v677
      %v768 = vadd.f32 %v424, %v680
      %v769 = vadd.f32 %v425, %v685
      %v770 = vadd.f32 %v426, %v688
      %v771 = vadd.f32 %v427, %v693
      %v772 = vadd.f32 %v428, %v696
      %v773 = vadd.f32 %v429, %v701
      %v774 = vadd.f32 %v430, %v704
      %v775 = vadd.f32 %v431, %v709
      %v776 = vadd.f32 %v432, %v712
      %v777 = vadd.f32 %v433, %v717
      %v778 = vadd.f32 %v434, %v720
      %v779 = vadd.f32 %v435, %v725
      %v780 = vadd.f32 %v436, %v728
      %v781 = vadd.f32 %v437, %v733
      %v782 = vadd.f32 %v438, %v736
      %v783 = vadd.f32 %v439, %v741
      %v784 = vadd.f32 %v440, %v744
      %v785 = vadd.f32 %v441, %v749
      %v786 = vadd.f32 %v442, %v752
      %vm787 = vcmask 523264
      %788 = vst.msk [vmem:[#allocation2] sm:$0xff] %vm787, %v755
      %789 = vst.msk [vmem:[#allocation2 + $0x8] sm:$0xff] %vm787, %v756
      %790 = vst.msk [vmem:[#allocation2 + $0x10] sm:$0xff] %vm787, %v757
      %791 = vst.msk [vmem:[#allocation2 + $0x18] sm:$0xff] %vm787, %v758
      %792 = vst.msk [vmem:[#allocation2 + $0x20] sm:$0xff] %vm787, %v759
      %793 = vst.msk [vmem:[#allocation2 + $0x28] sm:$0xff] %vm787, %v760
      %794 = vst.msk [vmem:[#allocation2 + $0x30] sm:$0xff] %vm787, %v761
      %795 = vst.msk [vmem:[#allocation2 + $0x38] sm:$0xff] %vm787, %v762
      %796 = vst.msk [vmem:[#allocation2 + $0x40] sm:$0xff] %vm787, %v763
      %797 = vst.msk [vmem:[#allocation2 + $0x48] sm:$0xff] %vm787, %v764
      %798 = vst.msk [vmem:[#allocation2 + $0x50] sm:$0xff] %vm787, %v765
      %799 = vst.msk [vmem:[#allocation2 + $0x58] sm:$0xff] %vm787, %v766
      %800 = vst.msk [vmem:[#allocation2 + $0x60] sm:$0xff] %vm787, %v767
      %801 = vst.msk [vmem:[#allocation2 + $0x68] sm:$0xff] %vm787, %v768
      %802 = vst.msk [vmem:[#allocation2 + $0x70] sm:$0xff] %vm787, %v769
      %803 = vst.msk [vmem:[#allocation2 + $0x78] sm:$0xff] %vm787, %v770
      %804 = vst.msk [vmem:[#allocation2 + $0x80] sm:$0xff] %vm787, %v771
      %805 = vst.msk [vmem:[#allocation2 + $0x88] sm:$0xff] %vm787, %v772
      %806 = vst.msk [vmem:[#allocation2 + $0x90] sm:$0xff] %vm787, %v773
      %807 = vst.msk [vmem:[#allocation2 + $0x98] sm:$0xff] %vm787, %v774
      %808 = vst.msk [vmem:[#allocation2 + $0xa0] sm:$0xff] %vm787, %v775
      %809 = vst.msk [vmem:[#allocation2 + $0xa8] sm:$0xff] %vm787, %v776
      %810 = vst.msk [vmem:[#allocation2 + $0xb0] sm:$0xff] %vm787, %v777
      %811 = vst.msk [vmem:[#allocation2 + $0xb8] sm:$0xff] %vm787, %v778
      %812 = vst.msk [vmem:[#allocation2 + $0xc0] sm:$0xff] %vm787, %v779
      %813 = vst.msk [vmem:[#allocation2 + $0xc8] sm:$0xff] %vm787, %v780
      %814 = vst.msk [vmem:[#allocation2 + $0xd0] sm:$0xff] %vm787, %v781
      %815 = vst.msk [vmem:[#allocation2 + $0xd8] sm:$0xff] %vm787, %v782
      %816 = vst.msk [vmem:[#allocation2 + $0xe0] sm:$0xff] %vm787, %v783
      %817 = vst.msk [vmem:[#allocation2 + $0xe8] sm:$0xff] %vm787, %v784
      %818 = vst.msk [vmem:[#allocation2 + $0xf0] sm:$0xff] %vm787, %v785
      %819 = vst.msk [vmem:[#allocation2 + $0xf8] sm:$0xff] %vm787, %v786
      // Predicated region
      $region45: #{unet_multihead_rot_forward.27} parent=39 // pred_check
        %p820 = pneg %p342
      $region46: #{unet_multihead_rot_forward.27} parent=39 // pred_check_branch
        %822 = sbr.rel (%p820) target = $region48
      $region47: #{unet_multihead_rot_forward.27} parent=39 // pred_region
        %v823 = vld [vmem:[#allocation2] sm:$0xff]
        %v824 = vld [vmem:[#allocation2 + $0x8] sm:$0xff]
        %v825 = vld [vmem:[#allocation2 + $0x10] sm:$0xff]
        %v826 = vld [vmem:[#allocation2 + $0x18] sm:$0xff]
        %v827 = vld [vmem:[#allocation2 + $0x20] sm:$0xff]
        %v828 = vld [vmem:[#allocation2 + $0x28] sm:$0xff]
        %v829 = vld [vmem:[#allocation2 + $0x30] sm:$0xff]
        %v830 = vld [vmem:[#allocation2 + $0x38] sm:$0xff]
        %v831 = vld [vmem:[#allocation2 + $0x40] sm:$0xff]
        %v832 = vld [vmem:[#allocation2 + $0x48] sm:$0xff]
        %v833 = vld [vmem:[#allocation2 + $0x50] sm:$0xff]
        %v834 = vld [vmem:[#allocation2 + $0x58] sm:$0xff]
        %v835 = vld [vmem:[#allocation2 + $0x60] sm:$0xff]
        %v836 = vld [vmem:[#allocation2 + $0x68] sm:$0xff]
        %v837 = vld [vmem:[#allocation2 + $0x70] sm:$0xff]
        %v838 = vld [vmem:[#allocation2 + $0x78] sm:$0xff]
        %v839 = vld [vmem:[#allocation2 + $0x80] sm:$0xff]
        %v840 = vld [vmem:[#allocation2 + $0x88] sm:$0xff]
        %v841 = vld [vmem:[#allocation2 + $0x90] sm:$0xff]
        %v842 = vld [vmem:[#allocation2 + $0x98] sm:$0xff]
        %v843 = vld [vmem:[#allocation2 + $0xa0] sm:$0xff]
        %v844 = vld [vmem:[#allocation2 + $0xa8] sm:$0xff]
        %v845 = vld [vmem:[#allocation2 + $0xb0] sm:$0xff]
        %v846 = vld [vmem:[#allocation2 + $0xb8] sm:$0xff]
        %v847 = vld [vmem:[#allocation2 + $0xc0] sm:$0xff]
        %v848 = vld [vmem:[#allocation2 + $0xc8] sm:$0xff]
        %v849 = vld [vmem:[#allocation2 + $0xd0] sm:$0xff]
        %v850 = vld [vmem:[#allocation2 + $0xd8] sm:$0xff]
        %v851 = vld [vmem:[#allocation2 + $0xe0] sm:$0xff]
        %v852 = vld [vmem:[#allocation2 + $0xe8] sm:$0xff]
        %v853 = vld [vmem:[#allocation2 + $0xf0] sm:$0xff]
        %v854 = vld [vmem:[#allocation2 + $0xf8] sm:$0xff]
        %v855 = vld [vmem:[%s331] sm:$0x1]
        %v857 = vlaneseq
        %v858 = vshrl.u32 %v857, 7
        %v859 = vsub.s32 0, %v858
        %v860 = vrot.slane %v855, %v859
        %v862 = vadd.f32 %v823, %v860
        %v863 = vadd.f32 %v824, %v860
        %v864 = vadd.f32 %v825, %v860
        %v865 = vadd.f32 %v826, %v860
        %v866 = vadd.f32 %v827, %v860
        %v867 = vadd.f32 %v828, %v860
        %v868 = vadd.f32 %v829, %v860
        %v869 = vadd.f32 %v830, %v860
        %v870 = vadd.f32 %v831, %v860
        %v871 = vadd.f32 %v832, %v860
        %v872 = vadd.f32 %v833, %v860
        %v873 = vadd.f32 %v834, %v860
        %v874 = vadd.f32 %v835, %v860
        %v875 = vadd.f32 %v836, %v860
        %v876 = vadd.f32 %v837, %v860
        %v877 = vadd.f32 %v838, %v860
        %v878 = vadd.f32 %v839, %v860
        %v879 = vadd.f32 %v840, %v860
        %v880 = vadd.f32 %v841, %v860
        %v881 = vadd.f32 %v842, %v860
        %v882 = vadd.f32 %v843, %v860
        %v883 = vadd.f32 %v844, %v860
        %v884 = vadd.f32 %v845, %v860
        %v885 = vadd.f32 %v846, %v860
        %v886 = vadd.f32 %v847, %v860
        %v887 = vadd.f32 %v848, %v860
        %v888 = vadd.f32 %v849, %v860
        %v889 = vadd.f32 %v850, %v860
        %v890 = vadd.f32 %v851, %v860
        %v891 = vadd.f32 %v852, %v860
        %v892 = vadd.f32 %v853, %v860
        %v893 = vadd.f32 %v854, %v860
        %v894 = vmax.f32 %v862, 0.0
        %v895 = vmax.f32 %v863, 0.0
        %v896 = vmax.f32 %v864, 0.0
        %v897 = vmax.f32 %v865, 0.0
        %v898 = vmax.f32 %v866, 0.0
        %v899 = vmax.f32 %v867, 0.0
        %v900 = vmax.f32 %v868, 0.0
        %v901 = vmax.f32 %v869, 0.0
        %v902 = vmax.f32 %v870, 0.0
        %v903 = vmax.f32 %v871, 0.0
        %v904 = vmax.f32 %v872, 0.0
        %v905 = vmax.f32 %v873, 0.0
        %v906 = vmax.f32 %v874, 0.0
        %v907 = vmax.f32 %v875, 0.0
        %v908 = vmax.f32 %v876, 0.0
        %v909 = vmax.f32 %v877, 0.0
        %v910 = vmax.f32 %v878, 0.0
        %v911 = vmax.f32 %v879, 0.0
        %v912 = vmax.f32 %v880, 0.0
        %v913 = vmax.f32 %v881, 0.0
        %v914 = vmax.f32 %v882, 0.0
        %v915 = vmax.f32 %v883, 0.0
        %v916 = vmax.f32 %v884, 0.0
        %v917 = vmax.f32 %v885, 0.0
        %v918 = vmax.f32 %v886, 0.0
        %v919 = vmax.f32 %v887, 0.0
        %v920 = vmax.f32 %v888, 0.0
        %v921 = vmax.f32 %v889, 0.0
        %v922 = vmax.f32 %v890, 0.0
        %v923 = vmax.f32 %v891, 0.0
        %v924 = vmax.f32 %v892, 0.0
        %v925 = vmax.f32 %v893, 0.0
        %926 = vst.msk [vmem:[%s339] sm:$0xff] %vm787, %v894
        %927 = vst.msk [vmem:[%s339 + $0x8] sm:$0xff] %vm787, %v895
        %928 = vst.msk [vmem:[%s339 + $0x10] sm:$0xff] %vm787, %v896
        %929 = vst.msk [vmem:[%s339 + $0x18] sm:$0xff] %vm787, %v897
        %930 = vst.msk [vmem:[%s339 + $0x20] sm:$0xff] %vm787, %v898
        %931 = vst.msk [vmem:[%s339 + $0x28] sm:$0xff] %vm787, %v899
        %932 = vst.msk [vmem:[%s339 + $0x30] sm:$0xff] %vm787, %v900
        %933 = vst.msk [vmem:[%s339 + $0x38] sm:$0xff] %vm787, %v901
        %934 = vst.msk [vmem:[%s339 + $0x40] sm:$0xff] %vm787, %v902
        %935 = vst.msk [vmem:[%s339 + $0x48] sm:$0xff] %vm787, %v903
        %936 = vst.msk [vmem:[%s339 + $0x50] sm:$0xff] %vm787, %v904
        %937 = vst.msk [vmem:[%s339 + $0x58] sm:$0xff] %vm787, %v905
        %938 = vst.msk [vmem:[%s339 + $0x60] sm:$0xff] %vm787, %v906
        %939 = vst.msk [vmem:[%s339 + $0x68] sm:$0xff] %vm787, %v907
        %940 = vst.msk [vmem:[%s339 + $0x70] sm:$0xff] %vm787, %v908
        %941 = vst.msk [vmem:[%s339 + $0x78] sm:$0xff] %vm787, %v909
        %942 = vst.msk [vmem:[%s339 + $0x80] sm:$0xff] %vm787, %v910
        %943 = vst.msk [vmem:[%s339 + $0x88] sm:$0xff] %vm787, %v911
        %944 = vst.msk [vmem:[%s339 + $0x90] sm:$0xff] %vm787, %v912
        %945 = vst.msk [vmem:[%s339 + $0x98] sm:$0xff] %vm787, %v913
        %946 = vst.msk [vmem:[%s339 + $0xa0] sm:$0xff] %vm787, %v914
        %947 = vst.msk [vmem:[%s339 + $0xa8] sm:$0xff] %vm787, %v915
        %948 = vst.msk [vmem:[%s339 + $0xb0] sm:$0xff] %vm787, %v916
        %949 = vst.msk [vmem:[%s339 + $0xb8] sm:$0xff] %vm787, %v917
        %950 = vst.msk [vmem:[%s339 + $0xc0] sm:$0xff] %vm787, %v918
        %951 = vst.msk [vmem:[%s339 + $0xc8] sm:$0xff] %vm787, %v919
        %952 = vst.msk [vmem:[%s339 + $0xd0] sm:$0xff] %vm787, %v920
        %953 = vst.msk [vmem:[%s339 + $0xd8] sm:$0xff] %vm787, %v921
        %954 = vst.msk [vmem:[%s339 + $0xe0] sm:$0xff] %vm787, %v922
        %955 = vst.msk [vmem:[%s339 + $0xe8] sm:$0xff] %vm787, %v923
        %956 = vst.msk [vmem:[%s339 + $0xf0] sm:$0xff] %vm787, %v924
        %957 = vst.msk [vmem:[%s339 + $0xf8] sm:$0xff] %vm787, %v925
      $region48: #{unet_multihead_rot_forward.27} parent=39 // pred_fallthru
        _
      %s958 = smul.u32 32, %s21
      %p959 = scmp.lt.s32.totalorder %s958, 63
      %s960 = scalar_select %p959, %s958, 63
      %p961 = scmp.lt.s32.totalorder %s22, 0
      %s962 = scalar_select %p961, %s22, 0
      %s963 = sadd.s32 %s962, %s960
      %s964 = smul.addr %s963, 8
      %s965 = scalar_lea.vmem %s5, %s964
      // Predicated region
      $region49: #{unet_multihead_rot_forward.27} parent=39 // pred_check
        %p966 = pneg %p189
      $region50: #{unet_multihead_rot_forward.27} parent=39 // pred_check_branch
        %968 = sbr.rel (%p966) target = $region52
      $region51: #{unet_multihead_rot_forward.27} parent=39 // pred_region
        %s969 = smul.u32 32, %s21
      $region52: #{unet_multihead_rot_forward.27} parent=39 // pred_fallthru
        _
    $region40: #{unet_multihead_rot_forward.27} parent=5 // pred_fallthru
      _
    %p970 = scmp.le.s32.totalorder 2, %s11
    // Predicated region
    $region53: #{unet_multihead_rot_forward.27} parent=5 // pred_check
      %p971 = pneg %p970
    $region54: #{unet_multihead_rot_forward.27} parent=5 // pred_check_branch
      %973 = sbr.rel (%p971) target = $region56
    $region55: #{unet_multihead_rot_forward.27} parent=5 // pred_region
      %s974 = ssub.s32 %s11, 2
      // Predicated region
      $region57: #{unet_multihead_rot_forward.27} parent=55 // pred_check
        %p975 = pneg %p195
      $region58: #{unet_multihead_rot_forward.27} parent=55 // pred_check_branch
        %977 = sbr.rel (%p975) target = $region60
      $region59: #{unet_multihead_rot_forward.27} parent=55 // pred_region
        %s978 = smul.u32 32, %s24
        %p979 = scmp.lt.s32.totalorder %s978, 63
        %s980 = scalar_select %p979, %s978, 63
        %p981 = scmp.lt.s32.totalorder %s25, 0
        %s982 = scalar_select %p981, %s25, 0
        %s983 = sadd.s32 %s982, %s980
        %s984 = smul.addr %s983, 8
        %s985 = scalar_lea.vmem %s5, %s984
      $region60: #{unet_multihead_rot_forward.27} parent=55 // pred_fallthru
        _
    $region56: #{unet_multihead_rot_forward.27} parent=5 // pred_fallthru
      _
  $region6: #{unet_multihead_rot_forward.27} parent=0 // loop_footer
    %s15 = sadd.s32 1, %s11
  $region7: #{unet_multihead_rot_forward.27} parent=0 // loop_footer_branch
    %10 = sbr.rel target = $region3
  $region8: #{unet_multihead_rot_forward.27} parent=0 // loop_exit
    _

// kernel: unet_multihead_rot_forward.28
$region0: #{unet_multihead_rot_forward.28}
  #allocation0 [shape = 'u32[]', space=smem, size = 0x4, offset = 0x4, fixed_abs, tag = 'smem constant byte address 0x4 - core index']
  #allocation1 [shape = 'u32[144,128]{1,0:T(1,128)}', space=vmem, size = 0x12000, scoped, tag = 'internal scratch']
  #allocation2 [shape = 'f32[256,128]{1,0:T(8,128)}', space=vmem, size = 0x20000, scoped, tag = 'scratch operand']
  %s0 = inlined_call_operand.vmem [shape: bf16[512,576], index: 0, kind: input, shape index: {}]
  %s1 = inlined_call_operand.vmem [shape: bf16[576,128], index: 1, kind: input, shape index: {}]
  %s2 = inlined_call_operand.vmem [shape: f32[1,576], index: 2, kind: input, shape index: {}, may-alias: {2,3}]
  %s3 = inlined_call_operand.vmem [shape: f32[1,576], index: 3, kind: input, shape index: {}, may-alias: {2,3}]
  %s4 = inlined_call_operand.vmem [shape: f32[1,128], index: 4, kind: input, shape index: {}]
  %s5 = inlined_call_operand.vmem [shape: f32[512,128], index: 5, kind: output, shape index: {}]
  %s6 = sld [smem:[#allocation0]]
  $region61: #{unet_multihead_rot_forward.28} parent=0
    _
  %s8 = ssub.s32 1, %s6
  %s9 = scalar_select 0, %s8, %s6
  loop: start=0, step=1, limit=4
  $region2: #{unet_multihead_rot_forward.28} parent=0 // loop_pre_header
    _
  $region3: #{unet_multihead_rot_forward.28} parent=0 // loop_header
    %s11 = sphi 0, %s15
    %p12 = scmp.ge.s32.totalorder %s11, 4
    %s18 = sphi 0, %s37
    %s19 = sphi 0, %s33
    %s20 = sphi 0, %s29
    %s21 = sphi 0, %s18
    %s22 = sphi 0, %s19
    %s23 = sphi 0, %s20
    %s24 = sphi 0, %s21
    %s25 = sphi 0, %s22
    %s26 = sphi 0, %s23
    %s42 = sphi 0, %s44
    %s45 = sphi 0, %s42
    %s46 = sphi 0, %s45
    %s62 = sphi 0, %s46
    %s70 = sphi 0, %s72
    %s73 = sphi 0, %s70
    %s74 = sphi 0, %s73
    %s90 = sphi 0, %s74
    %s96 = sphi 0, %s98
    %s99 = sphi 0, %s96
    %s100 = sphi 0, %s99
    %s116 = sphi 0, %s100
    %s122 = sphi 0, %s124
    %s125 = sphi 0, %s122
    %s126 = sphi 0, %s125
    %s142 = sphi 0, %s126
    %s148 = sphi 0, %s150
    %s151 = sphi 0, %s148
    %s152 = sphi 0, %s151
    %s168 = sphi 0, %s152
    %s176 = sphi 0, %s178
    %s179 = sphi 0, %s176
    %s180 = sphi 0, %s179
    %s196 = sphi 0, %s180
  $region4: #{unet_multihead_rot_forward.28} parent=0 // loop_header_branch
    %14 = sbr.rel (%p12) target = $region8
  $region5: #{unet_multihead_rot_forward.28} parent=0 // loop_body
    %s16 = ssub.s32 %s11, 1
    %s17 = ssub.s32 %s11, 2
    %s27 = sadd.s32 1, %s20
    %p28 = scmp.ge.s32.totalorder %s27, 1
    %s29 = scalar_select %p28, 0, %s27
    %s30 = sadd.s32 1, %s19
    %s31 = scalar_select %p28, %s30, %s19
    %p32 = scmp.ge.s32.totalorder %s31, 1
    %s33 = scalar_select %p32, 0, %s31
    %s34 = sadd.s32 1, %s18
    %s35 = scalar_select %p32, %s34, %s18
    %p36 = scmp.ge.s32.totalorder %s35, 2
    %s37 = scalar_select %p36, 0, %s35
    %s38 = ssub.s32 %s18, %s37
    %s39 = ssub.s32 %s20, %s29
    %s40 = sor.u32 %s38, %s39
    %p41 = scmp.eq.s32.totalorder %s40, 0
    %s43 = sadd.s32 %s42, 1
    %s44 = scalar_select %p41, %s42, %s43
    %p47 = pneg %p41
    %p48 = scmp.eq.s32.totalorder %s11, 1
    %p49 = por %p47, %p48
    %p50 = scmp.ne.s32.totalorder %s42, %s45
    %p51 = scmp.eq.s32.totalorder %s11, 0
    %p52 = por %p50, %p51
    %p53 = scmp.ne.s32.totalorder %s42, %s45
    %p54 = scmp.eq.s32.totalorder %s16, 1
    %p55 = por %p53, %p54
    %p56 = scmp.ne.s32.totalorder %s45, %s46
    %p57 = scmp.eq.s32.totalorder %s16, 0
    %p58 = por %p56, %p57
    %p59 = scmp.ne.s32.totalorder %s45, %s46
    %p60 = scmp.eq.s32.totalorder %s17, 1
    %p61 = por %p59, %p60
    %p63 = scmp.ne.s32.totalorder %s46, %s62
    %p64 = scmp.eq.s32.totalorder %s17, 0
    %p65 = por %p63, %p64
    %s66 = ssub.s32 %s20, %s29
    %s67 = ssub.s32 %s19, %s33
    %s68 = sor.u32 %s66, %s67
    %p69 = scmp.eq.s32.totalorder %s68, 0
    %s71 = sadd.s32 %s70, 1
    %s72 = scalar_select %p69, %s70, %s71
    %p75 = pneg %p69
    %p76 = scmp.eq.s32.totalorder %s11, 1
    %p77 = por %p75, %p76
    %p78 = scmp.ne.s32.totalorder %s70, %s73
    %p79 = scmp.eq.s32.totalorder %s11, 0
    %p80 = por %p78, %p79
    %p81 = scmp.ne.s32.totalorder %s70, %s73
    %p82 = scmp.eq.s32.totalorder %s16, 1
    %p83 = por %p81, %p82
    %p84 = scmp.ne.s32.totalorder %s73, %s74
    %p85 = scmp.eq.s32.totalorder %s16, 0
    %p86 = por %p84, %p85
    %p87 = scmp.ne.s32.totalorder %s73, %s74
    %p88 = scmp.eq.s32.totalorder %s17, 1
    %p89 = por %p87, %p88
    %p91 = scmp.ne.s32.totalorder %s74, %s90
    %p92 = scmp.eq.s32.totalorder %s17, 0
    %p93 = por %p91, %p92
    %s94 = ssub.s32 %s20, %s29
    %p95 = scmp.eq.s32.totalorder %s94, 0
    %s97 = sadd.s32 %s96, 1
    %s98 = scalar_select %p95, %s96, %s97
    %p101 = pneg %p95
    %p102 = scmp.eq.s32.totalorder %s11, 1
    %p103 = por %p101, %p102
    %p104 = scmp.ne.s32.totalorder %s96, %s99
    %p105 = scmp.eq.s32.totalorder %s11, 0
    %p106 = por %p104, %p105
    %p107 = scmp.ne.s32.totalorder %s96, %s99
    %p108 = scmp.eq.s32.totalorder %s16, 1
    %p109 = por %p107, %p108
    %p110 = scmp.ne.s32.totalorder %s99, %s100
    %p111 = scmp.eq.s32.totalorder %s16, 0
    %p112 = por %p110, %p111
    %p113 = scmp.ne.s32.totalorder %s99, %s100
    %p114 = scmp.eq.s32.totalorder %s17, 1
    %p115 = por %p113, %p114
    %p117 = scmp.ne.s32.totalorder %s100, %s116
    %p118 = scmp.eq.s32.totalorder %s17, 0
    %p119 = por %p117, %p118
    %s120 = ssub.s32 %s20, %s29
    %p121 = scmp.eq.s32.totalorder %s120, 0
    %s123 = sadd.s32 %s122, 1
    %s124 = scalar_select %p121, %s122, %s123
    %p127 = pneg %p121
    %p128 = scmp.eq.s32.totalorder %s11, 1
    %p129 = por %p127, %p128
    %p130 = scmp.ne.s32.totalorder %s122, %s125
    %p131 = scmp.eq.s32.totalorder %s11, 0
    %p132 = por %p130, %p131
    %p133 = scmp.ne.s32.totalorder %s122, %s125
    %p134 = scmp.eq.s32.totalorder %s16, 1
    %p135 = por %p133, %p134
    %p136 = scmp.ne.s32.totalorder %s125, %s126
    %p137 = scmp.eq.s32.totalorder %s16, 0
    %p138 = por %p136, %p137
    %p139 = scmp.ne.s32.totalorder %s125, %s126
    %p140 = scmp.eq.s32.totalorder %s17, 1
    %p141 = por %p139, %p140
    %p143 = scmp.ne.s32.totalorder %s126, %s142
    %p144 = scmp.eq.s32.totalorder %s17, 0
    %p145 = por %p143, %p144
    %s146 = ssub.s32 %s19, %s33
    %p147 = scmp.eq.s32.totalorder %s146, 0
    %s149 = sadd.s32 %s148, 1
    %s150 = scalar_select %p147, %s148, %s149
    %p153 = pneg %p147
    %p154 = scmp.eq.s32.totalorder %s11, 1
    %p155 = por %p153, %p154
    %p156 = scmp.ne.s32.totalorder %s148, %s151
    %p157 = scmp.eq.s32.totalorder %s11, 0
    %p158 = por %p156, %p157
    %p159 = scmp.ne.s32.totalorder %s148, %s151
    %p160 = scmp.eq.s32.totalorder %s16, 1
    %p161 = por %p159, %p160
    %p162 = scmp.ne.s32.totalorder %s151, %s152
    %p163 = scmp.eq.s32.totalorder %s16, 0
    %p164 = por %p162, %p163
    %p165 = scmp.ne.s32.totalorder %s151, %s152
    %p166 = scmp.eq.s32.totalorder %s17, 1
    %p167 = por %p165, %p166
    %p169 = scmp.ne.s32.totalorder %s152, %s168
    %p170 = scmp.eq.s32.totalorder %s17, 0
    %p171 = por %p169, %p170
    %s172 = ssub.s32 %s18, %s37
    %s173 = ssub.s32 %s19, %s33
    %s174 = sor.u32 %s172, %s173
    %p175 = scmp.eq.s32.totalorder %s174, 0
    %s177 = sadd.s32 %s176, 1
    %s178 = scalar_select %p175, %s176, %s177
    %p181 = pneg %p175
    %p182 = scmp.eq.s32.totalorder %s11, 1
    %p183 = por %p181, %p182
    %p184 = scmp.ne.s32.totalorder %s176, %s179
    %p185 = scmp.eq.s32.totalorder %s11, 0
    %p186 = por %p184, %p185
    %p187 = scmp.ne.s32.totalorder %s176, %s179
    %p188 = scmp.eq.s32.totalorder %s16, 1
    %p189 = por %p187, %p188
    %p190 = scmp.ne.s32.totalorder %s179, %s180
    %p191 = scmp.eq.s32.totalorder %s16, 0
    %p192 = por %p190, %p191
    %p193 = scmp.ne.s32.totalorder %s179, %s180
    %p194 = scmp.eq.s32.totalorder %s17, 1
    %p195 = por %p193, %p194
    %p197 = scmp.ne.s32.totalorder %s180, %s196
    %p198 = scmp.eq.s32.totalorder %s17, 0
    %p199 = por %p197, %p198
    %p200 = scmp.le.s32.totalorder 1, %s11
    %p201 = scmp.lt.s32.totalorder %s11, 3
    %p202 = pnand %p200, %p201
    %p203 = pneg %p202
    // Predicated region
    $region9: #{unet_multihead_rot_forward.28} parent=5 // pred_check
      _
    $region10: #{unet_multihead_rot_forward.28} parent=5 // pred_check_branch
      %205 = sbr.rel (%p202) target = $region12
    $region11: #{unet_multihead_rot_forward.28} parent=5 // pred_region
      %s206 = ssub.s32 %s11, 1
      // Predicated region
      $region13: #{unet_multihead_rot_forward.28} parent=11 // pred_check
        %p207 = pneg %p86
      $region14: #{unet_multihead_rot_forward.28} parent=11 // pred_check_branch
        %209 = sbr.rel (%p207) target = $region16
      $region15: #{unet_multihead_rot_forward.28} parent=11 // pred_region
        %s210 = smul.u32 72, %s23
        %p211 = scmp.lt.s32.totalorder %s210, 71
        %s212 = scalar_select %p211, %s210, 71
        %p213 = scmp.lt.s32.totalorder %s22, 0
        %s214 = scalar_select %p213, %s22, 0
        %s215 = sadd.s32 %s214, %s212
        %s216 = smul.addr %s215, 4
        %s217 = scalar_lea.vmem %s1, %s216
        %s218 = smul.u32 72, %s23
      $region16: #{unet_multihead_rot_forward.28} parent=11 // pred_fallthru
        _
      // Predicated region
      $region17: #{unet_multihead_rot_forward.28} parent=11 // pred_check
        %p219 = pneg %p112
      $region18: #{unet_multihead_rot_forward.28} parent=11 // pred_check_branch
        %221 = sbr.rel (%p219) target = $region20
      $region19: #{unet_multihead_rot_forward.28} parent=11 // pred_region
        %s222 = smul.u32 5, %s23
        %p223 = scmp.lt.s32.totalorder %s222, 4
        %s224 = scalar_select %p223, %s222, 4
        %s225 = scalar_lea.vmem %s2, %s224
        %s226 = smul.u32 5, %s23
      $region20: #{unet_multihead_rot_forward.28} parent=11 // pred_fallthru
        _
      // Predicated region
      $region21: #{unet_multihead_rot_forward.28} parent=11 // pred_check
        %p227 = pneg %p138
      $region22: #{unet_multihead_rot_forward.28} parent=11 // pred_check_branch
        %229 = sbr.rel (%p227) target = $region24
      $region23: #{unet_multihead_rot_forward.28} parent=11 // pred_region
        %s230 = smul.u32 5, %s23
        %p231 = scmp.lt.s32.totalorder %s230, 4
        %s232 = scalar_select %p231, %s230, 4
        %s233 = scalar_lea.vmem %s3, %s232
        %s234 = smul.u32 5, %s23
      $region24: #{unet_multihead_rot_forward.28} parent=11 // pred_fallthru
        _
      // Predicated region
      $region25: #{unet_multihead_rot_forward.28} parent=11 // pred_check
        %p235 = pneg %p164
      $region26: #{unet_multihead_rot_forward.28} parent=11 // pred_check_branch
        %237 = sbr.rel (%p235) target = $region28
      $region27: #{unet_multihead_rot_forward.28} parent=11 // pred_region
        %p238 = scmp.lt.s32.totalorder %s22, 0
        %s239 = scalar_select %p238, %s22, 0
        %s240 = scalar_lea.vmem %s4, %s239
      $region28: #{unet_multihead_rot_forward.28} parent=11 // pred_fallthru
        _
    $region12: #{unet_multihead_rot_forward.28} parent=5 // pred_fallthru
      _
    %p241 = scmp.lt.s32.totalorder %s11, 2
    // Predicated region
    $region29: #{unet_multihead_rot_forward.28} parent=5 // pred_check
      %p242 = pneg %p241
    $region30: #{unet_multihead_rot_forward.28} parent=5 // pred_check_branch
      %244 = sbr.rel (%p242) target = $region32
    $region31: #{unet_multihead_rot_forward.28} parent=5 // pred_region
      // Predicated region
      $region33: #{unet_multihead_rot_forward.28} parent=31 // pred_check
        %p245 = pneg %p52
      $region34: #{unet_multihead_rot_forward.28} parent=31 // pred_check_branch
        %247 = sbr.rel (%p245) target = $region36
      $region35: #{unet_multihead_rot_forward.28} parent=31 // pred_region
        %s248 = smul.u32 32, %s18
        %s249 = smul.u32 5, %s20
        %p250 = scmp.lt.s32.totalorder %s248, 63
        %s251 = scalar_select %p250, %s248, 63
        %p252 = scmp.lt.s32.totalorder %s249, 4
        %s253 = scalar_select %p252, %s249, 4
        %s254 = smul.addr %s251, 5
        %s255 = sadd.s32 %s253, %s254
        %s256 = smul.addr %s255, 4
        %s257 = scalar_lea.vmem %s0, %s256
        %s258 = smul.u32 32, %s18
        %s259 = smul.u32 5, %s20
      $region36: #{unet_multihead_rot_forward.28} parent=31 // pred_fallthru
        _
    $region32: #{unet_multihead_rot_forward.28} parent=5 // pred_fallthru
      _
    %p260 = scmp.le.s32.totalorder 1, %s11
    %p261 = scmp.lt.s32.totalorder %s11, 3
    %p262 = pnand %p260, %p261
    %p263 = pneg %p262
    // Predicated region
    $region37: #{unet_multihead_rot_forward.28} parent=5 // pred_check
      _
    $region38: #{unet_multihead_rot_forward.28} parent=5 // pred_check_branch
      %265 = sbr.rel (%p262) target = $region40
    $region39: #{unet_multihead_rot_forward.28} parent=5 // pred_region
      %s266 = ssub.s32 %s11, 1
      %s267 = smul.u32 32, %s21
      %s268 = smul.u32 5, %s23
      %p269 = scmp.lt.s32.totalorder %s267, 63
      %s270 = scalar_select %p269, %s267, 63
      %p271 = scmp.lt.s32.totalorder %s268, 4
      %s272 = scalar_select %p271, %s268, 4
      %s273 = smul.addr %s270, 5
      %s274 = sadd.s32 %s272, %s273
      %s275 = smul.addr %s274, 4
      %s276 = scalar_lea.vmem %s0, %s275
      %p277 = pneg %p58
      %p278 = pneg %p55
      %s279 = smul.u32 72, %s23
      %p280 = scmp.lt.s32.totalorder %s279, 71
      %s281 = scalar_select %p280, %s279, 71
      %p282 = scmp.lt.s32.totalorder %s22, 0
      %s283 = scalar_select %p282, %s22, 0
      %s284 = sadd.s32 %s283, %s281
      %s285 = smul.addr %s284, 4
      %s286 = scalar_lea.vmem %s1, %s285
      %p287 = pneg %p86
      %p288 = pneg %p83
      %s289 = smul.u32 5, %s23
      %p290 = scmp.lt.s32.totalorder %s289, 4
      %s291 = scalar_select %p290, %s289, 4
      %s292 = scalar_lea.vmem %s2, %s291
      %p293 = pneg %p112
      %p294 = pneg %p109
      %s295 = smul.u32 5, %s23
      %p296 = scmp.lt.s32.totalorder %s295, 4
      %s297 = scalar_select %p296, %s295, 4
      %s298 = scalar_lea.vmem %s3, %s297
      %p299 = pneg %p138
      %p300 = pneg %p135
      %p301 = scmp.lt.s32.totalorder %s22, 0
      %s302 = scalar_select %p301, %s22, 0
      %s303 = scalar_lea.vmem %s4, %s302
      %p304 = pneg %p164
      %p305 = pneg %p161
      %p306 = pneg %p192
      %p307 = pneg %p189
      %s308 = smul.u32 32, %s21
      %p309 = scmp.lt.s32.totalorder %s308, 63
      %s310 = scalar_select %p309, %s308, 63
      %p311 = scmp.lt.s32.totalorder %s22, 0
      %s312 = scalar_select %p311, %s22, 0
      %s313 = sadd.s32 %s312, %s310
      %s314 = smul.addr %s313, 8
      %s315 = scalar_lea.vmem %s5, %s314
      %s316 = smul.u32 32, %s21
      %s317 = smul.u32 5, %s23
      %p318 = scmp.lt.s32.totalorder %s316, 63
      %s319 = scalar_select %p318, %s316, 63
      %p320 = scmp.lt.s32.totalorder %s317, 4
      %s321 = scalar_select %p320, %s317, 4
      %s322 = smul.addr %s319, 5
      %s323 = sadd.s32 %s321, %s322
      %s324 = smul.addr %s323, 4
      %s325 = scalar_lea.vmem %s0, %s324
      %s326 = smul.u32 32, %s21
      %s327 = smul.u32 5, %s23
      %s328 = smul.u32 72, %s23
      %p329 = scmp.lt.s32.totalorder %s328, 71
      %s330 = scalar_select %p329, %s328, 71
      %p331 = scmp.lt.s32.totalorder %s22, 0
      %s332 = scalar_select %p331, %s22, 0
      %s333 = sadd.s32 %s332, %s330
      %s334 = smul.addr %s333, 4
      %s335 = scalar_lea.vmem %s1, %s334
      %s336 = smul.u32 72, %s23
      %s337 = smul.u32 5, %s23
      %p338 = scmp.lt.s32.totalorder %s337, 4
      %s339 = scalar_select %p338, %s337, 4
      %s340 = scalar_lea.vmem %s2, %s339
      %s341 = smul.u32 5, %s23
      %s342 = smul.u32 5, %s23
      %p343 = scmp.lt.s32.totalorder %s342, 4
      %s344 = scalar_select %p343, %s342, 4
      %s345 = scalar_lea.vmem %s3, %s344
      %s346 = smul.u32 5, %s23
      %p347 = scmp.lt.s32.totalorder %s22, 0
      %s348 = scalar_select %p347, %s22, 0
      %s349 = scalar_lea.vmem %s4, %s348
      %s350 = smul.u32 32, %s21
      %p351 = scmp.lt.s32.totalorder %s350, 63
      %s352 = scalar_select %p351, %s350, 63
      %p353 = scmp.lt.s32.totalorder %s22, 0
      %s354 = scalar_select %p353, %s22, 0
      %s355 = sadd.s32 %s354, %s352
      %s356 = smul.addr %s355, 8
      %s357 = scalar_lea.vmem %s5, %s356
      %s358 = smul.u32 32, %s21
      %p360 = scmp.eq.s32.totalorder %s23, 0
      // Predicated region
      $region41: #{unet_multihead_rot_forward.28} parent=39 // pred_check
        %p361 = pneg %p360
      $region42: #{unet_multihead_rot_forward.28} parent=39 // pred_check_branch
        %363 = sbr.rel (%p361) target = $region44
      $region43: #{unet_multihead_rot_forward.28} parent=39 // pred_region
        %364 = vst [vmem:[#allocation2] sm:$0xff] 0.0
        %365 = vst [vmem:[#allocation2 + $0x8] sm:$0xff] 0.0
        %366 = vst [vmem:[#allocation2 + $0x10] sm:$0xff] 0.0
        %367 = vst [vmem:[#allocation2 + $0x18] sm:$0xff] 0.0
        %368 = vst [vmem:[#allocation2 + $0x20] sm:$0xff] 0.0
        %369 = vst [vmem:[#allocation2 + $0x28] sm:$0xff] 0.0
        %370 = vst [vmem:[#allocation2 + $0x30] sm:$0xff] 0.0
        %371 = vst [vmem:[#allocation2 + $0x38] sm:$0xff] 0.0
        %372 = vst [vmem:[#allocation2 + $0x40] sm:$0xff] 0.0
        %373 = vst [vmem:[#allocation2 + $0x48] sm:$0xff] 0.0
        %374 = vst [vmem:[#allocation2 + $0x50] sm:$0xff] 0.0
        %375 = vst [vmem:[#allocation2 + $0x58] sm:$0xff] 0.0
        %376 = vst [vmem:[#allocation2 + $0x60] sm:$0xff] 0.0
        %377 = vst [vmem:[#allocation2 + $0x68] sm:$0xff] 0.0
        %378 = vst [vmem:[#allocation2 + $0x70] sm:$0xff] 0.0
        %379 = vst [vmem:[#allocation2 + $0x78] sm:$0xff] 0.0
        %380 = vst [vmem:[#allocation2 + $0x80] sm:$0xff] 0.0
        %381 = vst [vmem:[#allocation2 + $0x88] sm:$0xff] 0.0
        %382 = vst [vmem:[#allocation2 + $0x90] sm:$0xff] 0.0
        %383 = vst [vmem:[#allocation2 + $0x98] sm:$0xff] 0.0
        %384 = vst [vmem:[#allocation2 + $0xa0] sm:$0xff] 0.0
        %385 = vst [vmem:[#allocation2 + $0xa8] sm:$0xff] 0.0
        %386 = vst [vmem:[#allocation2 + $0xb0] sm:$0xff] 0.0
        %387 = vst [vmem:[#allocation2 + $0xb8] sm:$0xff] 0.0
        %388 = vst [vmem:[#allocation2 + $0xc0] sm:$0xff] 0.0
        %389 = vst [vmem:[#allocation2 + $0xc8] sm:$0xff] 0.0
        %390 = vst [vmem:[#allocation2 + $0xd0] sm:$0xff] 0.0
        %391 = vst [vmem:[#allocation2 + $0xd8] sm:$0xff] 0.0
        %392 = vst [vmem:[#allocation2 + $0xe0] sm:$0xff] 0.0
        %393 = vst [vmem:[#allocation2 + $0xe8] sm:$0xff] 0.0
        %394 = vst [vmem:[#allocation2 + $0xf0] sm:$0xff] 0.0
        %395 = vst [vmem:[#allocation2 + $0xf8] sm:$0xff] 0.0
      $region44: #{unet_multihead_rot_forward.28} parent=39 // pred_fallthru
        _
      %v396 = vld [vmem:[%s325] sm:$0xff]
      %v397 = vld [vmem:[%s325 + $0x8] sm:$0xff]
      %v398 = vld [vmem:[%s325 + $0x10] sm:$0xf]
      %v399 = vld [vmem:[%s325 + $0x14] sm:$0xff]
      %v400 = vld [vmem:[%s325 + $0x1c] sm:$0xff]
      %v401 = vld [vmem:[%s325 + $0x24] sm:$0xf]
      %v402 = vld [vmem:[%s325 + $0x28] sm:$0xff]
      %v403 = vld [vmem:[%s325 + $0x30] sm:$0xff]
      %v404 = vld [vmem:[%s325 + $0x38] sm:$0xf]
      %v405 = vld [vmem:[%s325 + $0x3c] sm:$0xff]
      %v406 = vld [vmem:[%s325 + $0x44] sm:$0xff]
      %v407 = vld [vmem:[%s325 + $0x4c] sm:$0xf]
      %v408 = vld [vmem:[%s325 + $0x50] sm:$0xff]
      %v409 = vld [vmem:[%s325 + $0x58] sm:$0xff]
      %v410 = vld [vmem:[%s325 + $0x60] sm:$0xf]
      %v411 = vld [vmem:[%s325 + $0x64] sm:$0xff]
      %v412 = vld [vmem:[%s325 + $0x6c] sm:$0xff]
      %v413 = vld [vmem:[%s325 + $0x74] sm:$0xf]
      %v414 = vld [vmem:[%s325 + $0x78] sm:$0xff]
      %v415 = vld [vmem:[%s325 + $0x80] sm:$0xff]
      %v416 = vld [vmem:[%s325 + $0x88] sm:$0xf]
      %v417 = vld [vmem:[%s325 + $0x8c] sm:$0xff]
      %v418 = vld [vmem:[%s325 + $0x94] sm:$0xff]
      %v419 = vld [vmem:[%s325 + $0x9c] sm:$0xf]
      %v420 = vld [vmem:[%s325 + $0xa0] sm:$0xff]
      %v421 = vld [vmem:[%s325 + $0xa8] sm:$0xff]
      %v422 = vld [vmem:[%s325 + $0xb0] sm:$0xf]
      %v423 = vld [vmem:[%s325 + $0xb4] sm:$0xff]
      %v424 = vld [vmem:[%s325 + $0xbc] sm:$0xff]
      %v425 = vld [vmem:[%s325 + $0xc4] sm:$0xf]
      %v426 = vld [vmem:[%s325 + $0xc8] sm:$0xff]
      %v427 = vld [vmem:[%s325 + $0xd0] sm:$0xff]
      %v428 = vld [vmem:[%s325 + $0xd8] sm:$0xf]
      %v429 = vld [vmem:[%s325 + $0xdc] sm:$0xff]
      %v430 = vld [vmem:[%s325 + $0xe4] sm:$0xff]
      %v431 = vld [vmem:[%s325 + $0xec] sm:$0xf]
      %v432 = vld [vmem:[%s325 + $0xf0] sm:$0xff]
      %v433 = vld [vmem:[%s325 + $0xf8] sm:$0xff]
      %v434 = vld [vmem:[%s325 + $0x100] sm:$0xf]
      %v435 = vld [vmem:[%s325 + $0x104] sm:$0xff]
      %v436 = vld [vmem:[%s325 + $0x10c] sm:$0xff]
      %v437 = vld [vmem:[%s325 + $0x114] sm:$0xf]
      %v438 = vld [vmem:[%s325 + $0x118] sm:$0xff]
      %v439 = vld [vmem:[%s325 + $0x120] sm:$0xff]
      %v440 = vld [vmem:[%s325 + $0x128] sm:$0xf]
      %v441 = vld [vmem:[%s325 + $0x12c] sm:$0xff]
      %v442 = vld [vmem:[%s325 + $0x134] sm:$0xff]
      %v443 = vld [vmem:[%s325 + $0x13c] sm:$0xf]
      %v444 = vld [vmem:[%s325 + $0x140] sm:$0xff]
      %v445 = vld [vmem:[%s325 + $0x148] sm:$0xff]
      %v446 = vld [vmem:[%s325 + $0x150] sm:$0xf]
      %v447 = vld [vmem:[%s325 + $0x154] sm:$0xff]
      %v448 = vld [vmem:[%s325 + $0x15c] sm:$0xff]
      %v449 = vld [vmem:[%s325 + $0x164] sm:$0xf]
      %v450 = vld [vmem:[%s325 + $0x168] sm:$0xff]
      %v451 = vld [vmem:[%s325 + $0x170] sm:$0xff]
      %v452 = vld [vmem:[%s325 + $0x178] sm:$0xf]
      %v453 = vld [vmem:[%s325 + $0x17c] sm:$0xff]
      %v454 = vld [vmem:[%s325 + $0x184] sm:$0xff]
      %v455 = vld [vmem:[%s325 + $0x18c] sm:$0xf]
      %v456 = vld [vmem:[%s325 + $0x190] sm:$0xff]
      %v457 = vld [vmem:[%s325 + $0x198] sm:$0xff]
      %v458 = vld [vmem:[%s325 + $0x1a0] sm:$0xf]
      %v459 = vld [vmem:[%s325 + $0x1a4] sm:$0xff]
      %v460 = vld [vmem:[%s325 + $0x1ac] sm:$0xff]
      %v461 = vld [vmem:[%s325 + $0x1b4] sm:$0xf]
      %v462 = vld [vmem:[%s325 + $0x1b8] sm:$0xff]
      %v463 = vld [vmem:[%s325 + $0x1c0] sm:$0xff]
      %v464 = vld [vmem:[%s325 + $0x1c8] sm:$0xf]
      %v465 = vld [vmem:[%s325 + $0x1cc] sm:$0xff]
      %v466 = vld [vmem:[%s325 + $0x1d4] sm:$0xff]
      %v467 = vld [vmem:[%s325 + $0x1dc] sm:$0xf]
      %v468 = vld [vmem:[%s325 + $0x1e0] sm:$0xff]
      %v469 = vld [vmem:[%s325 + $0x1e8] sm:$0xff]
      %v470 = vld [vmem:[%s325 + $0x1f0] sm:$0xf]
      %v471 = vld [vmem:[%s325 + $0x1f4] sm:$0xff]
      %v472 = vld [vmem:[%s325 + $0x1fc] sm:$0xff]
      %v473 = vld [vmem:[%s325 + $0x204] sm:$0xf]
      %v474 = vld [vmem:[%s325 + $0x208] sm:$0xff]
      %v475 = vld [vmem:[%s325 + $0x210] sm:$0xff]
      %v476 = vld [vmem:[%s325 + $0x218] sm:$0xf]
      %v477 = vld [vmem:[%s325 + $0x21c] sm:$0xff]
      %v478 = vld [vmem:[%s325 + $0x224] sm:$0xff]
      %v479 = vld [vmem:[%s325 + $0x22c] sm:$0xf]
      %v480 = vld [vmem:[%s325 + $0x230] sm:$0xff]
      %v481 = vld [vmem:[%s325 + $0x238] sm:$0xff]
      %v482 = vld [vmem:[%s325 + $0x240] sm:$0xf]
      %v483 = vld [vmem:[%s325 + $0x244] sm:$0xff]
      %v484 = vld [vmem:[%s325 + $0x24c] sm:$0xff]
      %v485 = vld [vmem:[%s325 + $0x254] sm:$0xf]
      %v486 = vld [vmem:[%s325 + $0x258] sm:$0xff]
      %v487 = vld [vmem:[%s325 + $0x260] sm:$0xff]
      %v488 = vld [vmem:[%s325 + $0x268] sm:$0xf]
      %v489 = vld [vmem:[%s325 + $0x26c] sm:$0xff]
      %v490 = vld [vmem:[%s325 + $0x274] sm:$0xff]
      %v491 = vld [vmem:[%s325 + $0x27c] sm:$0xf]
      %v492 = vld [vmem:[#allocation2] sm:$0xff]
      %v493 = vld [vmem:[#allocation2 + $0x8] sm:$0xff]
      %v494 = vld [vmem:[#allocation2 + $0x10] sm:$0xff]
      %v495 = vld [vmem:[#allocation2 + $0x18] sm:$0xff]
      %v496 = vld [vmem:[#allocation2 + $0x20] sm:$0xff]
      %v497 = vld [vmem:[#allocation2 + $0x28] sm:$0xff]
      %v498 = vld [vmem:[#allocation2 + $0x30] sm:$0xff]
      %v499 = vld [vmem:[#allocation2 + $0x38] sm:$0xff]
      %v500 = vld [vmem:[#allocation2 + $0x40] sm:$0xff]
      %v501 = vld [vmem:[#allocation2 + $0x48] sm:$0xff]
      %v502 = vld [vmem:[#allocation2 + $0x50] sm:$0xff]
      %v503 = vld [vmem:[#allocation2 + $0x58] sm:$0xff]
      %v504 = vld [vmem:[#allocation2 + $0x60] sm:$0xff]
      %v505 = vld [vmem:[#allocation2 + $0x68] sm:$0xff]
      %v506 = vld [vmem:[#allocation2 + $0x70] sm:$0xff]
      %v507 = vld [vmem:[#allocation2 + $0x78] sm:$0xff]
      %v508 = vld [vmem:[#allocation2 + $0x80] sm:$0xff]
      %v509 = vld [vmem:[#allocation2 + $0x88] sm:$0xff]
      %v510 = vld [vmem:[#allocation2 + $0x90] sm:$0xff]
      %v511 = vld [vmem:[#allocation2 + $0x98] sm:$0xff]
      %v512 = vld [vmem:[#allocation2 + $0xa0] sm:$0xff]
      %v513 = vld [vmem:[#allocation2 + $0xa8] sm:$0xff]
      %v514 = vld [vmem:[#allocation2 + $0xb0] sm:$0xff]
      %v515 = vld [vmem:[#allocation2 + $0xb8] sm:$0xff]
      %v516 = vld [vmem:[#allocation2 + $0xc0] sm:$0xff]
      %v517 = vld [vmem:[#allocation2 + $0xc8] sm:$0xff]
      %v518 = vld [vmem:[#allocation2 + $0xd0] sm:$0xff]
      %v519 = vld [vmem:[#allocation2 + $0xd8] sm:$0xff]
      %v520 = vld [vmem:[#allocation2 + $0xe0] sm:$0xff]
      %v521 = vld [vmem:[#allocation2 + $0xe8] sm:$0xff]
      %v522 = vld [vmem:[#allocation2 + $0xf0] sm:$0xff]
      %v523 = vld [vmem:[#allocation2 + $0xf8] sm:$0xff]
      %v524 = vld [vmem:[%s335] sm:$0xf]
      %v525 = vld [vmem:[%s335 + $0x4] sm:$0xf]
      %v526 = vld [vmem:[%s335 + $0x8] sm:$0xf]
      %v527 = vld [vmem:[%s335 + $0xc] sm:$0xf]
      %v528 = vld [vmem:[%s335 + $0x10] sm:$0xf]
      %v529 = vld [vmem:[%s335 + $0x14] sm:$0xf]
      %v530 = vld [vmem:[%s335 + $0x18] sm:$0xf]
      %v531 = vld [vmem:[%s335 + $0x1c] sm:$0xf]
      %v532 = vld [vmem:[%s335 + $0x20] sm:$0xf]
      %v533 = vld [vmem:[%s335 + $0x24] sm:$0xf]
      %v534 = vld [vmem:[%s335 + $0x28] sm:$0xf]
      %v535 = vld [vmem:[%s335 + $0x2c] sm:$0xf]
      %v536 = vld [vmem:[%s335 + $0x30] sm:$0xf]
      %v537 = vld [vmem:[%s335 + $0x34] sm:$0xf]
      %v538 = vld [vmem:[%s335 + $0x38] sm:$0xf]
      %v539 = vld [vmem:[%s335 + $0x3c] sm:$0xf]
      %v540 = vld [vmem:[%s335 + $0x40] sm:$0xf]
      %v541 = vld [vmem:[%s335 + $0x44] sm:$0xf]
      %v542 = vld [vmem:[%s335 + $0x48] sm:$0xf]
      %v543 = vld [vmem:[%s335 + $0x4c] sm:$0xf]
      %v544 = vld [vmem:[%s335 + $0x50] sm:$0xf]
      %v545 = vld [vmem:[%s335 + $0x54] sm:$0xf]
      %v546 = vld [vmem:[%s335 + $0x58] sm:$0xf]
      %v547 = vld [vmem:[%s335 + $0x5c] sm:$0xf]
      %v548 = vld [vmem:[%s335 + $0x60] sm:$0xf]
      %v549 = vld [vmem:[%s335 + $0x64] sm:$0xf]
      %v550 = vld [vmem:[%s335 + $0x68] sm:$0xf]
      %v551 = vld [vmem:[%s335 + $0x6c] sm:$0xf]
      %v552 = vld [vmem:[%s335 + $0x70] sm:$0xf]
      %v553 = vld [vmem:[%s335 + $0x74] sm:$0xf]
      %v554 = vld [vmem:[%s335 + $0x78] sm:$0xf]
      %v555 = vld [vmem:[%s335 + $0x7c] sm:$0xf]
      %v556 = vld [vmem:[%s335 + $0x80] sm:$0xf]
      %v557 = vld [vmem:[%s335 + $0x84] sm:$0xf]
      %v558 = vld [vmem:[%s335 + $0x88] sm:$0xf]
      %v559 = vld [vmem:[%s335 + $0x8c] sm:$0xf]
      %v560 = vld [vmem:[%s335 + $0x90] sm:$0xf]
      %v561 = vld [vmem:[%s335 + $0x94] sm:$0xf]
      %v562 = vld [vmem:[%s335 + $0x98] sm:$0xf]
      %v563 = vld [vmem:[%s335 + $0x9c] sm:$0xf]
      %v564 = vld [vmem:[%s335 + $0xa0] sm:$0xf]
      %v565 = vld [vmem:[%s335 + $0xa4] sm:$0xf]
      %v566 = vld [vmem:[%s335 + $0xa8] sm:$0xf]
      %v567 = vld [vmem:[%s335 + $0xac] sm:$0xf]
      %v568 = vld [vmem:[%s335 + $0xb0] sm:$0xf]
      %v569 = vld [vmem:[%s335 + $0xb4] sm:$0xf]
      %v570 = vld [vmem:[%s335 + $0xb8] sm:$0xf]
      %v571 = vld [vmem:[%s335 + $0xbc] sm:$0xf]
      %v572 = vld [vmem:[%s335 + $0xc0] sm:$0xf]
      %v573 = vld [vmem:[%s335 + $0xc4] sm:$0xf]
      %v574 = vld [vmem:[%s335 + $0xc8] sm:$0xf]
      %v575 = vld [vmem:[%s335 + $0xcc] sm:$0xf]
      %v576 = vld [vmem:[%s335 + $0xd0] sm:$0xf]
      %v577 = vld [vmem:[%s335 + $0xd4] sm:$0xf]
      %v578 = vld [vmem:[%s335 + $0xd8] sm:$0xf]
      %v579 = vld [vmem:[%s335 + $0xdc] sm:$0xf]
      %v580 = vld [vmem:[%s335 + $0xe0] sm:$0xf]
      %v581 = vld [vmem:[%s335 + $0xe4] sm:$0xf]
      %v582 = vld [vmem:[%s335 + $0xe8] sm:$0xf]
      %v583 = vld [vmem:[%s335 + $0xec] sm:$0xf]
      %v584 = vld [vmem:[%s335 + $0xf0] sm:$0xf]
      %v585 = vld [vmem:[%s335 + $0xf4] sm:$0xf]
      %v586 = vld [vmem:[%s335 + $0xf8] sm:$0xf]
      %v587 = vld [vmem:[%s335 + $0xfc] sm:$0xf]
      %v588 = vld [vmem:[%s335 + $0x100] sm:$0xf]
      %v589 = vld [vmem:[%s335 + $0x104] sm:$0xf]
      %v590 = vld [vmem:[%s335 + $0x108] sm:$0xf]
      %v591 = vld [vmem:[%s335 + $0x10c] sm:$0xf]
      %v592 = vld [vmem:[%s335 + $0x110] sm:$0xf]
      %v593 = vld [vmem:[%s335 + $0x114] sm:$0xf]
      %v594 = vld [vmem:[%s335 + $0x118] sm:$0xf]
      %v595 = vld [vmem:[%s335 + $0x11c] sm:$0xf]
      %v692 = vunpack.c.l.b16 %v396
      %v693 = vunpack.c.h.b16 %v396
      %v694 = vunpack.c.l.b16 %v397
      %v695 = vunpack.c.h.b16 %v397
      %v696 = vunpack.c.l.b16 %v398
      %v697 = vunpack.c.l.b16 %v399
      %v698 = vunpack.c.h.b16 %v399
      %v699 = vunpack.c.l.b16 %v400
      %v700 = vunpack.c.h.b16 %v400
      %v701 = vunpack.c.l.b16 %v401
      %v702 = vunpack.c.l.b16 %v402
      %v703 = vunpack.c.h.b16 %v402
      %v704 = vunpack.c.l.b16 %v403
      %v705 = vunpack.c.h.b16 %v403
      %v706 = vunpack.c.l.b16 %v404
      %v707 = vunpack.c.l.b16 %v405
      %v708 = vunpack.c.h.b16 %v405
      %v709 = vunpack.c.l.b16 %v406
      %v710 = vunpack.c.h.b16 %v406
      %v711 = vunpack.c.l.b16 %v407
      %v712 = vunpack.c.l.b16 %v408
      %v713 = vunpack.c.h.b16 %v408
      %v714 = vunpack.c.l.b16 %v409
      %v715 = vunpack.c.h.b16 %v409
      %v716 = vunpack.c.l.b16 %v410
      %v717 = vunpack.c.l.b16 %v411
      %v718 = vunpack.c.h.b16 %v411
      %v719 = vunpack.c.l.b16 %v412
      %v720 = vunpack.c.h.b16 %v412
      %v721 = vunpack.c.l.b16 %v413
      %v722 = vunpack.c.l.b16 %v414
      %v723 = vunpack.c.h.b16 %v414
      %v724 = vunpack.c.l.b16 %v415
      %v725 = vunpack.c.h.b16 %v415
      %v726 = vunpack.c.l.b16 %v416
      %v727 = vunpack.c.l.b16 %v417
      %v728 = vunpack.c.h.b16 %v417
      %v729 = vunpack.c.l.b16 %v418
      %v730 = vunpack.c.h.b16 %v418
      %v731 = vunpack.c.l.b16 %v419
      %v732 = vunpack.c.l.b16 %v420
      %v733 = vunpack.c.h.b16 %v420
      %v734 = vunpack.c.l.b16 %v421
      %v735 = vunpack.c.h.b16 %v421
      %v736 = vunpack.c.l.b16 %v422
      %v737 = vunpack.c.l.b16 %v423
      %v738 = vunpack.c.h.b16 %v423
      %v739 = vunpack.c.l.b16 %v424
      %v740 = vunpack.c.h.b16 %v424
      %v741 = vunpack.c.l.b16 %v425
      %v742 = vunpack.c.l.b16 %v426
      %v743 = vunpack.c.h.b16 %v426
      %v744 = vunpack.c.l.b16 %v427
      %v745 = vunpack.c.h.b16 %v427
      %v746 = vunpack.c.l.b16 %v428
      %v747 = vunpack.c.l.b16 %v429
      %v748 = vunpack.c.h.b16 %v429
      %v749 = vunpack.c.l.b16 %v430
      %v750 = vunpack.c.h.b16 %v430
      %v751 = vunpack.c.l.b16 %v431
      %v752 = vunpack.c.l.b16 %v432
      %v753 = vunpack.c.h.b16 %v432
      %v754 = vunpack.c.l.b16 %v433
      %v755 = vunpack.c.h.b16 %v433
      %v756 = vunpack.c.l.b16 %v434
      %v757 = vunpack.c.l.b16 %v435
      %v758 = vunpack.c.h.b16 %v435
      %v759 = vunpack.c.l.b16 %v436
      %v760 = vunpack.c.h.b16 %v436
      %v761 = vunpack.c.l.b16 %v437
      %v762 = vunpack.c.l.b16 %v438
      %v763 = vunpack.c.h.b16 %v438
      %v764 = vunpack.c.l.b16 %v439
      %v765 = vunpack.c.h.b16 %v439
      %v766 = vunpack.c.l.b16 %v440
      %v767 = vunpack.c.l.b16 %v441
      %v768 = vunpack.c.h.b16 %v441
      %v769 = vunpack.c.l.b16 %v442
      %v770 = vunpack.c.h.b16 %v442
      %v771 = vunpack.c.l.b16 %v443
      %v772 = vunpack.c.l.b16 %v444
      %v773 = vunpack.c.h.b16 %v444
      %v774 = vunpack.c.l.b16 %v445
      %v775 = vunpack.c.h.b16 %v445
      %v776 = vunpack.c.l.b16 %v446
      %v777 = vunpack.c.l.b16 %v447
      %v778 = vunpack.c.h.b16 %v447
      %v779 = vunpack.c.l.b16 %v448
      %v780 = vunpack.c.h.b16 %v448
      %v781 = vunpack.c.l.b16 %v449
      %v782 = vunpack.c.l.b16 %v450
      %v783 = vunpack.c.h.b16 %v450
      %v784 = vunpack.c.l.b16 %v451
      %v785 = vunpack.c.h.b16 %v451
      %v786 = vunpack.c.l.b16 %v452
      %v787 = vunpack.c.l.b16 %v453
      %v788 = vunpack.c.h.b16 %v453
      %v789 = vunpack.c.l.b16 %v454
      %v790 = vunpack.c.h.b16 %v454
      %v791 = vunpack.c.l.b16 %v455
      %v792 = vunpack.c.l.b16 %v456
      %v793 = vunpack.c.h.b16 %v456
      %v794 = vunpack.c.l.b16 %v457
      %v795 = vunpack.c.h.b16 %v457
      %v796 = vunpack.c.l.b16 %v458
      %v797 = vunpack.c.l.b16 %v459
      %v798 = vunpack.c.h.b16 %v459
      %v799 = vunpack.c.l.b16 %v460
      %v800 = vunpack.c.h.b16 %v460
      %v801 = vunpack.c.l.b16 %v461
      %v802 = vunpack.c.l.b16 %v462
      %v803 = vunpack.c.h.b16 %v462
      %v804 = vunpack.c.l.b16 %v463
      %v805 = vunpack.c.h.b16 %v463
      %v806 = vunpack.c.l.b16 %v464
      %v807 = vunpack.c.l.b16 %v465
      %v808 = vunpack.c.h.b16 %v465
      %v809 = vunpack.c.l.b16 %v466
      %v810 = vunpack.c.h.b16 %v466
      %v811 = vunpack.c.l.b16 %v467
      %v812 = vunpack.c.l.b16 %v468
      %v813 = vunpack.c.h.b16 %v468
      %v814 = vunpack.c.l.b16 %v469
      %v815 = vunpack.c.h.b16 %v469
      %v816 = vunpack.c.l.b16 %v470
      %v817 = vunpack.c.l.b16 %v471
      %v818 = vunpack.c.h.b16 %v471
      %v819 = vunpack.c.l.b16 %v472
      %v820 = vunpack.c.h.b16 %v472
      %v821 = vunpack.c.l.b16 %v473
      %v822 = vunpack.c.l.b16 %v474
      %v823 = vunpack.c.h.b16 %v474
      %v824 = vunpack.c.l.b16 %v475
      %v825 = vunpack.c.h.b16 %v475
      %v826 = vunpack.c.l.b16 %v476
      %v827 = vunpack.c.l.b16 %v477
      %v828 = vunpack.c.h.b16 %v477
      %v829 = vunpack.c.l.b16 %v478
      %v830 = vunpack.c.h.b16 %v478
      %v831 = vunpack.c.l.b16 %v479
      %v832 = vunpack.c.l.b16 %v480
      %v833 = vunpack.c.h.b16 %v480
      %v834 = vunpack.c.l.b16 %v481
      %v835 = vunpack.c.h.b16 %v481
      %v836 = vunpack.c.l.b16 %v482
      %v837 = vunpack.c.l.b16 %v483
      %v838 = vunpack.c.h.b16 %v483
      %v839 = vunpack.c.l.b16 %v484
      %v840 = vunpack.c.h.b16 %v484
      %v841 = vunpack.c.l.b16 %v485
      %v842 = vunpack.c.l.b16 %v486
      %v843 = vunpack.c.h.b16 %v486
      %v844 = vunpack.c.l.b16 %v487
      %v845 = vunpack.c.h.b16 %v487
      %v846 = vunpack.c.l.b16 %v488
      %v847 = vunpack.c.l.b16 %v489
      %v848 = vunpack.c.h.b16 %v489
      %v849 = vunpack.c.l.b16 %v490
      %v850 = vunpack.c.h.b16 %v490
      %v851 = vunpack.c.l.b16 %v491
      %v852 = vpack.c.b16 %v697, %v692
      %v853 = vpack.c.b16 %v698, %v693
      %v854 = vpack.c.b16 %v699, %v694
      %v855 = vpack.c.b16 %v700, %v695
      %v856 = vpack.c.b16 %v701, %v696
      %v857 = vpack.c.b16 %v707, %v702
      %v858 = vpack.c.b16 %v708, %v703
      %v859 = vpack.c.b16 %v709, %v704
      %v860 = vpack.c.b16 %v710, %v705
      %v861 = vpack.c.b16 %v711, %v706
      %v862 = vpack.c.b16 %v717, %v712
      %v863 = vpack.c.b16 %v718, %v713
      %v864 = vpack.c.b16 %v719, %v714
      %v865 = vpack.c.b16 %v720, %v715
      %v866 = vpack.c.b16 %v721, %v716
      %v867 = vpack.c.b16 %v727, %v722
      %v868 = vpack.c.b16 %v728, %v723
      %v869 = vpack.c.b16 %v729, %v724
      %v870 = vpack.c.b16 %v730, %v725
      %v871 = vpack.c.b16 %v731, %v726
      %v872 = vpack.c.b16 %v737, %v732
      %v873 = vpack.c.b16 %v738, %v733
      %v874 = vpack.c.b16 %v739, %v734
      %v875 = vpack.c.b16 %v740, %v735
      %v876 = vpack.c.b16 %v741, %v736
      %v877 = vpack.c.b16 %v747, %v742
      %v878 = vpack.c.b16 %v748, %v743
      %v879 = vpack.c.b16 %v749, %v744
      %v880 = vpack.c.b16 %v750, %v745
      %v881 = vpack.c.b16 %v751, %v746
      %v882 = vpack.c.b16 %v757, %v752
      %v883 = vpack.c.b16 %v758, %v753
      %v884 = vpack.c.b16 %v759, %v754
      %v885 = vpack.c.b16 %v760, %v755
      %v886 = vpack.c.b16 %v761, %v756
      %v887 = vpack.c.b16 %v767, %v762
      %v888 = vpack.c.b16 %v768, %v763
      %v889 = vpack.c.b16 %v769, %v764
      %v890 = vpack.c.b16 %v770, %v765
      %v891 = vpack.c.b16 %v771, %v766
      %v892 = vpack.c.b16 %v777, %v772
      %v893 = vpack.c.b16 %v778, %v773
      %v894 = vpack.c.b16 %v779, %v774
      %v895 = vpack.c.b16 %v780, %v775
      %v896 = vpack.c.b16 %v781, %v776
      %v897 = vpack.c.b16 %v787, %v782
      %v898 = vpack.c.b16 %v788, %v783
      %v899 = vpack.c.b16 %v789, %v784
      %v900 = vpack.c.b16 %v790, %v785
      %v901 = vpack.c.b16 %v791, %v786
      %v902 = vpack.c.b16 %v797, %v792
      %v903 = vpack.c.b16 %v798, %v793
      %v904 = vpack.c.b16 %v799, %v794
      %v905 = vpack.c.b16 %v800, %v795
      %v906 = vpack.c.b16 %v801, %v796
      %v907 = vpack.c.b16 %v807, %v802
      %v908 = vpack.c.b16 %v808, %v803
      %v909 = vpack.c.b16 %v809, %v804
      %v910 = vpack.c.b16 %v810, %v805
      %v911 = vpack.c.b16 %v811, %v806
      %v912 = vpack.c.b16 %v817, %v812
      %v913 = vpack.c.b16 %v818, %v813
      %v914 = vpack.c.b16 %v819, %v814
      %v915 = vpack.c.b16 %v820, %v815
      %v916 = vpack.c.b16 %v821, %v816
      %v917 = vpack.c.b16 %v827, %v822
      %v918 = vpack.c.b16 %v828, %v823
      %v919 = vpack.c.b16 %v829, %v824
      %v920 = vpack.c.b16 %v830, %v825
      %v921 = vpack.c.b16 %v831, %v826
      %v922 = vpack.c.b16 %v837, %v832
      %v923 = vpack.c.b16 %v838, %v833
      %v924 = vpack.c.b16 %v839, %v834
      %v925 = vpack.c.b16 %v840, %v835
      %v926 = vpack.c.b16 %v841, %v836
      %v927 = vpack.c.b16 %v847, %v842
      %v928 = vpack.c.b16 %v848, %v843
      %v929 = vpack.c.b16 %v849, %v844
      %v930 = vpack.c.b16 %v850, %v845
      %v931 = vpack.c.b16 %v851, %v846
      %v1068 = vunpack.c.l.b16 %v524
      %v1069 = vunpack.c.l.b16 %v525
      %v1070 = vunpack.c.l.b16 %v526
      %v1071 = vunpack.c.l.b16 %v527
      %v1072 = vunpack.c.l.b16 %v528
      %v1073 = vunpack.c.l.b16 %v529
      %v1074 = vunpack.c.l.b16 %v530
      %v1075 = vunpack.c.l.b16 %v531
      %v1076 = vunpack.c.l.b16 %v532
      %v1077 = vunpack.c.l.b16 %v533
      %v1078 = vunpack.c.l.b16 %v534
      %v1079 = vunpack.c.l.b16 %v535
      %v1080 = vunpack.c.l.b16 %v536
      %v1081 = vunpack.c.l.b16 %v537
      %v1082 = vunpack.c.l.b16 %v538
      %v1083 = vunpack.c.l.b16 %v539
      %v1084 = vunpack.c.l.b16 %v540
      %v1085 = vunpack.c.l.b16 %v541
      %v1086 = vunpack.c.l.b16 %v542
      %v1087 = vunpack.c.l.b16 %v543
      %v1088 = vunpack.c.l.b16 %v544
      %v1089 = vunpack.c.l.b16 %v545
      %v1090 = vunpack.c.l.b16 %v546
      %v1091 = vunpack.c.l.b16 %v547
      %v1092 = vunpack.c.l.b16 %v548
      %v1093 = vunpack.c.l.b16 %v549
      %v1094 = vunpack.c.l.b16 %v550
      %v1095 = vunpack.c.l.b16 %v551
      %v1096 = vunpack.c.l.b16 %v552
      %v1097 = vunpack.c.l.b16 %v553
      %v1098 = vunpack.c.l.b16 %v554
      %v1099 = vunpack.c.l.b16 %v555
      %v1100 = vunpack.c.l.b16 %v556
      %v1101 = vunpack.c.l.b16 %v557
      %v1102 = vunpack.c.l.b16 %v558
      %v1103 = vunpack.c.l.b16 %v559
      %v1104 = vunpack.c.l.b16 %v560
      %v1105 = vunpack.c.l.b16 %v561
      %v1106 = vunpack.c.l.b16 %v562
      %v1107 = vunpack.c.l.b16 %v563
      %v1108 = vunpack.c.l.b16 %v564
      %v1109 = vunpack.c.l.b16 %v565
      %v1110 = vunpack.c.l.b16 %v566
      %v1111 = vunpack.c.l.b16 %v567
      %v1112 = vunpack.c.l.b16 %v568
      %v1113 = vunpack.c.l.b16 %v569
      %v1114 = vunpack.c.l.b16 %v570
      %v1115 = vunpack.c.l.b16 %v571
      %v1116 = vunpack.c.l.b16 %v572
      %v1117 = vunpack.c.l.b16 %v573
      %v1118 = vunpack.c.l.b16 %v574
      %v1119 = vunpack.c.l.b16 %v575
      %v1120 = vunpack.c.l.b16 %v576
      %v1121 = vunpack.c.l.b16 %v577
      %v1122 = vunpack.c.l.b16 %v578
      %v1123 = vunpack.c.l.b16 %v579
      %v1124 = vunpack.c.l.b16 %v580
      %v1125 = vunpack.c.l.b16 %v581
      %v1126 = vunpack.c.l.b16 %v582
      %v1127 = vunpack.c.l.b16 %v583
      %v1128 = vunpack.c.l.b16 %v584
      %v1129 = vunpack.c.l.b16 %v585
      %v1130 = vunpack.c.l.b16 %v586
      %v1131 = vunpack.c.l.b16 %v587
      %v1132 = vunpack.c.l.b16 %v588
      %v1133 = vunpack.c.l.b16 %v589
      %v1134 = vunpack.c.l.b16 %v590
      %v1135 = vunpack.c.l.b16 %v591
      %v1136 = vunpack.c.l.b16 %v592
      %v1137 = vunpack.c.l.b16 %v593
      %v1138 = vunpack.c.l.b16 %v594
      %v1139 = vunpack.c.l.b16 %v595
      %v1140 = vpack.c.b16 %v1069, %v1068
      %v1141 = vpack.c.b16 %v1071, %v1070
      %v1142 = vpack.c.b16 %v1073, %v1072
      %v1143 = vpack.c.b16 %v1075, %v1074
      %v1144 = vpack.c.b16 %v1077, %v1076
      %v1145 = vpack.c.b16 %v1079, %v1078
      %v1146 = vpack.c.b16 %v1081, %v1080
      %v1147 = vpack.c.b16 %v1083, %v1082
      %v1148 = vpack.c.b16 %v1085, %v1084
      %v1149 = vpack.c.b16 %v1087, %v1086
      %v1150 = vpack.c.b16 %v1089, %v1088
      %v1151 = vpack.c.b16 %v1091, %v1090
      %v1152 = vpack.c.b16 %v1093, %v1092
      %v1153 = vpack.c.b16 %v1095, %v1094
      %v1154 = vpack.c.b16 %v1097, %v1096
      %v1155 = vpack.c.b16 %v1099, %v1098
      %v1156 = vpack.c.b16 %v1101, %v1100
      %v1157 = vpack.c.b16 %v1103, %v1102
      %v1158 = vpack.c.b16 %v1105, %v1104
      %v1159 = vpack.c.b16 %v1107, %v1106
      %v1160 = vpack.c.b16 %v1109, %v1108
      %v1161 = vpack.c.b16 %v1111, %v1110
      %v1162 = vpack.c.b16 %v1113, %v1112
      %v1163 = vpack.c.b16 %v1115, %v1114
      %v1164 = vpack.c.b16 %v1117, %v1116
      %v1165 = vpack.c.b16 %v1119, %v1118
      %v1166 = vpack.c.b16 %v1121, %v1120
      %v1167 = vpack.c.b16 %v1123, %v1122
      %v1168 = vpack.c.b16 %v1125, %v1124
      %v1169 = vpack.c.b16 %v1127, %v1126
      %v1170 = vpack.c.b16 %v1129, %v1128
      %v1171 = vpack.c.b16 %v1131, %v1130
      %v1172 = vpack.c.b16 %v1133, %v1132
      %v1173 = vpack.c.b16 %v1135, %v1134
      %v1174 = vpack.c.b16 %v1137, %v1136
      %v1175 = vpack.c.b16 %v1139, %v1138
      %vm1212 = vcmask 523264
      %v1214 = vsel %vm1212, %v856, 0
      %v1217 = vsel %vm1212, %v861, 0
      %v1220 = vsel %vm1212, %v866, 0
      %v1223 = vsel %vm1212, %v871, 0
      %v1226 = vsel %vm1212, %v876, 0
      %v1229 = vsel %vm1212, %v881, 0
      %v1232 = vsel %vm1212, %v886, 0
      %v1235 = vsel %vm1212, %v891, 0
      %v1238 = vsel %vm1212, %v896, 0
      %v1241 = vsel %vm1212, %v901, 0
      %v1244 = vsel %vm1212, %v906, 0
      %v1247 = vsel %vm1212, %v911, 0
      %v1250 = vsel %vm1212, %v916, 0
      %v1253 = vsel %vm1212, %v921, 0
      %v1256 = vsel %vm1212, %v926, 0
      %v1259 = vsel %vm1212, %v931, 0
      %1261 = vmatprep.subr.bf16.mxu0 0
      %1262 = vmatpush1.bf16.msra.mxu0 %v1140
      %1263 = vmatprep.subr.bf16.mxu0 0
      %1264 = vmatpush1.bf16.msra.mxu0 %v1141
      %1265 = vmatprep.subr.bf16.mxu0 0
      %1266 = vmatpush1.bf16.msra.mxu0 %v1142
      %1267 = vmatprep.subr.bf16.mxu0 0
      %1268 = vmatpush1.bf16.msra.mxu0 %v1143
      %1269 = vmatprep.subr.bf16.mxu0 0
      %1270 = vmatpush1.bf16.msra.mxu0 %v1144
      %1271 = vmatprep.subr.bf16.mxu0 0
      %1272 = vmatpush1.bf16.msra.mxu0 %v1145
      %1273 = vmatprep.subr.bf16.mxu0 0
      %1274 = vmatpush1.bf16.msra.mxu0 %v1146
      %1275 = vmatprep.subr.bf16.mxu0 0
      %1276 = vmatpush1.bf16.msra.mxu0 %v1147
      %1277 = vmatprep.subr.bf16.mxu0 0
      %1278 = vmatpush1.bf16.msra.mxu0 %v1148
      %1279 = vmatprep.subr.bf16.mxu0 0
      %1280 = vmatpush1.bf16.msra.mxu0 %v1149
      %1281 = vmatprep.subr.bf16.mxu0 0
      %1282 = vmatpush1.bf16.msra.mxu0 %v1150
      %1283 = vmatprep.subr.bf16.mxu0 0
      %1284 = vmatpush1.bf16.msra.mxu0 %v1151
      %1285 = vmatprep.subr.bf16.mxu0 0
      %1286 = vmatpush1.bf16.msra.mxu0 %v1152
      %1287 = vmatprep.subr.bf16.mxu0 0
      %1288 = vmatpush1.bf16.msra.mxu0 %v1153
      %1289 = vmatprep.subr.bf16.mxu0 0
      %1290 = vmatpush1.bf16.msra.mxu0 %v1154
      %1291 = vmatprep.subr.bf16.mxu0 0
      %1292 = vmatpush1.bf16.msra.mxu0 %v1155
      %1293 = vmatprep.mubr.bf16.mxu0 %v853
      %1294 = vmatmul.mubr.bf16.gmra.mrb[0].mxu0 %v852
      %v1295 = vpop.f32.mrb[0].mxu0
      %v1296 = vadd.f32 0.0, %v1295
      %v1297 = vpop.f32.mrb[0].mxu0
      %v1298 = vpop.f32.mrb[0].mxu0
      %v1299 = vadd.f32 0.0, %v1298
      %v1300 = vpop.f32.mrb[0].mxu0
      %1301 = vmatprep.mubr.bf16.mxu0 %v858
      %1302 = vmatmul.mubr.bf16.gmra.mrb[0].mxu0 %v857
      %v1303 = vpop.f32.mrb[0].mxu0
      %v1304 = vadd.f32 0.0, %v1303
      %v1305 = vpop.f32.mrb[0].mxu0
      %v1306 = vpop.f32.mrb[0].mxu0
      %v1307 = vadd.f32 0.0, %v1306
      %v1308 = vpop.f32.mrb[0].mxu0
      %1309 = vmatprep.mubr.bf16.mxu0 %v863
      %1310 = vmatmul.mubr.bf16.gmra.mrb[0].mxu0 %v862
      %v1311 = vpop.f32.mrb[0].mxu0
      %v1312 = vadd.f32 0.0, %v1311
      %v1313 = vpop.f32.mrb[0].mxu0
      %v1314 = vpop.f32.mrb[0].mxu0
      %v1315 = vadd.f32 0.0, %v1314
      %v1316 = vpop.f32.mrb[0].mxu0
      %1317 = vmatprep.mubr.bf16.mxu0 %v868
      %1318 = vmatmul.mubr.bf16.gmra.mrb[0].mxu0 %v867
      %v1319 = vpop.f32.mrb[0].mxu0
      %v1320 = vadd.f32 0.0, %v1319
      %v1321 = vpop.f32.mrb[0].mxu0
      %v1322 = vpop.f32.mrb[0].mxu0
      %v1323 = vadd.f32 0.0, %v1322
      %v1324 = vpop.f32.mrb[0].mxu0
      %1325 = vmatprep.mubr.bf16.mxu0 %v873
      %1326 = vmatmul.mubr.bf16.gmra.mrb[0].mxu0 %v872
      %v1327 = vpop.f32.mrb[0].mxu0
      %v1328 = vadd.f32 0.0, %v1327
      %v1329 = vpop.f32.mrb[0].mxu0
      %v1330 = vpop.f32.mrb[0].mxu0
      %v1331 = vadd.f32 0.0, %v1330
      %v1332 = vpop.f32.mrb[0].mxu0
      %1333 = vmatprep.mubr.bf16.mxu0 %v878
      %1334 = vmatmul.mubr.bf16.gmra.mrb[0].mxu0 %v877
      %v1335 = vpop.f32.mrb[0].mxu0
      %v1336 = vadd.f32 0.0, %v1335
      %v1337 = vpop.f32.mrb[0].mxu0
      %v1338 = vpop.f32.mrb[0].mxu0
      %v1339 = vadd.f32 0.0, %v1338
      %v1340 = vpop.f32.mrb[0].mxu0
      %1341 = vmatprep.mubr.bf16.mxu0 %v883
      %1342 = vmatmul.mubr.bf16.gmra.mrb[0].mxu0 %v882
      %v1343 = vpop.f32.mrb[0].mxu0
      %v1344 = vadd.f32 0.0, %v1343
      %v1345 = vpop.f32.mrb[0].mxu0
      %v1346 = vpop.f32.mrb[0].mxu0
      %v1347 = vadd.f32 0.0, %v1346
      %v1348 = vpop.f32.mrb[0].mxu0
      %1349 = vmatprep.mubr.bf16.mxu0 %v888
      %1350 = vmatmul.mubr.bf16.gmra.mrb[0].mxu0 %v887
      %v1351 = vpop.f32.mrb[0].mxu0
      %v1352 = vadd.f32 0.0, %v1351
      %v1353 = vpop.f32.mrb[0].mxu0
      %v1354 = vpop.f32.mrb[0].mxu0
      %v1355 = vadd.f32 0.0, %v1354
      %v1356 = vpop.f32.mrb[0].mxu0
      %1357 = vmatprep.mubr.bf16.mxu0 %v893
      %1358 = vmatmul.mubr.bf16.gmra.mrb[0].mxu0 %v892
      %v1359 = vpop.f32.mrb[0].mxu0
      %v1360 = vadd.f32 0.0, %v1359
      %v1361 = vpop.f32.mrb[0].mxu0
      %v1362 = vpop.f32.mrb[0].mxu0
      %v1363 = vadd.f32 0.0, %v1362
      %v1364 = vpop.f32.mrb[0].mxu0
      %1365 = vmatprep.mubr.bf16.mxu0 %v898
      %1366 = vmatmul.mubr.bf16.gmra.mrb[0].mxu0 %v897
      %v1367 = vpop.f32.mrb[0].mxu0
      %v1368 = vadd.f32 0.0, %v1367
      %v1369 = vpop.f32.mrb[0].mxu0
      %v1370 = vpop.f32.mrb[0].mxu0
      %v1371 = vadd.f32 0.0, %v1370
      %v1372 = vpop.f32.mrb[0].mxu0
      %1373 = vmatprep.mubr.bf16.mxu0 %v903
      %1374 = vmatmul.mubr.bf16.gmra.mrb[0].mxu0 %v902
      %v1375 = vpop.f32.mrb[0].mxu0
      %v1376 = vadd.f32 0.0, %v1375
      %v1377 = vpop.f32.mrb[0].mxu0
      %v1378 = vpop.f32.mrb[0].mxu0
      %v1379 = vadd.f32 0.0, %v1378
      %v1380 = vpop.f32.mrb[0].mxu0
      %1381 = vmatprep.mubr.bf16.mxu0 %v908
      %1382 = vmatmul.mubr.bf16.gmra.mrb[0].mxu0 %v907
      %v1383 = vpop.f32.mrb[0].mxu0
      %v1384 = vadd.f32 0.0, %v1383
      %v1385 = vpop.f32.mrb[0].mxu0
      %v1386 = vpop.f32.mrb[0].mxu0
      %v1387 = vadd.f32 0.0, %v1386
      %v1388 = vpop.f32.mrb[0].mxu0
      %1389 = vmatprep.mubr.bf16.mxu0 %v913
      %1390 = vmatmul.mubr.bf16.gmra.mrb[0].mxu0 %v912
      %v1391 = vpop.f32.mrb[0].mxu0
      %v1392 = vadd.f32 0.0, %v1391
      %v1393 = vpop.f32.mrb[0].mxu0
      %v1394 = vpop.f32.mrb[0].mxu0
      %v1395 = vadd.f32 0.0, %v1394
      %v1396 = vpop.f32.mrb[0].mxu0
      %1397 = vmatprep.mubr.bf16.mxu0 %v918
      %1398 = vmatmul.mubr.bf16.gmra.mrb[0].mxu0 %v917
      %v1399 = vpop.f32.mrb[0].mxu0
      %v1400 = vadd.f32 0.0, %v1399
      %v1401 = vpop.f32.mrb[0].mxu0
      %v1402 = vpop.f32.mrb[0].mxu0
      %v1403 = vadd.f32 0.0, %v1402
      %v1404 = vpop.f32.mrb[0].mxu0
      %1405 = vmatprep.mubr.bf16.mxu0 %v923
      %1406 = vmatmul.mubr.bf16.gmra.mrb[0].mxu0 %v922
      %v1407 = vpop.f32.mrb[0].mxu0
      %v1408 = vadd.f32 0.0, %v1407
      %v1409 = vpop.f32.mrb[0].mxu0
      %v1410 = vpop.f32.mrb[0].mxu0
      %v1411 = vadd.f32 0.0, %v1410
      %v1412 = vpop.f32.mrb[0].mxu0
      %1413 = vmatprep.mubr.bf16.mxu0 %v928
      %1414 = vmatmul.mubr.bf16.gmra.mrb[0].mxu0 %v927
      %v1415 = vpop.f32.mrb[0].mxu0
      %v1416 = vadd.f32 0.0, %v1415
      %v1417 = vpop.f32.mrb[0].mxu0
      %v1418 = vpop.f32.mrb[0].mxu0
      %v1419 = vadd.f32 0.0, %v1418
      %v1420 = vpop.f32.mrb[0].mxu0
      %1421 = vdwg.mxu0
      %1422 = vmatprep.subr.bf16.mxu0 0
      %1423 = vmatpush1.bf16.msra.mxu0 %v1156
      %1424 = vmatprep.subr.bf16.mxu0 0
      %1425 = vmatpush1.bf16.msra.mxu0 %v1157
      %1426 = vmatprep.subr.bf16.mxu0 0
      %1427 = vmatpush1.bf16.msra.mxu0 %v1158
      %1428 = vmatprep.subr.bf16.mxu0 0
      %1429 = vmatpush1.bf16.msra.mxu0 %v1159
      %1430 = vmatprep.subr.bf16.mxu0 0
      %1431 = vmatpush1.bf16.msra.mxu0 %v1160
      %1432 = vmatprep.subr.bf16.mxu0 0
      %1433 = vmatpush1.bf16.msra.mxu0 %v1161
      %1434 = vmatprep.subr.bf16.mxu0 0
      %1435 = vmatpush1.bf16.msra.mxu0 %v1162
      %1436 = vmatprep.subr.bf16.mxu0 0
      %1437 = vmatpush1.bf16.msra.mxu0 %v1163
      %1438 = vmatprep.subr.bf16.mxu0 0
      %1439 = vmatpush1.bf16.msra.mxu0 %v1164
      %1440 = vmatprep.subr.bf16.mxu0 0
      %1441 = vmatpush1.bf16.msra.mxu0 %v1165
      %1442 = vmatprep.subr.bf16.mxu0 0
      %1443 = vmatpush1.bf16.msra.mxu0 %v1166
      %1444 = vmatprep.subr.bf16.mxu0 0
      %1445 = vmatpush1.bf16.msra.mxu0 %v1167
      %1446 = vmatprep.subr.bf16.mxu0 0
      %1447 = vmatpush1.bf16.msra.mxu0 %v1168
      %1448 = vmatprep.subr.bf16.mxu0 0
      %1449 = vmatpush1.bf16.msra.mxu0 %v1169
      %1450 = vmatprep.subr.bf16.mxu0 0
      %1451 = vmatpush1.bf16.msra.mxu0 %v1170
      %1452 = vmatprep.subr.bf16.mxu0 0
      %1453 = vmatpush1.bf16.msra.mxu0 %v1171
      %1454 = vmatprep.mubr.bf16.mxu0 %v855
      %1455 = vmatmul.mubr.bf16.gmra.mrb[0].mxu0 %v854
      %v1456 = vpop.f32.mrb[0].mxu0
      %v1457 = vadd.f32 %v1296, %v1456
      %v1458 = vpop.f32.mrb[0].mxu0
      %v1459 = vpop.f32.mrb[0].mxu0
      %v1460 = vadd.f32 %v1299, %v1459
      %v1461 = vpop.f32.mrb[0].mxu0
      %1462 = vmatprep.mubr.bf16.mxu0 %v860
      %1463 = vmatmul.mubr.bf16.gmra.mrb[0].mxu0 %v859
      %v1464 = vpop.f32.mrb[0].mxu0
      %v1465 = vadd.f32 %v1304, %v1464
      %v1466 = vpop.f32.mrb[0].mxu0
      %v1467 = vpop.f32.mrb[0].mxu0
      %v1468 = vadd.f32 %v1307, %v1467
      %v1469 = vpop.f32.mrb[0].mxu0
      %1470 = vmatprep.mubr.bf16.mxu0 %v865
      %1471 = vmatmul.mubr.bf16.gmra.mrb[0].mxu0 %v864
      %v1472 = vpop.f32.mrb[0].mxu0
      %v1473 = vadd.f32 %v1312, %v1472
      %v1474 = vpop.f32.mrb[0].mxu0
      %v1475 = vpop.f32.mrb[0].mxu0
      %v1476 = vadd.f32 %v1315, %v1475
      %v1477 = vpop.f32.mrb[0].mxu0
      %1478 = vmatprep.mubr.bf16.mxu0 %v870
      %1479 = vmatmul.mubr.bf16.gmra.mrb[0].mxu0 %v869
      %v1480 = vpop.f32.mrb[0].mxu0
      %v1481 = vadd.f32 %v1320, %v1480
      %v1482 = vpop.f32.mrb[0].mxu0
      %v1483 = vpop.f32.mrb[0].mxu0
      %v1484 = vadd.f32 %v1323, %v1483
      %v1485 = vpop.f32.mrb[0].mxu0
      %1486 = vmatprep.mubr.bf16.mxu0 %v875
      %1487 = vmatmul.mubr.bf16.gmra.mrb[0].mxu0 %v874
      %v1488 = vpop.f32.mrb[0].mxu0
      %v1489 = vadd.f32 %v1328, %v1488
      %v1490 = vpop.f32.mrb[0].mxu0
      %v1491 = vpop.f32.mrb[0].mxu0
      %v1492 = vadd.f32 %v1331, %v1491
      %v1493 = vpop.f32.mrb[0].mxu0
      %1494 = vmatprep.mubr.bf16.mxu0 %v880
      %1495 = vmatmul.mubr.bf16.gmra.mrb[0].mxu0 %v879
      %v1496 = vpop.f32.mrb[0].mxu0
      %v1497 = vadd.f32 %v1336, %v1496
      %v1498 = vpop.f32.mrb[0].mxu0
      %v1499 = vpop.f32.mrb[0].mxu0
      %v1500 = vadd.f32 %v1339, %v1499
      %v1501 = vpop.f32.mrb[0].mxu0
      %1502 = vmatprep.mubr.bf16.mxu0 %v885
      %1503 = vmatmul.mubr.bf16.gmra.mrb[0].mxu0 %v884
      %v1504 = vpop.f32.mrb[0].mxu0
      %v1505 = vadd.f32 %v1344, %v1504
      %v1506 = vpop.f32.mrb[0].mxu0
      %v1507 = vpop.f32.mrb[0].mxu0
      %v1508 = vadd.f32 %v1347, %v1507
      %v1509 = vpop.f32.mrb[0].mxu0
      %1510 = vmatprep.mubr.bf16.mxu0 %v890
      %1511 = vmatmul.mubr.bf16.gmra.mrb[0].mxu0 %v889
      %v1512 = vpop.f32.mrb[0].mxu0
      %v1513 = vadd.f32 %v1352, %v1512
      %v1514 = vpop.f32.mrb[0].mxu0
      %v1515 = vpop.f32.mrb[0].mxu0
      %v1516 = vadd.f32 %v1355, %v1515
      %v1517 = vpop.f32.mrb[0].mxu0
      %1518 = vmatprep.mubr.bf16.mxu0 %v895
      %1519 = vmatmul.mubr.bf16.gmra.mrb[0].mxu0 %v894
      %v1520 = vpop.f32.mrb[0].mxu0
      %v1521 = vadd.f32 %v1360, %v1520
      %v1522 = vpop.f32.mrb[0].mxu0
      %v1523 = vpop.f32.mrb[0].mxu0
      %v1524 = vadd.f32 %v1363, %v1523
      %v1525 = vpop.f32.mrb[0].mxu0
      %1526 = vmatprep.mubr.bf16.mxu0 %v900
      %1527 = vmatmul.mubr.bf16.gmra.mrb[0].mxu0 %v899
      %v1528 = vpop.f32.mrb[0].mxu0
      %v1529 = vadd.f32 %v1368, %v1528
      %v1530 = vpop.f32.mrb[0].mxu0
      %v1531 = vpop.f32.mrb[0].mxu0
      %v1532 = vadd.f32 %v1371, %v1531
      %v1533 = vpop.f32.mrb[0].mxu0
      %1534 = vmatprep.mubr.bf16.mxu0 %v905
      %1535 = vmatmul.mubr.bf16.gmra.mrb[0].mxu0 %v904
      %v1536 = vpop.f32.mrb[0].mxu0
      %v1537 = vadd.f32 %v1376, %v1536
      %v1538 = vpop.f32.mrb[0].mxu0
      %v1539 = vpop.f32.mrb[0].mxu0
      %v1540 = vadd.f32 %v1379, %v1539
      %v1541 = vpop.f32.mrb[0].mxu0
      %1542 = vmatprep.mubr.bf16.mxu0 %v910
      %1543 = vmatmul.mubr.bf16.gmra.mrb[0].mxu0 %v909
      %v1544 = vpop.f32.mrb[0].mxu0
      %v1545 = vadd.f32 %v1384, %v1544
      %v1546 = vpop.f32.mrb[0].mxu0
      %v1547 = vpop.f32.mrb[0].mxu0
      %v1548 = vadd.f32 %v1387, %v1547
      %v1549 = vpop.f32.mrb[0].mxu0
      %1550 = vmatprep.mubr.bf16.mxu0 %v915
      %1551 = vmatmul.mubr.bf16.gmra.mrb[0].mxu0 %v914
      %v1552 = vpop.f32.mrb[0].mxu0
      %v1553 = vadd.f32 %v1392, %v1552
      %v1554 = vpop.f32.mrb[0].mxu0
      %v1555 = vpop.f32.mrb[0].mxu0
      %v1556 = vadd.f32 %v1395, %v1555
      %v1557 = vpop.f32.mrb[0].mxu0
      %1558 = vmatprep.mubr.bf16.mxu0 %v920
      %1559 = vmatmul.mubr.bf16.gmra.mrb[0].mxu0 %v919
      %v1560 = vpop.f32.mrb[0].mxu0
      %v1561 = vadd.f32 %v1400, %v1560
      %v1562 = vpop.f32.mrb[0].mxu0
      %v1563 = vpop.f32.mrb[0].mxu0
      %v1564 = vadd.f32 %v1403, %v1563
      %v1565 = vpop.f32.mrb[0].mxu0
      %1566 = vmatprep.mubr.bf16.mxu0 %v925
      %1567 = vmatmul.mubr.bf16.gmra.mrb[0].mxu0 %v924
      %v1568 = vpop.f32.mrb[0].mxu0
      %v1569 = vadd.f32 %v1408, %v1568
      %v1570 = vpop.f32.mrb[0].mxu0
      %v1571 = vpop.f32.mrb[0].mxu0
      %v1572 = vadd.f32 %v1411, %v1571
      %v1573 = vpop.f32.mrb[0].mxu0
      %1574 = vmatprep.mubr.bf16.mxu0 %v930
      %1575 = vmatmul.mubr.bf16.gmra.mrb[0].mxu0 %v929
      %v1576 = vpop.f32.mrb[0].mxu0
      %v1577 = vadd.f32 %v1416, %v1576
      %v1578 = vpop.f32.mrb[0].mxu0
      %v1579 = vpop.f32.mrb[0].mxu0
      %v1580 = vadd.f32 %v1419, %v1579
      %v1581 = vpop.f32.mrb[0].mxu0
      %1582 = vdwg.mxu0
      %1583 = vmatprep.subr.bf16.mxu0 0
      %1584 = vmatpush1.bf16.msra.mxu0 %v1172
      %1585 = vmatprep.subr.bf16.mxu0 0
      %1586 = vmatpush1.bf16.msra.mxu0 %v1173
      %1587 = vmatprep.subr.bf16.mxu0 0
      %1588 = vmatpush1.bf16.msra.mxu0 %v1174
      %1589 = vmatprep.subr.bf16.mxu0 0
      %1590 = vmatpush1.bf16.msra.mxu0 %v1175
      %1591 = vmatprep.subr.bf16.mxu0 0
      %1592 = vmatpush1.bf16.msra.mxu0 0
      %1593 = vmatprep.subr.bf16.mxu0 0
      %1594 = vmatpush1.bf16.msra.mxu0 0
      %1595 = vmatprep.subr.bf16.mxu0 0
      %1596 = vmatpush1.bf16.msra.mxu0 0
      %1597 = vmatprep.subr.bf16.mxu0 0
      %1598 = vmatpush1.bf16.msra.mxu0 0
      %1599 = vmatprep.subr.bf16.mxu0 0
      %1600 = vmatpush1.bf16.msra.mxu0 0
      %1601 = vmatprep.subr.bf16.mxu0 0
      %1602 = vmatpush1.bf16.msra.mxu0 0
      %1603 = vmatprep.subr.bf16.mxu0 0
      %1604 = vmatpush1.bf16.msra.mxu0 0
      %1605 = vmatprep.subr.bf16.mxu0 0
      %1606 = vmatpush1.bf16.msra.mxu0 0
      %1607 = vmatprep.subr.bf16.mxu0 0
      %1608 = vmatpush1.bf16.msra.mxu0 0
      %1609 = vmatprep.subr.bf16.mxu0 0
      %1610 = vmatpush1.bf16.msra.mxu0 0
      %1611 = vmatprep.subr.bf16.mxu0 0
      %1612 = vmatpush1.bf16.msra.mxu0 0
      %1613 = vmatprep.subr.bf16.mxu0 0
      %1614 = vmatpush1.bf16.msra.mxu0 0
      %1615 = vmatprep.mubr.bf16.mxu0 0
      %1616 = vmatmul.mubr.bf16.gmra.mrb[0].mxu0 %v1214
      %v1617 = vpop.f32.mrb[0].mxu0
      %v1618 = vadd.f32 %v1457, %v1617
      %v1619 = vpop.f32.mrb[0].mxu0
      %v1620 = vpop.f32.mrb[0].mxu0
      %v1621 = vadd.f32 %v1460, %v1620
      %v1622 = vpop.f32.mrb[0].mxu0
      %1623 = vmatprep.mubr.bf16.mxu0 0
      %1624 = vmatmul.mubr.bf16.gmra.mrb[0].mxu0 %v1217
      %v1625 = vpop.f32.mrb[0].mxu0
      %v1626 = vadd.f32 %v1465, %v1625
      %v1627 = vpop.f32.mrb[0].mxu0
      %v1628 = vpop.f32.mrb[0].mxu0
      %v1629 = vadd.f32 %v1468, %v1628
      %v1630 = vpop.f32.mrb[0].mxu0
      %1631 = vmatprep.mubr.bf16.mxu0 0
      %1632 = vmatmul.mubr.bf16.gmra.mrb[0].mxu0 %v1220
      %v1633 = vpop.f32.mrb[0].mxu0
      %v1634 = vadd.f32 %v1473, %v1633
      %v1635 = vpop.f32.mrb[0].mxu0
      %v1636 = vpop.f32.mrb[0].mxu0
      %v1637 = vadd.f32 %v1476, %v1636
      %v1638 = vpop.f32.mrb[0].mxu0
      %1639 = vmatprep.mubr.bf16.mxu0 0
      %1640 = vmatmul.mubr.bf16.gmra.mrb[0].mxu0 %v1223
      %v1641 = vpop.f32.mrb[0].mxu0
      %v1642 = vadd.f32 %v1481, %v1641
      %v1643 = vpop.f32.mrb[0].mxu0
      %v1644 = vpop.f32.mrb[0].mxu0
      %v1645 = vadd.f32 %v1484, %v1644
      %v1646 = vpop.f32.mrb[0].mxu0
      %1647 = vmatprep.mubr.bf16.mxu0 0
      %1648 = vmatmul.mubr.bf16.gmra.mrb[0].mxu0 %v1226
      %v1649 = vpop.f32.mrb[0].mxu0
      %v1650 = vadd.f32 %v1489, %v1649
      %v1651 = vpop.f32.mrb[0].mxu0
      %v1652 = vpop.f32.mrb[0].mxu0
      %v1653 = vadd.f32 %v1492, %v1652
      %v1654 = vpop.f32.mrb[0].mxu0
      %1655 = vmatprep.mubr.bf16.mxu0 0
      %1656 = vmatmul.mubr.bf16.gmra.mrb[0].mxu0 %v1229
      %v1657 = vpop.f32.mrb[0].mxu0
      %v1658 = vadd.f32 %v1497, %v1657
      %v1659 = vpop.f32.mrb[0].mxu0
      %v1660 = vpop.f32.mrb[0].mxu0
      %v1661 = vadd.f32 %v1500, %v1660
      %v1662 = vpop.f32.mrb[0].mxu0
      %1663 = vmatprep.mubr.bf16.mxu0 0
      %1664 = vmatmul.mubr.bf16.gmra.mrb[0].mxu0 %v1232
      %v1665 = vpop.f32.mrb[0].mxu0
      %v1666 = vadd.f32 %v1505, %v1665
      %v1667 = vpop.f32.mrb[0].mxu0
      %v1668 = vpop.f32.mrb[0].mxu0
      %v1669 = vadd.f32 %v1508, %v1668
      %v1670 = vpop.f32.mrb[0].mxu0
      %1671 = vmatprep.mubr.bf16.mxu0 0
      %1672 = vmatmul.mubr.bf16.gmra.mrb[0].mxu0 %v1235
      %v1673 = vpop.f32.mrb[0].mxu0
      %v1674 = vadd.f32 %v1513, %v1673
      %v1675 = vpop.f32.mrb[0].mxu0
      %v1676 = vpop.f32.mrb[0].mxu0
      %v1677 = vadd.f32 %v1516, %v1676
      %v1678 = vpop.f32.mrb[0].mxu0
      %1679 = vmatprep.mubr.bf16.mxu0 0
      %1680 = vmatmul.mubr.bf16.gmra.mrb[0].mxu0 %v1238
      %v1681 = vpop.f32.mrb[0].mxu0
      %v1682 = vadd.f32 %v1521, %v1681
      %v1683 = vpop.f32.mrb[0].mxu0
      %v1684 = vpop.f32.mrb[0].mxu0
      %v1685 = vadd.f32 %v1524, %v1684
      %v1686 = vpop.f32.mrb[0].mxu0
      %1687 = vmatprep.mubr.bf16.mxu0 0
      %1688 = vmatmul.mubr.bf16.gmra.mrb[0].mxu0 %v1241
      %v1689 = vpop.f32.mrb[0].mxu0
      %v1690 = vadd.f32 %v1529, %v1689
      %v1691 = vpop.f32.mrb[0].mxu0
      %v1692 = vpop.f32.mrb[0].mxu0
      %v1693 = vadd.f32 %v1532, %v1692
      %v1694 = vpop.f32.mrb[0].mxu0
      %1695 = vmatprep.mubr.bf16.mxu0 0
      %1696 = vmatmul.mubr.bf16.gmra.mrb[0].mxu0 %v1244
      %v1697 = vpop.f32.mrb[0].mxu0
      %v1698 = vadd.f32 %v1537, %v1697
      %v1699 = vpop.f32.mrb[0].mxu0
      %v1700 = vpop.f32.mrb[0].mxu0
      %v1701 = vadd.f32 %v1540, %v1700
      %v1702 = vpop.f32.mrb[0].mxu0
      %1703 = vmatprep.mubr.bf16.mxu0 0
      %1704 = vmatmul.mubr.bf16.gmra.mrb[0].mxu0 %v1247
      %v1705 = vpop.f32.mrb[0].mxu0
      %v1706 = vadd.f32 %v1545, %v1705
      %v1707 = vpop.f32.mrb[0].mxu0
      %v1708 = vpop.f32.mrb[0].mxu0
      %v1709 = vadd.f32 %v1548, %v1708
      %v1710 = vpop.f32.mrb[0].mxu0
      %1711 = vmatprep.mubr.bf16.mxu0 0
      %1712 = vmatmul.mubr.bf16.gmra.mrb[0].mxu0 %v1250
      %v1713 = vpop.f32.mrb[0].mxu0
      %v1714 = vadd.f32 %v1553, %v1713
      %v1715 = vpop.f32.mrb[0].mxu0
      %v1716 = vpop.f32.mrb[0].mxu0
      %v1717 = vadd.f32 %v1556, %v1716
      %v1718 = vpop.f32.mrb[0].mxu0
      %1719 = vmatprep.mubr.bf16.mxu0 0
      %1720 = vmatmul.mubr.bf16.gmra.mrb[0].mxu0 %v1253
      %v1721 = vpop.f32.mrb[0].mxu0
      %v1722 = vadd.f32 %v1561, %v1721
      %v1723 = vpop.f32.mrb[0].mxu0
      %v1724 = vpop.f32.mrb[0].mxu0
      %v1725 = vadd.f32 %v1564, %v1724
      %v1726 = vpop.f32.mrb[0].mxu0
      %1727 = vmatprep.mubr.bf16.mxu0 0
      %1728 = vmatmul.mubr.bf16.gmra.mrb[0].mxu0 %v1256
      %v1729 = vpop.f32.mrb[0].mxu0
      %v1730 = vadd.f32 %v1569, %v1729
      %v1731 = vpop.f32.mrb[0].mxu0
      %v1732 = vpop.f32.mrb[0].mxu0
      %v1733 = vadd.f32 %v1572, %v1732
      %v1734 = vpop.f32.mrb[0].mxu0
      %1735 = vmatprep.mubr.bf16.mxu0 0
      %1736 = vmatmul.mubr.bf16.gmra.mrb[0].mxu0 %v1259
      %v1737 = vpop.f32.mrb[0].mxu0
      %v1738 = vadd.f32 %v1577, %v1737
      %v1739 = vpop.f32.mrb[0].mxu0
      %v1740 = vpop.f32.mrb[0].mxu0
      %v1741 = vadd.f32 %v1580, %v1740
      %v1742 = vpop.f32.mrb[0].mxu0
      %1743 = vdwg.mxu0
      %v1744 = vadd.f32 %v492, %v1618
      %v1745 = vadd.f32 %v493, %v1621
      %v1746 = vadd.f32 %v494, %v1626
      %v1747 = vadd.f32 %v495, %v1629
      %v1748 = vadd.f32 %v496, %v1634
      %v1749 = vadd.f32 %v497, %v1637
      %v1750 = vadd.f32 %v498, %v1642
      %v1751 = vadd.f32 %v499, %v1645
      %v1752 = vadd.f32 %v500, %v1650
      %v1753 = vadd.f32 %v501, %v1653
      %v1754 = vadd.f32 %v502, %v1658
      %v1755 = vadd.f32 %v503, %v1661
      %v1756 = vadd.f32 %v504, %v1666
      %v1757 = vadd.f32 %v505, %v1669
      %v1758 = vadd.f32 %v506, %v1674
      %v1759 = vadd.f32 %v507, %v1677
      %v1760 = vadd.f32 %v508, %v1682
      %v1761 = vadd.f32 %v509, %v1685
      %v1762 = vadd.f32 %v510, %v1690
      %v1763 = vadd.f32 %v511, %v1693
      %v1764 = vadd.f32 %v512, %v1698
      %v1765 = vadd.f32 %v513, %v1701
      %v1766 = vadd.f32 %v514, %v1706
      %v1767 = vadd.f32 %v515, %v1709
      %v1768 = vadd.f32 %v516, %v1714
      %v1769 = vadd.f32 %v517, %v1717
      %v1770 = vadd.f32 %v518, %v1722
      %v1771 = vadd.f32 %v519, %v1725
      %v1772 = vadd.f32 %v520, %v1730
      %v1773 = vadd.f32 %v521, %v1733
      %v1774 = vadd.f32 %v522, %v1738
      %v1775 = vadd.f32 %v523, %v1741
      %1776 = vst [vmem:[#allocation2] sm:$0xff] %v1744
      %1777 = vst [vmem:[#allocation2 + $0x8] sm:$0xff] %v1745
      %1778 = vst [vmem:[#allocation2 + $0x10] sm:$0xff] %v1746
      %1779 = vst [vmem:[#allocation2 + $0x18] sm:$0xff] %v1747
      %1780 = vst [vmem:[#allocation2 + $0x20] sm:$0xff] %v1748
      %1781 = vst [vmem:[#allocation2 + $0x28] sm:$0xff] %v1749
      %1782 = vst [vmem:[#allocation2 + $0x30] sm:$0xff] %v1750
      %1783 = vst [vmem:[#allocation2 + $0x38] sm:$0xff] %v1751
      %1784 = vst [vmem:[#allocation2 + $0x40] sm:$0xff] %v1752
      %1785 = vst [vmem:[#allocation2 + $0x48] sm:$0xff] %v1753
      %1786 = vst [vmem:[#allocation2 + $0x50] sm:$0xff] %v1754
      %1787 = vst [vmem:[#allocation2 + $0x58] sm:$0xff] %v1755
      %1788 = vst [vmem:[#allocation2 + $0x60] sm:$0xff] %v1756
      %1789 = vst [vmem:[#allocation2 + $0x68] sm:$0xff] %v1757
      %1790 = vst [vmem:[#allocation2 + $0x70] sm:$0xff] %v1758
      %1791 = vst [vmem:[#allocation2 + $0x78] sm:$0xff] %v1759
      %1792 = vst [vmem:[#allocation2 + $0x80] sm:$0xff] %v1760
      %1793 = vst [vmem:[#allocation2 + $0x88] sm:$0xff] %v1761
      %1794 = vst [vmem:[#allocation2 + $0x90] sm:$0xff] %v1762
      %1795 = vst [vmem:[#allocation2 + $0x98] sm:$0xff] %v1763
      %1796 = vst [vmem:[#allocation2 + $0xa0] sm:$0xff] %v1764
      %1797 = vst [vmem:[#allocation2 + $0xa8] sm:$0xff] %v1765
      %1798 = vst [vmem:[#allocation2 + $0xb0] sm:$0xff] %v1766
      %1799 = vst [vmem:[#allocation2 + $0xb8] sm:$0xff] %v1767
      %1800 = vst [vmem:[#allocation2 + $0xc0] sm:$0xff] %v1768
      %1801 = vst [vmem:[#allocation2 + $0xc8] sm:$0xff] %v1769
      %1802 = vst [vmem:[#allocation2 + $0xd0] sm:$0xff] %v1770
      %1803 = vst [vmem:[#allocation2 + $0xd8] sm:$0xff] %v1771
      %1804 = vst [vmem:[#allocation2 + $0xe0] sm:$0xff] %v1772
      %1805 = vst [vmem:[#allocation2 + $0xe8] sm:$0xff] %v1773
      %1806 = vst [vmem:[#allocation2 + $0xf0] sm:$0xff] %v1774
      %1807 = vst [vmem:[#allocation2 + $0xf8] sm:$0xff] %v1775
      // Predicated region
      $region45: #{unet_multihead_rot_forward.28} parent=39 // pred_check
        %p1808 = pneg %p360
      $region46: #{unet_multihead_rot_forward.28} parent=39 // pred_check_branch
        %1810 = sbr.rel (%p1808) target = $region48
      $region47: #{unet_multihead_rot_forward.28} parent=39 // pred_region
        %v1811 = vld [vmem:[#allocation2] sm:$0xff]
        %v1812 = vld [vmem:[#allocation2 + $0x8] sm:$0xff]
        %v1813 = vld [vmem:[#allocation2 + $0x10] sm:$0xff]
        %v1814 = vld [vmem:[#allocation2 + $0x18] sm:$0xff]
        %v1815 = vld [vmem:[#allocation2 + $0x20] sm:$0xff]
        %v1816 = vld [vmem:[#allocation2 + $0x28] sm:$0xff]
        %v1817 = vld [vmem:[#allocation2 + $0x30] sm:$0xff]
        %v1818 = vld [vmem:[#allocation2 + $0x38] sm:$0xff]
        %v1819 = vld [vmem:[#allocation2 + $0x40] sm:$0xff]
        %v1820 = vld [vmem:[#allocation2 + $0x48] sm:$0xff]
        %v1821 = vld [vmem:[#allocation2 + $0x50] sm:$0xff]
        %v1822 = vld [vmem:[#allocation2 + $0x58] sm:$0xff]
        %v1823 = vld [vmem:[#allocation2 + $0x60] sm:$0xff]
        %v1824 = vld [vmem:[#allocation2 + $0x68] sm:$0xff]
        %v1825 = vld [vmem:[#allocation2 + $0x70] sm:$0xff]
        %v1826 = vld [vmem:[#allocation2 + $0x78] sm:$0xff]
        %v1827 = vld [vmem:[#allocation2 + $0x80] sm:$0xff]
        %v1828 = vld [vmem:[#allocation2 + $0x88] sm:$0xff]
        %v1829 = vld [vmem:[#allocation2 + $0x90] sm:$0xff]
        %v1830 = vld [vmem:[#allocation2 + $0x98] sm:$0xff]
        %v1831 = vld [vmem:[#allocation2 + $0xa0] sm:$0xff]
        %v1832 = vld [vmem:[#allocation2 + $0xa8] sm:$0xff]
        %v1833 = vld [vmem:[#allocation2 + $0xb0] sm:$0xff]
        %v1834 = vld [vmem:[#allocation2 + $0xb8] sm:$0xff]
        %v1835 = vld [vmem:[#allocation2 + $0xc0] sm:$0xff]
        %v1836 = vld [vmem:[#allocation2 + $0xc8] sm:$0xff]
        %v1837 = vld [vmem:[#allocation2 + $0xd0] sm:$0xff]
        %v1838 = vld [vmem:[#allocation2 + $0xd8] sm:$0xff]
        %v1839 = vld [vmem:[#allocation2 + $0xe0] sm:$0xff]
        %v1840 = vld [vmem:[#allocation2 + $0xe8] sm:$0xff]
        %v1841 = vld [vmem:[#allocation2 + $0xf0] sm:$0xff]
        %v1842 = vld [vmem:[#allocation2 + $0xf8] sm:$0xff]
        %v1843 = vld [vmem:[%s349] sm:$0x1]
        %v1845 = vlaneseq
        %v1846 = vshrl.u32 %v1845, 7
        %v1847 = vsub.s32 0, %v1846
        %v1848 = vrot.slane %v1843, %v1847
        %v1850 = vadd.f32 %v1811, %v1848
        %v1851 = vadd.f32 %v1812, %v1848
        %v1852 = vadd.f32 %v1813, %v1848
        %v1853 = vadd.f32 %v1814, %v1848
        %v1854 = vadd.f32 %v1815, %v1848
        %v1855 = vadd.f32 %v1816, %v1848
        %v1856 = vadd.f32 %v1817, %v1848
        %v1857 = vadd.f32 %v1818, %v1848
        %v1858 = vadd.f32 %v1819, %v1848
        %v1859 = vadd.f32 %v1820, %v1848
        %v1860 = vadd.f32 %v1821, %v1848
        %v1861 = vadd.f32 %v1822, %v1848
        %v1862 = vadd.f32 %v1823, %v1848
        %v1863 = vadd.f32 %v1824, %v1848
        %v1864 = vadd.f32 %v1825, %v1848
        %v1865 = vadd.f32 %v1826, %v1848
        %v1866 = vadd.f32 %v1827, %v1848
        %v1867 = vadd.f32 %v1828, %v1848
        %v1868 = vadd.f32 %v1829, %v1848
        %v1869 = vadd.f32 %v1830, %v1848
        %v1870 = vadd.f32 %v1831, %v1848
        %v1871 = vadd.f32 %v1832, %v1848
        %v1872 = vadd.f32 %v1833, %v1848
        %v1873 = vadd.f32 %v1834, %v1848
        %v1874 = vadd.f32 %v1835, %v1848
        %v1875 = vadd.f32 %v1836, %v1848
        %v1876 = vadd.f32 %v1837, %v1848
        %v1877 = vadd.f32 %v1838, %v1848
        %v1878 = vadd.f32 %v1839, %v1848
        %v1879 = vadd.f32 %v1840, %v1848
        %v1880 = vadd.f32 %v1841, %v1848
        %v1881 = vadd.f32 %v1842, %v1848
        %v1882 = vmax.f32 %v1850, 0.0
        %v1883 = vmax.f32 %v1851, 0.0
        %v1884 = vmax.f32 %v1852, 0.0
        %v1885 = vmax.f32 %v1853, 0.0
        %v1886 = vmax.f32 %v1854, 0.0
        %v1887 = vmax.f32 %v1855, 0.0
        %v1888 = vmax.f32 %v1856, 0.0
        %v1889 = vmax.f32 %v1857, 0.0
        %v1890 = vmax.f32 %v1858, 0.0
        %v1891 = vmax.f32 %v1859, 0.0
        %v1892 = vmax.f32 %v1860, 0.0
        %v1893 = vmax.f32 %v1861, 0.0
        %v1894 = vmax.f32 %v1862, 0.0
        %v1895 = vmax.f32 %v1863, 0.0
        %v1896 = vmax.f32 %v1864, 0.0
        %v1897 = vmax.f32 %v1865, 0.0
        %v1898 = vmax.f32 %v1866, 0.0
        %v1899 = vmax.f32 %v1867, 0.0
        %v1900 = vmax.f32 %v1868, 0.0
        %v1901 = vmax.f32 %v1869, 0.0
        %v1902 = vmax.f32 %v1870, 0.0
        %v1903 = vmax.f32 %v1871, 0.0
        %v1904 = vmax.f32 %v1872, 0.0
        %v1905 = vmax.f32 %v1873, 0.0
        %v1906 = vmax.f32 %v1874, 0.0
        %v1907 = vmax.f32 %v1875, 0.0
        %v1908 = vmax.f32 %v1876, 0.0
        %v1909 = vmax.f32 %v1877, 0.0
        %v1910 = vmax.f32 %v1878, 0.0
        %v1911 = vmax.f32 %v1879, 0.0
        %v1912 = vmax.f32 %v1880, 0.0
        %v1913 = vmax.f32 %v1881, 0.0
        %1914 = vst [vmem:[%s357] sm:$0xff] %v1882
        %1915 = vst [vmem:[%s357 + $0x8] sm:$0xff] %v1883
        %1916 = vst [vmem:[%s357 + $0x10] sm:$0xff] %v1884
        %1917 = vst [vmem:[%s357 + $0x18] sm:$0xff] %v1885
        %1918 = vst [vmem:[%s357 + $0x20] sm:$0xff] %v1886
        %1919 = vst [vmem:[%s357 + $0x28] sm:$0xff] %v1887
        %1920 = vst [vmem:[%s357 + $0x30] sm:$0xff] %v1888
        %1921 = vst [vmem:[%s357 + $0x38] sm:$0xff] %v1889
        %1922 = vst [vmem:[%s357 + $0x40] sm:$0xff] %v1890
        %1923 = vst [vmem:[%s357 + $0x48] sm:$0xff] %v1891
        %1924 = vst [vmem:[%s357 + $0x50] sm:$0xff] %v1892
        %1925 = vst [vmem:[%s357 + $0x58] sm:$0xff] %v1893
        %1926 = vst [vmem:[%s357 + $0x60] sm:$0xff] %v1894
        %1927 = vst [vmem:[%s357 + $0x68] sm:$0xff] %v1895
        %1928 = vst [vmem:[%s357 + $0x70] sm:$0xff] %v1896
        %1929 = vst [vmem:[%s357 + $0x78] sm:$0xff] %v1897
        %1930 = vst [vmem:[%s357 + $0x80] sm:$0xff] %v1898
        %1931 = vst [vmem:[%s357 + $0x88] sm:$0xff] %v1899
        %1932 = vst [vmem:[%s357 + $0x90] sm:$0xff] %v1900
        %1933 = vst [vmem:[%s357 + $0x98] sm:$0xff] %v1901
        %1934 = vst [vmem:[%s357 + $0xa0] sm:$0xff] %v1902
        %1935 = vst [vmem:[%s357 + $0xa8] sm:$0xff] %v1903
        %1936 = vst [vmem:[%s357 + $0xb0] sm:$0xff] %v1904
        %1937 = vst [vmem:[%s357 + $0xb8] sm:$0xff] %v1905
        %1938 = vst [vmem:[%s357 + $0xc0] sm:$0xff] %v1906
        %1939 = vst [vmem:[%s357 + $0xc8] sm:$0xff] %v1907
        %1940 = vst [vmem:[%s357 + $0xd0] sm:$0xff] %v1908
        %1941 = vst [vmem:[%s357 + $0xd8] sm:$0xff] %v1909
        %1942 = vst [vmem:[%s357 + $0xe0] sm:$0xff] %v1910
        %1943 = vst [vmem:[%s357 + $0xe8] sm:$0xff] %v1911
        %1944 = vst [vmem:[%s357 + $0xf0] sm:$0xff] %v1912
        %1945 = vst [vmem:[%s357 + $0xf8] sm:$0xff] %v1913
      $region48: #{unet_multihead_rot_forward.28} parent=39 // pred_fallthru
        _
      %s1946 = smul.u32 32, %s21
      %p1947 = scmp.lt.s32.totalorder %s1946, 63
      %s1948 = scalar_select %p1947, %s1946, 63
      %p1949 = scmp.lt.s32.totalorder %s22, 0
      %s1950 = scalar_select %p1949, %s22, 0
      %s1951 = sadd.s32 %s1950, %s1948
      %s1952 = smul.addr %s1951, 8
      %s1953 = scalar_lea.vmem %s5, %s1952
      // Predicated region
      $region49: #{unet_multihead_rot_forward.28} parent=39 // pred_check
        %p1954 = pneg %p189
      $region50: #{unet_multihead_rot_forward.28} parent=39 // pred_check_branch
        %1956 = sbr.rel (%p1954) target = $region52
      $region51: #{unet_multihead_rot_forward.28} parent=39 // pred_region
        %s1957 = smul.u32 32, %s21
      $region52: #{unet_multihead_rot_forward.28} parent=39 // pred_fallthru
        _
    $region40: #{unet_multihead_rot_forward.28} parent=5 // pred_fallthru
      _
    %p1958 = scmp.le.s32.totalorder 2, %s11
    // Predicated region
    $region53: #{unet_multihead_rot_forward.28} parent=5 // pred_check
      %p1959 = pneg %p1958
    $region54: #{unet_multihead_rot_forward.28} parent=5 // pred_check_branch
      %1961 = sbr.rel (%p1959) target = $region56
    $region55: #{unet_multihead_rot_forward.28} parent=5 // pred_region
      %s1962 = ssub.s32 %s11, 2
      // Predicated region
      $region57: #{unet_multihead_rot_forward.28} parent=55 // pred_check
        %p1963 = pneg %p195
      $region58: #{unet_multihead_rot_forward.28} parent=55 // pred_check_branch
        %1965 = sbr.rel (%p1963) target = $region60
      $region59: #{unet_multihead_rot_forward.28} parent=55 // pred_region
        %s1966 = smul.u32 32, %s24
        %p1967 = scmp.lt.s32.totalorder %s1966, 63
        %s1968 = scalar_select %p1967, %s1966, 63
        %p1969 = scmp.lt.s32.totalorder %s25, 0
        %s1970 = scalar_select %p1969, %s25, 0
        %s1971 = sadd.s32 %s1970, %s1968
        %s1972 = smul.addr %s1971, 8
        %s1973 = scalar_lea.vmem %s5, %s1972
      $region60: #{unet_multihead_rot_forward.28} parent=55 // pred_fallthru
        _
    $region56: #{unet_multihead_rot_forward.28} parent=5 // pred_fallthru
      _
  $region6: #{unet_multihead_rot_forward.28} parent=0 // loop_footer
    %s15 = sadd.s32 1, %s11
  $region7: #{unet_multihead_rot_forward.28} parent=0 // loop_footer_branch
    %10 = sbr.rel target = $region3
  $region8: #{unet_multihead_rot_forward.28} parent=0 // loop_exit
    _

// kernel: unet_multihead_rot_forward.29
$region0: #{unet_multihead_rot_forward.29}
  #allocation0 [shape = 'u32[]', space=smem, size = 0x4, offset = 0x4, fixed_abs, tag = 'smem constant byte address 0x4 - core index']
  #allocation1 [shape = 'u32[144,128]{1,0:T(1,128)}', space=vmem, size = 0x12000, scoped, tag = 'internal scratch']
  #allocation2 [shape = 'f32[256,6]{1,0:T(8,128)}', space=vmem, size = 0x20000, scoped, tag = 'scratch operand']
  %s0 = inlined_call_operand.vmem [shape: bf16[512,1536], index: 0, kind: input, shape index: {}]
  %s1 = inlined_call_operand.vmem [shape: bf16[1536,6], index: 1, kind: input, shape index: {}]
  %s2 = inlined_call_operand.vmem [shape: f32[1,1536], index: 2, kind: input, shape index: {}, may-alias: {2,3}]
  %s3 = inlined_call_operand.vmem [shape: f32[1,1536], index: 3, kind: input, shape index: {}, may-alias: {2,3}]
  %s4 = inlined_call_operand.vmem [shape: f32[1,6], index: 4, kind: input, shape index: {}]
  %s5 = inlined_call_operand.vmem [shape: f32[512,6], index: 5, kind: output, shape index: {}]
  %s6 = sld [smem:[#allocation0]]
  $region84: #{unet_multihead_rot_forward.29} parent=0
    _
  %s8 = ssub.s32 1, %s6
  %s9 = scalar_select 0, %s8, %s6
  $region1: #{unet_multihead_rot_forward.29} parent=0
    #allocation3 [shape = 'u8[524288]{0}', space=vmem, size = 0x80000, scoped, tag = 'input window, operand 0']
    loop: start=0, step=1, limit=8
    $region2: #{unet_multihead_rot_forward.29} parent=1 // loop_pre_header
      _
    $region3: #{unet_multihead_rot_forward.29} parent=1 // loop_header
      %s11 = sphi 0, %s15
      %p12 = scmp.ge.s32.totalorder %s11, 8
      %s18 = sphi 0, %s37
      %s19 = sphi 0, %s33
      %s20 = sphi 0, %s29
      %s21 = sphi 0, %s18
      %s22 = sphi 0, %s19
      %s23 = sphi 0, %s20
      %s24 = sphi 0, %s21
      %s25 = sphi 0, %s22
      %s26 = sphi 0, %s23
      %s42 = sphi 0, %s44
      %s45 = sphi 0, %s42
      %s46 = sphi 0, %s45
      %s62 = sphi 0, %s46
      %s70 = sphi 0, %s72
      %s73 = sphi 0, %s70
      %s74 = sphi 0, %s73
      %s90 = sphi 0, %s74
      %s96 = sphi 0, %s98
      %s99 = sphi 0, %s96
      %s100 = sphi 0, %s99
      %s116 = sphi 0, %s100
      %s122 = sphi 0, %s124
      %s125 = sphi 0, %s122
      %s126 = sphi 0, %s125
      %s142 = sphi 0, %s126
      %s148 = sphi 0, %s150
      %s151 = sphi 0, %s148
      %s152 = sphi 0, %s151
      %s168 = sphi 0, %s152
      %s176 = sphi 0, %s178
      %s179 = sphi 0, %s176
      %s180 = sphi 0, %s179
      %s196 = sphi 0, %s180
    $region4: #{unet_multihead_rot_forward.29} parent=1 // loop_header_branch
      %14 = sbr.rel (%p12) target = $region8
    $region5: #{unet_multihead_rot_forward.29} parent=1 // loop_body
      %s16 = ssub.s32 %s11, 1
      %s17 = ssub.s32 %s11, 2
      %s27 = sadd.s32 1, %s20
      %p28 = scmp.ge.s32.totalorder %s27, 3
      %s29 = scalar_select %p28, 0, %s27
      %s30 = sadd.s32 1, %s19
      %s31 = scalar_select %p28, %s30, %s19
      %p32 = scmp.ge.s32.totalorder %s31, 1
      %s33 = scalar_select %p32, 0, %s31
      %s34 = sadd.s32 1, %s18
      %s35 = scalar_select %p32, %s34, %s18
      %p36 = scmp.ge.s32.totalorder %s35, 2
      %s37 = scalar_select %p36, 0, %s35
      %s38 = ssub.s32 %s18, %s37
      %s39 = ssub.s32 %s20, %s29
      %s40 = sor.u32 %s38, %s39
      %p41 = scmp.eq.s32.totalorder %s40, 0
      %s43 = sadd.s32 %s42, 1
      %s44 = scalar_select %p41, %s42, %s43
      %p47 = pneg %p41
      %p48 = scmp.eq.s32.totalorder %s11, 5
      %p49 = por %p47, %p48
      %p50 = scmp.ne.s32.totalorder %s42, %s45
      %p51 = scmp.eq.s32.totalorder %s11, 0
      %p52 = por %p50, %p51
      %p53 = scmp.ne.s32.totalorder %s42, %s45
      %p54 = scmp.eq.s32.totalorder %s16, 5
      %p55 = por %p53, %p54
      %p56 = scmp.ne.s32.totalorder %s45, %s46
      %p57 = scmp.eq.s32.totalorder %s16, 0
      %p58 = por %p56, %p57
      %p59 = scmp.ne.s32.totalorder %s45, %s46
      %p60 = scmp.eq.s32.totalorder %s17, 5
      %p61 = por %p59, %p60
      %p63 = scmp.ne.s32.totalorder %s46, %s62
      %p64 = scmp.eq.s32.totalorder %s17, 0
      %p65 = por %p63, %p64
      %s66 = ssub.s32 %s20, %s29
      %s67 = ssub.s32 %s19, %s33
      %s68 = sor.u32 %s66, %s67
      %p69 = scmp.eq.s32.totalorder %s68, 0
      %s71 = sadd.s32 %s70, 1
      %s72 = scalar_select %p69, %s70, %s71
      %p75 = pneg %p69
      %p76 = scmp.eq.s32.totalorder %s11, 5
      %p77 = por %p75, %p76
      %p78 = scmp.ne.s32.totalorder %s70, %s73
      %p79 = scmp.eq.s32.totalorder %s11, 0
      %p80 = por %p78, %p79
      %p81 = scmp.ne.s32.totalorder %s70, %s73
      %p82 = scmp.eq.s32.totalorder %s16, 5
      %p83 = por %p81, %p82
      %p84 = scmp.ne.s32.totalorder %s73, %s74
      %p85 = scmp.eq.s32.totalorder %s16, 0
      %p86 = por %p84, %p85
      %p87 = scmp.ne.s32.totalorder %s73, %s74
      %p88 = scmp.eq.s32.totalorder %s17, 5
      %p89 = por %p87, %p88
      %p91 = scmp.ne.s32.totalorder %s74, %s90
      %p92 = scmp.eq.s32.totalorder %s17, 0
      %p93 = por %p91, %p92
      %s94 = ssub.s32 %s20, %s29
      %p95 = scmp.eq.s32.totalorder %s94, 0
      %s97 = sadd.s32 %s96, 1
      %s98 = scalar_select %p95, %s96, %s97
      %p101 = pneg %p95
      %p102 = scmp.eq.s32.totalorder %s11, 5
      %p103 = por %p101, %p102
      %p104 = scmp.ne.s32.totalorder %s96, %s99
      %p105 = scmp.eq.s32.totalorder %s11, 0
      %p106 = por %p104, %p105
      %p107 = scmp.ne.s32.totalorder %s96, %s99
      %p108 = scmp.eq.s32.totalorder %s16, 5
      %p109 = por %p107, %p108
      %p110 = scmp.ne.s32.totalorder %s99, %s100
      %p111 = scmp.eq.s32.totalorder %s16, 0
      %p112 = por %p110, %p111
      %p113 = scmp.ne.s32.totalorder %s99, %s100
      %p114 = scmp.eq.s32.totalorder %s17, 5
      %p115 = por %p113, %p114
      %p117 = scmp.ne.s32.totalorder %s100, %s116
      %p118 = scmp.eq.s32.totalorder %s17, 0
      %p119 = por %p117, %p118
      %s120 = ssub.s32 %s20, %s29
      %p121 = scmp.eq.s32.totalorder %s120, 0
      %s123 = sadd.s32 %s122, 1
      %s124 = scalar_select %p121, %s122, %s123
      %p127 = pneg %p121
      %p128 = scmp.eq.s32.totalorder %s11, 5
      %p129 = por %p127, %p128
      %p130 = scmp.ne.s32.totalorder %s122, %s125
      %p131 = scmp.eq.s32.totalorder %s11, 0
      %p132 = por %p130, %p131
      %p133 = scmp.ne.s32.totalorder %s122, %s125
      %p134 = scmp.eq.s32.totalorder %s16, 5
      %p135 = por %p133, %p134
      %p136 = scmp.ne.s32.totalorder %s125, %s126
      %p137 = scmp.eq.s32.totalorder %s16, 0
      %p138 = por %p136, %p137
      %p139 = scmp.ne.s32.totalorder %s125, %s126
      %p140 = scmp.eq.s32.totalorder %s17, 5
      %p141 = por %p139, %p140
      %p143 = scmp.ne.s32.totalorder %s126, %s142
      %p144 = scmp.eq.s32.totalorder %s17, 0
      %p145 = por %p143, %p144
      %s146 = ssub.s32 %s19, %s33
      %p147 = scmp.eq.s32.totalorder %s146, 0
      %s149 = sadd.s32 %s148, 1
      %s150 = scalar_select %p147, %s148, %s149
      %p153 = pneg %p147
      %p154 = scmp.eq.s32.totalorder %s11, 5
      %p155 = por %p153, %p154
      %p156 = scmp.ne.s32.totalorder %s148, %s151
      %p157 = scmp.eq.s32.totalorder %s11, 0
      %p158 = por %p156, %p157
      %p159 = scmp.ne.s32.totalorder %s148, %s151
      %p160 = scmp.eq.s32.totalorder %s16, 5
      %p161 = por %p159, %p160
      %p162 = scmp.ne.s32.totalorder %s151, %s152
      %p163 = scmp.eq.s32.totalorder %s16, 0
      %p164 = por %p162, %p163
      %p165 = scmp.ne.s32.totalorder %s151, %s152
      %p166 = scmp.eq.s32.totalorder %s17, 5
      %p167 = por %p165, %p166
      %p169 = scmp.ne.s32.totalorder %s152, %s168
      %p170 = scmp.eq.s32.totalorder %s17, 0
      %p171 = por %p169, %p170
      %s172 = ssub.s32 %s18, %s37
      %s173 = ssub.s32 %s19, %s33
      %s174 = sor.u32 %s172, %s173
      %p175 = scmp.eq.s32.totalorder %s174, 0
      %s177 = sadd.s32 %s176, 1
      %s178 = scalar_select %p175, %s176, %s177
      %p181 = pneg %p175
      %p182 = scmp.eq.s32.totalorder %s11, 5
      %p183 = por %p181, %p182
      %p184 = scmp.ne.s32.totalorder %s176, %s179
      %p185 = scmp.eq.s32.totalorder %s11, 0
      %p186 = por %p184, %p185
      %p187 = scmp.ne.s32.totalorder %s176, %s179
      %p188 = scmp.eq.s32.totalorder %s16, 5
      %p189 = por %p187, %p188
      %p190 = scmp.ne.s32.totalorder %s179, %s180
      %p191 = scmp.eq.s32.totalorder %s16, 0
      %p192 = por %p190, %p191
      %p193 = scmp.ne.s32.totalorder %s179, %s180
      %p194 = scmp.eq.s32.totalorder %s17, 5
      %p195 = por %p193, %p194
      %p197 = scmp.ne.s32.totalorder %s180, %s196
      %p198 = scmp.eq.s32.totalorder %s17, 0
      %p199 = por %p197, %p198
      %p200 = scmp.le.s32.totalorder 1, %s11
      %p201 = scmp.lt.s32.totalorder %s11, 7
      %p202 = pnand %p200, %p201
      %p203 = pneg %p202
      // Predicated region
      $region9: #{unet_multihead_rot_forward.29} parent=5 // pred_check
        _
      $region10: #{unet_multihead_rot_forward.29} parent=5 // pred_check_branch
        %205 = sbr.rel (%p202) target = $region12
      $region11: #{unet_multihead_rot_forward.29} parent=5 // pred_region
        %s206 = ssub.s32 %s11, 1
        // Predicated region
        $region13: #{unet_multihead_rot_forward.29} parent=11 // pred_check
          %p207 = pneg %p164
        $region14: #{unet_multihead_rot_forward.29} parent=11 // pred_check_branch
          %209 = sbr.rel (%p207) target = $region16
        $region15: #{unet_multihead_rot_forward.29} parent=11 // pred_region
          %p210 = scmp.lt.s32.totalorder %s22, 0
          %s211 = scalar_select %p210, %s22, 0
          %s212 = scalar_lea.vmem %s4, %s211
        $region16: #{unet_multihead_rot_forward.29} parent=11 // pred_fallthru
          _
      $region12: #{unet_multihead_rot_forward.29} parent=5 // pred_fallthru
        _
      %p213 = scmp.lt.s32.totalorder %s11, 6
      // Predicated region
      $region17: #{unet_multihead_rot_forward.29} parent=5 // pred_check
        %p214 = pneg %p213
      $region18: #{unet_multihead_rot_forward.29} parent=5 // pred_check_branch
        %216 = sbr.rel (%p214) target = $region20
      $region19: #{unet_multihead_rot_forward.29} parent=5 // pred_region
        // Predicated region
        $region21: #{unet_multihead_rot_forward.29} parent=19 // pred_check
          %p217 = pneg %p52
        $region22: #{unet_multihead_rot_forward.29} parent=19 // pred_check_branch
          %219 = sbr.rel (%p217) target = $region24
        $region23: #{unet_multihead_rot_forward.29} parent=19 // pred_region
          %s220 = sand.u32 %s42, 1
          %s221 = sand.u32 %s42, 1
          %s222 = smul.addr %s221, 512
          %s223 = scalar_lea.vmem [#allocation3], %s222
          %s224 = smul.u32 32, %s18
          %s225 = smul.u32 4, %s20
          %s226 = smul.addr %s224, 12
          %s227 = sadd.s32 %s225, %s226
          %s228 = smul.addr %s227, 4
          %s229 = scalar_lea.vmem %s0, %s228
          // Predicated region
          $region25: #{unet_multihead_rot_forward.29} parent=23 // pred_check
            _
          $region26: #{unet_multihead_rot_forward.29} parent=23 // pred_check_branch
            %231 = sbr.rel (0) target = $region28
          $region27: #{unet_multihead_rot_forward.29} parent=23 // pred_region
            // Predicated region
            $region29: #{unet_multihead_rot_forward.29} parent=27 // pred_check
              _
            $region30: #{unet_multihead_rot_forward.29} parent=27 // pred_check_branch
              %233 = sbr.rel (0) target = $region32
            $region31: #{unet_multihead_rot_forward.29} parent=27 // pred_region
              loop: start=0, step=1, limit=1
              $region33: #{unet_multihead_rot_forward.29} parent=31 // loop_pre_header
                _
              $region34: #{unet_multihead_rot_forward.29} parent=31 // loop_header
                %s235 = sphi 0, %s239
                %p236 = scmp.ge.s32.totalorder %s235, 1
                %s240 = sphi %s229, %s229
                %s241 = sphi %s223, %s223
              $region35: #{unet_multihead_rot_forward.29} parent=31 // loop_header_branch
                %238 = sbr.rel (%p236) target = $region39
              $region36: #{unet_multihead_rot_forward.29} parent=31 // loop_body
                %v242 = vld [vmem:[%s240] sm:$0xff]
                %243 = vst [vmem:[%s241] sm:$0xff] %v242
                %v244 = vld [vmem:[%s240 + $0x8] sm:$0xff]
                %245 = vst [vmem:[%s241 + $0x8] sm:$0xff] %v244
                %v246 = vld [vmem:[%s240 + $0x30] sm:$0xff]
                %247 = vst [vmem:[%s241 + $0x10] sm:$0xff] %v246
                %v248 = vld [vmem:[%s240 + $0x38] sm:$0xff]
                %249 = vst [vmem:[%s241 + $0x18] sm:$0xff] %v248
                %v250 = vld [vmem:[%s240 + $0x60] sm:$0xff]
                %251 = vst [vmem:[%s241 + $0x20] sm:$0xff] %v250
                %v252 = vld [vmem:[%s240 + $0x68] sm:$0xff]
                %253 = vst [vmem:[%s241 + $0x28] sm:$0xff] %v252
                %v254 = vld [vmem:[%s240 + $0x90] sm:$0xff]
                %255 = vst [vmem:[%s241 + $0x30] sm:$0xff] %v254
                %v256 = vld [vmem:[%s240 + $0x98] sm:$0xff]
                %257 = vst [vmem:[%s241 + $0x38] sm:$0xff] %v256
                %v258 = vld [vmem:[%s240 + $0xc0] sm:$0xff]
                %259 = vst [vmem:[%s241 + $0x40] sm:$0xff] %v258
                %v260 = vld [vmem:[%s240 + $0xc8] sm:$0xff]
                %261 = vst [vmem:[%s241 + $0x48] sm:$0xff] %v260
                %v262 = vld [vmem:[%s240 + $0xf0] sm:$0xff]
                %263 = vst [vmem:[%s241 + $0x50] sm:$0xff] %v262
                %v264 = vld [vmem:[%s240 + $0xf8] sm:$0xff]
                %265 = vst [vmem:[%s241 + $0x58] sm:$0xff] %v264
                %v266 = vld [vmem:[%s240 + $0x120] sm:$0xff]
                %267 = vst [vmem:[%s241 + $0x60] sm:$0xff] %v266
                %v268 = vld [vmem:[%s240 + $0x128] sm:$0xff]
                %269 = vst [vmem:[%s241 + $0x68] sm:$0xff] %v268
                %v270 = vld [vmem:[%s240 + $0x150] sm:$0xff]
                %271 = vst [vmem:[%s241 + $0x70] sm:$0xff] %v270
                %v272 = vld [vmem:[%s240 + $0x158] sm:$0xff]
                %273 = vst [vmem:[%s241 + $0x78] sm:$0xff] %v272
                %v274 = vld [vmem:[%s240 + $0x180] sm:$0xff]
                %275 = vst [vmem:[%s241 + $0x80] sm:$0xff] %v274
                %v276 = vld [vmem:[%s240 + $0x188] sm:$0xff]
                %277 = vst [vmem:[%s241 + $0x88] sm:$0xff] %v276
                %v278 = vld [vmem:[%s240 + $0x1b0] sm:$0xff]
                %279 = vst [vmem:[%s241 + $0x90] sm:$0xff] %v278
                %v280 = vld [vmem:[%s240 + $0x1b8] sm:$0xff]
                %281 = vst [vmem:[%s241 + $0x98] sm:$0xff] %v280
                %v282 = vld [vmem:[%s240 + $0x1e0] sm:$0xff]
                %283 = vst [vmem:[%s241 + $0xa0] sm:$0xff] %v282
                %v284 = vld [vmem:[%s240 + $0x1e8] sm:$0xff]
                %285 = vst [vmem:[%s241 + $0xa8] sm:$0xff] %v284
                %v286 = vld [vmem:[%s240 + $0x210] sm:$0xff]
                %287 = vst [vmem:[%s241 + $0xb0] sm:$0xff] %v286
                %v288 = vld [vmem:[%s240 + $0x218] sm:$0xff]
                %289 = vst [vmem:[%s241 + $0xb8] sm:$0xff] %v288
                %v290 = vld [vmem:[%s240 + $0x240] sm:$0xff]
                %291 = vst [vmem:[%s241 + $0xc0] sm:$0xff] %v290
                %v292 = vld [vmem:[%s240 + $0x248] sm:$0xff]
                %293 = vst [vmem:[%s241 + $0xc8] sm:$0xff] %v292
                %v294 = vld [vmem:[%s240 + $0x270] sm:$0xff]
                %295 = vst [vmem:[%s241 + $0xd0] sm:$0xff] %v294
                %v296 = vld [vmem:[%s240 + $0x278] sm:$0xff]
                %297 = vst [vmem:[%s241 + $0xd8] sm:$0xff] %v296
                %v298 = vld [vmem:[%s240 + $0x2a0] sm:$0xff]
                %299 = vst [vmem:[%s241 + $0xe0] sm:$0xff] %v298
                %v300 = vld [vmem:[%s240 + $0x2a8] sm:$0xff]
                %301 = vst [vmem:[%s241 + $0xe8] sm:$0xff] %v300
                %v302 = vld [vmem:[%s240 + $0x2d0] sm:$0xff]
                %303 = vst [vmem:[%s241 + $0xf0] sm:$0xff] %v302
                %v304 = vld [vmem:[%s240 + $0x2d8] sm:$0xff]
                %305 = vst [vmem:[%s241 + $0xf8] sm:$0xff] %v304
                %v306 = vld [vmem:[%s240 + $0x300] sm:$0xff]
                %307 = vst [vmem:[%s241 + $0x100] sm:$0xff] %v306
                %v308 = vld [vmem:[%s240 + $0x308] sm:$0xff]
                %309 = vst [vmem:[%s241 + $0x108] sm:$0xff] %v308
                %v310 = vld [vmem:[%s240 + $0x330] sm:$0xff]
                %311 = vst [vmem:[%s241 + $0x110] sm:$0xff] %v310
                %v312 = vld [vmem:[%s240 + $0x338] sm:$0xff]
                %313 = vst [vmem:[%s241 + $0x118] sm:$0xff] %v312
                %v314 = vld [vmem:[%s240 + $0x360] sm:$0xff]
                %315 = vst [vmem:[%s241 + $0x120] sm:$0xff] %v314
                %v316 = vld [vmem:[%s240 + $0x368] sm:$0xff]
                %317 = vst [vmem:[%s241 + $0x128] sm:$0xff] %v316
                %v318 = vld [vmem:[%s240 + $0x390] sm:$0xff]
                %319 = vst [vmem:[%s241 + $0x130] sm:$0xff] %v318
                %v320 = vld [vmem:[%s240 + $0x398] sm:$0xff]
                %321 = vst [vmem:[%s241 + $0x138] sm:$0xff] %v320
                %v322 = vld [vmem:[%s240 + $0x3c0] sm:$0xff]
                %323 = vst [vmem:[%s241 + $0x140] sm:$0xff] %v322
                %v324 = vld [vmem:[%s240 + $0x3c8] sm:$0xff]
                %325 = vst [vmem:[%s241 + $0x148] sm:$0xff] %v324
                %v326 = vld [vmem:[%s240 + $0x3f0] sm:$0xff]
                %327 = vst [vmem:[%s241 + $0x150] sm:$0xff] %v326
                %v328 = vld [vmem:[%s240 + $0x3f8] sm:$0xff]
                %329 = vst [vmem:[%s241 + $0x158] sm:$0xff] %v328
                %v330 = vld [vmem:[%s240 + $0x420] sm:$0xff]
                %331 = vst [vmem:[%s241 + $0x160] sm:$0xff] %v330
                %v332 = vld [vmem:[%s240 + $0x428] sm:$0xff]
                %333 = vst [vmem:[%s241 + $0x168] sm:$0xff] %v332
                %v334 = vld [vmem:[%s240 + $0x450] sm:$0xff]
                %335 = vst [vmem:[%s241 + $0x170] sm:$0xff] %v334
                %v336 = vld [vmem:[%s240 + $0x458] sm:$0xff]
                %337 = vst [vmem:[%s241 + $0x178] sm:$0xff] %v336
                %v338 = vld [vmem:[%s240 + $0x480] sm:$0xff]
                %339 = vst [vmem:[%s241 + $0x180] sm:$0xff] %v338
                %v340 = vld [vmem:[%s240 + $0x488] sm:$0xff]
                %341 = vst [vmem:[%s241 + $0x188] sm:$0xff] %v340
                %v342 = vld [vmem:[%s240 + $0x4b0] sm:$0xff]
                %343 = vst [vmem:[%s241 + $0x190] sm:$0xff] %v342
                %v344 = vld [vmem:[%s240 + $0x4b8] sm:$0xff]
                %345 = vst [vmem:[%s241 + $0x198] sm:$0xff] %v344
                %v346 = vld [vmem:[%s240 + $0x4e0] sm:$0xff]
                %347 = vst [vmem:[%s241 + $0x1a0] sm:$0xff] %v346
                %v348 = vld [vmem:[%s240 + $0x4e8] sm:$0xff]
                %349 = vst [vmem:[%s241 + $0x1a8] sm:$0xff] %v348
                %v350 = vld [vmem:[%s240 + $0x510] sm:$0xff]
                %351 = vst [vmem:[%s241 + $0x1b0] sm:$0xff] %v350
                %v352 = vld [vmem:[%s240 + $0x518] sm:$0xff]
                %353 = vst [vmem:[%s241 + $0x1b8] sm:$0xff] %v352
                %v354 = vld [vmem:[%s240 + $0x540] sm:$0xff]
                %355 = vst [vmem:[%s241 + $0x1c0] sm:$0xff] %v354
                %v356 = vld [vmem:[%s240 + $0x548] sm:$0xff]
                %357 = vst [vmem:[%s241 + $0x1c8] sm:$0xff] %v356
                %v358 = vld [vmem:[%s240 + $0x570] sm:$0xff]
                %359 = vst [vmem:[%s241 + $0x1d0] sm:$0xff] %v358
                %v360 = vld [vmem:[%s240 + $0x578] sm:$0xff]
                %361 = vst [vmem:[%s241 + $0x1d8] sm:$0xff] %v360
                %v362 = vld [vmem:[%s240 + $0x5a0] sm:$0xff]
                %363 = vst [vmem:[%s241 + $0x1e0] sm:$0xff] %v362
                %v364 = vld [vmem:[%s240 + $0x5a8] sm:$0xff]
                %365 = vst [vmem:[%s241 + $0x1e8] sm:$0xff] %v364
                %v366 = vld [vmem:[%s240 + $0x5d0] sm:$0xff]
                %367 = vst [vmem:[%s241 + $0x1f0] sm:$0xff] %v366
                %v368 = vld [vmem:[%s240 + $0x5d8] sm:$0xff]
                %369 = vst [vmem:[%s241 + $0x1f8] sm:$0xff] %v368
              $region37: #{unet_multihead_rot_forward.29} parent=31 // loop_footer
                %s239 = sadd.s32 1, %s235
              $region38: #{unet_multihead_rot_forward.29} parent=31 // loop_footer_branch
                %234 = sbr.rel target = $region34
              $region39: #{unet_multihead_rot_forward.29} parent=31 // loop_exit
                _
            $region32: #{unet_multihead_rot_forward.29} parent=27 // pred_fallthru
              _
            // Predicated region
            $region40: #{unet_multihead_rot_forward.29} parent=27 // pred_check
              _
            $region41: #{unet_multihead_rot_forward.29} parent=27 // pred_check_branch
              %371 = sbr.rel target = $region43
            $region42: #{unet_multihead_rot_forward.29} parent=27 // pred_region
              _
            $region43: #{unet_multihead_rot_forward.29} parent=27 // pred_fallthru
              _
          $region28: #{unet_multihead_rot_forward.29} parent=23 // pred_fallthru
            _
          %372 = vnop
        $region24: #{unet_multihead_rot_forward.29} parent=19 // pred_fallthru
          _
        // Predicated region
        $region44: #{unet_multihead_rot_forward.29} parent=19 // pred_check
          %p373 = pneg %p80
        $region45: #{unet_multihead_rot_forward.29} parent=19 // pred_check_branch
          %375 = sbr.rel (%p373) target = $region47
        $region46: #{unet_multihead_rot_forward.29} parent=19 // pred_region
          %s376 = smul.u32 64, %s20
          %p377 = scmp.lt.s32.totalorder %s376, 191
          %s378 = scalar_select %p377, %s376, 191
          %p379 = scmp.lt.s32.totalorder %s19, 0
          %s380 = scalar_select %p379, %s19, 0
          %s381 = sadd.s32 %s380, %s378
          %s382 = smul.addr %s381, 4
          %s383 = scalar_lea.vmem %s1, %s382
          %s384 = smul.u32 64, %s20
        $region47: #{unet_multihead_rot_forward.29} parent=19 // pred_fallthru
          _
        // Predicated region
        $region48: #{unet_multihead_rot_forward.29} parent=19 // pred_check
          %p385 = pneg %p106
        $region49: #{unet_multihead_rot_forward.29} parent=19 // pred_check_branch
          %387 = sbr.rel (%p385) target = $region51
        $region50: #{unet_multihead_rot_forward.29} parent=19 // pred_region
          %s388 = smul.u32 4, %s20
          %p389 = scmp.lt.s32.totalorder %s388, 11
          %s390 = scalar_select %p389, %s388, 11
          %s391 = scalar_lea.vmem %s2, %s390
          %s392 = smul.u32 4, %s20
        $region51: #{unet_multihead_rot_forward.29} parent=19 // pred_fallthru
          _
        // Predicated region
        $region52: #{unet_multihead_rot_forward.29} parent=19 // pred_check
          %p393 = pneg %p132
        $region53: #{unet_multihead_rot_forward.29} parent=19 // pred_check_branch
          %395 = sbr.rel (%p393) target = $region55
        $region54: #{unet_multihead_rot_forward.29} parent=19 // pred_region
          %s396 = smul.u32 4, %s20
          %p397 = scmp.lt.s32.totalorder %s396, 11
          %s398 = scalar_select %p397, %s396, 11
          %s399 = scalar_lea.vmem %s3, %s398
          %s400 = smul.u32 4, %s20
        $region55: #{unet_multihead_rot_forward.29} parent=19 // pred_fallthru
          _
      $region20: #{unet_multihead_rot_forward.29} parent=5 // pred_fallthru
        _
      %p401 = scmp.le.s32.totalorder 1, %s11
      %p402 = scmp.lt.s32.totalorder %s11, 7
      %p403 = pnand %p401, %p402
      %p404 = pneg %p403
      // Predicated region
      $region56: #{unet_multihead_rot_forward.29} parent=5 // pred_check
        _
      $region57: #{unet_multihead_rot_forward.29} parent=5 // pred_check_branch
        %406 = sbr.rel (%p403) target = $region59
      $region58: #{unet_multihead_rot_forward.29} parent=5 // pred_region
        %s407 = ssub.s32 %s11, 1
        %s408 = sand.u32 %s45, 1
        %s409 = sand.u32 %s45, 1
        %s410 = smul.addr %s409, 512
        %s411 = scalar_lea.vmem [#allocation3], %s410
        // Predicated region
        $region60: #{unet_multihead_rot_forward.29} parent=58 // pred_check
          %p412 = pneg %p58
        $region61: #{unet_multihead_rot_forward.29} parent=58 // pred_check_branch
          %414 = sbr.rel (%p412) target = $region63
        $region62: #{unet_multihead_rot_forward.29} parent=58 // pred_region
          _
        $region63: #{unet_multihead_rot_forward.29} parent=58 // pred_fallthru
          _
        %s415 = sand.u32 %s45, 1
        %s416 = sand.u32 %s45, 1
        %s417 = smul.addr %s416, 512
        %s418 = scalar_lea.vmem [#allocation3], %s417
        %p419 = pneg %p58
        %p420 = pneg %p55
        %s421 = smul.u32 64, %s23
        %p422 = scmp.lt.s32.totalorder %s421, 191
        %s423 = scalar_select %p422, %s421, 191
        %p424 = scmp.lt.s32.totalorder %s22, 0
        %s425 = scalar_select %p424, %s22, 0
        %s426 = sadd.s32 %s425, %s423
        %s427 = smul.addr %s426, 4
        %s428 = scalar_lea.vmem %s1, %s427
        %p429 = pneg %p86
        %p430 = pneg %p83
        %s431 = smul.u32 4, %s23
        %p432 = scmp.lt.s32.totalorder %s431, 11
        %s433 = scalar_select %p432, %s431, 11
        %s434 = scalar_lea.vmem %s2, %s433
        %p435 = pneg %p112
        %p436 = pneg %p109
        %s437 = smul.u32 4, %s23
        %p438 = scmp.lt.s32.totalorder %s437, 11
        %s439 = scalar_select %p438, %s437, 11
        %s440 = scalar_lea.vmem %s3, %s439
        %p441 = pneg %p138
        %p442 = pneg %p135
        %p443 = scmp.lt.s32.totalorder %s22, 0
        %s444 = scalar_select %p443, %s22, 0
        %s445 = scalar_lea.vmem %s4, %s444
        %p446 = pneg %p164
        %p447 = pneg %p161
        %p448 = pneg %p192
        %p449 = pneg %p189
        %s450 = smul.u32 32, %s21
        %p451 = scmp.lt.s32.totalorder %s450, 63
        %s452 = scalar_select %p451, %s450, 63
        %p453 = scmp.lt.s32.totalorder %s22, 0
        %s454 = scalar_select %p453, %s22, 0
        %s455 = sadd.s32 %s454, %s452
        %s456 = smul.addr %s455, 8
        %s457 = scalar_lea.vmem %s5, %s456
        %s458 = smul.u32 32, %s21
        %s459 = smul.u32 4, %s23
        %s460 = smul.u32 64, %s23
        %p461 = scmp.lt.s32.totalorder %s460, 191
        %s462 = scalar_select %p461, %s460, 191
        %p463 = scmp.lt.s32.totalorder %s22, 0
        %s464 = scalar_select %p463, %s22, 0
        %s465 = sadd.s32 %s464, %s462
        %s466 = smul.addr %s465, 4
        %s467 = scalar_lea.vmem %s1, %s466
        %s468 = smul.u32 64, %s23
        %s469 = smul.u32 4, %s23
        %p470 = scmp.lt.s32.totalorder %s469, 11
        %s471 = scalar_select %p470, %s469, 11
        %s472 = scalar_lea.vmem %s2, %s471
        %s473 = smul.u32 4, %s23
        %s474 = smul.u32 4, %s23
        %p475 = scmp.lt.s32.totalorder %s474, 11
        %s476 = scalar_select %p475, %s474, 11
        %s477 = scalar_lea.vmem %s3, %s476
        %s478 = smul.u32 4, %s23
        %p479 = scmp.lt.s32.totalorder %s22, 0
        %s480 = scalar_select %p479, %s22, 0
        %s481 = scalar_lea.vmem %s4, %s480
        %s482 = smul.u32 32, %s21
        %p483 = scmp.lt.s32.totalorder %s482, 63
        %s484 = scalar_select %p483, %s482, 63
        %p485 = scmp.lt.s32.totalorder %s22, 0
        %s486 = scalar_select %p485, %s22, 0
        %s487 = sadd.s32 %s486, %s484
        %s488 = smul.addr %s487, 8
        %s489 = scalar_lea.vmem %s5, %s488
        %s490 = smul.u32 32, %s21
        %p492 = scmp.eq.s32.totalorder %s23, 0
        // Predicated region
        $region64: #{unet_multihead_rot_forward.29} parent=58 // pred_check
          %p493 = pneg %p492
        $region65: #{unet_multihead_rot_forward.29} parent=58 // pred_check_branch
          %495 = sbr.rel (%p493) target = $region67
        $region66: #{unet_multihead_rot_forward.29} parent=58 // pred_region
          %vm496 = vcmask 48128
          %497 = vst.msk [vmem:[#allocation2] sm:$0xff] %vm496, 0.0
          %498 = vst.msk [vmem:[#allocation2 + $0x8] sm:$0xff] %vm496, 0.0
          %499 = vst.msk [vmem:[#allocation2 + $0x10] sm:$0xff] %vm496, 0.0
          %500 = vst.msk [vmem:[#allocation2 + $0x18] sm:$0xff] %vm496, 0.0
          %501 = vst.msk [vmem:[#allocation2 + $0x20] sm:$0xff] %vm496, 0.0
          %502 = vst.msk [vmem:[#allocation2 + $0x28] sm:$0xff] %vm496, 0.0
          %503 = vst.msk [vmem:[#allocation2 + $0x30] sm:$0xff] %vm496, 0.0
          %504 = vst.msk [vmem:[#allocation2 + $0x38] sm:$0xff] %vm496, 0.0
          %505 = vst.msk [vmem:[#allocation2 + $0x40] sm:$0xff] %vm496, 0.0
          %506 = vst.msk [vmem:[#allocation2 + $0x48] sm:$0xff] %vm496, 0.0
          %507 = vst.msk [vmem:[#allocation2 + $0x50] sm:$0xff] %vm496, 0.0
          %508 = vst.msk [vmem:[#allocation2 + $0x58] sm:$0xff] %vm496, 0.0
          %509 = vst.msk [vmem:[#allocation2 + $0x60] sm:$0xff] %vm496, 0.0
          %510 = vst.msk [vmem:[#allocation2 + $0x68] sm:$0xff] %vm496, 0.0
          %511 = vst.msk [vmem:[#allocation2 + $0x70] sm:$0xff] %vm496, 0.0
          %512 = vst.msk [vmem:[#allocation2 + $0x78] sm:$0xff] %vm496, 0.0
          %513 = vst.msk [vmem:[#allocation2 + $0x80] sm:$0xff] %vm496, 0.0
          %514 = vst.msk [vmem:[#allocation2 + $0x88] sm:$0xff] %vm496, 0.0
          %515 = vst.msk [vmem:[#allocation2 + $0x90] sm:$0xff] %vm496, 0.0
          %516 = vst.msk [vmem:[#allocation2 + $0x98] sm:$0xff] %vm496, 0.0
          %517 = vst.msk [vmem:[#allocation2 + $0xa0] sm:$0xff] %vm496, 0.0
          %518 = vst.msk [vmem:[#allocation2 + $0xa8] sm:$0xff] %vm496, 0.0
          %519 = vst.msk [vmem:[#allocation2 + $0xb0] sm:$0xff] %vm496, 0.0
          %520 = vst.msk [vmem:[#allocation2 + $0xb8] sm:$0xff] %vm496, 0.0
          %521 = vst.msk [vmem:[#allocation2 + $0xc0] sm:$0xff] %vm496, 0.0
          %522 = vst.msk [vmem:[#allocation2 + $0xc8] sm:$0xff] %vm496, 0.0
          %523 = vst.msk [vmem:[#allocation2 + $0xd0] sm:$0xff] %vm496, 0.0
          %524 = vst.msk [vmem:[#allocation2 + $0xd8] sm:$0xff] %vm496, 0.0
          %525 = vst.msk [vmem:[#allocation2 + $0xe0] sm:$0xff] %vm496, 0.0
          %526 = vst.msk [vmem:[#allocation2 + $0xe8] sm:$0xff] %vm496, 0.0
          %527 = vst.msk [vmem:[#allocation2 + $0xf0] sm:$0xff] %vm496, 0.0
          %528 = vst.msk [vmem:[#allocation2 + $0xf8] sm:$0xff] %vm496, 0.0
        $region67: #{unet_multihead_rot_forward.29} parent=58 // pred_fallthru
          _
        %v529 = vld [vmem:[%s411] sm:$0xff]
        %v530 = vld [vmem:[%s411 + $0x8] sm:$0xff]
        %v531 = vld [vmem:[%s411 + $0x10] sm:$0xff]
        %v532 = vld [vmem:[%s411 + $0x18] sm:$0xff]
        %v533 = vld [vmem:[%s411 + $0x20] sm:$0xff]
        %v534 = vld [vmem:[%s411 + $0x28] sm:$0xff]
        %v535 = vld [vmem:[%s411 + $0x30] sm:$0xff]
        %v536 = vld [vmem:[%s411 + $0x38] sm:$0xff]
        %v537 = vld [vmem:[%s411 + $0x40] sm:$0xff]
        %v538 = vld [vmem:[%s411 + $0x48] sm:$0xff]
        %v539 = vld [vmem:[%s411 + $0x50] sm:$0xff]
        %v540 = vld [vmem:[%s411 + $0x58] sm:$0xff]
        %v541 = vld [vmem:[%s411 + $0x60] sm:$0xff]
        %v542 = vld [vmem:[%s411 + $0x68] sm:$0xff]
        %v543 = vld [vmem:[%s411 + $0x70] sm:$0xff]
        %v544 = vld [vmem:[%s411 + $0x78] sm:$0xff]
        %v545 = vld [vmem:[%s411 + $0x80] sm:$0xff]
        %v546 = vld [vmem:[%s411 + $0x88] sm:$0xff]
        %v547 = vld [vmem:[%s411 + $0x90] sm:$0xff]
        %v548 = vld [vmem:[%s411 + $0x98] sm:$0xff]
        %v549 = vld [vmem:[%s411 + $0xa0] sm:$0xff]
        %v550 = vld [vmem:[%s411 + $0xa8] sm:$0xff]
        %v551 = vld [vmem:[%s411 + $0xb0] sm:$0xff]
        %v552 = vld [vmem:[%s411 + $0xb8] sm:$0xff]
        %v553 = vld [vmem:[%s411 + $0xc0] sm:$0xff]
        %v554 = vld [vmem:[%s411 + $0xc8] sm:$0xff]
        %v555 = vld [vmem:[%s411 + $0xd0] sm:$0xff]
        %v556 = vld [vmem:[%s411 + $0xd8] sm:$0xff]
        %v557 = vld [vmem:[%s411 + $0xe0] sm:$0xff]
        %v558 = vld [vmem:[%s411 + $0xe8] sm:$0xff]
        %v559 = vld [vmem:[%s411 + $0xf0] sm:$0xff]
        %v560 = vld [vmem:[%s411 + $0xf8] sm:$0xff]
        %v561 = vld [vmem:[%s411 + $0x100] sm:$0xff]
        %v562 = vld [vmem:[%s411 + $0x108] sm:$0xff]
        %v563 = vld [vmem:[%s411 + $0x110] sm:$0xff]
        %v564 = vld [vmem:[%s411 + $0x118] sm:$0xff]
        %v565 = vld [vmem:[%s411 + $0x120] sm:$0xff]
        %v566 = vld [vmem:[%s411 + $0x128] sm:$0xff]
        %v567 = vld [vmem:[%s411 + $0x130] sm:$0xff]
        %v568 = vld [vmem:[%s411 + $0x138] sm:$0xff]
        %v569 = vld [vmem:[%s411 + $0x140] sm:$0xff]
        %v570 = vld [vmem:[%s411 + $0x148] sm:$0xff]
        %v571 = vld [vmem:[%s411 + $0x150] sm:$0xff]
        %v572 = vld [vmem:[%s411 + $0x158] sm:$0xff]
        %v573 = vld [vmem:[%s411 + $0x160] sm:$0xff]
        %v574 = vld [vmem:[%s411 + $0x168] sm:$0xff]
        %v575 = vld [vmem:[%s411 + $0x170] sm:$0xff]
        %v576 = vld [vmem:[%s411 + $0x178] sm:$0xff]
        %v577 = vld [vmem:[%s411 + $0x180] sm:$0xff]
        %v578 = vld [vmem:[%s411 + $0x188] sm:$0xff]
        %v579 = vld [vmem:[%s411 + $0x190] sm:$0xff]
        %v580 = vld [vmem:[%s411 + $0x198] sm:$0xff]
        %v581 = vld [vmem:[%s411 + $0x1a0] sm:$0xff]
        %v582 = vld [vmem:[%s411 + $0x1a8] sm:$0xff]
        %v583 = vld [vmem:[%s411 + $0x1b0] sm:$0xff]
        %v584 = vld [vmem:[%s411 + $0x1b8] sm:$0xff]
        %v585 = vld [vmem:[%s411 + $0x1c0] sm:$0xff]
        %v586 = vld [vmem:[%s411 + $0x1c8] sm:$0xff]
        %v587 = vld [vmem:[%s411 + $0x1d0] sm:$0xff]
        %v588 = vld [vmem:[%s411 + $0x1d8] sm:$0xff]
        %v589 = vld [vmem:[%s411 + $0x1e0] sm:$0xff]
        %v590 = vld [vmem:[%s411 + $0x1e8] sm:$0xff]
        %v591 = vld [vmem:[%s411 + $0x1f0] sm:$0xff]
        %v592 = vld [vmem:[%s411 + $0x1f8] sm:$0xff]
        %v593 = vld [vmem:[#allocation2] sm:$0xff]
        %v594 = vld [vmem:[#allocation2 + $0x8] sm:$0xff]
        %v595 = vld [vmem:[#allocation2 + $0x10] sm:$0xff]
        %v596 = vld [vmem:[#allocation2 + $0x18] sm:$0xff]
        %v597 = vld [vmem:[#allocation2 + $0x20] sm:$0xff]
        %v598 = vld [vmem:[#allocation2 + $0x28] sm:$0xff]
        %v599 = vld [vmem:[#allocation2 + $0x30] sm:$0xff]
        %v600 = vld [vmem:[#allocation2 + $0x38] sm:$0xff]
        %v601 = vld [vmem:[#allocation2 + $0x40] sm:$0xff]
        %v602 = vld [vmem:[#allocation2 + $0x48] sm:$0xff]
        %v603 = vld [vmem:[#allocation2 + $0x50] sm:$0xff]
        %v604 = vld [vmem:[#allocation2 + $0x58] sm:$0xff]
        %v605 = vld [vmem:[#allocation2 + $0x60] sm:$0xff]
        %v606 = vld [vmem:[#allocation2 + $0x68] sm:$0xff]
        %v607 = vld [vmem:[#allocation2 + $0x70] sm:$0xff]
        %v608 = vld [vmem:[#allocation2 + $0x78] sm:$0xff]
        %v609 = vld [vmem:[#allocation2 + $0x80] sm:$0xff]
        %v610 = vld [vmem:[#allocation2 + $0x88] sm:$0xff]
        %v611 = vld [vmem:[#allocation2 + $0x90] sm:$0xff]
        %v612 = vld [vmem:[#allocation2 + $0x98] sm:$0xff]
        %v613 = vld [vmem:[#allocation2 + $0xa0] sm:$0xff]
        %v614 = vld [vmem:[#allocation2 + $0xa8] sm:$0xff]
        %v615 = vld [vmem:[#allocation2 + $0xb0] sm:$0xff]
        %v616 = vld [vmem:[#allocation2 + $0xb8] sm:$0xff]
        %v617 = vld [vmem:[#allocation2 + $0xc0] sm:$0xff]
        %v618 = vld [vmem:[#allocation2 + $0xc8] sm:$0xff]
        %v619 = vld [vmem:[#allocation2 + $0xd0] sm:$0xff]
        %v620 = vld [vmem:[#allocation2 + $0xd8] sm:$0xff]
        %v621 = vld [vmem:[#allocation2 + $0xe0] sm:$0xff]
        %v622 = vld [vmem:[#allocation2 + $0xe8] sm:$0xff]
        %v623 = vld [vmem:[#allocation2 + $0xf0] sm:$0xff]
        %v624 = vld [vmem:[#allocation2 + $0xf8] sm:$0xff]
        %v625 = vld [vmem:[%s467] sm:$0xf]
        %v626 = vld [vmem:[%s467 + $0x4] sm:$0xf]
        %v627 = vld [vmem:[%s467 + $0x8] sm:$0xf]
        %v628 = vld [vmem:[%s467 + $0xc] sm:$0xf]
        %v629 = vld [vmem:[%s467 + $0x10] sm:$0xf]
        %v630 = vld [vmem:[%s467 + $0x14] sm:$0xf]
        %v631 = vld [vmem:[%s467 + $0x18] sm:$0xf]
        %v632 = vld [vmem:[%s467 + $0x1c] sm:$0xf]
        %v633 = vld [vmem:[%s467 + $0x20] sm:$0xf]
        %v634 = vld [vmem:[%s467 + $0x24] sm:$0xf]
        %v635 = vld [vmem:[%s467 + $0x28] sm:$0xf]
        %v636 = vld [vmem:[%s467 + $0x2c] sm:$0xf]
        %v637 = vld [vmem:[%s467 + $0x30] sm:$0xf]
        %v638 = vld [vmem:[%s467 + $0x34] sm:$0xf]
        %v639 = vld [vmem:[%s467 + $0x38] sm:$0xf]
        %v640 = vld [vmem:[%s467 + $0x3c] sm:$0xf]
        %v641 = vld [vmem:[%s467 + $0x40] sm:$0xf]
        %v642 = vld [vmem:[%s467 + $0x44] sm:$0xf]
        %v643 = vld [vmem:[%s467 + $0x48] sm:$0xf]
        %v644 = vld [vmem:[%s467 + $0x4c] sm:$0xf]
        %v645 = vld [vmem:[%s467 + $0x50] sm:$0xf]
        %v646 = vld [vmem:[%s467 + $0x54] sm:$0xf]
        %v647 = vld [vmem:[%s467 + $0x58] sm:$0xf]
        %v648 = vld [vmem:[%s467 + $0x5c] sm:$0xf]
        %v649 = vld [vmem:[%s467 + $0x60] sm:$0xf]
        %v650 = vld [vmem:[%s467 + $0x64] sm:$0xf]
        %v651 = vld [vmem:[%s467 + $0x68] sm:$0xf]
        %v652 = vld [vmem:[%s467 + $0x6c] sm:$0xf]
        %v653 = vld [vmem:[%s467 + $0x70] sm:$0xf]
        %v654 = vld [vmem:[%s467 + $0x74] sm:$0xf]
        %v655 = vld [vmem:[%s467 + $0x78] sm:$0xf]
        %v656 = vld [vmem:[%s467 + $0x7c] sm:$0xf]
        %v657 = vld [vmem:[%s467 + $0x80] sm:$0xf]
        %v658 = vld [vmem:[%s467 + $0x84] sm:$0xf]
        %v659 = vld [vmem:[%s467 + $0x88] sm:$0xf]
        %v660 = vld [vmem:[%s467 + $0x8c] sm:$0xf]
        %v661 = vld [vmem:[%s467 + $0x90] sm:$0xf]
        %v662 = vld [vmem:[%s467 + $0x94] sm:$0xf]
        %v663 = vld [vmem:[%s467 + $0x98] sm:$0xf]
        %v664 = vld [vmem:[%s467 + $0x9c] sm:$0xf]
        %v665 = vld [vmem:[%s467 + $0xa0] sm:$0xf]
        %v666 = vld [vmem:[%s467 + $0xa4] sm:$0xf]
        %v667 = vld [vmem:[%s467 + $0xa8] sm:$0xf]
        %v668 = vld [vmem:[%s467 + $0xac] sm:$0xf]
        %v669 = vld [vmem:[%s467 + $0xb0] sm:$0xf]
        %v670 = vld [vmem:[%s467 + $0xb4] sm:$0xf]
        %v671 = vld [vmem:[%s467 + $0xb8] sm:$0xf]
        %v672 = vld [vmem:[%s467 + $0xbc] sm:$0xf]
        %v673 = vld [vmem:[%s467 + $0xc0] sm:$0xf]
        %v674 = vld [vmem:[%s467 + $0xc4] sm:$0xf]
        %v675 = vld [vmem:[%s467 + $0xc8] sm:$0xf]
        %v676 = vld [vmem:[%s467 + $0xcc] sm:$0xf]
        %v677 = vld [vmem:[%s467 + $0xd0] sm:$0xf]
        %v678 = vld [vmem:[%s467 + $0xd4] sm:$0xf]
        %v679 = vld [vmem:[%s467 + $0xd8] sm:$0xf]
        %v680 = vld [vmem:[%s467 + $0xdc] sm:$0xf]
        %v681 = vld [vmem:[%s467 + $0xe0] sm:$0xf]
        %v682 = vld [vmem:[%s467 + $0xe4] sm:$0xf]
        %v683 = vld [vmem:[%s467 + $0xe8] sm:$0xf]
        %v684 = vld [vmem:[%s467 + $0xec] sm:$0xf]
        %v685 = vld [vmem:[%s467 + $0xf0] sm:$0xf]
        %v686 = vld [vmem:[%s467 + $0xf4] sm:$0xf]
        %v687 = vld [vmem:[%s467 + $0xf8] sm:$0xf]
        %v688 = vld [vmem:[%s467 + $0xfc] sm:$0xf]
        %v753 = vunpack.c.l.b16 %v529
        %v754 = vunpack.c.h.b16 %v529
        %v755 = vunpack.c.l.b16 %v530
        %v756 = vunpack.c.h.b16 %v530
        %v757 = vunpack.c.l.b16 %v531
        %v758 = vunpack.c.h.b16 %v531
        %v759 = vunpack.c.l.b16 %v532
        %v760 = vunpack.c.h.b16 %v532
        %v761 = vunpack.c.l.b16 %v533
        %v762 = vunpack.c.h.b16 %v533
        %v763 = vunpack.c.l.b16 %v534
        %v764 = vunpack.c.h.b16 %v534
        %v765 = vunpack.c.l.b16 %v535
        %v766 = vunpack.c.h.b16 %v535
        %v767 = vunpack.c.l.b16 %v536
        %v768 = vunpack.c.h.b16 %v536
        %v769 = vunpack.c.l.b16 %v537
        %v770 = vunpack.c.h.b16 %v537
        %v771 = vunpack.c.l.b16 %v538
        %v772 = vunpack.c.h.b16 %v538
        %v773 = vunpack.c.l.b16 %v539
        %v774 = vunpack.c.h.b16 %v539
        %v775 = vunpack.c.l.b16 %v540
        %v776 = vunpack.c.h.b16 %v540
        %v777 = vunpack.c.l.b16 %v541
        %v778 = vunpack.c.h.b16 %v541
        %v779 = vunpack.c.l.b16 %v542
        %v780 = vunpack.c.h.b16 %v542
        %v781 = vunpack.c.l.b16 %v543
        %v782 = vunpack.c.h.b16 %v543
        %v783 = vunpack.c.l.b16 %v544
        %v784 = vunpack.c.h.b16 %v544
        %v785 = vunpack.c.l.b16 %v545
        %v786 = vunpack.c.h.b16 %v545
        %v787 = vunpack.c.l.b16 %v546
        %v788 = vunpack.c.h.b16 %v546
        %v789 = vunpack.c.l.b16 %v547
        %v790 = vunpack.c.h.b16 %v547
        %v791 = vunpack.c.l.b16 %v548
        %v792 = vunpack.c.h.b16 %v548
        %v793 = vunpack.c.l.b16 %v549
        %v794 = vunpack.c.h.b16 %v549
        %v795 = vunpack.c.l.b16 %v550
        %v796 = vunpack.c.h.b16 %v550
        %v797 = vunpack.c.l.b16 %v551
        %v798 = vunpack.c.h.b16 %v551
        %v799 = vunpack.c.l.b16 %v552
        %v800 = vunpack.c.h.b16 %v552
        %v801 = vunpack.c.l.b16 %v553
        %v802 = vunpack.c.h.b16 %v553
        %v803 = vunpack.c.l.b16 %v554
        %v804 = vunpack.c.h.b16 %v554
        %v805 = vunpack.c.l.b16 %v555
        %v806 = vunpack.c.h.b16 %v555
        %v807 = vunpack.c.l.b16 %v556
        %v808 = vunpack.c.h.b16 %v556
        %v809 = vunpack.c.l.b16 %v557
        %v810 = vunpack.c.h.b16 %v557
        %v811 = vunpack.c.l.b16 %v558
        %v812 = vunpack.c.h.b16 %v558
        %v813 = vunpack.c.l.b16 %v559
        %v814 = vunpack.c.h.b16 %v559
        %v815 = vunpack.c.l.b16 %v560
        %v816 = vunpack.c.h.b16 %v560
        %v817 = vunpack.c.l.b16 %v561
        %v818 = vunpack.c.h.b16 %v561
        %v819 = vunpack.c.l.b16 %v562
        %v820 = vunpack.c.h.b16 %v562
        %v821 = vunpack.c.l.b16 %v563
        %v822 = vunpack.c.h.b16 %v563
        %v823 = vunpack.c.l.b16 %v564
        %v824 = vunpack.c.h.b16 %v564
        %v825 = vunpack.c.l.b16 %v565
        %v826 = vunpack.c.h.b16 %v565
        %v827 = vunpack.c.l.b16 %v566
        %v828 = vunpack.c.h.b16 %v566
        %v829 = vunpack.c.l.b16 %v567
        %v830 = vunpack.c.h.b16 %v567
        %v831 = vunpack.c.l.b16 %v568
        %v832 = vunpack.c.h.b16 %v568
        %v833 = vunpack.c.l.b16 %v569
        %v834 = vunpack.c.h.b16 %v569
        %v835 = vunpack.c.l.b16 %v570
        %v836 = vunpack.c.h.b16 %v570
        %v837 = vunpack.c.l.b16 %v571
        %v838 = vunpack.c.h.b16 %v571
        %v839 = vunpack.c.l.b16 %v572
        %v840 = vunpack.c.h.b16 %v572
        %v841 = vunpack.c.l.b16 %v573
        %v842 = vunpack.c.h.b16 %v573
        %v843 = vunpack.c.l.b16 %v574
        %v844 = vunpack.c.h.b16 %v574
        %v845 = vunpack.c.l.b16 %v575
        %v846 = vunpack.c.h.b16 %v575
        %v847 = vunpack.c.l.b16 %v576
        %v848 = vunpack.c.h.b16 %v576
        %v849 = vunpack.c.l.b16 %v577
        %v850 = vunpack.c.h.b16 %v577
        %v851 = vunpack.c.l.b16 %v578
        %v852 = vunpack.c.h.b16 %v578
        %v853 = vunpack.c.l.b16 %v579
        %v854 = vunpack.c.h.b16 %v579
        %v855 = vunpack.c.l.b16 %v580
        %v856 = vunpack.c.h.b16 %v580
        %v857 = vunpack.c.l.b16 %v581
        %v858 = vunpack.c.h.b16 %v581
        %v859 = vunpack.c.l.b16 %v582
        %v860 = vunpack.c.h.b16 %v582
        %v861 = vunpack.c.l.b16 %v583
        %v862 = vunpack.c.h.b16 %v583
        %v863 = vunpack.c.l.b16 %v584
        %v864 = vunpack.c.h.b16 %v584
        %v865 = vunpack.c.l.b16 %v585
        %v866 = vunpack.c.h.b16 %v585
        %v867 = vunpack.c.l.b16 %v586
        %v868 = vunpack.c.h.b16 %v586
        %v869 = vunpack.c.l.b16 %v587
        %v870 = vunpack.c.h.b16 %v587
        %v871 = vunpack.c.l.b16 %v588
        %v872 = vunpack.c.h.b16 %v588
        %v873 = vunpack.c.l.b16 %v589
        %v874 = vunpack.c.h.b16 %v589
        %v875 = vunpack.c.l.b16 %v590
        %v876 = vunpack.c.h.b16 %v590
        %v877 = vunpack.c.l.b16 %v591
        %v878 = vunpack.c.h.b16 %v591
        %v879 = vunpack.c.l.b16 %v592
        %v880 = vunpack.c.h.b16 %v592
        %v881 = vpack.c.b16 %v757, %v753
        %v882 = vpack.c.b16 %v758, %v754
        %v883 = vpack.c.b16 %v759, %v755
        %v884 = vpack.c.b16 %v760, %v756
        %v885 = vpack.c.b16 %v765, %v761
        %v886 = vpack.c.b16 %v766, %v762
        %v887 = vpack.c.b16 %v767, %v763
        %v888 = vpack.c.b16 %v768, %v764
        %v889 = vpack.c.b16 %v773, %v769
        %v890 = vpack.c.b16 %v774, %v770
        %v891 = vpack.c.b16 %v775, %v771
        %v892 = vpack.c.b16 %v776, %v772
        %v893 = vpack.c.b16 %v781, %v777
        %v894 = vpack.c.b16 %v782, %v778
        %v895 = vpack.c.b16 %v783, %v779
        %v896 = vpack.c.b16 %v784, %v780
        %v897 = vpack.c.b16 %v789, %v785
        %v898 = vpack.c.b16 %v790, %v786
        %v899 = vpack.c.b16 %v791, %v787
        %v900 = vpack.c.b16 %v792, %v788
        %v901 = vpack.c.b16 %v797, %v793
        %v902 = vpack.c.b16 %v798, %v794
        %v903 = vpack.c.b16 %v799, %v795
        %v904 = vpack.c.b16 %v800, %v796
        %v905 = vpack.c.b16 %v805, %v801
        %v906 = vpack.c.b16 %v806, %v802
        %v907 = vpack.c.b16 %v807, %v803
        %v908 = vpack.c.b16 %v808, %v804
        %v909 = vpack.c.b16 %v813, %v809
        %v910 = vpack.c.b16 %v814, %v810
        %v911 = vpack.c.b16 %v815, %v811
        %v912 = vpack.c.b16 %v816, %v812
        %v913 = vpack.c.b16 %v821, %v817
        %v914 = vpack.c.b16 %v822, %v818
        %v915 = vpack.c.b16 %v823, %v819
        %v916 = vpack.c.b16 %v824, %v820
        %v917 = vpack.c.b16 %v829, %v825
        %v918 = vpack.c.b16 %v830, %v826
        %v919 = vpack.c.b16 %v831, %v827
        %v920 = vpack.c.b16 %v832, %v828
        %v921 = vpack.c.b16 %v837, %v833
        %v922 = vpack.c.b16 %v838, %v834
        %v923 = vpack.c.b16 %v839, %v835
        %v924 = vpack.c.b16 %v840, %v836
        %v925 = vpack.c.b16 %v845, %v841
        %v926 = vpack.c.b16 %v846, %v842
        %v927 = vpack.c.b16 %v847, %v843
        %v928 = vpack.c.b16 %v848, %v844
        %v929 = vpack.c.b16 %v853, %v849
        %v930 = vpack.c.b16 %v854, %v850
        %v931 = vpack.c.b16 %v855, %v851
        %v932 = vpack.c.b16 %v856, %v852
        %v933 = vpack.c.b16 %v861, %v857
        %v934 = vpack.c.b16 %v862, %v858
        %v935 = vpack.c.b16 %v863, %v859
        %v936 = vpack.c.b16 %v864, %v860
        %v937 = vpack.c.b16 %v869, %v865
        %v938 = vpack.c.b16 %v870, %v866
        %v939 = vpack.c.b16 %v871, %v867
        %v940 = vpack.c.b16 %v872, %v868
        %v941 = vpack.c.b16 %v877, %v873
        %v942 = vpack.c.b16 %v878, %v874
        %v943 = vpack.c.b16 %v879, %v875
        %v944 = vpack.c.b16 %v880, %v876
        %v1073 = vunpack.c.l.b16 %v625
        %v1074 = vunpack.c.l.b16 %v626
        %v1075 = vunpack.c.l.b16 %v627
        %v1076 = vunpack.c.l.b16 %v628
        %v1077 = vunpack.c.l.b16 %v629
        %v1078 = vunpack.c.l.b16 %v630
        %v1079 = vunpack.c.l.b16 %v631
        %v1080 = vunpack.c.l.b16 %v632
        %v1081 = vunpack.c.l.b16 %v633
        %v1082 = vunpack.c.l.b16 %v634
        %v1083 = vunpack.c.l.b16 %v635
        %v1084 = vunpack.c.l.b16 %v636
        %v1085 = vunpack.c.l.b16 %v637
        %v1086 = vunpack.c.l.b16 %v638
        %v1087 = vunpack.c.l.b16 %v639
        %v1088 = vunpack.c.l.b16 %v640
        %v1089 = vunpack.c.l.b16 %v641
        %v1090 = vunpack.c.l.b16 %v642
        %v1091 = vunpack.c.l.b16 %v643
        %v1092 = vunpack.c.l.b16 %v644
        %v1093 = vunpack.c.l.b16 %v645
        %v1094 = vunpack.c.l.b16 %v646
        %v1095 = vunpack.c.l.b16 %v647
        %v1096 = vunpack.c.l.b16 %v648
        %v1097 = vunpack.c.l.b16 %v649
        %v1098 = vunpack.c.l.b16 %v650
        %v1099 = vunpack.c.l.b16 %v651
        %v1100 = vunpack.c.l.b16 %v652
        %v1101 = vunpack.c.l.b16 %v653
        %v1102 = vunpack.c.l.b16 %v654
        %v1103 = vunpack.c.l.b16 %v655
        %v1104 = vunpack.c.l.b16 %v656
        %v1105 = vunpack.c.l.b16 %v657
        %v1106 = vunpack.c.l.b16 %v658
        %v1107 = vunpack.c.l.b16 %v659
        %v1108 = vunpack.c.l.b16 %v660
        %v1109 = vunpack.c.l.b16 %v661
        %v1110 = vunpack.c.l.b16 %v662
        %v1111 = vunpack.c.l.b16 %v663
        %v1112 = vunpack.c.l.b16 %v664
        %v1113 = vunpack.c.l.b16 %v665
        %v1114 = vunpack.c.l.b16 %v666
        %v1115 = vunpack.c.l.b16 %v667
        %v1116 = vunpack.c.l.b16 %v668
        %v1117 = vunpack.c.l.b16 %v669
        %v1118 = vunpack.c.l.b16 %v670
        %v1119 = vunpack.c.l.b16 %v671
        %v1120 = vunpack.c.l.b16 %v672
        %v1121 = vunpack.c.l.b16 %v673
        %v1122 = vunpack.c.l.b16 %v674
        %v1123 = vunpack.c.l.b16 %v675
        %v1124 = vunpack.c.l.b16 %v676
        %v1125 = vunpack.c.l.b16 %v677
        %v1126 = vunpack.c.l.b16 %v678
        %v1127 = vunpack.c.l.b16 %v679
        %v1128 = vunpack.c.l.b16 %v680
        %v1129 = vunpack.c.l.b16 %v681
        %v1130 = vunpack.c.l.b16 %v682
        %v1131 = vunpack.c.l.b16 %v683
        %v1132 = vunpack.c.l.b16 %v684
        %v1133 = vunpack.c.l.b16 %v685
        %v1134 = vunpack.c.l.b16 %v686
        %v1135 = vunpack.c.l.b16 %v687
        %v1136 = vunpack.c.l.b16 %v688
        %v1137 = vpack.c.b16 %v1074, %v1073
        %v1138 = vpack.c.b16 %v1076, %v1075
        %v1139 = vpack.c.b16 %v1078, %v1077
        %v1140 = vpack.c.b16 %v1080, %v1079
        %v1141 = vpack.c.b16 %v1082, %v1081
        %v1142 = vpack.c.b16 %v1084, %v1083
        %v1143 = vpack.c.b16 %v1086, %v1085
        %v1144 = vpack.c.b16 %v1088, %v1087
        %v1145 = vpack.c.b16 %v1090, %v1089
        %v1146 = vpack.c.b16 %v1092, %v1091
        %v1147 = vpack.c.b16 %v1094, %v1093
        %v1148 = vpack.c.b16 %v1096, %v1095
        %v1149 = vpack.c.b16 %v1098, %v1097
        %v1150 = vpack.c.b16 %v1100, %v1099
        %v1151 = vpack.c.b16 %v1102, %v1101
        %v1152 = vpack.c.b16 %v1104, %v1103
        %v1153 = vpack.c.b16 %v1106, %v1105
        %v1154 = vpack.c.b16 %v1108, %v1107
        %v1155 = vpack.c.b16 %v1110, %v1109
        %v1156 = vpack.c.b16 %v1112, %v1111
        %v1157 = vpack.c.b16 %v1114, %v1113
        %v1158 = vpack.c.b16 %v1116, %v1115
        %v1159 = vpack.c.b16 %v1118, %v1117
        %v1160 = vpack.c.b16 %v1120, %v1119
        %v1161 = vpack.c.b16 %v1122, %v1121
        %v1162 = vpack.c.b16 %v1124, %v1123
        %v1163 = vpack.c.b16 %v1126, %v1125
        %v1164 = vpack.c.b16 %v1128, %v1127
        %v1165 = vpack.c.b16 %v1130, %v1129
        %v1166 = vpack.c.b16 %v1132, %v1131
        %v1167 = vpack.c.b16 %v1134, %v1133
        %v1168 = vpack.c.b16 %v1136, %v1135
        %1201 = vmatprep.subr.bf16.mxu0 0
        %1202 = vmatpush1.bf16.msra.mxu0 %v1137
        %1203 = vmatprep.subr.bf16.mxu0 0
        %1204 = vmatpush1.bf16.msra.mxu0 %v1138
        %1205 = vmatprep.subr.bf16.mxu0 0
        %1206 = vmatpush1.bf16.msra.mxu0 %v1139
        %1207 = vmatprep.subr.bf16.mxu0 0
        %1208 = vmatpush1.bf16.msra.mxu0 %v1140
        %1209 = vmatprep.subr.bf16.mxu0 0
        %1210 = vmatpush1.bf16.msra.mxu0 %v1141
        %1211 = vmatprep.subr.bf16.mxu0 0
        %1212 = vmatpush1.bf16.msra.mxu0 %v1142
        %1213 = vmatprep.subr.bf16.mxu0 0
        %1214 = vmatpush1.bf16.msra.mxu0 %v1143
        %1215 = vmatprep.subr.bf16.mxu0 0
        %1216 = vmatpush1.bf16.msra.mxu0 %v1144
        %1217 = vmatprep.subr.bf16.mxu0 0
        %1218 = vmatpush1.bf16.msra.mxu0 %v1145
        %1219 = vmatprep.subr.bf16.mxu0 0
        %1220 = vmatpush1.bf16.msra.mxu0 %v1146
        %1221 = vmatprep.subr.bf16.mxu0 0
        %1222 = vmatpush1.bf16.msra.mxu0 %v1147
        %1223 = vmatprep.subr.bf16.mxu0 0
        %1224 = vmatpush1.bf16.msra.mxu0 %v1148
        %1225 = vmatprep.subr.bf16.mxu0 0
        %1226 = vmatpush1.bf16.msra.mxu0 %v1149
        %1227 = vmatprep.subr.bf16.mxu0 0
        %1228 = vmatpush1.bf16.msra.mxu0 %v1150
        %1229 = vmatprep.subr.bf16.mxu0 0
        %1230 = vmatpush1.bf16.msra.mxu0 %v1151
        %1231 = vmatprep.subr.bf16.mxu0 0
        %1232 = vmatpush1.bf16.msra.mxu0 %v1152
        %1233 = vmatprep.mubr.bf16.mxu0 %v882
        %1234 = vmatmul.mubr.bf16.gmra.mrb[0].mxu0 %v881
        %v1235 = vpop.f32.mrb[0].mxu0
        %v1236 = vadd.f32 0.0, %v1235
        %v1237 = vpop.f32.mrb[0].mxu0
        %v1238 = vpop.f32.mrb[0].mxu0
        %v1239 = vadd.f32 0.0, %v1238
        %v1240 = vpop.f32.mrb[0].mxu0
        %1241 = vmatprep.mubr.bf16.mxu0 %v886
        %1242 = vmatmul.mubr.bf16.gmra.mrb[0].mxu0 %v885
        %v1243 = vpop.f32.mrb[0].mxu0
        %v1244 = vadd.f32 0.0, %v1243
        %v1245 = vpop.f32.mrb[0].mxu0
        %v1246 = vpop.f32.mrb[0].mxu0
        %v1247 = vadd.f32 0.0, %v1246
        %v1248 = vpop.f32.mrb[0].mxu0
        %1249 = vmatprep.mubr.bf16.mxu0 %v890
        %1250 = vmatmul.mubr.bf16.gmra.mrb[0].mxu0 %v889
        %v1251 = vpop.f32.mrb[0].mxu0
        %v1252 = vadd.f32 0.0, %v1251
        %v1253 = vpop.f32.mrb[0].mxu0
        %v1254 = vpop.f32.mrb[0].mxu0
        %v1255 = vadd.f32 0.0, %v1254
        %v1256 = vpop.f32.mrb[0].mxu0
        %1257 = vmatprep.mubr.bf16.mxu0 %v894
        %1258 = vmatmul.mubr.bf16.gmra.mrb[0].mxu0 %v893
        %v1259 = vpop.f32.mrb[0].mxu0
        %v1260 = vadd.f32 0.0, %v1259
        %v1261 = vpop.f32.mrb[0].mxu0
        %v1262 = vpop.f32.mrb[0].mxu0
        %v1263 = vadd.f32 0.0, %v1262
        %v1264 = vpop.f32.mrb[0].mxu0
        %1265 = vmatprep.mubr.bf16.mxu0 %v898
        %1266 = vmatmul.mubr.bf16.gmra.mrb[0].mxu0 %v897
        %v1267 = vpop.f32.mrb[0].mxu0
        %v1268 = vadd.f32 0.0, %v1267
        %v1269 = vpop.f32.mrb[0].mxu0
        %v1270 = vpop.f32.mrb[0].mxu0
        %v1271 = vadd.f32 0.0, %v1270
        %v1272 = vpop.f32.mrb[0].mxu0
        %1273 = vmatprep.mubr.bf16.mxu0 %v902
        %1274 = vmatmul.mubr.bf16.gmra.mrb[0].mxu0 %v901
        %v1275 = vpop.f32.mrb[0].mxu0
        %v1276 = vadd.f32 0.0, %v1275
        %v1277 = vpop.f32.mrb[0].mxu0
        %v1278 = vpop.f32.mrb[0].mxu0
        %v1279 = vadd.f32 0.0, %v1278
        %v1280 = vpop.f32.mrb[0].mxu0
        %1281 = vmatprep.mubr.bf16.mxu0 %v906
        %1282 = vmatmul.mubr.bf16.gmra.mrb[0].mxu0 %v905
        %v1283 = vpop.f32.mrb[0].mxu0
        %v1284 = vadd.f32 0.0, %v1283
        %v1285 = vpop.f32.mrb[0].mxu0
        %v1286 = vpop.f32.mrb[0].mxu0
        %v1287 = vadd.f32 0.0, %v1286
        %v1288 = vpop.f32.mrb[0].mxu0
        %1289 = vmatprep.mubr.bf16.mxu0 %v910
        %1290 = vmatmul.mubr.bf16.gmra.mrb[0].mxu0 %v909
        %v1291 = vpop.f32.mrb[0].mxu0
        %v1292 = vadd.f32 0.0, %v1291
        %v1293 = vpop.f32.mrb[0].mxu0
        %v1294 = vpop.f32.mrb[0].mxu0
        %v1295 = vadd.f32 0.0, %v1294
        %v1296 = vpop.f32.mrb[0].mxu0
        %1297 = vmatprep.mubr.bf16.mxu0 %v914
        %1298 = vmatmul.mubr.bf16.gmra.mrb[0].mxu0 %v913
        %v1299 = vpop.f32.mrb[0].mxu0
        %v1300 = vadd.f32 0.0, %v1299
        %v1301 = vpop.f32.mrb[0].mxu0
        %v1302 = vpop.f32.mrb[0].mxu0
        %v1303 = vadd.f32 0.0, %v1302
        %v1304 = vpop.f32.mrb[0].mxu0
        %1305 = vmatprep.mubr.bf16.mxu0 %v918
        %1306 = vmatmul.mubr.bf16.gmra.mrb[0].mxu0 %v917
        %v1307 = vpop.f32.mrb[0].mxu0
        %v1308 = vadd.f32 0.0, %v1307
        %v1309 = vpop.f32.mrb[0].mxu0
        %v1310 = vpop.f32.mrb[0].mxu0
        %v1311 = vadd.f32 0.0, %v1310
        %v1312 = vpop.f32.mrb[0].mxu0
        %1313 = vmatprep.mubr.bf16.mxu0 %v922
        %1314 = vmatmul.mubr.bf16.gmra.mrb[0].mxu0 %v921
        %v1315 = vpop.f32.mrb[0].mxu0
        %v1316 = vadd.f32 0.0, %v1315
        %v1317 = vpop.f32.mrb[0].mxu0
        %v1318 = vpop.f32.mrb[0].mxu0
        %v1319 = vadd.f32 0.0, %v1318
        %v1320 = vpop.f32.mrb[0].mxu0
        %1321 = vmatprep.mubr.bf16.mxu0 %v926
        %1322 = vmatmul.mubr.bf16.gmra.mrb[0].mxu0 %v925
        %v1323 = vpop.f32.mrb[0].mxu0
        %v1324 = vadd.f32 0.0, %v1323
        %v1325 = vpop.f32.mrb[0].mxu0
        %v1326 = vpop.f32.mrb[0].mxu0
        %v1327 = vadd.f32 0.0, %v1326
        %v1328 = vpop.f32.mrb[0].mxu0
        %1329 = vmatprep.mubr.bf16.mxu0 %v930
        %1330 = vmatmul.mubr.bf16.gmra.mrb[0].mxu0 %v929
        %v1331 = vpop.f32.mrb[0].mxu0
        %v1332 = vadd.f32 0.0, %v1331
        %v1333 = vpop.f32.mrb[0].mxu0
        %v1334 = vpop.f32.mrb[0].mxu0
        %v1335 = vadd.f32 0.0, %v1334
        %v1336 = vpop.f32.mrb[0].mxu0
        %1337 = vmatprep.mubr.bf16.mxu0 %v934
        %1338 = vmatmul.mubr.bf16.gmra.mrb[0].mxu0 %v933
        %v1339 = vpop.f32.mrb[0].mxu0
        %v1340 = vadd.f32 0.0, %v1339
        %v1341 = vpop.f32.mrb[0].mxu0
        %v1342 = vpop.f32.mrb[0].mxu0
        %v1343 = vadd.f32 0.0, %v1342
        %v1344 = vpop.f32.mrb[0].mxu0
        %1345 = vmatprep.mubr.bf16.mxu0 %v938
        %1346 = vmatmul.mubr.bf16.gmra.mrb[0].mxu0 %v937
        %v1347 = vpop.f32.mrb[0].mxu0
        %v1348 = vadd.f32 0.0, %v1347
        %v1349 = vpop.f32.mrb[0].mxu0
        %v1350 = vpop.f32.mrb[0].mxu0
        %v1351 = vadd.f32 0.0, %v1350
        %v1352 = vpop.f32.mrb[0].mxu0
        %1353 = vmatprep.mubr.bf16.mxu0 %v942
        %1354 = vmatmul.mubr.bf16.gmra.mrb[0].mxu0 %v941
        %v1355 = vpop.f32.mrb[0].mxu0
        %v1356 = vadd.f32 0.0, %v1355
        %v1357 = vpop.f32.mrb[0].mxu0
        %v1358 = vpop.f32.mrb[0].mxu0
        %v1359 = vadd.f32 0.0, %v1358
        %v1360 = vpop.f32.mrb[0].mxu0
        %1361 = vdwg.mxu0
        %1362 = vmatprep.subr.bf16.mxu0 0
        %1363 = vmatpush1.bf16.msra.mxu0 %v1153
        %1364 = vmatprep.subr.bf16.mxu0 0
        %1365 = vmatpush1.bf16.msra.mxu0 %v1154
        %1366 = vmatprep.subr.bf16.mxu0 0
        %1367 = vmatpush1.bf16.msra.mxu0 %v1155
        %1368 = vmatprep.subr.bf16.mxu0 0
        %1369 = vmatpush1.bf16.msra.mxu0 %v1156
        %1370 = vmatprep.subr.bf16.mxu0 0
        %1371 = vmatpush1.bf16.msra.mxu0 %v1157
        %1372 = vmatprep.subr.bf16.mxu0 0
        %1373 = vmatpush1.bf16.msra.mxu0 %v1158
        %1374 = vmatprep.subr.bf16.mxu0 0
        %1375 = vmatpush1.bf16.msra.mxu0 %v1159
        %1376 = vmatprep.subr.bf16.mxu0 0
        %1377 = vmatpush1.bf16.msra.mxu0 %v1160
        %1378 = vmatprep.subr.bf16.mxu0 0
        %1379 = vmatpush1.bf16.msra.mxu0 %v1161
        %1380 = vmatprep.subr.bf16.mxu0 0
        %1381 = vmatpush1.bf16.msra.mxu0 %v1162
        %1382 = vmatprep.subr.bf16.mxu0 0
        %1383 = vmatpush1.bf16.msra.mxu0 %v1163
        %1384 = vmatprep.subr.bf16.mxu0 0
        %1385 = vmatpush1.bf16.msra.mxu0 %v1164
        %1386 = vmatprep.subr.bf16.mxu0 0
        %1387 = vmatpush1.bf16.msra.mxu0 %v1165
        %1388 = vmatprep.subr.bf16.mxu0 0
        %1389 = vmatpush1.bf16.msra.mxu0 %v1166
        %1390 = vmatprep.subr.bf16.mxu0 0
        %1391 = vmatpush1.bf16.msra.mxu0 %v1167
        %1392 = vmatprep.subr.bf16.mxu0 0
        %1393 = vmatpush1.bf16.msra.mxu0 %v1168
        %1394 = vmatprep.mubr.bf16.mxu0 %v884
        %1395 = vmatmul.mubr.bf16.gmra.mrb[0].mxu0 %v883
        %v1396 = vpop.f32.mrb[0].mxu0
        %v1397 = vadd.f32 %v1236, %v1396
        %v1398 = vpop.f32.mrb[0].mxu0
        %v1399 = vpop.f32.mrb[0].mxu0
        %v1400 = vadd.f32 %v1239, %v1399
        %v1401 = vpop.f32.mrb[0].mxu0
        %1402 = vmatprep.mubr.bf16.mxu0 %v888
        %1403 = vmatmul.mubr.bf16.gmra.mrb[0].mxu0 %v887
        %v1404 = vpop.f32.mrb[0].mxu0
        %v1405 = vadd.f32 %v1244, %v1404
        %v1406 = vpop.f32.mrb[0].mxu0
        %v1407 = vpop.f32.mrb[0].mxu0
        %v1408 = vadd.f32 %v1247, %v1407
        %v1409 = vpop.f32.mrb[0].mxu0
        %1410 = vmatprep.mubr.bf16.mxu0 %v892
        %1411 = vmatmul.mubr.bf16.gmra.mrb[0].mxu0 %v891
        %v1412 = vpop.f32.mrb[0].mxu0
        %v1413 = vadd.f32 %v1252, %v1412
        %v1414 = vpop.f32.mrb[0].mxu0
        %v1415 = vpop.f32.mrb[0].mxu0
        %v1416 = vadd.f32 %v1255, %v1415
        %v1417 = vpop.f32.mrb[0].mxu0
        %1418 = vmatprep.mubr.bf16.mxu0 %v896
        %1419 = vmatmul.mubr.bf16.gmra.mrb[0].mxu0 %v895
        %v1420 = vpop.f32.mrb[0].mxu0
        %v1421 = vadd.f32 %v1260, %v1420
        %v1422 = vpop.f32.mrb[0].mxu0
        %v1423 = vpop.f32.mrb[0].mxu0
        %v1424 = vadd.f32 %v1263, %v1423
        %v1425 = vpop.f32.mrb[0].mxu0
        %1426 = vmatprep.mubr.bf16.mxu0 %v900
        %1427 = vmatmul.mubr.bf16.gmra.mrb[0].mxu0 %v899
        %v1428 = vpop.f32.mrb[0].mxu0
        %v1429 = vadd.f32 %v1268, %v1428
        %v1430 = vpop.f32.mrb[0].mxu0
        %v1431 = vpop.f32.mrb[0].mxu0
        %v1432 = vadd.f32 %v1271, %v1431
        %v1433 = vpop.f32.mrb[0].mxu0
        %1434 = vmatprep.mubr.bf16.mxu0 %v904
        %1435 = vmatmul.mubr.bf16.gmra.mrb[0].mxu0 %v903
        %v1436 = vpop.f32.mrb[0].mxu0
        %v1437 = vadd.f32 %v1276, %v1436
        %v1438 = vpop.f32.mrb[0].mxu0
        %v1439 = vpop.f32.mrb[0].mxu0
        %v1440 = vadd.f32 %v1279, %v1439
        %v1441 = vpop.f32.mrb[0].mxu0
        %1442 = vmatprep.mubr.bf16.mxu0 %v908
        %1443 = vmatmul.mubr.bf16.gmra.mrb[0].mxu0 %v907
        %v1444 = vpop.f32.mrb[0].mxu0
        %v1445 = vadd.f32 %v1284, %v1444
        %v1446 = vpop.f32.mrb[0].mxu0
        %v1447 = vpop.f32.mrb[0].mxu0
        %v1448 = vadd.f32 %v1287, %v1447
        %v1449 = vpop.f32.mrb[0].mxu0
        %1450 = vmatprep.mubr.bf16.mxu0 %v912
        %1451 = vmatmul.mubr.bf16.gmra.mrb[0].mxu0 %v911
        %v1452 = vpop.f32.mrb[0].mxu0
        %v1453 = vadd.f32 %v1292, %v1452
        %v1454 = vpop.f32.mrb[0].mxu0
        %v1455 = vpop.f32.mrb[0].mxu0
        %v1456 = vadd.f32 %v1295, %v1455
        %v1457 = vpop.f32.mrb[0].mxu0
        %1458 = vmatprep.mubr.bf16.mxu0 %v916
        %1459 = vmatmul.mubr.bf16.gmra.mrb[0].mxu0 %v915
        %v1460 = vpop.f32.mrb[0].mxu0
        %v1461 = vadd.f32 %v1300, %v1460
        %v1462 = vpop.f32.mrb[0].mxu0
        %v1463 = vpop.f32.mrb[0].mxu0
        %v1464 = vadd.f32 %v1303, %v1463
        %v1465 = vpop.f32.mrb[0].mxu0
        %1466 = vmatprep.mubr.bf16.mxu0 %v920
        %1467 = vmatmul.mubr.bf16.gmra.mrb[0].mxu0 %v919
        %v1468 = vpop.f32.mrb[0].mxu0
        %v1469 = vadd.f32 %v1308, %v1468
        %v1470 = vpop.f32.mrb[0].mxu0
        %v1471 = vpop.f32.mrb[0].mxu0
        %v1472 = vadd.f32 %v1311, %v1471
        %v1473 = vpop.f32.mrb[0].mxu0
        %1474 = vmatprep.mubr.bf16.mxu0 %v924
        %1475 = vmatmul.mubr.bf16.gmra.mrb[0].mxu0 %v923
        %v1476 = vpop.f32.mrb[0].mxu0
        %v1477 = vadd.f32 %v1316, %v1476
        %v1478 = vpop.f32.mrb[0].mxu0
        %v1479 = vpop.f32.mrb[0].mxu0
        %v1480 = vadd.f32 %v1319, %v1479
        %v1481 = vpop.f32.mrb[0].mxu0
        %1482 = vmatprep.mubr.bf16.mxu0 %v928
        %1483 = vmatmul.mubr.bf16.gmra.mrb[0].mxu0 %v927
        %v1484 = vpop.f32.mrb[0].mxu0
        %v1485 = vadd.f32 %v1324, %v1484
        %v1486 = vpop.f32.mrb[0].mxu0
        %v1487 = vpop.f32.mrb[0].mxu0
        %v1488 = vadd.f32 %v1327, %v1487
        %v1489 = vpop.f32.mrb[0].mxu0
        %1490 = vmatprep.mubr.bf16.mxu0 %v932
        %1491 = vmatmul.mubr.bf16.gmra.mrb[0].mxu0 %v931
        %v1492 = vpop.f32.mrb[0].mxu0
        %v1493 = vadd.f32 %v1332, %v1492
        %v1494 = vpop.f32.mrb[0].mxu0
        %v1495 = vpop.f32.mrb[0].mxu0
        %v1496 = vadd.f32 %v1335, %v1495
        %v1497 = vpop.f32.mrb[0].mxu0
        %1498 = vmatprep.mubr.bf16.mxu0 %v936
        %1499 = vmatmul.mubr.bf16.gmra.mrb[0].mxu0 %v935
        %v1500 = vpop.f32.mrb[0].mxu0
        %v1501 = vadd.f32 %v1340, %v1500
        %v1502 = vpop.f32.mrb[0].mxu0
        %v1503 = vpop.f32.mrb[0].mxu0
        %v1504 = vadd.f32 %v1343, %v1503
        %v1505 = vpop.f32.mrb[0].mxu0
        %1506 = vmatprep.mubr.bf16.mxu0 %v940
        %1507 = vmatmul.mubr.bf16.gmra.mrb[0].mxu0 %v939
        %v1508 = vpop.f32.mrb[0].mxu0
        %v1509 = vadd.f32 %v1348, %v1508
        %v1510 = vpop.f32.mrb[0].mxu0
        %v1511 = vpop.f32.mrb[0].mxu0
        %v1512 = vadd.f32 %v1351, %v1511
        %v1513 = vpop.f32.mrb[0].mxu0
        %1514 = vmatprep.mubr.bf16.mxu0 %v944
        %1515 = vmatmul.mubr.bf16.gmra.mrb[0].mxu0 %v943
        %v1516 = vpop.f32.mrb[0].mxu0
        %v1517 = vadd.f32 %v1356, %v1516
        %v1518 = vpop.f32.mrb[0].mxu0
        %v1519 = vpop.f32.mrb[0].mxu0
        %v1520 = vadd.f32 %v1359, %v1519
        %v1521 = vpop.f32.mrb[0].mxu0
        %1522 = vdwg.mxu0
        %v1523 = vadd.f32 %v593, %v1397
        %v1524 = vadd.f32 %v594, %v1400
        %v1525 = vadd.f32 %v595, %v1405
        %v1526 = vadd.f32 %v596, %v1408
        %v1527 = vadd.f32 %v597, %v1413
        %v1528 = vadd.f32 %v598, %v1416
        %v1529 = vadd.f32 %v599, %v1421
        %v1530 = vadd.f32 %v600, %v1424
        %v1531 = vadd.f32 %v601, %v1429
        %v1532 = vadd.f32 %v602, %v1432
        %v1533 = vadd.f32 %v603, %v1437
        %v1534 = vadd.f32 %v604, %v1440
        %v1535 = vadd.f32 %v605, %v1445
        %v1536 = vadd.f32 %v606, %v1448
        %v1537 = vadd.f32 %v607, %v1453
        %v1538 = vadd.f32 %v608, %v1456
        %v1539 = vadd.f32 %v609, %v1461
        %v1540 = vadd.f32 %v610, %v1464
        %v1541 = vadd.f32 %v611, %v1469
        %v1542 = vadd.f32 %v612, %v1472
        %v1543 = vadd.f32 %v613, %v1477
        %v1544 = vadd.f32 %v614, %v1480
        %v1545 = vadd.f32 %v615, %v1485
        %v1546 = vadd.f32 %v616, %v1488
        %v1547 = vadd.f32 %v617, %v1493
        %v1548 = vadd.f32 %v618, %v1496
        %v1549 = vadd.f32 %v619, %v1501
        %v1550 = vadd.f32 %v620, %v1504
        %v1551 = vadd.f32 %v621, %v1509
        %v1552 = vadd.f32 %v622, %v1512
        %v1553 = vadd.f32 %v623, %v1517
        %v1554 = vadd.f32 %v624, %v1520
        %vm1555 = vcmask 48128
        %1556 = vst.msk [vmem:[#allocation2] sm:$0xff] %vm1555, %v1523
        %1557 = vst.msk [vmem:[#allocation2 + $0x8] sm:$0xff] %vm1555, %v1524
        %1558 = vst.msk [vmem:[#allocation2 + $0x10] sm:$0xff] %vm1555, %v1525
        %1559 = vst.msk [vmem:[#allocation2 + $0x18] sm:$0xff] %vm1555, %v1526
        %1560 = vst.msk [vmem:[#allocation2 + $0x20] sm:$0xff] %vm1555, %v1527
        %1561 = vst.msk [vmem:[#allocation2 + $0x28] sm:$0xff] %vm1555, %v1528
        %1562 = vst.msk [vmem:[#allocation2 + $0x30] sm:$0xff] %vm1555, %v1529
        %1563 = vst.msk [vmem:[#allocation2 + $0x38] sm:$0xff] %vm1555, %v1530
        %1564 = vst.msk [vmem:[#allocation2 + $0x40] sm:$0xff] %vm1555, %v1531
        %1565 = vst.msk [vmem:[#allocation2 + $0x48] sm:$0xff] %vm1555, %v1532
        %1566 = vst.msk [vmem:[#allocation2 + $0x50] sm:$0xff] %vm1555, %v1533
        %1567 = vst.msk [vmem:[#allocation2 + $0x58] sm:$0xff] %vm1555, %v1534
        %1568 = vst.msk [vmem:[#allocation2 + $0x60] sm:$0xff] %vm1555, %v1535
        %1569 = vst.msk [vmem:[#allocation2 + $0x68] sm:$0xff] %vm1555, %v1536
        %1570 = vst.msk [vmem:[#allocation2 + $0x70] sm:$0xff] %vm1555, %v1537
        %1571 = vst.msk [vmem:[#allocation2 + $0x78] sm:$0xff] %vm1555, %v1538
        %1572 = vst.msk [vmem:[#allocation2 + $0x80] sm:$0xff] %vm1555, %v1539
        %1573 = vst.msk [vmem:[#allocation2 + $0x88] sm:$0xff] %vm1555, %v1540
        %1574 = vst.msk [vmem:[#allocation2 + $0x90] sm:$0xff] %vm1555, %v1541
        %1575 = vst.msk [vmem:[#allocation2 + $0x98] sm:$0xff] %vm1555, %v1542
        %1576 = vst.msk [vmem:[#allocation2 + $0xa0] sm:$0xff] %vm1555, %v1543
        %1577 = vst.msk [vmem:[#allocation2 + $0xa8] sm:$0xff] %vm1555, %v1544
        %1578 = vst.msk [vmem:[#allocation2 + $0xb0] sm:$0xff] %vm1555, %v1545
        %1579 = vst.msk [vmem:[#allocation2 + $0xb8] sm:$0xff] %vm1555, %v1546
        %1580 = vst.msk [vmem:[#allocation2 + $0xc0] sm:$0xff] %vm1555, %v1547
        %1581 = vst.msk [vmem:[#allocation2 + $0xc8] sm:$0xff] %vm1555, %v1548
        %1582 = vst.msk [vmem:[#allocation2 + $0xd0] sm:$0xff] %vm1555, %v1549
        %1583 = vst.msk [vmem:[#allocation2 + $0xd8] sm:$0xff] %vm1555, %v1550
        %1584 = vst.msk [vmem:[#allocation2 + $0xe0] sm:$0xff] %vm1555, %v1551
        %1585 = vst.msk [vmem:[#allocation2 + $0xe8] sm:$0xff] %vm1555, %v1552
        %1586 = vst.msk [vmem:[#allocation2 + $0xf0] sm:$0xff] %vm1555, %v1553
        %1587 = vst.msk [vmem:[#allocation2 + $0xf8] sm:$0xff] %vm1555, %v1554
        %p1588 = scmp.eq.s32.totalorder %s23, 2
        // Predicated region
        $region68: #{unet_multihead_rot_forward.29} parent=58 // pred_check
          %p1589 = pneg %p1588
        $region69: #{unet_multihead_rot_forward.29} parent=58 // pred_check_branch
          %1591 = sbr.rel (%p1589) target = $region71
        $region70: #{unet_multihead_rot_forward.29} parent=58 // pred_region
          %v1592 = vld [vmem:[#allocation2] sm:$0xff]
          %v1593 = vld [vmem:[#allocation2 + $0x8] sm:$0xff]
          %v1594 = vld [vmem:[#allocation2 + $0x10] sm:$0xff]
          %v1595 = vld [vmem:[#allocation2 + $0x18] sm:$0xff]
          %v1596 = vld [vmem:[#allocation2 + $0x20] sm:$0xff]
          %v1597 = vld [vmem:[#allocation2 + $0x28] sm:$0xff]
          %v1598 = vld [vmem:[#allocation2 + $0x30] sm:$0xff]
          %v1599 = vld [vmem:[#allocation2 + $0x38] sm:$0xff]
          %v1600 = vld [vmem:[#allocation2 + $0x40] sm:$0xff]
          %v1601 = vld [vmem:[#allocation2 + $0x48] sm:$0xff]
          %v1602 = vld [vmem:[#allocation2 + $0x50] sm:$0xff]
          %v1603 = vld [vmem:[#allocation2 + $0x58] sm:$0xff]
          %v1604 = vld [vmem:[#allocation2 + $0x60] sm:$0xff]
          %v1605 = vld [vmem:[#allocation2 + $0x68] sm:$0xff]
          %v1606 = vld [vmem:[#allocation2 + $0x70] sm:$0xff]
          %v1607 = vld [vmem:[#allocation2 + $0x78] sm:$0xff]
          %v1608 = vld [vmem:[#allocation2 + $0x80] sm:$0xff]
          %v1609 = vld [vmem:[#allocation2 + $0x88] sm:$0xff]
          %v1610 = vld [vmem:[#allocation2 + $0x90] sm:$0xff]
          %v1611 = vld [vmem:[#allocation2 + $0x98] sm:$0xff]
          %v1612 = vld [vmem:[#allocation2 + $0xa0] sm:$0xff]
          %v1613 = vld [vmem:[#allocation2 + $0xa8] sm:$0xff]
          %v1614 = vld [vmem:[#allocation2 + $0xb0] sm:$0xff]
          %v1615 = vld [vmem:[#allocation2 + $0xb8] sm:$0xff]
          %v1616 = vld [vmem:[#allocation2 + $0xc0] sm:$0xff]
          %v1617 = vld [vmem:[#allocation2 + $0xc8] sm:$0xff]
          %v1618 = vld [vmem:[#allocation2 + $0xd0] sm:$0xff]
          %v1619 = vld [vmem:[#allocation2 + $0xd8] sm:$0xff]
          %v1620 = vld [vmem:[#allocation2 + $0xe0] sm:$0xff]
          %v1621 = vld [vmem:[#allocation2 + $0xe8] sm:$0xff]
          %v1622 = vld [vmem:[#allocation2 + $0xf0] sm:$0xff]
          %v1623 = vld [vmem:[#allocation2 + $0xf8] sm:$0xff]
          %v1624 = vld [vmem:[%s481] sm:$0x1]
          %v1626 = vlaneseq
          %v1627 = vshrl.u32 %v1626, 7
          %v1628 = vsub.s32 0, %v1627
          %v1629 = vrot.slane %v1624, %v1628
          %v1631 = vadd.f32 %v1592, %v1629
          %v1632 = vadd.f32 %v1593, %v1629
          %v1633 = vadd.f32 %v1594, %v1629
          %v1634 = vadd.f32 %v1595, %v1629
          %v1635 = vadd.f32 %v1596, %v1629
          %v1636 = vadd.f32 %v1597, %v1629
          %v1637 = vadd.f32 %v1598, %v1629
          %v1638 = vadd.f32 %v1599, %v1629
          %v1639 = vadd.f32 %v1600, %v1629
          %v1640 = vadd.f32 %v1601, %v1629
          %v1641 = vadd.f32 %v1602, %v1629
          %v1642 = vadd.f32 %v1603, %v1629
          %v1643 = vadd.f32 %v1604, %v1629
          %v1644 = vadd.f32 %v1605, %v1629
          %v1645 = vadd.f32 %v1606, %v1629
          %v1646 = vadd.f32 %v1607, %v1629
          %v1647 = vadd.f32 %v1608, %v1629
          %v1648 = vadd.f32 %v1609, %v1629
          %v1649 = vadd.f32 %v1610, %v1629
          %v1650 = vadd.f32 %v1611, %v1629
          %v1651 = vadd.f32 %v1612, %v1629
          %v1652 = vadd.f32 %v1613, %v1629
          %v1653 = vadd.f32 %v1614, %v1629
          %v1654 = vadd.f32 %v1615, %v1629
          %v1655 = vadd.f32 %v1616, %v1629
          %v1656 = vadd.f32 %v1617, %v1629
          %v1657 = vadd.f32 %v1618, %v1629
          %v1658 = vadd.f32 %v1619, %v1629
          %v1659 = vadd.f32 %v1620, %v1629
          %v1660 = vadd.f32 %v1621, %v1629
          %v1661 = vadd.f32 %v1622, %v1629
          %v1662 = vadd.f32 %v1623, %v1629
          %1663 = vst.msk [vmem:[%s489] sm:$0xff] %vm1555, %v1631
          %1664 = vst.msk [vmem:[%s489 + $0x8] sm:$0xff] %vm1555, %v1632
          %1665 = vst.msk [vmem:[%s489 + $0x10] sm:$0xff] %vm1555, %v1633
          %1666 = vst.msk [vmem:[%s489 + $0x18] sm:$0xff] %vm1555, %v1634
          %1667 = vst.msk [vmem:[%s489 + $0x20] sm:$0xff] %vm1555, %v1635
          %1668 = vst.msk [vmem:[%s489 + $0x28] sm:$0xff] %vm1555, %v1636
          %1669 = vst.msk [vmem:[%s489 + $0x30] sm:$0xff] %vm1555, %v1637
          %1670 = vst.msk [vmem:[%s489 + $0x38] sm:$0xff] %vm1555, %v1638
          %1671 = vst.msk [vmem:[%s489 + $0x40] sm:$0xff] %vm1555, %v1639
          %1672 = vst.msk [vmem:[%s489 + $0x48] sm:$0xff] %vm1555, %v1640
          %1673 = vst.msk [vmem:[%s489 + $0x50] sm:$0xff] %vm1555, %v1641
          %1674 = vst.msk [vmem:[%s489 + $0x58] sm:$0xff] %vm1555, %v1642
          %1675 = vst.msk [vmem:[%s489 + $0x60] sm:$0xff] %vm1555, %v1643
          %1676 = vst.msk [vmem:[%s489 + $0x68] sm:$0xff] %vm1555, %v1644
          %1677 = vst.msk [vmem:[%s489 + $0x70] sm:$0xff] %vm1555, %v1645
          %1678 = vst.msk [vmem:[%s489 + $0x78] sm:$0xff] %vm1555, %v1646
          %1679 = vst.msk [vmem:[%s489 + $0x80] sm:$0xff] %vm1555, %v1647
          %1680 = vst.msk [vmem:[%s489 + $0x88] sm:$0xff] %vm1555, %v1648
          %1681 = vst.msk [vmem:[%s489 + $0x90] sm:$0xff] %vm1555, %v1649
          %1682 = vst.msk [vmem:[%s489 + $0x98] sm:$0xff] %vm1555, %v1650
          %1683 = vst.msk [vmem:[%s489 + $0xa0] sm:$0xff] %vm1555, %v1651
          %1684 = vst.msk [vmem:[%s489 + $0xa8] sm:$0xff] %vm1555, %v1652
          %1685 = vst.msk [vmem:[%s489 + $0xb0] sm:$0xff] %vm1555, %v1653
          %1686 = vst.msk [vmem:[%s489 + $0xb8] sm:$0xff] %vm1555, %v1654
          %1687 = vst.msk [vmem:[%s489 + $0xc0] sm:$0xff] %vm1555, %v1655
          %1688 = vst.msk [vmem:[%s489 + $0xc8] sm:$0xff] %vm1555, %v1656
          %1689 = vst.msk [vmem:[%s489 + $0xd0] sm:$0xff] %vm1555, %v1657
          %1690 = vst.msk [vmem:[%s489 + $0xd8] sm:$0xff] %vm1555, %v1658
          %1691 = vst.msk [vmem:[%s489 + $0xe0] sm:$0xff] %vm1555, %v1659
          %1692 = vst.msk [vmem:[%s489 + $0xe8] sm:$0xff] %vm1555, %v1660
          %1693 = vst.msk [vmem:[%s489 + $0xf0] sm:$0xff] %vm1555, %v1661
          %1694 = vst.msk [vmem:[%s489 + $0xf8] sm:$0xff] %vm1555, %v1662
        $region71: #{unet_multihead_rot_forward.29} parent=58 // pred_fallthru
          _
        %s1695 = smul.u32 32, %s21
        %p1696 = scmp.lt.s32.totalorder %s1695, 63
        %s1697 = scalar_select %p1696, %s1695, 63
        %p1698 = scmp.lt.s32.totalorder %s22, 0
        %s1699 = scalar_select %p1698, %s22, 0
        %s1700 = sadd.s32 %s1699, %s1697
        %s1701 = smul.addr %s1700, 8
        %s1702 = scalar_lea.vmem %s5, %s1701
        // Predicated region
        $region72: #{unet_multihead_rot_forward.29} parent=58 // pred_check
          %p1703 = pneg %p189
        $region73: #{unet_multihead_rot_forward.29} parent=58 // pred_check_branch
          %1705 = sbr.rel (%p1703) target = $region75
        $region74: #{unet_multihead_rot_forward.29} parent=58 // pred_region
          %s1706 = smul.u32 32, %s21
        $region75: #{unet_multihead_rot_forward.29} parent=58 // pred_fallthru
          _
      $region59: #{unet_multihead_rot_forward.29} parent=5 // pred_fallthru
        _
      %p1707 = scmp.le.s32.totalorder 2, %s11
      // Predicated region
      $region76: #{unet_multihead_rot_forward.29} parent=5 // pred_check
        %p1708 = pneg %p1707
      $region77: #{unet_multihead_rot_forward.29} parent=5 // pred_check_branch
        %1710 = sbr.rel (%p1708) target = $region79
      $region78: #{unet_multihead_rot_forward.29} parent=5 // pred_region
        %s1711 = ssub.s32 %s11, 2
        // Predicated region
        $region80: #{unet_multihead_rot_forward.29} parent=78 // pred_check
          %p1712 = pneg %p195
        $region81: #{unet_multihead_rot_forward.29} parent=78 // pred_check_branch
          %1714 = sbr.rel (%p1712) target = $region83
        $region82: #{unet_multihead_rot_forward.29} parent=78 // pred_region
          %s1715 = smul.u32 32, %s24
          %p1716 = scmp.lt.s32.totalorder %s1715, 63
          %s1717 = scalar_select %p1716, %s1715, 63
          %p1718 = scmp.lt.s32.totalorder %s25, 0
          %s1719 = scalar_select %p1718, %s25, 0
          %s1720 = sadd.s32 %s1719, %s1717
          %s1721 = smul.addr %s1720, 8
          %s1722 = scalar_lea.vmem %s5, %s1721
        $region83: #{unet_multihead_rot_forward.29} parent=78 // pred_fallthru
          _
      $region79: #{unet_multihead_rot_forward.29} parent=5 // pred_fallthru
        _
    $region6: #{unet_multihead_rot_forward.29} parent=1 // loop_footer
      %s15 = sadd.s32 1, %s11
    $region7: #{unet_multihead_rot_forward.29} parent=1 // loop_footer_branch
      %10 = sbr.rel target = $region3
    $region8: #{unet_multihead_rot_forward.29} parent=1 // loop_exit
      _

// kernel: unet_multihead_rot_forward.26
$region0: #{unet_multihead_rot_forward.26}
  #allocation0 [shape = 'u32[]', space=smem, size = 0x4, offset = 0x4, fixed_abs, tag = 'smem constant byte address 0x4 - core index']
  #allocation1 [shape = 'u32[144,128]{1,0:T(1,128)}', space=vmem, size = 0x12000, scoped, tag = 'internal scratch']
  #allocation2 [shape = 'f32[128,4]{1,0:T(8,128)}', space=vmem, size = 0x10000, scoped, tag = 'scratch operand']
  %s0 = inlined_call_operand.vmem [shape: bf16[128,144], index: 0, kind: input, shape index: {}]
  %s1 = inlined_call_operand.vmem [shape: bf16[144,4], index: 1, kind: input, shape index: {}]
  %s2 = inlined_call_operand.vmem [shape: f32[1,144], index: 2, kind: input, shape index: {}]
  %s3 = inlined_call_operand.vmem [shape: f32[1,144], index: 3, kind: input, shape index: {}]
  %s4 = inlined_call_operand.vmem [shape: f32[1,4], index: 4, kind: input, shape index: {}]
  %s5 = inlined_call_operand.vmem [shape: f32[128,4], index: 5, kind: output, shape index: {}]
  %s6 = sld [smem:[#allocation0]]
  $region38: #{unet_multihead_rot_forward.26} parent=0
    _
  %s8 = ssub.s32 1, %s6
  %s9 = scalar_select 0, %s8, %s6
  // Predicated region
  $region2: #{unet_multihead_rot_forward.26} parent=0 // pred_check
    _
  $region3: #{unet_multihead_rot_forward.26} parent=0 // pred_check_branch
    %11 = sbr.rel (0) target = $region5
  $region4: #{unet_multihead_rot_forward.26} parent=0 // pred_region
    _
  $region5: #{unet_multihead_rot_forward.26} parent=0 // pred_fallthru
    _
  // Predicated region
  $region6: #{unet_multihead_rot_forward.26} parent=0 // pred_check
    _
  $region7: #{unet_multihead_rot_forward.26} parent=0 // pred_check_branch
    %13 = sbr.rel (0) target = $region9
  $region8: #{unet_multihead_rot_forward.26} parent=0 // pred_region
    _
  $region9: #{unet_multihead_rot_forward.26} parent=0 // pred_fallthru
    _
  // Predicated region
  $region10: #{unet_multihead_rot_forward.26} parent=0 // pred_check
    _
  $region11: #{unet_multihead_rot_forward.26} parent=0 // pred_check_branch
    %15 = sbr.rel (0) target = $region13
  $region12: #{unet_multihead_rot_forward.26} parent=0 // pred_region
    _
  $region13: #{unet_multihead_rot_forward.26} parent=0 // pred_fallthru
    _
  // Predicated region
  $region14: #{unet_multihead_rot_forward.26} parent=0 // pred_check
    _
  $region15: #{unet_multihead_rot_forward.26} parent=0 // pred_check_branch
    %17 = sbr.rel (0) target = $region17
  $region16: #{unet_multihead_rot_forward.26} parent=0 // pred_region
    _
  $region17: #{unet_multihead_rot_forward.26} parent=0 // pred_fallthru
    _
  // Predicated region
  $region18: #{unet_multihead_rot_forward.26} parent=0 // pred_check
    _
  $region19: #{unet_multihead_rot_forward.26} parent=0 // pred_check_branch
    %19 = sbr.rel (0) target = $region21
  $region20: #{unet_multihead_rot_forward.26} parent=0 // pred_region
    _
  $region21: #{unet_multihead_rot_forward.26} parent=0 // pred_fallthru
    _
  %p21 = scmp.eq.s32.totalorder 0, 0
  // Predicated region
  $region22: #{unet_multihead_rot_forward.26} parent=0 // pred_check
    %p22 = pneg %p21
  $region23: #{unet_multihead_rot_forward.26} parent=0 // pred_check_branch
    %24 = sbr.rel (%p22) target = $region25
  $region24: #{unet_multihead_rot_forward.26} parent=0 // pred_region
    %vm25 = vcmask 31744
    %26 = vst.msk [vmem:[#allocation2] sm:$0xff] %vm25, 0.0
    %27 = vst.msk [vmem:[#allocation2 + $0x8] sm:$0xff] %vm25, 0.0
    %28 = vst.msk [vmem:[#allocation2 + $0x10] sm:$0xff] %vm25, 0.0
    %29 = vst.msk [vmem:[#allocation2 + $0x18] sm:$0xff] %vm25, 0.0
    %30 = vst.msk [vmem:[#allocation2 + $0x20] sm:$0xff] %vm25, 0.0
    %31 = vst.msk [vmem:[#allocation2 + $0x28] sm:$0xff] %vm25, 0.0
    %32 = vst.msk [vmem:[#allocation2 + $0x30] sm:$0xff] %vm25, 0.0
    %33 = vst.msk [vmem:[#allocation2 + $0x38] sm:$0xff] %vm25, 0.0
    %34 = vst.msk [vmem:[#allocation2 + $0x40] sm:$0xff] %vm25, 0.0
    %35 = vst.msk [vmem:[#allocation2 + $0x48] sm:$0xff] %vm25, 0.0
    %36 = vst.msk [vmem:[#allocation2 + $0x50] sm:$0xff] %vm25, 0.0
    %37 = vst.msk [vmem:[#allocation2 + $0x58] sm:$0xff] %vm25, 0.0
    %38 = vst.msk [vmem:[#allocation2 + $0x60] sm:$0xff] %vm25, 0.0
    %39 = vst.msk [vmem:[#allocation2 + $0x68] sm:$0xff] %vm25, 0.0
    %40 = vst.msk [vmem:[#allocation2 + $0x70] sm:$0xff] %vm25, 0.0
    %41 = vst.msk [vmem:[#allocation2 + $0x78] sm:$0xff] %vm25, 0.0
  $region25: #{unet_multihead_rot_forward.26} parent=0 // pred_fallthru
    _
  %v42 = vld [vmem:[%s0] sm:$0xff]
  %v43 = vld [vmem:[%s0 + $0x8] sm:$0xff]
  %v44 = vld [vmem:[%s0 + $0x10] sm:$0xff]
  %v45 = vld [vmem:[%s0 + $0x18] sm:$0xff]
  %v46 = vld [vmem:[%s0 + $0x20] sm:$0xff]
  %v47 = vld [vmem:[%s0 + $0x28] sm:$0xff]
  %v48 = vld [vmem:[%s0 + $0x30] sm:$0xff]
  %v49 = vld [vmem:[%s0 + $0x38] sm:$0xff]
  %v50 = vld [vmem:[%s0 + $0x40] sm:$0xff]
  %v51 = vld [vmem:[%s0 + $0x48] sm:$0xff]
  %v52 = vld [vmem:[%s0 + $0x50] sm:$0xff]
  %v53 = vld [vmem:[%s0 + $0x58] sm:$0xff]
  %v54 = vld [vmem:[%s0 + $0x60] sm:$0xff]
  %v55 = vld [vmem:[%s0 + $0x68] sm:$0xff]
  %v56 = vld [vmem:[%s0 + $0x70] sm:$0xff]
  %v57 = vld [vmem:[%s0 + $0x78] sm:$0xff]
  %v58 = vunpack.c.l.bf16 %v42
  %v59 = vunpack.c.h.bf16 %v42
  %v60 = vunpack.c.l.bf16 %v43
  %v61 = vunpack.c.h.bf16 %v43
  %v62 = vunpack.c.l.bf16 %v44
  %v63 = vunpack.c.h.bf16 %v44
  %v64 = vunpack.c.l.bf16 %v45
  %v65 = vunpack.c.h.bf16 %v45
  %v66 = vunpack.c.l.bf16 %v46
  %v67 = vunpack.c.h.bf16 %v46
  %v68 = vunpack.c.l.bf16 %v47
  %v69 = vunpack.c.h.bf16 %v47
  %v70 = vunpack.c.l.bf16 %v48
  %v71 = vunpack.c.h.bf16 %v48
  %v72 = vunpack.c.l.bf16 %v49
  %v73 = vunpack.c.h.bf16 %v49
  %v74 = vunpack.c.l.bf16 %v50
  %v75 = vunpack.c.h.bf16 %v50
  %v76 = vunpack.c.l.bf16 %v51
  %v77 = vunpack.c.h.bf16 %v51
  %v78 = vunpack.c.l.bf16 %v52
  %v79 = vunpack.c.h.bf16 %v52
  %v80 = vunpack.c.l.bf16 %v53
  %v81 = vunpack.c.h.bf16 %v53
  %v82 = vunpack.c.l.bf16 %v54
  %v83 = vunpack.c.h.bf16 %v54
  %v84 = vunpack.c.l.bf16 %v55
  %v85 = vunpack.c.h.bf16 %v55
  %v86 = vunpack.c.l.bf16 %v56
  %v87 = vunpack.c.h.bf16 %v56
  %v88 = vunpack.c.l.bf16 %v57
  %v89 = vunpack.c.h.bf16 %v57
  %v90 = vld [vmem:[%s2] sm:$0x3]
  %v92 = vlaneseq
  %v93 = vshrl.u32 %v92, 7
  %v94 = vsub.s32 0, %v93
  %v95 = vrot.slane %v90, %v94
  %v96 = vlaneseq
  %v97 = vshrl.u32 %v96, 7
  %v98 = vsub.s32 1, %v97
  %v99 = vrot.slane %v90, %v98
  %v102 = vmul.f32 %v58, %v95
  %v103 = vmul.f32 %v59, %v99
  %v104 = vmul.f32 %v60, %v95
  %v105 = vmul.f32 %v61, %v99
  %v106 = vmul.f32 %v62, %v95
  %v107 = vmul.f32 %v63, %v99
  %v108 = vmul.f32 %v64, %v95
  %v109 = vmul.f32 %v65, %v99
  %v110 = vmul.f32 %v66, %v95
  %v111 = vmul.f32 %v67, %v99
  %v112 = vmul.f32 %v68, %v95
  %v113 = vmul.f32 %v69, %v99
  %v114 = vmul.f32 %v70, %v95
  %v115 = vmul.f32 %v71, %v99
  %v116 = vmul.f32 %v72, %v95
  %v117 = vmul.f32 %v73, %v99
  %v118 = vmul.f32 %v74, %v95
  %v119 = vmul.f32 %v75, %v99
  %v120 = vmul.f32 %v76, %v95
  %v121 = vmul.f32 %v77, %v99
  %v122 = vmul.f32 %v78, %v95
  %v123 = vmul.f32 %v79, %v99
  %v124 = vmul.f32 %v80, %v95
  %v125 = vmul.f32 %v81, %v99
  %v126 = vmul.f32 %v82, %v95
  %v127 = vmul.f32 %v83, %v99
  %v128 = vmul.f32 %v84, %v95
  %v129 = vmul.f32 %v85, %v99
  %v130 = vmul.f32 %v86, %v95
  %v131 = vmul.f32 %v87, %v99
  %v132 = vmul.f32 %v88, %v95
  %v133 = vmul.f32 %v89, %v99
  %v134 = vld [vmem:[%s3] sm:$0x3]
  %v136 = vlaneseq
  %v137 = vshrl.u32 %v136, 7
  %v138 = vsub.s32 0, %v137
  %v139 = vrot.slane %v134, %v138
  %v140 = vlaneseq
  %v141 = vshrl.u32 %v140, 7
  %v142 = vsub.s32 1, %v141
  %v143 = vrot.slane %v134, %v142
  %v146 = vadd.f32 %v102, %v139
  %v147 = vadd.f32 %v103, %v143
  %v148 = vadd.f32 %v104, %v139
  %v149 = vadd.f32 %v105, %v143
  %v150 = vadd.f32 %v106, %v139
  %v151 = vadd.f32 %v107, %v143
  %v152 = vadd.f32 %v108, %v139
  %v153 = vadd.f32 %v109, %v143
  %v154 = vadd.f32 %v110, %v139
  %v155 = vadd.f32 %v111, %v143
  %v156 = vadd.f32 %v112, %v139
  %v157 = vadd.f32 %v113, %v143
  %v158 = vadd.f32 %v114, %v139
  %v159 = vadd.f32 %v115, %v143
  %v160 = vadd.f32 %v116, %v139
  %v161 = vadd.f32 %v117, %v143
  %v162 = vadd.f32 %v118, %v139
  %v163 = vadd.f32 %v119, %v143
  %v164 = vadd.f32 %v120, %v139
  %v165 = vadd.f32 %v121, %v143
  %v166 = vadd.f32 %v122, %v139
  %v167 = vadd.f32 %v123, %v143
  %v168 = vadd.f32 %v124, %v139
  %v169 = vadd.f32 %v125, %v143
  %v170 = vadd.f32 %v126, %v139
  %v171 = vadd.f32 %v127, %v143
  %v172 = vadd.f32 %v128, %v139
  %v173 = vadd.f32 %v129, %v143
  %v174 = vadd.f32 %v130, %v139
  %v175 = vadd.f32 %v131, %v143
  %v176 = vadd.f32 %v132, %v139
  %v177 = vadd.f32 %v133, %v143
  %v178 = vmax.f32 %v146, 0.0
  %v179 = vmax.f32 %v147, 0.0
  %v180 = vmax.f32 %v148, 0.0
  %v181 = vmax.f32 %v149, 0.0
  %v182 = vmax.f32 %v150, 0.0
  %v183 = vmax.f32 %v151, 0.0
  %v184 = vmax.f32 %v152, 0.0
  %v185 = vmax.f32 %v153, 0.0
  %v186 = vmax.f32 %v154, 0.0
  %v187 = vmax.f32 %v155, 0.0
  %v188 = vmax.f32 %v156, 0.0
  %v189 = vmax.f32 %v157, 0.0
  %v190 = vmax.f32 %v158, 0.0
  %v191 = vmax.f32 %v159, 0.0
  %v192 = vmax.f32 %v160, 0.0
  %v193 = vmax.f32 %v161, 0.0
  %v194 = vmax.f32 %v162, 0.0
  %v195 = vmax.f32 %v163, 0.0
  %v196 = vmax.f32 %v164, 0.0
  %v197 = vmax.f32 %v165, 0.0
  %v198 = vmax.f32 %v166, 0.0
  %v199 = vmax.f32 %v167, 0.0
  %v200 = vmax.f32 %v168, 0.0
  %v201 = vmax.f32 %v169, 0.0
  %v202 = vmax.f32 %v170, 0.0
  %v203 = vmax.f32 %v171, 0.0
  %v204 = vmax.f32 %v172, 0.0
  %v205 = vmax.f32 %v173, 0.0
  %v206 = vmax.f32 %v174, 0.0
  %v207 = vmax.f32 %v175, 0.0
  %v208 = vmax.f32 %v176, 0.0
  %v209 = vmax.f32 %v177, 0.0
  %v210 = vpack.c.bf16 %v180, %v178
  %v211 = vpack.c.bf16 %v181, %v179
  %v212 = vpack.c.bf16 %v184, %v182
  %v213 = vpack.c.bf16 %v185, %v183
  %v214 = vpack.c.bf16 %v188, %v186
  %v215 = vpack.c.bf16 %v189, %v187
  %v216 = vpack.c.bf16 %v192, %v190
  %v217 = vpack.c.bf16 %v193, %v191
  %v218 = vpack.c.bf16 %v196, %v194
  %v219 = vpack.c.bf16 %v197, %v195
  %v220 = vpack.c.bf16 %v200, %v198
  %v221 = vpack.c.bf16 %v201, %v199
  %v222 = vpack.c.bf16 %v204, %v202
  %v223 = vpack.c.bf16 %v205, %v203
  %v224 = vpack.c.bf16 %v208, %v206
  %v225 = vpack.c.bf16 %v209, %v207
  %v226 = vld [vmem:[#allocation2] sm:$0xff]
  %v227 = vld [vmem:[#allocation2 + $0x8] sm:$0xff]
  %v228 = vld [vmem:[#allocation2 + $0x10] sm:$0xff]
  %v229 = vld [vmem:[#allocation2 + $0x18] sm:$0xff]
  %v230 = vld [vmem:[#allocation2 + $0x20] sm:$0xff]
  %v231 = vld [vmem:[#allocation2 + $0x28] sm:$0xff]
  %v232 = vld [vmem:[#allocation2 + $0x30] sm:$0xff]
  %v233 = vld [vmem:[#allocation2 + $0x38] sm:$0xff]
  %v234 = vld [vmem:[#allocation2 + $0x40] sm:$0xff]
  %v235 = vld [vmem:[#allocation2 + $0x48] sm:$0xff]
  %v236 = vld [vmem:[#allocation2 + $0x50] sm:$0xff]
  %v237 = vld [vmem:[#allocation2 + $0x58] sm:$0xff]
  %v238 = vld [vmem:[#allocation2 + $0x60] sm:$0xff]
  %v239 = vld [vmem:[#allocation2 + $0x68] sm:$0xff]
  %v240 = vld [vmem:[#allocation2 + $0x70] sm:$0xff]
  %v241 = vld [vmem:[#allocation2 + $0x78] sm:$0xff]
  %v242 = vld [vmem:[%s1] sm:$0xf]
  %v243 = vld [vmem:[%s1 + $0x4] sm:$0xf]
  %v244 = vld [vmem:[%s1 + $0x8] sm:$0xf]
  %v245 = vld [vmem:[%s1 + $0xc] sm:$0xf]
  %v246 = vld [vmem:[%s1 + $0x10] sm:$0xf]
  %v247 = vld [vmem:[%s1 + $0x14] sm:$0xf]
  %v248 = vld [vmem:[%s1 + $0x18] sm:$0xf]
  %v249 = vld [vmem:[%s1 + $0x1c] sm:$0xf]
  %v250 = vld [vmem:[%s1 + $0x20] sm:$0xf]
  %v251 = vld [vmem:[%s1 + $0x24] sm:$0xf]
  %v252 = vld [vmem:[%s1 + $0x28] sm:$0xf]
  %v253 = vld [vmem:[%s1 + $0x2c] sm:$0xf]
  %v254 = vld [vmem:[%s1 + $0x30] sm:$0xf]
  %v255 = vld [vmem:[%s1 + $0x34] sm:$0xf]
  %v256 = vld [vmem:[%s1 + $0x38] sm:$0xf]
  %v257 = vld [vmem:[%s1 + $0x3c] sm:$0xf]
  %v258 = vld [vmem:[%s1 + $0x40] sm:$0xf]
  %v259 = vld [vmem:[%s1 + $0x44] sm:$0xf]
  %v278 = vunpack.c.l.b16 %v242
  %v279 = vunpack.c.l.b16 %v243
  %v280 = vunpack.c.l.b16 %v244
  %v281 = vunpack.c.l.b16 %v245
  %v282 = vunpack.c.l.b16 %v246
  %v283 = vunpack.c.l.b16 %v247
  %v284 = vunpack.c.l.b16 %v248
  %v285 = vunpack.c.l.b16 %v249
  %v286 = vunpack.c.l.b16 %v250
  %v287 = vunpack.c.l.b16 %v251
  %v288 = vunpack.c.l.b16 %v252
  %v289 = vunpack.c.l.b16 %v253
  %v290 = vunpack.c.l.b16 %v254
  %v291 = vunpack.c.l.b16 %v255
  %v292 = vunpack.c.l.b16 %v256
  %v293 = vunpack.c.l.b16 %v257
  %v294 = vunpack.c.l.b16 %v258
  %v295 = vunpack.c.l.b16 %v259
  %v296 = vpack.c.b16 %v279, %v278
  %v297 = vpack.c.b16 %v281, %v280
  %v298 = vpack.c.b16 %v283, %v282
  %v299 = vpack.c.b16 %v285, %v284
  %v300 = vpack.c.b16 %v287, %v286
  %v301 = vpack.c.b16 %v289, %v288
  %v302 = vpack.c.b16 %v291, %v290
  %v303 = vpack.c.b16 %v293, %v292
  %v304 = vpack.c.b16 %v295, %v294
  %vm314 = vcmask 130048
  %v316 = vsel %vm314, %v211, 0
  %v319 = vsel %vm314, %v213, 0
  %v322 = vsel %vm314, %v215, 0
  %v325 = vsel %vm314, %v217, 0
  %v328 = vsel %vm314, %v219, 0
  %v331 = vsel %vm314, %v221, 0
  %v334 = vsel %vm314, %v223, 0
  %v337 = vsel %vm314, %v225, 0
  %339 = vmatprep.subr.bf16.mxu0 0
  %340 = vmatpush1.bf16.msra.mxu0 %v296
  %341 = vmatprep.subr.bf16.mxu0 0
  %342 = vmatpush1.bf16.msra.mxu0 %v297
  %343 = vmatprep.subr.bf16.mxu0 0
  %344 = vmatpush1.bf16.msra.mxu0 %v298
  %345 = vmatprep.subr.bf16.mxu0 0
  %346 = vmatpush1.bf16.msra.mxu0 %v299
  %347 = vmatprep.subr.bf16.mxu0 0
  %348 = vmatpush1.bf16.msra.mxu0 %v300
  %349 = vmatprep.subr.bf16.mxu0 0
  %350 = vmatpush1.bf16.msra.mxu0 %v301
  %351 = vmatprep.subr.bf16.mxu0 0
  %352 = vmatpush1.bf16.msra.mxu0 %v302
  %353 = vmatprep.subr.bf16.mxu0 0
  %354 = vmatpush1.bf16.msra.mxu0 %v303
  %355 = vmatprep.subr.bf16.mxu0 0
  %356 = vmatpush1.bf16.msra.mxu0 %v304
  %357 = vmatprep.subr.bf16.mxu0 0
  %358 = vmatpush1.bf16.msra.mxu0 0
  %359 = vmatprep.subr.bf16.mxu0 0
  %360 = vmatpush1.bf16.msra.mxu0 0
  %361 = vmatprep.subr.bf16.mxu0 0
  %362 = vmatpush1.bf16.msra.mxu0 0
  %363 = vmatprep.subr.bf16.mxu0 0
  %364 = vmatpush1.bf16.msra.mxu0 0
  %365 = vmatprep.subr.bf16.mxu0 0
  %366 = vmatpush1.bf16.msra.mxu0 0
  %367 = vmatprep.subr.bf16.mxu0 0
  %368 = vmatpush1.bf16.msra.mxu0 0
  %369 = vmatprep.subr.bf16.mxu0 0
  %370 = vmatpush1.bf16.msra.mxu0 0
  %371 = vmatprep.mubr.bf16.mxu0 %v316
  %372 = vmatmul.mubr.bf16.gmra.mrb[0].mxu0 %v210
  %v373 = vpop.f32.mrb[0].mxu0
  %v374 = vadd.f32 0.0, %v373
  %v375 = vpop.f32.mrb[0].mxu0
  %v376 = vpop.f32.mrb[0].mxu0
  %v377 = vadd.f32 0.0, %v376
  %v378 = vpop.f32.mrb[0].mxu0
  %379 = vmatprep.mubr.bf16.mxu0 %v319
  %380 = vmatmul.mubr.bf16.gmra.mrb[0].mxu0 %v212
  %v381 = vpop.f32.mrb[0].mxu0
  %v382 = vadd.f32 0.0, %v381
  %v383 = vpop.f32.mrb[0].mxu0
  %v384 = vpop.f32.mrb[0].mxu0
  %v385 = vadd.f32 0.0, %v384
  %v386 = vpop.f32.mrb[0].mxu0
  %387 = vmatprep.mubr.bf16.mxu0 %v322
  %388 = vmatmul.mubr.bf16.gmra.mrb[0].mxu0 %v214
  %v389 = vpop.f32.mrb[0].mxu0
  %v390 = vadd.f32 0.0, %v389
  %v391 = vpop.f32.mrb[0].mxu0
  %v392 = vpop.f32.mrb[0].mxu0
  %v393 = vadd.f32 0.0, %v392
  %v394 = vpop.f32.mrb[0].mxu0
  %395 = vmatprep.mubr.bf16.mxu0 %v325
  %396 = vmatmul.mubr.bf16.gmra.mrb[0].mxu0 %v216
  %v397 = vpop.f32.mrb[0].mxu0
  %v398 = vadd.f32 0.0, %v397
  %v399 = vpop.f32.mrb[0].mxu0
  %v400 = vpop.f32.mrb[0].mxu0
  %v401 = vadd.f32 0.0, %v400
  %v402 = vpop.f32.mrb[0].mxu0
  %403 = vmatprep.mubr.bf16.mxu0 %v328
  %404 = vmatmul.mubr.bf16.gmra.mrb[0].mxu0 %v218
  %v405 = vpop.f32.mrb[0].mxu0
  %v406 = vadd.f32 0.0, %v405
  %v407 = vpop.f32.mrb[0].mxu0
  %v408 = vpop.f32.mrb[0].mxu0
  %v409 = vadd.f32 0.0, %v408
  %v410 = vpop.f32.mrb[0].mxu0
  %411 = vmatprep.mubr.bf16.mxu0 %v331
  %412 = vmatmul.mubr.bf16.gmra.mrb[0].mxu0 %v220
  %v413 = vpop.f32.mrb[0].mxu0
  %v414 = vadd.f32 0.0, %v413
  %v415 = vpop.f32.mrb[0].mxu0
  %v416 = vpop.f32.mrb[0].mxu0
  %v417 = vadd.f32 0.0, %v416
  %v418 = vpop.f32.mrb[0].mxu0
  %419 = vmatprep.mubr.bf16.mxu0 %v334
  %420 = vmatmul.mubr.bf16.gmra.mrb[0].mxu0 %v222
  %v421 = vpop.f32.mrb[0].mxu0
  %v422 = vadd.f32 0.0, %v421
  %v423 = vpop.f32.mrb[0].mxu0
  %v424 = vpop.f32.mrb[0].mxu0
  %v425 = vadd.f32 0.0, %v424
  %v426 = vpop.f32.mrb[0].mxu0
  %427 = vmatprep.mubr.bf16.mxu0 %v337
  %428 = vmatmul.mubr.bf16.gmra.mrb[0].mxu0 %v224
  %v429 = vpop.f32.mrb[0].mxu0
  %v430 = vadd.f32 0.0, %v429
  %v431 = vpop.f32.mrb[0].mxu0
  %v432 = vpop.f32.mrb[0].mxu0
  %v433 = vadd.f32 0.0, %v432
  %v434 = vpop.f32.mrb[0].mxu0
  %435 = vdwg.mxu0
  %v436 = vadd.f32 %v226, %v374
  %v437 = vadd.f32 %v227, %v377
  %v438 = vadd.f32 %v228, %v382
  %v439 = vadd.f32 %v229, %v385
  %v440 = vadd.f32 %v230, %v390
  %v441 = vadd.f32 %v231, %v393
  %v442 = vadd.f32 %v232, %v398
  %v443 = vadd.f32 %v233, %v401
  %v444 = vadd.f32 %v234, %v406
  %v445 = vadd.f32 %v235, %v409
  %v446 = vadd.f32 %v236, %v414
  %v447 = vadd.f32 %v237, %v417
  %v448 = vadd.f32 %v238, %v422
  %v449 = vadd.f32 %v239, %v425
  %v450 = vadd.f32 %v240, %v430
  %v451 = vadd.f32 %v241, %v433
  %vm452 = vcmask 31744
  %453 = vst.msk [vmem:[#allocation2] sm:$0xff] %vm452, %v436
  %454 = vst.msk [vmem:[#allocation2 + $0x8] sm:$0xff] %vm452, %v437
  %455 = vst.msk [vmem:[#allocation2 + $0x10] sm:$0xff] %vm452, %v438
  %456 = vst.msk [vmem:[#allocation2 + $0x18] sm:$0xff] %vm452, %v439
  %457 = vst.msk [vmem:[#allocation2 + $0x20] sm:$0xff] %vm452, %v440
  %458 = vst.msk [vmem:[#allocation2 + $0x28] sm:$0xff] %vm452, %v441
  %459 = vst.msk [vmem:[#allocation2 + $0x30] sm:$0xff] %vm452, %v442
  %460 = vst.msk [vmem:[#allocation2 + $0x38] sm:$0xff] %vm452, %v443
  %461 = vst.msk [vmem:[#allocation2 + $0x40] sm:$0xff] %vm452, %v444
  %462 = vst.msk [vmem:[#allocation2 + $0x48] sm:$0xff] %vm452, %v445
  %463 = vst.msk [vmem:[#allocation2 + $0x50] sm:$0xff] %vm452, %v446
  %464 = vst.msk [vmem:[#allocation2 + $0x58] sm:$0xff] %vm452, %v447
  %465 = vst.msk [vmem:[#allocation2 + $0x60] sm:$0xff] %vm452, %v448
  %466 = vst.msk [vmem:[#allocation2 + $0x68] sm:$0xff] %vm452, %v449
  %467 = vst.msk [vmem:[#allocation2 + $0x70] sm:$0xff] %vm452, %v450
  %468 = vst.msk [vmem:[#allocation2 + $0x78] sm:$0xff] %vm452, %v451
  // Predicated region
  $region26: #{unet_multihead_rot_forward.26} parent=0 // pred_check
    %p469 = pneg %p21
  $region27: #{unet_multihead_rot_forward.26} parent=0 // pred_check_branch
    %471 = sbr.rel (%p469) target = $region29
  $region28: #{unet_multihead_rot_forward.26} parent=0 // pred_region
    %v472 = vld [vmem:[#allocation2] sm:$0xff]
    %v473 = vld [vmem:[#allocation2 + $0x8] sm:$0xff]
    %v474 = vld [vmem:[#allocation2 + $0x10] sm:$0xff]
    %v475 = vld [vmem:[#allocation2 + $0x18] sm:$0xff]
    %v476 = vld [vmem:[#allocation2 + $0x20] sm:$0xff]
    %v477 = vld [vmem:[#allocation2 + $0x28] sm:$0xff]
    %v478 = vld [vmem:[#allocation2 + $0x30] sm:$0xff]
    %v479 = vld [vmem:[#allocation2 + $0x38] sm:$0xff]
    %v480 = vld [vmem:[#allocation2 + $0x40] sm:$0xff]
    %v481 = vld [vmem:[#allocation2 + $0x48] sm:$0xff]
    %v482 = vld [vmem:[#allocation2 + $0x50] sm:$0xff]
    %v483 = vld [vmem:[#allocation2 + $0x58] sm:$0xff]
    %v484 = vld [vmem:[#allocation2 + $0x60] sm:$0xff]
    %v485 = vld [vmem:[#allocation2 + $0x68] sm:$0xff]
    %v486 = vld [vmem:[#allocation2 + $0x70] sm:$0xff]
    %v487 = vld [vmem:[#allocation2 + $0x78] sm:$0xff]
    %v488 = vld [vmem:[%s4] sm:$0x1]
    %v490 = vlaneseq
    %v491 = vshrl.u32 %v490, 7
    %v492 = vsub.s32 0, %v491
    %v493 = vrot.slane %v488, %v492
    %v495 = vadd.f32 %v472, %v493
    %v496 = vadd.f32 %v473, %v493
    %v497 = vadd.f32 %v474, %v493
    %v498 = vadd.f32 %v475, %v493
    %v499 = vadd.f32 %v476, %v493
    %v500 = vadd.f32 %v477, %v493
    %v501 = vadd.f32 %v478, %v493
    %v502 = vadd.f32 %v479, %v493
    %v503 = vadd.f32 %v480, %v493
    %v504 = vadd.f32 %v481, %v493
    %v505 = vadd.f32 %v482, %v493
    %v506 = vadd.f32 %v483, %v493
    %v507 = vadd.f32 %v484, %v493
    %v508 = vadd.f32 %v485, %v493
    %v509 = vadd.f32 %v486, %v493
    %v510 = vadd.f32 %v487, %v493
    %v511 = vxor.u32 %v495, 2147483648
    %v512 = vxor.u32 %v496, 2147483648
    %v513 = vxor.u32 %v497, 2147483648
    %v514 = vxor.u32 %v498, 2147483648
    %v515 = vxor.u32 %v499, 2147483648
    %v516 = vxor.u32 %v500, 2147483648
    %v517 = vxor.u32 %v501, 2147483648
    %v518 = vxor.u32 %v502, 2147483648
    %v519 = vxor.u32 %v503, 2147483648
    %v520 = vxor.u32 %v504, 2147483648
    %v521 = vxor.u32 %v505, 2147483648
    %v522 = vxor.u32 %v506, 2147483648
    %v523 = vxor.u32 %v507, 2147483648
    %v524 = vxor.u32 %v508, 2147483648
    %v525 = vxor.u32 %v509, 2147483648
    %v526 = vxor.u32 %v510, 2147483648
    %v527 = vmul.f32 %v511, 1.442695
    %v528 = vpow.pop %v527
    %v529 = vmul.f32 %v512, 1.442695
    %v530 = vpow.pop %v529
    %v531 = vmul.f32 %v513, 1.442695
    %v532 = vpow.pop %v531
    %v533 = vmul.f32 %v514, 1.442695
    %v534 = vpow.pop %v533
    %v535 = vmul.f32 %v515, 1.442695
    %v536 = vpow.pop %v535
    %v537 = vmul.f32 %v516, 1.442695
    %v538 = vpow.pop %v537
    %v539 = vmul.f32 %v517, 1.442695
    %v540 = vpow.pop %v539
    %v541 = vmul.f32 %v518, 1.442695
    %v542 = vpow.pop %v541
    %v543 = vmul.f32 %v519, 1.442695
    %v544 = vpow.pop %v543
    %v545 = vmul.f32 %v520, 1.442695
    %v546 = vpow.pop %v545
    %v547 = vmul.f32 %v521, 1.442695
    %v548 = vpow.pop %v547
    %v549 = vmul.f32 %v522, 1.442695
    %v550 = vpow.pop %v549
    %v551 = vmul.f32 %v523, 1.442695
    %v552 = vpow.pop %v551
    %v553 = vmul.f32 %v524, 1.442695
    %v554 = vpow.pop %v553
    %v555 = vmul.f32 %v525, 1.442695
    %v556 = vpow.pop %v555
    %v557 = vmul.f32 %v526, 1.442695
    %v558 = vpow.pop %v557
    %v559 = vadd.f32 %v528, 1.0
    %v560 = vadd.f32 %v530, 1.0
    %v561 = vadd.f32 %v532, 1.0
    %v562 = vadd.f32 %v534, 1.0
    %v563 = vadd.f32 %v536, 1.0
    %v564 = vadd.f32 %v538, 1.0
    %v565 = vadd.f32 %v540, 1.0
    %v566 = vadd.f32 %v542, 1.0
    %v567 = vadd.f32 %v544, 1.0
    %v568 = vadd.f32 %v546, 1.0
    %v569 = vadd.f32 %v548, 1.0
    %v570 = vadd.f32 %v550, 1.0
    %v571 = vadd.f32 %v552, 1.0
    %v572 = vadd.f32 %v554, 1.0
    %v573 = vadd.f32 %v556, 1.0
    %v574 = vadd.f32 %v558, 1.0
    %v575 = vrcp.pop %v559
    %v576 = vmul.f32 1.0, %v575
    %v577 = vrcp.pop %v560
    %v578 = vmul.f32 1.0, %v577
    %v579 = vrcp.pop %v561
    %v580 = vmul.f32 1.0, %v579
    %v581 = vrcp.pop %v562
    %v582 = vmul.f32 1.0, %v581
    %v583 = vrcp.pop %v563
    %v584 = vmul.f32 1.0, %v583
    %v585 = vrcp.pop %v564
    %v586 = vmul.f32 1.0, %v585
    %v587 = vrcp.pop %v565
    %v588 = vmul.f32 1.0, %v587
    %v589 = vrcp.pop %v566
    %v590 = vmul.f32 1.0, %v589
    %v591 = vrcp.pop %v567
    %v592 = vmul.f32 1.0, %v591
    %v593 = vrcp.pop %v568
    %v594 = vmul.f32 1.0, %v593
    %v595 = vrcp.pop %v569
    %v596 = vmul.f32 1.0, %v595
    %v597 = vrcp.pop %v570
    %v598 = vmul.f32 1.0, %v597
    %v599 = vrcp.pop %v571
    %v600 = vmul.f32 1.0, %v599
    %v601 = vrcp.pop %v572
    %v602 = vmul.f32 1.0, %v601
    %v603 = vrcp.pop %v573
    %v604 = vmul.f32 1.0, %v603
    %v605 = vrcp.pop %v574
    %v606 = vmul.f32 1.0, %v605
    %607 = vst.msk [vmem:[%s5] sm:$0xff] %vm452, %v576
    %608 = vst.msk [vmem:[%s5 + $0x8] sm:$0xff] %vm452, %v578
    %609 = vst.msk [vmem:[%s5 + $0x10] sm:$0xff] %vm452, %v580
    %610 = vst.msk [vmem:[%s5 + $0x18] sm:$0xff] %vm452, %v582
    %611 = vst.msk [vmem:[%s5 + $0x20] sm:$0xff] %vm452, %v584
    %612 = vst.msk [vmem:[%s5 + $0x28] sm:$0xff] %vm452, %v586
    %613 = vst.msk [vmem:[%s5 + $0x30] sm:$0xff] %vm452, %v588
    %614 = vst.msk [vmem:[%s5 + $0x38] sm:$0xff] %vm452, %v590
    %615 = vst.msk [vmem:[%s5 + $0x40] sm:$0xff] %vm452, %v592
    %616 = vst.msk [vmem:[%s5 + $0x48] sm:$0xff] %vm452, %v594
    %617 = vst.msk [vmem:[%s5 + $0x50] sm:$0xff] %vm452, %v596
    %618 = vst.msk [vmem:[%s5 + $0x58] sm:$0xff] %vm452, %v598
    %619 = vst.msk [vmem:[%s5 + $0x60] sm:$0xff] %vm452, %v600
    %620 = vst.msk [vmem:[%s5 + $0x68] sm:$0xff] %vm452, %v602
    %621 = vst.msk [vmem:[%s5 + $0x70] sm:$0xff] %vm452, %v604
    %622 = vst.msk [vmem:[%s5 + $0x78] sm:$0xff] %vm452, %v606
  $region29: #{unet_multihead_rot_forward.26} parent=0 // pred_fallthru
    _
  // Predicated region
  $region30: #{unet_multihead_rot_forward.26} parent=0 // pred_check
    _
  $region31: #{unet_multihead_rot_forward.26} parent=0 // pred_check_branch
    %624 = sbr.rel (0) target = $region33
  $region32: #{unet_multihead_rot_forward.26} parent=0 // pred_region
    _
  $region33: #{unet_multihead_rot_forward.26} parent=0 // pred_fallthru
    _
  // Predicated region
  $region34: #{unet_multihead_rot_forward.26} parent=0 // pred_check
    _
  $region35: #{unet_multihead_rot_forward.26} parent=0 // pred_check_branch
    %626 = sbr.rel (0) target = $region37
  $region36: #{unet_multihead_rot_forward.26} parent=0 // pred_region
    _
  $region37: #{unet_multihead_rot_forward.26} parent=0 // pred_fallthru
    _

</llo_original>
